<compile_context>
chip_gen: v6e
topology: v6e:2x2x1
jax: 0.10.0
libtpu: 0.0.40
codegen_flags: <defaults>
</compile_context>

<pallas_src>
import numpy as np
import jax
import jax.numpy as jnp
from jax.experimental import pallas as pl
from jax.experimental.pallas import tpu as pltpu


def _embed_nd_kernel(ids_ref, const_ref, out_ref):
    # ids_ref:   (1, block_s, n_axes) int32/float — raw axis ids for this tile
    # const_ref: (n_axes + 1, L)      float32 — rows: [w_0..w_{n-1}, phase]
    #            w_i[lane]  = omega[lane//4] if axis(lane//4) == i else 0
    #            phase[lane]= 0 for k in {0,3}, +pi/2 for k==1, -pi/2 for k==2
    # out_ref:   (1, block_s, L)               — interleaved [cos,-sin,sin,cos]
    n_axes = ids_ref.shape[2]
    ids = ids_ref[0].astype(jnp.float32)                 # (block_s, n_axes) VALU cast

    # arg[s, lane] = phase(lane) + ids[s, axis(lane)] * omega(lane).
    arg = const_ref[n_axes:n_axes + 1, :]                # (1, L) phase, broadcasts
    for i in range(n_axes):
        arg = arg + ids[:, i:i + 1] * const_ref[i:i + 1, :]

    # Single transcendental per output lane (cos(x+pi/2) = -sin(x), etc.).
    out_ref[0] = jnp.cos(arg).astype(out_ref.dtype)


def _pick_block_s(S: int, B: int, *, max_rows: int = 4096,
                  min_grid_steps: int = 4) -> int:
    """Pick the S-tile size.

    Goals: big tiles (cap 4096 rows) to amortize the ~0.35 us per-step overhead
    and keep DMA chunks near the HBM roofline, but at least `min_grid_steps`
    total grid steps (B * S_tiles) so v7x's two TensorCores both get work and
    the pipeline double-buffers.  Prefer tiles that divide S (no ragged tail);
    tiles are multiples of 8 (sublane rule) unless they span the whole axis.
    """
    min_tiles = pl.cdiv(S, max_rows)
    want_tiles = max(min_tiles, pl.cdiv(min_grid_steps, max(B, 1)))
    if want_tiles <= 1:
        return S
    bs = ((pl.cdiv(S, want_tiles) + 7) // 8) * 8         # even split, rounded to 8
    if bs >= S:
        return S                                         # S too small to split
    # Prefer an exact divisor of S (no ragged tail), but never shrink the tile
    # below bs/2 just to get one.
    for cand in range(bs, max(7, bs // 2), -8):
        if S % cand == 0:
            return cand
    return bs                                            # ragged tail; writeback masked


def embed_nd(ids: jax.Array, axes_dim, theta: int, *, block_s=None,
             out_dtype=jnp.float32) -> jax.Array:
    """JAX/Pallas equivalent of EmbedND(dim, theta, axes_dim).forward(ids)."""
    B, S, n_axes = ids.shape
    assert n_axes == len(axes_dim)

    # ---- host-side constants (float64, like torch, then cast to f32) --------
    omegas, axis_idx = [], []
    for i, d in enumerate(axes_dim):
        assert d % 2 == 0, "The dimension must be even."
        scale = np.arange(0, d, 2, dtype=np.float64) / d
        omegas.append(1.0 / (float(theta) ** scale))
        axis_idx.extend([i] * (d // 2))
    omega = np.concatenate(omegas)                       # (D2,) float64
    axis_idx = np.asarray(axis_idx, dtype=np.int64)      # (D2,)
    D2 = omega.shape[0]
    L = 4 * D2                                           # lane-dense fused width

    omega4 = np.repeat(omega, 4)                         # (L,) omega per lane
    axis4 = np.repeat(axis_idx, 4)                       # (L,) owning axis per lane
    k4 = np.tile(np.arange(4), D2)                       # (L,) position in 2x2 matrix

    rows = [np.where(axis4 == i, omega4, 0.0) for i in range(n_axes)]
    half_pi = np.pi / 2.0
    phase = np.where(k4 == 1, half_pi, np.where(k4 == 2, -half_pi, 0.0))
    rows.append(phase)                                   # -> cos(arg+phase)
    const = jnp.asarray(np.stack(rows), dtype=jnp.float32)  # (n_axes+1, L)

    if block_s is None:
        block_s = _pick_block_s(S, B)
    grid = (B, pl.cdiv(S, block_s))

    out_flat = pl.pallas_call(
        _embed_nd_kernel,
        out_shape=jax.ShapeDtypeStruct((B, S, L), out_dtype),
        grid_spec=pltpu.PrefetchScalarGridSpec(
            num_scalar_prefetch=0,
            grid=grid,
            in_specs=[
                # per-(batch, S-tile) block of raw ids; tiny HBM read, cast in-kernel
                pl.BlockSpec((1, block_s, n_axes), lambda b, s: (b, s, 0)),
                # constants: same block every step -> fetched once by the pipeline
                pl.BlockSpec((n_axes + 1, L), lambda b, s: (0, 0)),
            ],
            out_specs=pl.BlockSpec((1, block_s, L), lambda b, s: (b, s, 0)),
        ),
        compiler_params=pltpu.CompilerParams(
            dimension_semantics=("parallel", "parallel"),
        ),
    )(ids, const)

    # Free reshape (contiguous, row-major) to the module's output layout.
    return out_flat.reshape(B, 1, S, D2, 2, 2)


def _embed_nd_reference(ids, axes_dim, theta):
    """Pure-JAX reference mirroring the PyTorch code (for correctness check)."""
    outs = []
    B = ids.shape[0]
    for i, d in enumerate(axes_dim):
        scale = np.arange(0, d, 2, dtype=np.float64) / d
        omega = jnp.asarray(1.0 / (float(theta) ** scale), dtype=jnp.float32)
        pos = ids[..., i].astype(jnp.float32)
        out = jnp.einsum("...n,d->...nd", pos, omega)
        stacked = jnp.stack(
            [jnp.cos(out), -jnp.sin(out), jnp.sin(out), jnp.cos(out)], axis=-1)
        outs.append(stacked.reshape(B, -1, d // 2, 2, 2))
    return jnp.concatenate(outs, axis=-3)[:, None]


if __name__ == "__main__":
    # Real Flux rotary config: axes_dim = [16, 56, 56] -> dim = 128, D2 = 64,
    # fused lane width L = 256 (two full vregs).  Small sequence for the test;
    # default _pick_block_s gives block_s=256 -> grid (2, 2) = 4 parallel steps.
    axes_dim = [16, 56, 56]
    theta = 10000
    B, S, n_axes = 2, 512, len(axes_dim)

    key = jax.random.PRNGKey(0)
    ids = jax.random.randint(key, (B, S, n_axes), 0, 64, dtype=jnp.int32)

    out = embed_nd(ids, axes_dim, theta)
    out = jax.block_until_ready(out)

    ref = _embed_nd_reference(ids, axes_dim, theta)
    assert out.shape == (B, 1, S, sum(axes_dim) // 2, 2, 2), out.shape
    assert out.dtype == jnp.float32
    np.testing.assert_allclose(np.asarray(out), np.asarray(ref), rtol=1e-5, atol=1e-5)

    print("KERNEL_OK")
</pallas_src>

<mosaic_0001>
module attributes {stable_mosaic.version = 11 : i64} {
  func.func @_embed_nd_kernel(%arg0: i32, %arg1: i32, %arg2: memref<1x256x3xi32, #tpu.memory_space<vmem>>, %arg3: memref<4x256xf32, #tpu.memory_space<vmem>>, %arg4: memref<1x256x256xf32, #tpu.memory_space<vmem>>) attributes {dimension_semantics = [#tpu.dimension_semantics<parallel>, #tpu.dimension_semantics<parallel>], iteration_bounds = array<i64: 2, 2>, scalar_prefetch = 0 : i64, scratch_operands = 0 : i64, tpu.core_type = #tpu.core_type<tc>, window_params = [{transform_indices = @transform_0, window_bounds = array<i64: 1, 256, 3>}, {pipeline_mode = #tpu.pipeline_mode<synchronous>, transform_indices = @transform_1, window_bounds = array<i64: 4, 256>}, {transform_indices = @transform_2, window_bounds = array<i64: 1, 256, 256>}]} {
    %c0 = arith.constant 0 : index
    %c0_0 = arith.constant 0 : index
    %c0_1 = arith.constant 0 : index
    %0 = vector.load %arg2[%c0, %c0_0, %c0_1] : memref<1x256x3xi32, #tpu.memory_space<vmem>>, vector<1x256x3xi32>
    %1 = vector.shape_cast %0 : vector<1x256x3xi32> to vector<256x3xi32>
    %2 = arith.sitofp %1 : vector<256x3xi32> to vector<256x3xf32>
    %c3 = arith.constant 3 : index
    %c0_2 = arith.constant 0 : index
    %3 = vector.load %arg3[%c3, %c0_2] : memref<4x256xf32, #tpu.memory_space<vmem>>, vector<1x256xf32>
    %4 = vector.extract_strided_slice %2 {offsets = [0, 0], sizes = [256, 1], strides = [1, 1]} : vector<256x3xf32> to vector<256x1xf32>
    %c0_3 = arith.constant 0 : index
    %c0_4 = arith.constant 0 : index
    %5 = vector.load %arg3[%c0_3, %c0_4] : memref<4x256xf32, #tpu.memory_space<vmem>>, vector<1x256xf32>
    %6 = vector.broadcast %4 : vector<256x1xf32> to vector<256x256xf32>
    %7 = vector.broadcast %5 : vector<1x256xf32> to vector<256x256xf32>
    %8 = arith.mulf %6, %7 : vector<256x256xf32>
    %9 = vector.broadcast %3 : vector<1x256xf32> to vector<256x256xf32>
    %10 = arith.addf %9, %8 : vector<256x256xf32>
    %11 = vector.extract_strided_slice %2 {offsets = [0, 1], sizes = [256, 1], strides = [1, 1]} : vector<256x3xf32> to vector<256x1xf32>
    %c1 = arith.constant 1 : index
    %c0_5 = arith.constant 0 : index
    %12 = vector.load %arg3[%c1, %c0_5] : memref<4x256xf32, #tpu.memory_space<vmem>>, vector<1x256xf32>
    %13 = vector.broadcast %11 : vector<256x1xf32> to vector<256x256xf32>
    %14 = vector.broadcast %12 : vector<1x256xf32> to vector<256x256xf32>
    %15 = arith.mulf %13, %14 : vector<256x256xf32>
    %16 = arith.addf %10, %15 : vector<256x256xf32>
    %17 = vector.extract_strided_slice %2 {offsets = [0, 2], sizes = [256, 1], strides = [1, 1]} : vector<256x3xf32> to vector<256x1xf32>
    %c2 = arith.constant 2 : index
    %c0_6 = arith.constant 0 : index
    %18 = vector.load %arg3[%c2, %c0_6] : memref<4x256xf32, #tpu.memory_space<vmem>>, vector<1x256xf32>
    %19 = vector.broadcast %17 : vector<256x1xf32> to vector<256x256xf32>
    %20 = vector.broadcast %18 : vector<1x256xf32> to vector<256x256xf32>
    %21 = arith.mulf %19, %20 : vector<256x256xf32>
    %22 = arith.addf %16, %21 : vector<256x256xf32>
    %23 = math.cos %22 : vector<256x256xf32>
    %c0_7 = arith.constant 0 : index
    %c0_8 = arith.constant 0 : index
    %c0_9 = arith.constant 0 : index
    %24 = vector.load %arg4[%c0_7, %c0_8, %c0_9] : memref<1x256x256xf32, #tpu.memory_space<vmem>>, vector<1x256x256xf32>
    %25 = vector.shape_cast %24 : vector<1x256x256xf32> to vector<256x256xf32>
    %26 = vector.shape_cast %23 : vector<256x256xf32> to vector<1x256x256xf32>
    tpu.vector_store %arg4[%c0_7, %c0_8, %c0_9], %26 {strides = array<i32>} : memref<1x256x256xf32, #tpu.memory_space<vmem>>, vector<1x256x256xf32>,
    return
  }
  func.func @transform_0(%arg0: i32, %arg1: i32) -> (i32, i32, i32) {
    %c0_i32 = arith.constant 0 : i32
    %c0_i32_0 = arith.constant 0 : i32
    return %arg0, %arg1, %c0_i32 : i32, i32, i32
  }
  func.func @transform_1(%arg0: i32, %arg1: i32) -> (i32, i32) {
    %c0_i32 = arith.constant 0 : i32
    %c0_i32_0 = arith.constant 0 : i32
    %c0_i32_1 = arith.constant 0 : i32
    return %c0_i32, %c0_i32_0 : i32, i32
  }
  func.func @transform_2(%arg0: i32, %arg1: i32) -> (i32, i32, i32) {
    %c0_i32 = arith.constant 0 : i32
    %c0_i32_0 = arith.constant 0 : i32
    return %arg0, %arg1, %c0_i32 : i32, i32, i32
  }
}

</mosaic_0001>

<llo_original>
// kernel: tpu_custom_call.1
$region0: #{tpu_custom_call.1}
  #allocation0 [shape = 'u32[]', space=smem, size = 0x4, offset = 0x4, fixed_abs, tag = 'smem constant byte address 0x4 - core index']
  #allocation1 [shape = 'u32[144,128]{1,0:T(1,128)}', space=vmem, size = 0x12000, scoped, tag = 'internal scratch']
  %s0 = inlined_call_operand.vmem [shape: s32[2,512,3], index: 0, kind: input, shape index: {}]
  %s1 = inlined_call_operand.vmem [shape: f32[4,256], index: 1, kind: input, shape index: {}]
  %s2 = inlined_call_operand.hbm [shape: f32[2,512,256], index: 2, kind: output, shape index: {}]
  %s3 = sld [smem:[#allocation0]]
  $region41: #{tpu_custom_call.1} parent=0
    _
  %s5 = ssub.s32 1, %s3
  %s6 = scalar_select 0, %s5, %s3
  $region1: #{tpu_custom_call.1} parent=0
    #allocation2 [shape = 'u8[524288]{0}', space=vmem, size = 0x80000, scoped, tag = 'output window, operand 0']
    #allocation3 [shape = 's32[2]{0}', space=sflag, size = 0x8, scoped, tag = 'scoped memory for tpu_custom_call.1']
    %7 = vsyncpa [#allocation3], 0
    %s8 = scalar_lea.sflag [#allocation3], 1
    %9 = vsyncpa %s8, 0
    loop: start=0, step=1, limit=6
    $region2: #{tpu_custom_call.1} parent=1 // loop_pre_header
      _
    $region3: #{tpu_custom_call.1} parent=1 // loop_header
      %s11 = sphi 0, %s15
      %p12 = scmp.ge.s32.totalorder %s11, 6
      %s18 = sphi 0, %s30
      %s19 = sphi 0, %s26
      %s20 = sphi 0, %s18
      %s21 = sphi 0, %s19
      %s22 = sphi 0, %s20
      %s23 = sphi 0, %s21
      %s35 = sphi 0, %s37
      %s38 = sphi 0, %s35
      %s39 = sphi 0, %s38
      %s55 = sphi 0, %s39
      %s59 = sphi 0, %s59
      %s61 = sphi 0, %s59
      %s62 = sphi 0, %s61
      %s76 = sphi 0, %s62
      %s84 = sphi 0, %s86
      %s87 = sphi 0, %s84
      %s88 = sphi 0, %s87
      %s104 = sphi 0, %s88
    $region4: #{tpu_custom_call.1} parent=1 // loop_header_branch
      %14 = sbr.rel (%p12) target = $region8
    $region5: #{tpu_custom_call.1} parent=1 // loop_body
      %s16 = ssub.s32 %s11, 1
      %s17 = ssub.s32 %s11, 2
      %s24 = sadd.s32 1, %s19
      %p25 = scmp.ge.s32.totalorder %s24, 2
      %s26 = scalar_select %p25, 0, %s24
      %s27 = sadd.s32 1, %s18
      %s28 = scalar_select %p25, %s27, %s18
      %p29 = scmp.ge.s32.totalorder %s28, 2
      %s30 = scalar_select %p29, 0, %s28
      %s31 = ssub.s32 %s18, %s30
      %s32 = ssub.s32 %s19, %s26
      %s33 = sor.u32 %s31, %s32
      %p34 = scmp.eq.s32.totalorder %s33, 0
      %s36 = sadd.s32 %s35, 1
      %s37 = scalar_select %p34, %s35, %s36
      %p40 = pneg %p34
      %p41 = scmp.eq.s32.totalorder %s11, 3
      %p42 = por %p40, %p41
      %p43 = scmp.ne.s32.totalorder %s35, %s38
      %p44 = scmp.eq.s32.totalorder %s11, 0
      %p45 = por %p43, %p44
      %p46 = scmp.ne.s32.totalorder %s35, %s38
      %p47 = scmp.eq.s32.totalorder %s16, 3
      %p48 = por %p46, %p47
      %p49 = scmp.ne.s32.totalorder %s38, %s39
      %p50 = scmp.eq.s32.totalorder %s16, 0
      %p51 = por %p49, %p50
      %p52 = scmp.ne.s32.totalorder %s38, %s39
      %p53 = scmp.eq.s32.totalorder %s17, 3
      %p54 = por %p52, %p53
      %p56 = scmp.ne.s32.totalorder %s39, %s55
      %p57 = scmp.eq.s32.totalorder %s17, 0
      %p58 = por %p56, %p57
      %s60 = sadd.s32 %s59, 1
      %p63 = scmp.eq.s32.totalorder %s11, 3
      %p64 = scmp.ne.s32.totalorder %s59, %s61
      %p65 = scmp.eq.s32.totalorder %s11, 0
      %p66 = por %p64, %p65
      %p67 = scmp.ne.s32.totalorder %s59, %s61
      %p68 = scmp.eq.s32.totalorder %s16, 3
      %p69 = por %p67, %p68
      %p70 = scmp.ne.s32.totalorder %s61, %s62
      %p71 = scmp.eq.s32.totalorder %s16, 0
      %p72 = por %p70, %p71
      %p73 = scmp.ne.s32.totalorder %s61, %s62
      %p74 = scmp.eq.s32.totalorder %s17, 3
      %p75 = por %p73, %p74
      %p77 = scmp.ne.s32.totalorder %s62, %s76
      %p78 = scmp.eq.s32.totalorder %s17, 0
      %p79 = por %p77, %p78
      %s80 = ssub.s32 %s18, %s30
      %s81 = ssub.s32 %s19, %s26
      %s82 = sor.u32 %s80, %s81
      %p83 = scmp.eq.s32.totalorder %s82, 0
      %s85 = sadd.s32 %s84, 1
      %s86 = scalar_select %p83, %s84, %s85
      %p89 = pneg %p83
      %p90 = scmp.eq.s32.totalorder %s11, 3
      %p91 = por %p89, %p90
      %p92 = scmp.ne.s32.totalorder %s84, %s87
      %p93 = scmp.eq.s32.totalorder %s11, 0
      %p94 = por %p92, %p93
      %p95 = scmp.ne.s32.totalorder %s84, %s87
      %p96 = scmp.eq.s32.totalorder %s16, 3
      %p97 = por %p95, %p96
      %p98 = scmp.ne.s32.totalorder %s87, %s88
      %p99 = scmp.eq.s32.totalorder %s16, 0
      %p100 = por %p98, %p99
      %p101 = scmp.ne.s32.totalorder %s87, %s88
      %p102 = scmp.eq.s32.totalorder %s17, 3
      %p103 = por %p101, %p102
      %p105 = scmp.ne.s32.totalorder %s88, %s104
      %p106 = scmp.eq.s32.totalorder %s17, 0
      %p107 = por %p105, %p106
      %p108 = scmp.le.s32.totalorder 1, %s11
      %p109 = scmp.lt.s32.totalorder %s11, 5
      %p110 = pnand %p108, %p109
      %p111 = pneg %p110
      // Predicated region
      $region9: #{tpu_custom_call.1} parent=5 // pred_check
        _
      $region10: #{tpu_custom_call.1} parent=5 // pred_check_branch
        %113 = sbr.rel (%p110) target = $region12
      $region11: #{tpu_custom_call.1} parent=5 // pred_region
        %s114 = ssub.s32 %s11, 1
        // Predicated region
        $region13: #{tpu_custom_call.1} parent=11 // pred_check
          %p115 = pneg %p72
        $region14: #{tpu_custom_call.1} parent=11 // pred_check_branch
          %117 = sbr.rel (%p115) target = $region16
        $region15: #{tpu_custom_call.1} parent=11 // pred_region
          _
        $region16: #{tpu_custom_call.1} parent=11 // pred_fallthru
          _
      $region12: #{tpu_custom_call.1} parent=5 // pred_fallthru
        _
      %p118 = scmp.lt.s32.totalorder %s11, 4
      // Predicated region
      $region17: #{tpu_custom_call.1} parent=5 // pred_check
        %p119 = pneg %p118
      $region18: #{tpu_custom_call.1} parent=5 // pred_check_branch
        %121 = sbr.rel (%p119) target = $region20
      $region19: #{tpu_custom_call.1} parent=5 // pred_region
        // Predicated region
        $region21: #{tpu_custom_call.1} parent=19 // pred_check
          %p122 = pneg %p45
        $region22: #{tpu_custom_call.1} parent=19 // pred_check_branch
          %124 = sbr.rel (%p122) target = $region24
        $region23: #{tpu_custom_call.1} parent=19 // pred_region
          %s125 = smul.u32 32, %s19
          %p126 = scmp.lt.s32.totalorder %s18, 1
          %s127 = scalar_select %p126, %s18, 1
          %p128 = scmp.lt.s32.totalorder %s125, 63
          %s129 = scalar_select %p128, %s125, 63
          %s130 = smul.addr %s127, 64
          %s131 = sadd.s32 %s129, %s130
          %s132 = smul.addr %s131, 8
          %s133 = scalar_lea.vmem %s0, %s132
          %s134 = smul.u32 32, %s19
        $region24: #{tpu_custom_call.1} parent=19 // pred_fallthru
          _
      $region20: #{tpu_custom_call.1} parent=5 // pred_fallthru
        _
      %p135 = scmp.le.s32.totalorder 1, %s11
      %p136 = scmp.lt.s32.totalorder %s11, 5
      %p137 = pnand %p135, %p136
      %p138 = pneg %p137
      // Predicated region
      $region25: #{tpu_custom_call.1} parent=5 // pred_check
        _
      $region26: #{tpu_custom_call.1} parent=5 // pred_check_branch
        %140 = sbr.rel (%p137) target = $region28
      $region27: #{tpu_custom_call.1} parent=5 // pred_region
        %s141 = ssub.s32 %s11, 1
        %s142 = smul.u32 32, %s21
        %p143 = scmp.lt.s32.totalorder %s20, 1
        %s144 = scalar_select %p143, %s20, 1
        %p145 = scmp.lt.s32.totalorder %s142, 63
        %s146 = scalar_select %p145, %s142, 63
        %s147 = smul.addr %s144, 64
        %s148 = sadd.s32 %s146, %s147
        %s149 = smul.addr %s148, 8
        %s150 = scalar_lea.vmem %s0, %s149
        %p151 = pneg %p51
        %p152 = pneg %p48
        %p153 = pneg %p72
        %p154 = pneg %p69
        %p155 = pneg %p100
        %p156 = pneg %p97
        %s157 = sand.u32 %s87, 1
        %s158 = scalar_lea.sflag [#allocation3], %s157
        %s159 = sand.u32 %s87, 1
        %s160 = smul.addr %s159, 512
        %s161 = scalar_lea.vmem [#allocation2], %s160
        %s162 = smul.u32 32, %s21
        %p163 = scmp.lt.s32.totalorder %s20, 1
        %s164 = scalar_select %p163, %s20, 1
        %p165 = scmp.lt.s32.totalorder %s162, 63
        %s166 = scalar_select %p165, %s162, 63
        %s167 = smul.addr %s164, 64
        %s168 = sadd.s32 %s166, %s167
        %s169 = smul.addr %s168, 8
        %s170 = scalar_lea.vmem %s0, %s169
        %s171 = smul.u32 32, %s21
        %s172 = smul.u32 32, %s21
        %v173 = vld [vmem:[%s170] sm:$0xff]
        %v174 = vld [vmem:[%s170 + $0x8] sm:$0xff]
        %v175 = vld [vmem:[%s170 + $0x10] sm:$0xff]
        %v176 = vld [vmem:[%s170 + $0x18] sm:$0xff]
        %v177 = vld [vmem:[%s170 + $0x20] sm:$0xff]
        %v178 = vld [vmem:[%s170 + $0x28] sm:$0xff]
        %v179 = vld [vmem:[%s170 + $0x30] sm:$0xff]
        %v180 = vld [vmem:[%s170 + $0x38] sm:$0xff]
        %v181 = vld [vmem:[%s170 + $0x40] sm:$0xff]
        %v182 = vld [vmem:[%s170 + $0x48] sm:$0xff]
        %v183 = vld [vmem:[%s170 + $0x50] sm:$0xff]
        %v184 = vld [vmem:[%s170 + $0x58] sm:$0xff]
        %v185 = vld [vmem:[%s170 + $0x60] sm:$0xff]
        %v186 = vld [vmem:[%s170 + $0x68] sm:$0xff]
        %v187 = vld [vmem:[%s170 + $0x70] sm:$0xff]
        %v188 = vld [vmem:[%s170 + $0x78] sm:$0xff]
        %v189 = vld [vmem:[%s170 + $0x80] sm:$0xff]
        %v190 = vld [vmem:[%s170 + $0x88] sm:$0xff]
        %v191 = vld [vmem:[%s170 + $0x90] sm:$0xff]
        %v192 = vld [vmem:[%s170 + $0x98] sm:$0xff]
        %v193 = vld [vmem:[%s170 + $0xa0] sm:$0xff]
        %v194 = vld [vmem:[%s170 + $0xa8] sm:$0xff]
        %v195 = vld [vmem:[%s170 + $0xb0] sm:$0xff]
        %v196 = vld [vmem:[%s170 + $0xb8] sm:$0xff]
        %v197 = vld [vmem:[%s170 + $0xc0] sm:$0xff]
        %v198 = vld [vmem:[%s170 + $0xc8] sm:$0xff]
        %v199 = vld [vmem:[%s170 + $0xd0] sm:$0xff]
        %v200 = vld [vmem:[%s170 + $0xd8] sm:$0xff]
        %v201 = vld [vmem:[%s170 + $0xe0] sm:$0xff]
        %v202 = vld [vmem:[%s170 + $0xe8] sm:$0xff]
        %v203 = vld [vmem:[%s170 + $0xf0] sm:$0xff]
        %v204 = vld [vmem:[%s170 + $0xf8] sm:$0xff]
        %v205 = vcvt.s32.f32 %v173
        %v206 = vcvt.s32.f32 %v174
        %v207 = vcvt.s32.f32 %v175
        %v208 = vcvt.s32.f32 %v176
        %v209 = vcvt.s32.f32 %v177
        %v210 = vcvt.s32.f32 %v178
        %v211 = vcvt.s32.f32 %v179
        %v212 = vcvt.s32.f32 %v180
        %v213 = vcvt.s32.f32 %v181
        %v214 = vcvt.s32.f32 %v182
        %v215 = vcvt.s32.f32 %v183
        %v216 = vcvt.s32.f32 %v184
        %v217 = vcvt.s32.f32 %v185
        %v218 = vcvt.s32.f32 %v186
        %v219 = vcvt.s32.f32 %v187
        %v220 = vcvt.s32.f32 %v188
        %v221 = vcvt.s32.f32 %v189
        %v222 = vcvt.s32.f32 %v190
        %v223 = vcvt.s32.f32 %v191
        %v224 = vcvt.s32.f32 %v192
        %v225 = vcvt.s32.f32 %v193
        %v226 = vcvt.s32.f32 %v194
        %v227 = vcvt.s32.f32 %v195
        %v228 = vcvt.s32.f32 %v196
        %v229 = vcvt.s32.f32 %v197
        %v230 = vcvt.s32.f32 %v198
        %v231 = vcvt.s32.f32 %v199
        %v232 = vcvt.s32.f32 %v200
        %v233 = vcvt.s32.f32 %v201
        %v234 = vcvt.s32.f32 %v202
        %v235 = vcvt.s32.f32 %v203
        %v236 = vcvt.s32.f32 %v204
        %s237 = scalar_lea.vmem %s1, 3
        %v238 = vld [vmem:[%s237] ss:$4 sm:$0x3]
        %v239 = vld [vmem:[%s1] ss:$4 sm:$0x3]
        %241 = vset.pattern.permute.xlu0 0
        %242 = vperm.xlu0 %241, %v205
        %v243 = vpop.permute.xlu0 %242
        %246 = vset.pattern.permute.xlu0 0
        %247 = vperm.xlu0 %246, %v206
        %v248 = vpop.permute.xlu0 %247
        %251 = vset.pattern.permute.xlu0 0
        %252 = vperm.xlu0 %251, %v207
        %v253 = vpop.permute.xlu0 %252
        %256 = vset.pattern.permute.xlu0 0
        %257 = vperm.xlu0 %256, %v208
        %v258 = vpop.permute.xlu0 %257
        %261 = vset.pattern.permute.xlu0 0
        %262 = vperm.xlu0 %261, %v209
        %v263 = vpop.permute.xlu0 %262
        %266 = vset.pattern.permute.xlu0 0
        %267 = vperm.xlu0 %266, %v210
        %v268 = vpop.permute.xlu0 %267
        %271 = vset.pattern.permute.xlu0 0
        %272 = vperm.xlu0 %271, %v211
        %v273 = vpop.permute.xlu0 %272
        %276 = vset.pattern.permute.xlu0 0
        %277 = vperm.xlu0 %276, %v212
        %v278 = vpop.permute.xlu0 %277
        %281 = vset.pattern.permute.xlu0 0
        %282 = vperm.xlu0 %281, %v213
        %v283 = vpop.permute.xlu0 %282
        %286 = vset.pattern.permute.xlu0 0
        %287 = vperm.xlu0 %286, %v214
        %v288 = vpop.permute.xlu0 %287
        %291 = vset.pattern.permute.xlu0 0
        %292 = vperm.xlu0 %291, %v215
        %v293 = vpop.permute.xlu0 %292
        %296 = vset.pattern.permute.xlu0 0
        %297 = vperm.xlu0 %296, %v216
        %v298 = vpop.permute.xlu0 %297
        %301 = vset.pattern.permute.xlu0 0
        %302 = vperm.xlu0 %301, %v217
        %v303 = vpop.permute.xlu0 %302
        %306 = vset.pattern.permute.xlu0 0
        %307 = vperm.xlu0 %306, %v218
        %v308 = vpop.permute.xlu0 %307
        %311 = vset.pattern.permute.xlu0 0
        %312 = vperm.xlu0 %311, %v219
        %v313 = vpop.permute.xlu0 %312
        %316 = vset.pattern.permute.xlu0 0
        %317 = vperm.xlu0 %316, %v220
        %v318 = vpop.permute.xlu0 %317
        %321 = vset.pattern.permute.xlu0 0
        %322 = vperm.xlu0 %321, %v221
        %v323 = vpop.permute.xlu0 %322
        %326 = vset.pattern.permute.xlu0 0
        %327 = vperm.xlu0 %326, %v222
        %v328 = vpop.permute.xlu0 %327
        %331 = vset.pattern.permute.xlu0 0
        %332 = vperm.xlu0 %331, %v223
        %v333 = vpop.permute.xlu0 %332
        %336 = vset.pattern.permute.xlu0 0
        %337 = vperm.xlu0 %336, %v224
        %v338 = vpop.permute.xlu0 %337
        %341 = vset.pattern.permute.xlu0 0
        %342 = vperm.xlu0 %341, %v225
        %v343 = vpop.permute.xlu0 %342
        %346 = vset.pattern.permute.xlu0 0
        %347 = vperm.xlu0 %346, %v226
        %v348 = vpop.permute.xlu0 %347
        %351 = vset.pattern.permute.xlu0 0
        %352 = vperm.xlu0 %351, %v227
        %v353 = vpop.permute.xlu0 %352
        %356 = vset.pattern.permute.xlu0 0
        %357 = vperm.xlu0 %356, %v228
        %v358 = vpop.permute.xlu0 %357
        %361 = vset.pattern.permute.xlu0 0
        %362 = vperm.xlu0 %361, %v229
        %v363 = vpop.permute.xlu0 %362
        %366 = vset.pattern.permute.xlu0 0
        %367 = vperm.xlu0 %366, %v230
        %v368 = vpop.permute.xlu0 %367
        %371 = vset.pattern.permute.xlu0 0
        %372 = vperm.xlu0 %371, %v231
        %v373 = vpop.permute.xlu0 %372
        %376 = vset.pattern.permute.xlu0 0
        %377 = vperm.xlu0 %376, %v232
        %v378 = vpop.permute.xlu0 %377
        %381 = vset.pattern.permute.xlu0 0
        %382 = vperm.xlu0 %381, %v233
        %v383 = vpop.permute.xlu0 %382
        %386 = vset.pattern.permute.xlu0 0
        %387 = vperm.xlu0 %386, %v234
        %v388 = vpop.permute.xlu0 %387
        %391 = vset.pattern.permute.xlu0 0
        %392 = vperm.xlu0 %391, %v235
        %v393 = vpop.permute.xlu0 %392
        %396 = vset.pattern.permute.xlu0 0
        %397 = vperm.xlu0 %396, %v236
        %v398 = vpop.permute.xlu0 %397
        %v401 = vlaneseq
        %v402 = vshrl.u32 %v401, 7
        %v403 = vsub.s32 0, %v402
        %v404 = vrot.slane %v239, %v403
        %v405 = vlaneseq
        %v406 = vshrl.u32 %v405, 7
        %v407 = vsub.s32 1, %v406
        %v408 = vrot.slane %v239, %v407
        %v411 = vmul.f32 %v243, %v404
        %v412 = vmul.f32 %v243, %v408
        %v413 = vmul.f32 %v248, %v404
        %v414 = vmul.f32 %v248, %v408
        %v415 = vmul.f32 %v253, %v404
        %v416 = vmul.f32 %v253, %v408
        %v417 = vmul.f32 %v258, %v404
        %v418 = vmul.f32 %v258, %v408
        %v419 = vmul.f32 %v263, %v404
        %v420 = vmul.f32 %v263, %v408
        %v421 = vmul.f32 %v268, %v404
        %v422 = vmul.f32 %v268, %v408
        %v423 = vmul.f32 %v273, %v404
        %v424 = vmul.f32 %v273, %v408
        %v425 = vmul.f32 %v278, %v404
        %v426 = vmul.f32 %v278, %v408
        %v427 = vmul.f32 %v283, %v404
        %v428 = vmul.f32 %v283, %v408
        %v429 = vmul.f32 %v288, %v404
        %v430 = vmul.f32 %v288, %v408
        %v431 = vmul.f32 %v293, %v404
        %v432 = vmul.f32 %v293, %v408
        %v433 = vmul.f32 %v298, %v404
        %v434 = vmul.f32 %v298, %v408
        %v435 = vmul.f32 %v303, %v404
        %v436 = vmul.f32 %v303, %v408
        %v437 = vmul.f32 %v308, %v404
        %v438 = vmul.f32 %v308, %v408
        %v439 = vmul.f32 %v313, %v404
        %v440 = vmul.f32 %v313, %v408
        %v441 = vmul.f32 %v318, %v404
        %v442 = vmul.f32 %v318, %v408
        %v443 = vmul.f32 %v323, %v404
        %v444 = vmul.f32 %v323, %v408
        %v445 = vmul.f32 %v328, %v404
        %v446 = vmul.f32 %v328, %v408
        %v447 = vmul.f32 %v333, %v404
        %v448 = vmul.f32 %v333, %v408
        %v449 = vmul.f32 %v338, %v404
        %v450 = vmul.f32 %v338, %v408
        %v451 = vmul.f32 %v343, %v404
        %v452 = vmul.f32 %v343, %v408
        %v453 = vmul.f32 %v348, %v404
        %v454 = vmul.f32 %v348, %v408
        %v455 = vmul.f32 %v353, %v404
        %v456 = vmul.f32 %v353, %v408
        %v457 = vmul.f32 %v358, %v404
        %v458 = vmul.f32 %v358, %v408
        %v459 = vmul.f32 %v363, %v404
        %v460 = vmul.f32 %v363, %v408
        %v461 = vmul.f32 %v368, %v404
        %v462 = vmul.f32 %v368, %v408
        %v463 = vmul.f32 %v373, %v404
        %v464 = vmul.f32 %v373, %v408
        %v465 = vmul.f32 %v378, %v404
        %v466 = vmul.f32 %v378, %v408
        %v467 = vmul.f32 %v383, %v404
        %v468 = vmul.f32 %v383, %v408
        %v469 = vmul.f32 %v388, %v404
        %v470 = vmul.f32 %v388, %v408
        %v471 = vmul.f32 %v393, %v404
        %v472 = vmul.f32 %v393, %v408
        %v473 = vmul.f32 %v398, %v404
        %v474 = vmul.f32 %v398, %v408
        %v476 = vlaneseq
        %v477 = vshrl.u32 %v476, 7
        %v478 = vsub.s32 0, %v477
        %v479 = vrot.slane %v238, %v478
        %v480 = vlaneseq
        %v481 = vshrl.u32 %v480, 7
        %v482 = vsub.s32 1, %v481
        %v483 = vrot.slane %v238, %v482
        %v486 = vadd.f32 %v479, %v411
        %v487 = vadd.f32 %v483, %v412
        %v488 = vadd.f32 %v479, %v413
        %v489 = vadd.f32 %v483, %v414
        %v490 = vadd.f32 %v479, %v415
        %v491 = vadd.f32 %v483, %v416
        %v492 = vadd.f32 %v479, %v417
        %v493 = vadd.f32 %v483, %v418
        %v494 = vadd.f32 %v479, %v419
        %v495 = vadd.f32 %v483, %v420
        %v496 = vadd.f32 %v479, %v421
        %v497 = vadd.f32 %v483, %v422
        %v498 = vadd.f32 %v479, %v423
        %v499 = vadd.f32 %v483, %v424
        %v500 = vadd.f32 %v479, %v425
        %v501 = vadd.f32 %v483, %v426
        %v502 = vadd.f32 %v479, %v427
        %v503 = vadd.f32 %v483, %v428
        %v504 = vadd.f32 %v479, %v429
        %v505 = vadd.f32 %v483, %v430
        %v506 = vadd.f32 %v479, %v431
        %v507 = vadd.f32 %v483, %v432
        %v508 = vadd.f32 %v479, %v433
        %v509 = vadd.f32 %v483, %v434
        %v510 = vadd.f32 %v479, %v435
        %v511 = vadd.f32 %v483, %v436
        %v512 = vadd.f32 %v479, %v437
        %v513 = vadd.f32 %v483, %v438
        %v514 = vadd.f32 %v479, %v439
        %v515 = vadd.f32 %v483, %v440
        %v516 = vadd.f32 %v479, %v441
        %v517 = vadd.f32 %v483, %v442
        %v518 = vadd.f32 %v479, %v443
        %v519 = vadd.f32 %v483, %v444
        %v520 = vadd.f32 %v479, %v445
        %v521 = vadd.f32 %v483, %v446
        %v522 = vadd.f32 %v479, %v447
        %v523 = vadd.f32 %v483, %v448
        %v524 = vadd.f32 %v479, %v449
        %v525 = vadd.f32 %v483, %v450
        %v526 = vadd.f32 %v479, %v451
        %v527 = vadd.f32 %v483, %v452
        %v528 = vadd.f32 %v479, %v453
        %v529 = vadd.f32 %v483, %v454
        %v530 = vadd.f32 %v479, %v455
        %v531 = vadd.f32 %v483, %v456
        %v532 = vadd.f32 %v479, %v457
        %v533 = vadd.f32 %v483, %v458
        %v534 = vadd.f32 %v479, %v459
        %v535 = vadd.f32 %v483, %v460
        %v536 = vadd.f32 %v479, %v461
        %v537 = vadd.f32 %v483, %v462
        %v538 = vadd.f32 %v479, %v463
        %v539 = vadd.f32 %v483, %v464
        %v540 = vadd.f32 %v479, %v465
        %v541 = vadd.f32 %v483, %v466
        %v542 = vadd.f32 %v479, %v467
        %v543 = vadd.f32 %v483, %v468
        %v544 = vadd.f32 %v479, %v469
        %v545 = vadd.f32 %v483, %v470
        %v546 = vadd.f32 %v479, %v471
        %v547 = vadd.f32 %v483, %v472
        %v548 = vadd.f32 %v479, %v473
        %v549 = vadd.f32 %v483, %v474
        %s550 = scalar_lea.vmem %s1, 1
        %v551 = vld [vmem:[%s550] ss:$4 sm:$0x3]
        %552 = vset.pattern.permute.xlu0 1
        %553 = vperm.xlu0 %552, %v205
        %v554 = vpop.permute.xlu0 %553
        %556 = vset.pattern.permute.xlu0 1
        %557 = vperm.xlu0 %556, %v206
        %v558 = vpop.permute.xlu0 %557
        %560 = vset.pattern.permute.xlu0 1
        %561 = vperm.xlu0 %560, %v207
        %v562 = vpop.permute.xlu0 %561
        %564 = vset.pattern.permute.xlu0 1
        %565 = vperm.xlu0 %564, %v208
        %v566 = vpop.permute.xlu0 %565
        %568 = vset.pattern.permute.xlu0 1
        %569 = vperm.xlu0 %568, %v209
        %v570 = vpop.permute.xlu0 %569
        %572 = vset.pattern.permute.xlu0 1
        %573 = vperm.xlu0 %572, %v210
        %v574 = vpop.permute.xlu0 %573
        %576 = vset.pattern.permute.xlu0 1
        %577 = vperm.xlu0 %576, %v211
        %v578 = vpop.permute.xlu0 %577
        %580 = vset.pattern.permute.xlu0 1
        %581 = vperm.xlu0 %580, %v212
        %v582 = vpop.permute.xlu0 %581
        %584 = vset.pattern.permute.xlu0 1
        %585 = vperm.xlu0 %584, %v213
        %v586 = vpop.permute.xlu0 %585
        %588 = vset.pattern.permute.xlu0 1
        %589 = vperm.xlu0 %588, %v214
        %v590 = vpop.permute.xlu0 %589
        %592 = vset.pattern.permute.xlu0 1
        %593 = vperm.xlu0 %592, %v215
        %v594 = vpop.permute.xlu0 %593
        %596 = vset.pattern.permute.xlu0 1
        %597 = vperm.xlu0 %596, %v216
        %v598 = vpop.permute.xlu0 %597
        %600 = vset.pattern.permute.xlu0 1
        %601 = vperm.xlu0 %600, %v217
        %v602 = vpop.permute.xlu0 %601
        %604 = vset.pattern.permute.xlu0 1
        %605 = vperm.xlu0 %604, %v218
        %v606 = vpop.permute.xlu0 %605
        %608 = vset.pattern.permute.xlu0 1
        %609 = vperm.xlu0 %608, %v219
        %v610 = vpop.permute.xlu0 %609
        %612 = vset.pattern.permute.xlu0 1
        %613 = vperm.xlu0 %612, %v220
        %v614 = vpop.permute.xlu0 %613
        %616 = vset.pattern.permute.xlu0 1
        %617 = vperm.xlu0 %616, %v221
        %v618 = vpop.permute.xlu0 %617
        %620 = vset.pattern.permute.xlu0 1
        %621 = vperm.xlu0 %620, %v222
        %v622 = vpop.permute.xlu0 %621
        %624 = vset.pattern.permute.xlu0 1
        %625 = vperm.xlu0 %624, %v223
        %v626 = vpop.permute.xlu0 %625
        %628 = vset.pattern.permute.xlu0 1
        %629 = vperm.xlu0 %628, %v224
        %v630 = vpop.permute.xlu0 %629
        %632 = vset.pattern.permute.xlu0 1
        %633 = vperm.xlu0 %632, %v225
        %v634 = vpop.permute.xlu0 %633
        %636 = vset.pattern.permute.xlu0 1
        %637 = vperm.xlu0 %636, %v226
        %v638 = vpop.permute.xlu0 %637
        %640 = vset.pattern.permute.xlu0 1
        %641 = vperm.xlu0 %640, %v227
        %v642 = vpop.permute.xlu0 %641
        %644 = vset.pattern.permute.xlu0 1
        %645 = vperm.xlu0 %644, %v228
        %v646 = vpop.permute.xlu0 %645
        %648 = vset.pattern.permute.xlu0 1
        %649 = vperm.xlu0 %648, %v229
        %v650 = vpop.permute.xlu0 %649
        %652 = vset.pattern.permute.xlu0 1
        %653 = vperm.xlu0 %652, %v230
        %v654 = vpop.permute.xlu0 %653
        %656 = vset.pattern.permute.xlu0 1
        %657 = vperm.xlu0 %656, %v231
        %v658 = vpop.permute.xlu0 %657
        %660 = vset.pattern.permute.xlu0 1
        %661 = vperm.xlu0 %660, %v232
        %v662 = vpop.permute.xlu0 %661
        %664 = vset.pattern.permute.xlu0 1
        %665 = vperm.xlu0 %664, %v233
        %v666 = vpop.permute.xlu0 %665
        %668 = vset.pattern.permute.xlu0 1
        %669 = vperm.xlu0 %668, %v234
        %v670 = vpop.permute.xlu0 %669
        %672 = vset.pattern.permute.xlu0 1
        %673 = vperm.xlu0 %672, %v235
        %v674 = vpop.permute.xlu0 %673
        %676 = vset.pattern.permute.xlu0 1
        %677 = vperm.xlu0 %676, %v236
        %v678 = vpop.permute.xlu0 %677
        %v681 = vlaneseq
        %v682 = vshrl.u32 %v681, 7
        %v683 = vsub.s32 0, %v682
        %v684 = vrot.slane %v551, %v683
        %v685 = vlaneseq
        %v686 = vshrl.u32 %v685, 7
        %v687 = vsub.s32 1, %v686
        %v688 = vrot.slane %v551, %v687
        %v691 = vmul.f32 %v554, %v684
        %v692 = vmul.f32 %v554, %v688
        %v693 = vmul.f32 %v558, %v684
        %v694 = vmul.f32 %v558, %v688
        %v695 = vmul.f32 %v562, %v684
        %v696 = vmul.f32 %v562, %v688
        %v697 = vmul.f32 %v566, %v684
        %v698 = vmul.f32 %v566, %v688
        %v699 = vmul.f32 %v570, %v684
        %v700 = vmul.f32 %v570, %v688
        %v701 = vmul.f32 %v574, %v684
        %v702 = vmul.f32 %v574, %v688
        %v703 = vmul.f32 %v578, %v684
        %v704 = vmul.f32 %v578, %v688
        %v705 = vmul.f32 %v582, %v684
        %v706 = vmul.f32 %v582, %v688
        %v707 = vmul.f32 %v586, %v684
        %v708 = vmul.f32 %v586, %v688
        %v709 = vmul.f32 %v590, %v684
        %v710 = vmul.f32 %v590, %v688
        %v711 = vmul.f32 %v594, %v684
        %v712 = vmul.f32 %v594, %v688
        %v713 = vmul.f32 %v598, %v684
        %v714 = vmul.f32 %v598, %v688
        %v715 = vmul.f32 %v602, %v684
        %v716 = vmul.f32 %v602, %v688
        %v717 = vmul.f32 %v606, %v684
        %v718 = vmul.f32 %v606, %v688
        %v719 = vmul.f32 %v610, %v684
        %v720 = vmul.f32 %v610, %v688
        %v721 = vmul.f32 %v614, %v684
        %v722 = vmul.f32 %v614, %v688
        %v723 = vmul.f32 %v618, %v684
        %v724 = vmul.f32 %v618, %v688
        %v725 = vmul.f32 %v622, %v684
        %v726 = vmul.f32 %v622, %v688
        %v727 = vmul.f32 %v626, %v684
        %v728 = vmul.f32 %v626, %v688
        %v729 = vmul.f32 %v630, %v684
        %v730 = vmul.f32 %v630, %v688
        %v731 = vmul.f32 %v634, %v684
        %v732 = vmul.f32 %v634, %v688
        %v733 = vmul.f32 %v638, %v684
        %v734 = vmul.f32 %v638, %v688
        %v735 = vmul.f32 %v642, %v684
        %v736 = vmul.f32 %v642, %v688
        %v737 = vmul.f32 %v646, %v684
        %v738 = vmul.f32 %v646, %v688
        %v739 = vmul.f32 %v650, %v684
        %v740 = vmul.f32 %v650, %v688
        %v741 = vmul.f32 %v654, %v684
        %v742 = vmul.f32 %v654, %v688
        %v743 = vmul.f32 %v658, %v684
        %v744 = vmul.f32 %v658, %v688
        %v745 = vmul.f32 %v662, %v684
        %v746 = vmul.f32 %v662, %v688
        %v747 = vmul.f32 %v666, %v684
        %v748 = vmul.f32 %v666, %v688
        %v749 = vmul.f32 %v670, %v684
        %v750 = vmul.f32 %v670, %v688
        %v751 = vmul.f32 %v674, %v684
        %v752 = vmul.f32 %v674, %v688
        %v753 = vmul.f32 %v678, %v684
        %v754 = vmul.f32 %v678, %v688
        %v755 = vadd.f32 %v486, %v691
        %v756 = vadd.f32 %v487, %v692
        %v757 = vadd.f32 %v488, %v693
        %v758 = vadd.f32 %v489, %v694
        %v759 = vadd.f32 %v490, %v695
        %v760 = vadd.f32 %v491, %v696
        %v761 = vadd.f32 %v492, %v697
        %v762 = vadd.f32 %v493, %v698
        %v763 = vadd.f32 %v494, %v699
        %v764 = vadd.f32 %v495, %v700
        %v765 = vadd.f32 %v496, %v701
        %v766 = vadd.f32 %v497, %v702
        %v767 = vadd.f32 %v498, %v703
        %v768 = vadd.f32 %v499, %v704
        %v769 = vadd.f32 %v500, %v705
        %v770 = vadd.f32 %v501, %v706
        %v771 = vadd.f32 %v502, %v707
        %v772 = vadd.f32 %v503, %v708
        %v773 = vadd.f32 %v504, %v709
        %v774 = vadd.f32 %v505, %v710
        %v775 = vadd.f32 %v506, %v711
        %v776 = vadd.f32 %v507, %v712
        %v777 = vadd.f32 %v508, %v713
        %v778 = vadd.f32 %v509, %v714
        %v779 = vadd.f32 %v510, %v715
        %v780 = vadd.f32 %v511, %v716
        %v781 = vadd.f32 %v512, %v717
        %v782 = vadd.f32 %v513, %v718
        %v783 = vadd.f32 %v514, %v719
        %v784 = vadd.f32 %v515, %v720
        %v785 = vadd.f32 %v516, %v721
        %v786 = vadd.f32 %v517, %v722
        %v787 = vadd.f32 %v518, %v723
        %v788 = vadd.f32 %v519, %v724
        %v789 = vadd.f32 %v520, %v725
        %v790 = vadd.f32 %v521, %v726
        %v791 = vadd.f32 %v522, %v727
        %v792 = vadd.f32 %v523, %v728
        %v793 = vadd.f32 %v524, %v729
        %v794 = vadd.f32 %v525, %v730
        %v795 = vadd.f32 %v526, %v731
        %v796 = vadd.f32 %v527, %v732
        %v797 = vadd.f32 %v528, %v733
        %v798 = vadd.f32 %v529, %v734
        %v799 = vadd.f32 %v530, %v735
        %v800 = vadd.f32 %v531, %v736
        %v801 = vadd.f32 %v532, %v737
        %v802 = vadd.f32 %v533, %v738
        %v803 = vadd.f32 %v534, %v739
        %v804 = vadd.f32 %v535, %v740
        %v805 = vadd.f32 %v536, %v741
        %v806 = vadd.f32 %v537, %v742
        %v807 = vadd.f32 %v538, %v743
        %v808 = vadd.f32 %v539, %v744
        %v809 = vadd.f32 %v540, %v745
        %v810 = vadd.f32 %v541, %v746
        %v811 = vadd.f32 %v542, %v747
        %v812 = vadd.f32 %v543, %v748
        %v813 = vadd.f32 %v544, %v749
        %v814 = vadd.f32 %v545, %v750
        %v815 = vadd.f32 %v546, %v751
        %v816 = vadd.f32 %v547, %v752
        %v817 = vadd.f32 %v548, %v753
        %v818 = vadd.f32 %v549, %v754
        %s819 = scalar_lea.vmem %s1, 2
        %v820 = vld [vmem:[%s819] ss:$4 sm:$0x3]
        %821 = vset.pattern.permute.xlu0 2
        %822 = vperm.xlu0 %821, %v205
        %v823 = vpop.permute.xlu0 %822
        %825 = vset.pattern.permute.xlu0 2
        %826 = vperm.xlu0 %825, %v206
        %v827 = vpop.permute.xlu0 %826
        %829 = vset.pattern.permute.xlu0 2
        %830 = vperm.xlu0 %829, %v207
        %v831 = vpop.permute.xlu0 %830
        %833 = vset.pattern.permute.xlu0 2
        %834 = vperm.xlu0 %833, %v208
        %v835 = vpop.permute.xlu0 %834
        %837 = vset.pattern.permute.xlu0 2
        %838 = vperm.xlu0 %837, %v209
        %v839 = vpop.permute.xlu0 %838
        %841 = vset.pattern.permute.xlu0 2
        %842 = vperm.xlu0 %841, %v210
        %v843 = vpop.permute.xlu0 %842
        %845 = vset.pattern.permute.xlu0 2
        %846 = vperm.xlu0 %845, %v211
        %v847 = vpop.permute.xlu0 %846
        %849 = vset.pattern.permute.xlu0 2
        %850 = vperm.xlu0 %849, %v212
        %v851 = vpop.permute.xlu0 %850
        %853 = vset.pattern.permute.xlu0 2
        %854 = vperm.xlu0 %853, %v213
        %v855 = vpop.permute.xlu0 %854
        %857 = vset.pattern.permute.xlu0 2
        %858 = vperm.xlu0 %857, %v214
        %v859 = vpop.permute.xlu0 %858
        %861 = vset.pattern.permute.xlu0 2
        %862 = vperm.xlu0 %861, %v215
        %v863 = vpop.permute.xlu0 %862
        %865 = vset.pattern.permute.xlu0 2
        %866 = vperm.xlu0 %865, %v216
        %v867 = vpop.permute.xlu0 %866
        %869 = vset.pattern.permute.xlu0 2
        %870 = vperm.xlu0 %869, %v217
        %v871 = vpop.permute.xlu0 %870
        %873 = vset.pattern.permute.xlu0 2
        %874 = vperm.xlu0 %873, %v218
        %v875 = vpop.permute.xlu0 %874
        %877 = vset.pattern.permute.xlu0 2
        %878 = vperm.xlu0 %877, %v219
        %v879 = vpop.permute.xlu0 %878
        %881 = vset.pattern.permute.xlu0 2
        %882 = vperm.xlu0 %881, %v220
        %v883 = vpop.permute.xlu0 %882
        %885 = vset.pattern.permute.xlu0 2
        %886 = vperm.xlu0 %885, %v221
        %v887 = vpop.permute.xlu0 %886
        %889 = vset.pattern.permute.xlu0 2
        %890 = vperm.xlu0 %889, %v222
        %v891 = vpop.permute.xlu0 %890
        %893 = vset.pattern.permute.xlu0 2
        %894 = vperm.xlu0 %893, %v223
        %v895 = vpop.permute.xlu0 %894
        %897 = vset.pattern.permute.xlu0 2
        %898 = vperm.xlu0 %897, %v224
        %v899 = vpop.permute.xlu0 %898
        %901 = vset.pattern.permute.xlu0 2
        %902 = vperm.xlu0 %901, %v225
        %v903 = vpop.permute.xlu0 %902
        %905 = vset.pattern.permute.xlu0 2
        %906 = vperm.xlu0 %905, %v226
        %v907 = vpop.permute.xlu0 %906
        %909 = vset.pattern.permute.xlu0 2
        %910 = vperm.xlu0 %909, %v227
        %v911 = vpop.permute.xlu0 %910
        %913 = vset.pattern.permute.xlu0 2
        %914 = vperm.xlu0 %913, %v228
        %v915 = vpop.permute.xlu0 %914
        %917 = vset.pattern.permute.xlu0 2
        %918 = vperm.xlu0 %917, %v229
        %v919 = vpop.permute.xlu0 %918
        %921 = vset.pattern.permute.xlu0 2
        %922 = vperm.xlu0 %921, %v230
        %v923 = vpop.permute.xlu0 %922
        %925 = vset.pattern.permute.xlu0 2
        %926 = vperm.xlu0 %925, %v231
        %v927 = vpop.permute.xlu0 %926
        %929 = vset.pattern.permute.xlu0 2
        %930 = vperm.xlu0 %929, %v232
        %v931 = vpop.permute.xlu0 %930
        %933 = vset.pattern.permute.xlu0 2
        %934 = vperm.xlu0 %933, %v233
        %v935 = vpop.permute.xlu0 %934
        %937 = vset.pattern.permute.xlu0 2
        %938 = vperm.xlu0 %937, %v234
        %v939 = vpop.permute.xlu0 %938
        %941 = vset.pattern.permute.xlu0 2
        %942 = vperm.xlu0 %941, %v235
        %v943 = vpop.permute.xlu0 %942
        %945 = vset.pattern.permute.xlu0 2
        %946 = vperm.xlu0 %945, %v236
        %v947 = vpop.permute.xlu0 %946
        %v950 = vlaneseq
        %v951 = vshrl.u32 %v950, 7
        %v952 = vsub.s32 0, %v951
        %v953 = vrot.slane %v820, %v952
        %v954 = vlaneseq
        %v955 = vshrl.u32 %v954, 7
        %v956 = vsub.s32 1, %v955
        %v957 = vrot.slane %v820, %v956
        %v960 = vmul.f32 %v823, %v953
        %v961 = vmul.f32 %v823, %v957
        %v962 = vmul.f32 %v827, %v953
        %v963 = vmul.f32 %v827, %v957
        %v964 = vmul.f32 %v831, %v953
        %v965 = vmul.f32 %v831, %v957
        %v966 = vmul.f32 %v835, %v953
        %v967 = vmul.f32 %v835, %v957
        %v968 = vmul.f32 %v839, %v953
        %v969 = vmul.f32 %v839, %v957
        %v970 = vmul.f32 %v843, %v953
        %v971 = vmul.f32 %v843, %v957
        %v972 = vmul.f32 %v847, %v953
        %v973 = vmul.f32 %v847, %v957
        %v974 = vmul.f32 %v851, %v953
        %v975 = vmul.f32 %v851, %v957
        %v976 = vmul.f32 %v855, %v953
        %v977 = vmul.f32 %v855, %v957
        %v978 = vmul.f32 %v859, %v953
        %v979 = vmul.f32 %v859, %v957
        %v980 = vmul.f32 %v863, %v953
        %v981 = vmul.f32 %v863, %v957
        %v982 = vmul.f32 %v867, %v953
        %v983 = vmul.f32 %v867, %v957
        %v984 = vmul.f32 %v871, %v953
        %v985 = vmul.f32 %v871, %v957
        %v986 = vmul.f32 %v875, %v953
        %v987 = vmul.f32 %v875, %v957
        %v988 = vmul.f32 %v879, %v953
        %v989 = vmul.f32 %v879, %v957
        %v990 = vmul.f32 %v883, %v953
        %v991 = vmul.f32 %v883, %v957
        %v992 = vmul.f32 %v887, %v953
        %v993 = vmul.f32 %v887, %v957
        %v994 = vmul.f32 %v891, %v953
        %v995 = vmul.f32 %v891, %v957
        %v996 = vmul.f32 %v895, %v953
        %v997 = vmul.f32 %v895, %v957
        %v998 = vmul.f32 %v899, %v953
        %v999 = vmul.f32 %v899, %v957
        %v1000 = vmul.f32 %v903, %v953
        %v1001 = vmul.f32 %v903, %v957
        %v1002 = vmul.f32 %v907, %v953
        %v1003 = vmul.f32 %v907, %v957
        %v1004 = vmul.f32 %v911, %v953
        %v1005 = vmul.f32 %v911, %v957
        %v1006 = vmul.f32 %v915, %v953
        %v1007 = vmul.f32 %v915, %v957
        %v1008 = vmul.f32 %v919, %v953
        %v1009 = vmul.f32 %v919, %v957
        %v1010 = vmul.f32 %v923, %v953
        %v1011 = vmul.f32 %v923, %v957
        %v1012 = vmul.f32 %v927, %v953
        %v1013 = vmul.f32 %v927, %v957
        %v1014 = vmul.f32 %v931, %v953
        %v1015 = vmul.f32 %v931, %v957
        %v1016 = vmul.f32 %v935, %v953
        %v1017 = vmul.f32 %v935, %v957
        %v1018 = vmul.f32 %v939, %v953
        %v1019 = vmul.f32 %v939, %v957
        %v1020 = vmul.f32 %v943, %v953
        %v1021 = vmul.f32 %v943, %v957
        %v1022 = vmul.f32 %v947, %v953
        %v1023 = vmul.f32 %v947, %v957
        %v1024 = vadd.f32 %v755, %v960
        %v1025 = vadd.f32 %v756, %v961
        %v1026 = vadd.f32 %v757, %v962
        %v1027 = vadd.f32 %v758, %v963
        %v1028 = vadd.f32 %v759, %v964
        %v1029 = vadd.f32 %v760, %v965
        %v1030 = vadd.f32 %v761, %v966
        %v1031 = vadd.f32 %v762, %v967
        %v1032 = vadd.f32 %v763, %v968
        %v1033 = vadd.f32 %v764, %v969
        %v1034 = vadd.f32 %v765, %v970
        %v1035 = vadd.f32 %v766, %v971
        %v1036 = vadd.f32 %v767, %v972
        %v1037 = vadd.f32 %v768, %v973
        %v1038 = vadd.f32 %v769, %v974
        %v1039 = vadd.f32 %v770, %v975
        %v1040 = vadd.f32 %v771, %v976
        %v1041 = vadd.f32 %v772, %v977
        %v1042 = vadd.f32 %v773, %v978
        %v1043 = vadd.f32 %v774, %v979
        %v1044 = vadd.f32 %v775, %v980
        %v1045 = vadd.f32 %v776, %v981
        %v1046 = vadd.f32 %v777, %v982
        %v1047 = vadd.f32 %v778, %v983
        %v1048 = vadd.f32 %v779, %v984
        %v1049 = vadd.f32 %v780, %v985
        %v1050 = vadd.f32 %v781, %v986
        %v1051 = vadd.f32 %v782, %v987
        %v1052 = vadd.f32 %v783, %v988
        %v1053 = vadd.f32 %v784, %v989
        %v1054 = vadd.f32 %v785, %v990
        %v1055 = vadd.f32 %v786, %v991
        %v1056 = vadd.f32 %v787, %v992
        %v1057 = vadd.f32 %v788, %v993
        %v1058 = vadd.f32 %v789, %v994
        %v1059 = vadd.f32 %v790, %v995
        %v1060 = vadd.f32 %v791, %v996
        %v1061 = vadd.f32 %v792, %v997
        %v1062 = vadd.f32 %v793, %v998
        %v1063 = vadd.f32 %v794, %v999
        %v1064 = vadd.f32 %v795, %v1000
        %v1065 = vadd.f32 %v796, %v1001
        %v1066 = vadd.f32 %v797, %v1002
        %v1067 = vadd.f32 %v798, %v1003
        %v1068 = vadd.f32 %v799, %v1004
        %v1069 = vadd.f32 %v800, %v1005
        %v1070 = vadd.f32 %v801, %v1006
        %v1071 = vadd.f32 %v802, %v1007
        %v1072 = vadd.f32 %v803, %v1008
        %v1073 = vadd.f32 %v804, %v1009
        %v1074 = vadd.f32 %v805, %v1010
        %v1075 = vadd.f32 %v806, %v1011
        %v1076 = vadd.f32 %v807, %v1012
        %v1077 = vadd.f32 %v808, %v1013
        %v1078 = vadd.f32 %v809, %v1014
        %v1079 = vadd.f32 %v810, %v1015
        %v1080 = vadd.f32 %v811, %v1016
        %v1081 = vadd.f32 %v812, %v1017
        %v1082 = vadd.f32 %v813, %v1018
        %v1083 = vadd.f32 %v814, %v1019
        %v1084 = vadd.f32 %v815, %v1020
        %v1085 = vadd.f32 %v816, %v1021
        %v1086 = vadd.f32 %v817, %v1022
        %v1087 = vadd.f32 %v818, %v1023
        %v1088 = vand.u32 2147483647, %v1024
        %vm1089 = vcmp.le.f32.partialorder %v1088, 0.7853982
        %vm1090 = vcmp.lt.s32.totalorder %v1024, 0
        %v1091 = vand.u32 %v1024, 2139095040
        %v1092 = vshrl.u32 %v1091, 23
        %v1093 = vsub.s32 %v1092, 127
        %v1094 = vand.u32 2147483647, %v1024
        %v1095 = vand.u32 %v1094, 8388607
        %v1096 = vor.u32 %v1095, 8388608
        %v1097 = vsub.s32 0, %v1096
        %v1098 = vadd.s32 %v1093, 1
        %vm1099 = vcmp.gt.s32.totalorder %v1098, 0
        %v1100 = vsel %vm1099, %v1098, 0
        %v1101 = vshrl.u32 %v1100, 5
        %v1102 = vand.u32 %v1100, 31
        %v1103 = vsub.s32 32, %v1102
        %v1104 = vshrl.u32 683565275, %v1103
        %v1105 = vshll.u32 683565275, %v1102
        %v1106 = vshrl.u32 2475754826, %v1103
        %v1107 = vor.u32 %v1105, %v1106
        %v1108 = vshll.u32 2475754826, %v1102
        %v1109 = vshrl.u32 2131351028, %v1103
        %v1110 = vor.u32 %v1108, %v1109
        %v1111 = vshll.u32 2131351028, %v1102
        %v1112 = vshrl.u32 2102212464, %v1103
        %v1113 = vor.u32 %v1111, %v1112
        %v1114 = vshll.u32 2102212464, %v1102
        %v1115 = vshrl.u32 920167782, %v1103
        %v1116 = vor.u32 %v1114, %v1115
        %v1117 = vshll.u32 920167782, %v1102
        %v1118 = vshrl.u32 1326507024, %v1103
        %v1119 = vor.u32 %v1117, %v1118
        %vm1120 = vcmp.lt.s32.totalorder %v1101, 1
        %vm1121 = vcmp.lt.s32.totalorder %v1101, 2
        %vm1122 = vcmp.lt.s32.totalorder %v1101, 3
        %vm1123 = vcmp.lt.s32.totalorder %v1101, 4
        %v1124 = vsel %vm1120, %v1104, %v1107
        %v1125 = vsel %vm1123, %v1113, 2102212464
        %v1126 = vsel %vm1122, %v1110, %v1125
        %v1127 = vsel %vm1121, %v1124, %v1126
        %v1128 = vsel %vm1120, %v1107, %v1110
        %v1129 = vsel %vm1123, %v1116, 920167782
        %v1130 = vsel %vm1122, %v1113, %v1129
        %v1131 = vsel %vm1121, %v1128, %v1130
        %v1132 = vsel %vm1120, %v1110, %v1113
        %v1133 = vsel %vm1123, %v1119, 1326507024
        %v1134 = vsel %vm1122, %v1116, %v1133
        %v1135 = vsel %vm1121, %v1132, %v1134
        %v1136 = vshll.u32 %v1096, 8
        %v1137 = vmul.u32.u64.compose %v1136, %v1135
        %v1138 = vextract.low.u32 %v1137
        %v1139 = vextract.high.u32 %v1137
        %v1140 = vmul.u32.u64.compose %v1136, %v1131
        %v1141 = vextract.low.u32 %v1140
        %v1142 = vextract.high.u32 %v1140
        %v1143 = vmul.u32 %v1136, %v1127
        %v1144 = vadd.s32 %v1139, %v1141
        %vm1145 = vc.u32 %v1139, %v1141
        %v1146 = vadd.s32 %v1142, 1
        %v1147 = vsel %vm1145, %v1146, %v1142
        %v1148 = vadd.s32 %v1143, %v1147
        %v1149 = vadd.s32 %v1148, 536870912
        %v1150 = vshrl.u32 %v1149, 30
        %v1151 = vshll.u32 %v1150, 30
        %v1152 = vsub.s32 %v1148, %v1151
        %vm1153 = vcmp.lt.s32.totalorder %v1152, 0
        %v1154 = vsub.s32 0, %v1152
        %v1155 = vsel %vm1153, %v1154, %v1152
        %v1156 = vclz %v1155
        %v1157 = vsub.s32 %v1156, 2
        %vm1158 = vcmp.gt.s32.totalorder 0, %v1157
        %v1159 = vsel %vm1158, 0, %v1157
        %v1160 = vsub.s32 32, %v1159
        %v1161 = vshll.u32 %v1152, %v1159
        %v1162 = vshrl.u32 %v1144, %v1160
        %v1163 = vor.u32 %v1161, %v1162
        %v1164 = vsub.s32 4294967266, %v1159
        %v1165 = vadd.s32 %v1164, 127
        %v1166 = vshll.u32 %v1165, 23
        %v1167 = vor.u32 4788187, %v1166
        %v1168 = vand.u32 2147483647, %v1167
        %v1170 = vcvt.s32.f32 %v1163
        %v1171 = vmul.f32 %v1170, %v1168
        %v1172 = vxor.u32 %v1171, 2147483648
        %v1173 = vsel %vm1090, %v1172, %v1171
        %v1174 = vsub.s32 4, %v1150
        %v1175 = vsel %vm1090, %v1174, %v1150
        %v1176 = vsel %vm1089, %v1024, %v1173
        %v1177 = vsel %vm1089, 0, %v1175
        %v1178 = vcosq.f32.pop %v1176
        %v1179 = vsinq.f32.pop %v1176
        %vm1180 = vweird.f32 %v1024
        %v1181 = vand.u32 %v1177, 3
        %vm1182 = vcmp.lt.s32.totalorder %v1181, 2
        %vm1183 = vcmp.eq.s32.totalorder %v1181, 0
        %v1184 = vxor.u32 %v1179, 2147483648
        %v1185 = vsel %vm1183, %v1178, %v1184
        %vm1186 = vcmp.eq.s32.totalorder %v1181, 2
        %v1187 = vxor.u32 %v1178, 2147483648
        %v1188 = vsel %vm1186, %v1187, %v1179
        %v1189 = vsel %vm1182, %v1185, %v1188
        %v1190 = vsel %vm1180, nan, %v1189
        %v1191 = vand.u32 2147483647, %v1025
        %vm1192 = vcmp.le.f32.partialorder %v1191, 0.7853982
        %vm1193 = vcmp.lt.s32.totalorder %v1025, 0
        %v1194 = vand.u32 %v1025, 2139095040
        %v1195 = vshrl.u32 %v1194, 23
        %v1196 = vsub.s32 %v1195, 127
        %v1197 = vand.u32 2147483647, %v1025
        %v1198 = vand.u32 %v1197, 8388607
        %v1199 = vor.u32 %v1198, 8388608
        %v1200 = vsub.s32 0, %v1199
        %v1201 = vadd.s32 %v1196, 1
        %vm1202 = vcmp.gt.s32.totalorder %v1201, 0
        %v1203 = vsel %vm1202, %v1201, 0
        %v1204 = vshrl.u32 %v1203, 5
        %v1205 = vand.u32 %v1203, 31
        %v1206 = vsub.s32 32, %v1205
        %v1207 = vshrl.u32 683565275, %v1206
        %v1208 = vshll.u32 683565275, %v1205
        %v1209 = vshrl.u32 2475754826, %v1206
        %v1210 = vor.u32 %v1208, %v1209
        %v1211 = vshll.u32 2475754826, %v1205
        %v1212 = vshrl.u32 2131351028, %v1206
        %v1213 = vor.u32 %v1211, %v1212
        %v1214 = vshll.u32 2131351028, %v1205
        %v1215 = vshrl.u32 2102212464, %v1206
        %v1216 = vor.u32 %v1214, %v1215
        %v1217 = vshll.u32 2102212464, %v1205
        %v1218 = vshrl.u32 920167782, %v1206
        %v1219 = vor.u32 %v1217, %v1218
        %v1220 = vshll.u32 920167782, %v1205
        %v1221 = vshrl.u32 1326507024, %v1206
        %v1222 = vor.u32 %v1220, %v1221
        %vm1223 = vcmp.lt.s32.totalorder %v1204, 1
        %vm1224 = vcmp.lt.s32.totalorder %v1204, 2
        %vm1225 = vcmp.lt.s32.totalorder %v1204, 3
        %vm1226 = vcmp.lt.s32.totalorder %v1204, 4
        %v1227 = vsel %vm1223, %v1207, %v1210
        %v1228 = vsel %vm1226, %v1216, 2102212464
        %v1229 = vsel %vm1225, %v1213, %v1228
        %v1230 = vsel %vm1224, %v1227, %v1229
        %v1231 = vsel %vm1223, %v1210, %v1213
        %v1232 = vsel %vm1226, %v1219, 920167782
        %v1233 = vsel %vm1225, %v1216, %v1232
        %v1234 = vsel %vm1224, %v1231, %v1233
        %v1235 = vsel %vm1223, %v1213, %v1216
        %v1236 = vsel %vm1226, %v1222, 1326507024
        %v1237 = vsel %vm1225, %v1219, %v1236
        %v1238 = vsel %vm1224, %v1235, %v1237
        %v1239 = vshll.u32 %v1199, 8
        %v1240 = vmul.u32.u64.compose %v1239, %v1238
        %v1241 = vextract.low.u32 %v1240
        %v1242 = vextract.high.u32 %v1240
        %v1243 = vmul.u32.u64.compose %v1239, %v1234
        %v1244 = vextract.low.u32 %v1243
        %v1245 = vextract.high.u32 %v1243
        %v1246 = vmul.u32 %v1239, %v1230
        %v1247 = vadd.s32 %v1242, %v1244
        %vm1248 = vc.u32 %v1242, %v1244
        %v1249 = vadd.s32 %v1245, 1
        %v1250 = vsel %vm1248, %v1249, %v1245
        %v1251 = vadd.s32 %v1246, %v1250
        %v1252 = vadd.s32 %v1251, 536870912
        %v1253 = vshrl.u32 %v1252, 30
        %v1254 = vshll.u32 %v1253, 30
        %v1255 = vsub.s32 %v1251, %v1254
        %vm1256 = vcmp.lt.s32.totalorder %v1255, 0
        %v1257 = vsub.s32 0, %v1255
        %v1258 = vsel %vm1256, %v1257, %v1255
        %v1259 = vclz %v1258
        %v1260 = vsub.s32 %v1259, 2
        %vm1261 = vcmp.gt.s32.totalorder 0, %v1260
        %v1262 = vsel %vm1261, 0, %v1260
        %v1263 = vsub.s32 32, %v1262
        %v1264 = vshll.u32 %v1255, %v1262
        %v1265 = vshrl.u32 %v1247, %v1263
        %v1266 = vor.u32 %v1264, %v1265
        %v1267 = vsub.s32 4294967266, %v1262
        %v1268 = vadd.s32 %v1267, 127
        %v1269 = vshll.u32 %v1268, 23
        %v1270 = vor.u32 4788187, %v1269
        %v1271 = vand.u32 2147483647, %v1270
        %v1273 = vcvt.s32.f32 %v1266
        %v1274 = vmul.f32 %v1273, %v1271
        %v1275 = vxor.u32 %v1274, 2147483648
        %v1276 = vsel %vm1193, %v1275, %v1274
        %v1277 = vsub.s32 4, %v1253
        %v1278 = vsel %vm1193, %v1277, %v1253
        %v1279 = vsel %vm1192, %v1025, %v1276
        %v1280 = vsel %vm1192, 0, %v1278
        %v1281 = vcosq.f32.pop %v1279
        %v1282 = vsinq.f32.pop %v1279
        %vm1283 = vweird.f32 %v1025
        %v1284 = vand.u32 %v1280, 3
        %vm1285 = vcmp.lt.s32.totalorder %v1284, 2
        %vm1286 = vcmp.eq.s32.totalorder %v1284, 0
        %v1287 = vxor.u32 %v1282, 2147483648
        %v1288 = vsel %vm1286, %v1281, %v1287
        %vm1289 = vcmp.eq.s32.totalorder %v1284, 2
        %v1290 = vxor.u32 %v1281, 2147483648
        %v1291 = vsel %vm1289, %v1290, %v1282
        %v1292 = vsel %vm1285, %v1288, %v1291
        %v1293 = vsel %vm1283, nan, %v1292
        %v1294 = vand.u32 2147483647, %v1026
        %vm1295 = vcmp.le.f32.partialorder %v1294, 0.7853982
        %vm1296 = vcmp.lt.s32.totalorder %v1026, 0
        %v1297 = vand.u32 %v1026, 2139095040
        %v1298 = vshrl.u32 %v1297, 23
        %v1299 = vsub.s32 %v1298, 127
        %v1300 = vand.u32 2147483647, %v1026
        %v1301 = vand.u32 %v1300, 8388607
        %v1302 = vor.u32 %v1301, 8388608
        %v1303 = vsub.s32 0, %v1302
        %v1304 = vadd.s32 %v1299, 1
        %vm1305 = vcmp.gt.s32.totalorder %v1304, 0
        %v1306 = vsel %vm1305, %v1304, 0
        %v1307 = vshrl.u32 %v1306, 5
        %v1308 = vand.u32 %v1306, 31
        %v1309 = vsub.s32 32, %v1308
        %v1310 = vshrl.u32 683565275, %v1309
        %v1311 = vshll.u32 683565275, %v1308
        %v1312 = vshrl.u32 2475754826, %v1309
        %v1313 = vor.u32 %v1311, %v1312
        %v1314 = vshll.u32 2475754826, %v1308
        %v1315 = vshrl.u32 2131351028, %v1309
        %v1316 = vor.u32 %v1314, %v1315
        %v1317 = vshll.u32 2131351028, %v1308
        %v1318 = vshrl.u32 2102212464, %v1309
        %v1319 = vor.u32 %v1317, %v1318
        %v1320 = vshll.u32 2102212464, %v1308
        %v1321 = vshrl.u32 920167782, %v1309
        %v1322 = vor.u32 %v1320, %v1321
        %v1323 = vshll.u32 920167782, %v1308
        %v1324 = vshrl.u32 1326507024, %v1309
        %v1325 = vor.u32 %v1323, %v1324
        %vm1326 = vcmp.lt.s32.totalorder %v1307, 1
        %vm1327 = vcmp.lt.s32.totalorder %v1307, 2
        %vm1328 = vcmp.lt.s32.totalorder %v1307, 3
        %vm1329 = vcmp.lt.s32.totalorder %v1307, 4
        %v1330 = vsel %vm1326, %v1310, %v1313
        %v1331 = vsel %vm1329, %v1319, 2102212464
        %v1332 = vsel %vm1328, %v1316, %v1331
        %v1333 = vsel %vm1327, %v1330, %v1332
        %v1334 = vsel %vm1326, %v1313, %v1316
        %v1335 = vsel %vm1329, %v1322, 920167782
        %v1336 = vsel %vm1328, %v1319, %v1335
        %v1337 = vsel %vm1327, %v1334, %v1336
        %v1338 = vsel %vm1326, %v1316, %v1319
        %v1339 = vsel %vm1329, %v1325, 1326507024
        %v1340 = vsel %vm1328, %v1322, %v1339
        %v1341 = vsel %vm1327, %v1338, %v1340
        %v1342 = vshll.u32 %v1302, 8
        %v1343 = vmul.u32.u64.compose %v1342, %v1341
        %v1344 = vextract.low.u32 %v1343
        %v1345 = vextract.high.u32 %v1343
        %v1346 = vmul.u32.u64.compose %v1342, %v1337
        %v1347 = vextract.low.u32 %v1346
        %v1348 = vextract.high.u32 %v1346
        %v1349 = vmul.u32 %v1342, %v1333
        %v1350 = vadd.s32 %v1345, %v1347
        %vm1351 = vc.u32 %v1345, %v1347
        %v1352 = vadd.s32 %v1348, 1
        %v1353 = vsel %vm1351, %v1352, %v1348
        %v1354 = vadd.s32 %v1349, %v1353
        %v1355 = vadd.s32 %v1354, 536870912
        %v1356 = vshrl.u32 %v1355, 30
        %v1357 = vshll.u32 %v1356, 30
        %v1358 = vsub.s32 %v1354, %v1357
        %vm1359 = vcmp.lt.s32.totalorder %v1358, 0
        %v1360 = vsub.s32 0, %v1358
        %v1361 = vsel %vm1359, %v1360, %v1358
        %v1362 = vclz %v1361
        %v1363 = vsub.s32 %v1362, 2
        %vm1364 = vcmp.gt.s32.totalorder 0, %v1363
        %v1365 = vsel %vm1364, 0, %v1363
        %v1366 = vsub.s32 32, %v1365
        %v1367 = vshll.u32 %v1358, %v1365
        %v1368 = vshrl.u32 %v1350, %v1366
        %v1369 = vor.u32 %v1367, %v1368
        %v1370 = vsub.s32 4294967266, %v1365
        %v1371 = vadd.s32 %v1370, 127
        %v1372 = vshll.u32 %v1371, 23
        %v1373 = vor.u32 4788187, %v1372
        %v1374 = vand.u32 2147483647, %v1373
        %v1376 = vcvt.s32.f32 %v1369
        %v1377 = vmul.f32 %v1376, %v1374
        %v1378 = vxor.u32 %v1377, 2147483648
        %v1379 = vsel %vm1296, %v1378, %v1377
        %v1380 = vsub.s32 4, %v1356
        %v1381 = vsel %vm1296, %v1380, %v1356
        %v1382 = vsel %vm1295, %v1026, %v1379
        %v1383 = vsel %vm1295, 0, %v1381
        %v1384 = vcosq.f32.pop %v1382
        %v1385 = vsinq.f32.pop %v1382
        %vm1386 = vweird.f32 %v1026
        %v1387 = vand.u32 %v1383, 3
        %vm1388 = vcmp.lt.s32.totalorder %v1387, 2
        %vm1389 = vcmp.eq.s32.totalorder %v1387, 0
        %v1390 = vxor.u32 %v1385, 2147483648
        %v1391 = vsel %vm1389, %v1384, %v1390
        %vm1392 = vcmp.eq.s32.totalorder %v1387, 2
        %v1393 = vxor.u32 %v1384, 2147483648
        %v1394 = vsel %vm1392, %v1393, %v1385
        %v1395 = vsel %vm1388, %v1391, %v1394
        %v1396 = vsel %vm1386, nan, %v1395
        %v1397 = vand.u32 2147483647, %v1027
        %vm1398 = vcmp.le.f32.partialorder %v1397, 0.7853982
        %vm1399 = vcmp.lt.s32.totalorder %v1027, 0
        %v1400 = vand.u32 %v1027, 2139095040
        %v1401 = vshrl.u32 %v1400, 23
        %v1402 = vsub.s32 %v1401, 127
        %v1403 = vand.u32 2147483647, %v1027
        %v1404 = vand.u32 %v1403, 8388607
        %v1405 = vor.u32 %v1404, 8388608
        %v1406 = vsub.s32 0, %v1405
        %v1407 = vadd.s32 %v1402, 1
        %vm1408 = vcmp.gt.s32.totalorder %v1407, 0
        %v1409 = vsel %vm1408, %v1407, 0
        %v1410 = vshrl.u32 %v1409, 5
        %v1411 = vand.u32 %v1409, 31
        %v1412 = vsub.s32 32, %v1411
        %v1413 = vshrl.u32 683565275, %v1412
        %v1414 = vshll.u32 683565275, %v1411
        %v1415 = vshrl.u32 2475754826, %v1412
        %v1416 = vor.u32 %v1414, %v1415
        %v1417 = vshll.u32 2475754826, %v1411
        %v1418 = vshrl.u32 2131351028, %v1412
        %v1419 = vor.u32 %v1417, %v1418
        %v1420 = vshll.u32 2131351028, %v1411
        %v1421 = vshrl.u32 2102212464, %v1412
        %v1422 = vor.u32 %v1420, %v1421
        %v1423 = vshll.u32 2102212464, %v1411
        %v1424 = vshrl.u32 920167782, %v1412
        %v1425 = vor.u32 %v1423, %v1424
        %v1426 = vshll.u32 920167782, %v1411
        %v1427 = vshrl.u32 1326507024, %v1412
        %v1428 = vor.u32 %v1426, %v1427
        %vm1429 = vcmp.lt.s32.totalorder %v1410, 1
        %vm1430 = vcmp.lt.s32.totalorder %v1410, 2
        %vm1431 = vcmp.lt.s32.totalorder %v1410, 3
        %vm1432 = vcmp.lt.s32.totalorder %v1410, 4
        %v1433 = vsel %vm1429, %v1413, %v1416
        %v1434 = vsel %vm1432, %v1422, 2102212464
        %v1435 = vsel %vm1431, %v1419, %v1434
        %v1436 = vsel %vm1430, %v1433, %v1435
        %v1437 = vsel %vm1429, %v1416, %v1419
        %v1438 = vsel %vm1432, %v1425, 920167782
        %v1439 = vsel %vm1431, %v1422, %v1438
        %v1440 = vsel %vm1430, %v1437, %v1439
        %v1441 = vsel %vm1429, %v1419, %v1422
        %v1442 = vsel %vm1432, %v1428, 1326507024
        %v1443 = vsel %vm1431, %v1425, %v1442
        %v1444 = vsel %vm1430, %v1441, %v1443
        %v1445 = vshll.u32 %v1405, 8
        %v1446 = vmul.u32.u64.compose %v1445, %v1444
        %v1447 = vextract.low.u32 %v1446
        %v1448 = vextract.high.u32 %v1446
        %v1449 = vmul.u32.u64.compose %v1445, %v1440
        %v1450 = vextract.low.u32 %v1449
        %v1451 = vextract.high.u32 %v1449
        %v1452 = vmul.u32 %v1445, %v1436
        %v1453 = vadd.s32 %v1448, %v1450
        %vm1454 = vc.u32 %v1448, %v1450
        %v1455 = vadd.s32 %v1451, 1
        %v1456 = vsel %vm1454, %v1455, %v1451
        %v1457 = vadd.s32 %v1452, %v1456
        %v1458 = vadd.s32 %v1457, 536870912
        %v1459 = vshrl.u32 %v1458, 30
        %v1460 = vshll.u32 %v1459, 30
        %v1461 = vsub.s32 %v1457, %v1460
        %vm1462 = vcmp.lt.s32.totalorder %v1461, 0
        %v1463 = vsub.s32 0, %v1461
        %v1464 = vsel %vm1462, %v1463, %v1461
        %v1465 = vclz %v1464
        %v1466 = vsub.s32 %v1465, 2
        %vm1467 = vcmp.gt.s32.totalorder 0, %v1466
        %v1468 = vsel %vm1467, 0, %v1466
        %v1469 = vsub.s32 32, %v1468
        %v1470 = vshll.u32 %v1461, %v1468
        %v1471 = vshrl.u32 %v1453, %v1469
        %v1472 = vor.u32 %v1470, %v1471
        %v1473 = vsub.s32 4294967266, %v1468
        %v1474 = vadd.s32 %v1473, 127
        %v1475 = vshll.u32 %v1474, 23
        %v1476 = vor.u32 4788187, %v1475
        %v1477 = vand.u32 2147483647, %v1476
        %v1479 = vcvt.s32.f32 %v1472
        %v1480 = vmul.f32 %v1479, %v1477
        %v1481 = vxor.u32 %v1480, 2147483648
        %v1482 = vsel %vm1399, %v1481, %v1480
        %v1483 = vsub.s32 4, %v1459
        %v1484 = vsel %vm1399, %v1483, %v1459
        %v1485 = vsel %vm1398, %v1027, %v1482
        %v1486 = vsel %vm1398, 0, %v1484
        %v1487 = vcosq.f32.pop %v1485
        %v1488 = vsinq.f32.pop %v1485
        %vm1489 = vweird.f32 %v1027
        %v1490 = vand.u32 %v1486, 3
        %vm1491 = vcmp.lt.s32.totalorder %v1490, 2
        %vm1492 = vcmp.eq.s32.totalorder %v1490, 0
        %v1493 = vxor.u32 %v1488, 2147483648
        %v1494 = vsel %vm1492, %v1487, %v1493
        %vm1495 = vcmp.eq.s32.totalorder %v1490, 2
        %v1496 = vxor.u32 %v1487, 2147483648
        %v1497 = vsel %vm1495, %v1496, %v1488
        %v1498 = vsel %vm1491, %v1494, %v1497
        %v1499 = vsel %vm1489, nan, %v1498
        %v1500 = vand.u32 2147483647, %v1028
        %vm1501 = vcmp.le.f32.partialorder %v1500, 0.7853982
        %vm1502 = vcmp.lt.s32.totalorder %v1028, 0
        %v1503 = vand.u32 %v1028, 2139095040
        %v1504 = vshrl.u32 %v1503, 23
        %v1505 = vsub.s32 %v1504, 127
        %v1506 = vand.u32 2147483647, %v1028
        %v1507 = vand.u32 %v1506, 8388607
        %v1508 = vor.u32 %v1507, 8388608
        %v1509 = vsub.s32 0, %v1508
        %v1510 = vadd.s32 %v1505, 1
        %vm1511 = vcmp.gt.s32.totalorder %v1510, 0
        %v1512 = vsel %vm1511, %v1510, 0
        %v1513 = vshrl.u32 %v1512, 5
        %v1514 = vand.u32 %v1512, 31
        %v1515 = vsub.s32 32, %v1514
        %v1516 = vshrl.u32 683565275, %v1515
        %v1517 = vshll.u32 683565275, %v1514
        %v1518 = vshrl.u32 2475754826, %v1515
        %v1519 = vor.u32 %v1517, %v1518
        %v1520 = vshll.u32 2475754826, %v1514
        %v1521 = vshrl.u32 2131351028, %v1515
        %v1522 = vor.u32 %v1520, %v1521
        %v1523 = vshll.u32 2131351028, %v1514
        %v1524 = vshrl.u32 2102212464, %v1515
        %v1525 = vor.u32 %v1523, %v1524
        %v1526 = vshll.u32 2102212464, %v1514
        %v1527 = vshrl.u32 920167782, %v1515
        %v1528 = vor.u32 %v1526, %v1527
        %v1529 = vshll.u32 920167782, %v1514
        %v1530 = vshrl.u32 1326507024, %v1515
        %v1531 = vor.u32 %v1529, %v1530
        %vm1532 = vcmp.lt.s32.totalorder %v1513, 1
        %vm1533 = vcmp.lt.s32.totalorder %v1513, 2
        %vm1534 = vcmp.lt.s32.totalorder %v1513, 3
        %vm1535 = vcmp.lt.s32.totalorder %v1513, 4
        %v1536 = vsel %vm1532, %v1516, %v1519
        %v1537 = vsel %vm1535, %v1525, 2102212464
        %v1538 = vsel %vm1534, %v1522, %v1537
        %v1539 = vsel %vm1533, %v1536, %v1538
        %v1540 = vsel %vm1532, %v1519, %v1522
        %v1541 = vsel %vm1535, %v1528, 920167782
        %v1542 = vsel %vm1534, %v1525, %v1541
        %v1543 = vsel %vm1533, %v1540, %v1542
        %v1544 = vsel %vm1532, %v1522, %v1525
        %v1545 = vsel %vm1535, %v1531, 1326507024
        %v1546 = vsel %vm1534, %v1528, %v1545
        %v1547 = vsel %vm1533, %v1544, %v1546
        %v1548 = vshll.u32 %v1508, 8
        %v1549 = vmul.u32.u64.compose %v1548, %v1547
        %v1550 = vextract.low.u32 %v1549
        %v1551 = vextract.high.u32 %v1549
        %v1552 = vmul.u32.u64.compose %v1548, %v1543
        %v1553 = vextract.low.u32 %v1552
        %v1554 = vextract.high.u32 %v1552
        %v1555 = vmul.u32 %v1548, %v1539
        %v1556 = vadd.s32 %v1551, %v1553
        %vm1557 = vc.u32 %v1551, %v1553
        %v1558 = vadd.s32 %v1554, 1
        %v1559 = vsel %vm1557, %v1558, %v1554
        %v1560 = vadd.s32 %v1555, %v1559
        %v1561 = vadd.s32 %v1560, 536870912
        %v1562 = vshrl.u32 %v1561, 30
        %v1563 = vshll.u32 %v1562, 30
        %v1564 = vsub.s32 %v1560, %v1563
        %vm1565 = vcmp.lt.s32.totalorder %v1564, 0
        %v1566 = vsub.s32 0, %v1564
        %v1567 = vsel %vm1565, %v1566, %v1564
        %v1568 = vclz %v1567
        %v1569 = vsub.s32 %v1568, 2
        %vm1570 = vcmp.gt.s32.totalorder 0, %v1569
        %v1571 = vsel %vm1570, 0, %v1569
        %v1572 = vsub.s32 32, %v1571
        %v1573 = vshll.u32 %v1564, %v1571
        %v1574 = vshrl.u32 %v1556, %v1572
        %v1575 = vor.u32 %v1573, %v1574
        %v1576 = vsub.s32 4294967266, %v1571
        %v1577 = vadd.s32 %v1576, 127
        %v1578 = vshll.u32 %v1577, 23
        %v1579 = vor.u32 4788187, %v1578
        %v1580 = vand.u32 2147483647, %v1579
        %v1582 = vcvt.s32.f32 %v1575
        %v1583 = vmul.f32 %v1582, %v1580
        %v1584 = vxor.u32 %v1583, 2147483648
        %v1585 = vsel %vm1502, %v1584, %v1583
        %v1586 = vsub.s32 4, %v1562
        %v1587 = vsel %vm1502, %v1586, %v1562
        %v1588 = vsel %vm1501, %v1028, %v1585
        %v1589 = vsel %vm1501, 0, %v1587
        %v1590 = vcosq.f32.pop %v1588
        %v1591 = vsinq.f32.pop %v1588
        %vm1592 = vweird.f32 %v1028
        %v1593 = vand.u32 %v1589, 3
        %vm1594 = vcmp.lt.s32.totalorder %v1593, 2
        %vm1595 = vcmp.eq.s32.totalorder %v1593, 0
        %v1596 = vxor.u32 %v1591, 2147483648
        %v1597 = vsel %vm1595, %v1590, %v1596
        %vm1598 = vcmp.eq.s32.totalorder %v1593, 2
        %v1599 = vxor.u32 %v1590, 2147483648
        %v1600 = vsel %vm1598, %v1599, %v1591
        %v1601 = vsel %vm1594, %v1597, %v1600
        %v1602 = vsel %vm1592, nan, %v1601
        %v1603 = vand.u32 2147483647, %v1029
        %vm1604 = vcmp.le.f32.partialorder %v1603, 0.7853982
        %vm1605 = vcmp.lt.s32.totalorder %v1029, 0
        %v1606 = vand.u32 %v1029, 2139095040
        %v1607 = vshrl.u32 %v1606, 23
        %v1608 = vsub.s32 %v1607, 127
        %v1609 = vand.u32 2147483647, %v1029
        %v1610 = vand.u32 %v1609, 8388607
        %v1611 = vor.u32 %v1610, 8388608
        %v1612 = vsub.s32 0, %v1611
        %v1613 = vadd.s32 %v1608, 1
        %vm1614 = vcmp.gt.s32.totalorder %v1613, 0
        %v1615 = vsel %vm1614, %v1613, 0
        %v1616 = vshrl.u32 %v1615, 5
        %v1617 = vand.u32 %v1615, 31
        %v1618 = vsub.s32 32, %v1617
        %v1619 = vshrl.u32 683565275, %v1618
        %v1620 = vshll.u32 683565275, %v1617
        %v1621 = vshrl.u32 2475754826, %v1618
        %v1622 = vor.u32 %v1620, %v1621
        %v1623 = vshll.u32 2475754826, %v1617
        %v1624 = vshrl.u32 2131351028, %v1618
        %v1625 = vor.u32 %v1623, %v1624
        %v1626 = vshll.u32 2131351028, %v1617
        %v1627 = vshrl.u32 2102212464, %v1618
        %v1628 = vor.u32 %v1626, %v1627
        %v1629 = vshll.u32 2102212464, %v1617
        %v1630 = vshrl.u32 920167782, %v1618
        %v1631 = vor.u32 %v1629, %v1630
        %v1632 = vshll.u32 920167782, %v1617
        %v1633 = vshrl.u32 1326507024, %v1618
        %v1634 = vor.u32 %v1632, %v1633
        %vm1635 = vcmp.lt.s32.totalorder %v1616, 1
        %vm1636 = vcmp.lt.s32.totalorder %v1616, 2
        %vm1637 = vcmp.lt.s32.totalorder %v1616, 3
        %vm1638 = vcmp.lt.s32.totalorder %v1616, 4
        %v1639 = vsel %vm1635, %v1619, %v1622
        %v1640 = vsel %vm1638, %v1628, 2102212464
        %v1641 = vsel %vm1637, %v1625, %v1640
        %v1642 = vsel %vm1636, %v1639, %v1641
        %v1643 = vsel %vm1635, %v1622, %v1625
        %v1644 = vsel %vm1638, %v1631, 920167782
        %v1645 = vsel %vm1637, %v1628, %v1644
        %v1646 = vsel %vm1636, %v1643, %v1645
        %v1647 = vsel %vm1635, %v1625, %v1628
        %v1648 = vsel %vm1638, %v1634, 1326507024
        %v1649 = vsel %vm1637, %v1631, %v1648
        %v1650 = vsel %vm1636, %v1647, %v1649
        %v1651 = vshll.u32 %v1611, 8
        %v1652 = vmul.u32.u64.compose %v1651, %v1650
        %v1653 = vextract.low.u32 %v1652
        %v1654 = vextract.high.u32 %v1652
        %v1655 = vmul.u32.u64.compose %v1651, %v1646
        %v1656 = vextract.low.u32 %v1655
        %v1657 = vextract.high.u32 %v1655
        %v1658 = vmul.u32 %v1651, %v1642
        %v1659 = vadd.s32 %v1654, %v1656
        %vm1660 = vc.u32 %v1654, %v1656
        %v1661 = vadd.s32 %v1657, 1
        %v1662 = vsel %vm1660, %v1661, %v1657
        %v1663 = vadd.s32 %v1658, %v1662
        %v1664 = vadd.s32 %v1663, 536870912
        %v1665 = vshrl.u32 %v1664, 30
        %v1666 = vshll.u32 %v1665, 30
        %v1667 = vsub.s32 %v1663, %v1666
        %vm1668 = vcmp.lt.s32.totalorder %v1667, 0
        %v1669 = vsub.s32 0, %v1667
        %v1670 = vsel %vm1668, %v1669, %v1667
        %v1671 = vclz %v1670
        %v1672 = vsub.s32 %v1671, 2
        %vm1673 = vcmp.gt.s32.totalorder 0, %v1672
        %v1674 = vsel %vm1673, 0, %v1672
        %v1675 = vsub.s32 32, %v1674
        %v1676 = vshll.u32 %v1667, %v1674
        %v1677 = vshrl.u32 %v1659, %v1675
        %v1678 = vor.u32 %v1676, %v1677
        %v1679 = vsub.s32 4294967266, %v1674
        %v1680 = vadd.s32 %v1679, 127
        %v1681 = vshll.u32 %v1680, 23
        %v1682 = vor.u32 4788187, %v1681
        %v1683 = vand.u32 2147483647, %v1682
        %v1685 = vcvt.s32.f32 %v1678
        %v1686 = vmul.f32 %v1685, %v1683
        %v1687 = vxor.u32 %v1686, 2147483648
        %v1688 = vsel %vm1605, %v1687, %v1686
        %v1689 = vsub.s32 4, %v1665
        %v1690 = vsel %vm1605, %v1689, %v1665
        %v1691 = vsel %vm1604, %v1029, %v1688
        %v1692 = vsel %vm1604, 0, %v1690
        %v1693 = vcosq.f32.pop %v1691
        %v1694 = vsinq.f32.pop %v1691
        %vm1695 = vweird.f32 %v1029
        %v1696 = vand.u32 %v1692, 3
        %vm1697 = vcmp.lt.s32.totalorder %v1696, 2
        %vm1698 = vcmp.eq.s32.totalorder %v1696, 0
        %v1699 = vxor.u32 %v1694, 2147483648
        %v1700 = vsel %vm1698, %v1693, %v1699
        %vm1701 = vcmp.eq.s32.totalorder %v1696, 2
        %v1702 = vxor.u32 %v1693, 2147483648
        %v1703 = vsel %vm1701, %v1702, %v1694
        %v1704 = vsel %vm1697, %v1700, %v1703
        %v1705 = vsel %vm1695, nan, %v1704
        %v1706 = vand.u32 2147483647, %v1030
        %vm1707 = vcmp.le.f32.partialorder %v1706, 0.7853982
        %vm1708 = vcmp.lt.s32.totalorder %v1030, 0
        %v1709 = vand.u32 %v1030, 2139095040
        %v1710 = vshrl.u32 %v1709, 23
        %v1711 = vsub.s32 %v1710, 127
        %v1712 = vand.u32 2147483647, %v1030
        %v1713 = vand.u32 %v1712, 8388607
        %v1714 = vor.u32 %v1713, 8388608
        %v1715 = vsub.s32 0, %v1714
        %v1716 = vadd.s32 %v1711, 1
        %vm1717 = vcmp.gt.s32.totalorder %v1716, 0
        %v1718 = vsel %vm1717, %v1716, 0
        %v1719 = vshrl.u32 %v1718, 5
        %v1720 = vand.u32 %v1718, 31
        %v1721 = vsub.s32 32, %v1720
        %v1722 = vshrl.u32 683565275, %v1721
        %v1723 = vshll.u32 683565275, %v1720
        %v1724 = vshrl.u32 2475754826, %v1721
        %v1725 = vor.u32 %v1723, %v1724
        %v1726 = vshll.u32 2475754826, %v1720
        %v1727 = vshrl.u32 2131351028, %v1721
        %v1728 = vor.u32 %v1726, %v1727
        %v1729 = vshll.u32 2131351028, %v1720
        %v1730 = vshrl.u32 2102212464, %v1721
        %v1731 = vor.u32 %v1729, %v1730
        %v1732 = vshll.u32 2102212464, %v1720
        %v1733 = vshrl.u32 920167782, %v1721
        %v1734 = vor.u32 %v1732, %v1733
        %v1735 = vshll.u32 920167782, %v1720
        %v1736 = vshrl.u32 1326507024, %v1721
        %v1737 = vor.u32 %v1735, %v1736
        %vm1738 = vcmp.lt.s32.totalorder %v1719, 1
        %vm1739 = vcmp.lt.s32.totalorder %v1719, 2
        %vm1740 = vcmp.lt.s32.totalorder %v1719, 3
        %vm1741 = vcmp.lt.s32.totalorder %v1719, 4
        %v1742 = vsel %vm1738, %v1722, %v1725
        %v1743 = vsel %vm1741, %v1731, 2102212464
        %v1744 = vsel %vm1740, %v1728, %v1743
        %v1745 = vsel %vm1739, %v1742, %v1744
        %v1746 = vsel %vm1738, %v1725, %v1728
        %v1747 = vsel %vm1741, %v1734, 920167782
        %v1748 = vsel %vm1740, %v1731, %v1747
        %v1749 = vsel %vm1739, %v1746, %v1748
        %v1750 = vsel %vm1738, %v1728, %v1731
        %v1751 = vsel %vm1741, %v1737, 1326507024
        %v1752 = vsel %vm1740, %v1734, %v1751
        %v1753 = vsel %vm1739, %v1750, %v1752
        %v1754 = vshll.u32 %v1714, 8
        %v1755 = vmul.u32.u64.compose %v1754, %v1753
        %v1756 = vextract.low.u32 %v1755
        %v1757 = vextract.high.u32 %v1755
        %v1758 = vmul.u32.u64.compose %v1754, %v1749
        %v1759 = vextract.low.u32 %v1758
        %v1760 = vextract.high.u32 %v1758
        %v1761 = vmul.u32 %v1754, %v1745
        %v1762 = vadd.s32 %v1757, %v1759
        %vm1763 = vc.u32 %v1757, %v1759
        %v1764 = vadd.s32 %v1760, 1
        %v1765 = vsel %vm1763, %v1764, %v1760
        %v1766 = vadd.s32 %v1761, %v1765
        %v1767 = vadd.s32 %v1766, 536870912
        %v1768 = vshrl.u32 %v1767, 30
        %v1769 = vshll.u32 %v1768, 30
        %v1770 = vsub.s32 %v1766, %v1769
        %vm1771 = vcmp.lt.s32.totalorder %v1770, 0
        %v1772 = vsub.s32 0, %v1770
        %v1773 = vsel %vm1771, %v1772, %v1770
        %v1774 = vclz %v1773
        %v1775 = vsub.s32 %v1774, 2
        %vm1776 = vcmp.gt.s32.totalorder 0, %v1775
        %v1777 = vsel %vm1776, 0, %v1775
        %v1778 = vsub.s32 32, %v1777
        %v1779 = vshll.u32 %v1770, %v1777
        %v1780 = vshrl.u32 %v1762, %v1778
        %v1781 = vor.u32 %v1779, %v1780
        %v1782 = vsub.s32 4294967266, %v1777
        %v1783 = vadd.s32 %v1782, 127
        %v1784 = vshll.u32 %v1783, 23
        %v1785 = vor.u32 4788187, %v1784
        %v1786 = vand.u32 2147483647, %v1785
        %v1788 = vcvt.s32.f32 %v1781
        %v1789 = vmul.f32 %v1788, %v1786
        %v1790 = vxor.u32 %v1789, 2147483648
        %v1791 = vsel %vm1708, %v1790, %v1789
        %v1792 = vsub.s32 4, %v1768
        %v1793 = vsel %vm1708, %v1792, %v1768
        %v1794 = vsel %vm1707, %v1030, %v1791
        %v1795 = vsel %vm1707, 0, %v1793
        %v1796 = vcosq.f32.pop %v1794
        %v1797 = vsinq.f32.pop %v1794
        %vm1798 = vweird.f32 %v1030
        %v1799 = vand.u32 %v1795, 3
        %vm1800 = vcmp.lt.s32.totalorder %v1799, 2
        %vm1801 = vcmp.eq.s32.totalorder %v1799, 0
        %v1802 = vxor.u32 %v1797, 2147483648
        %v1803 = vsel %vm1801, %v1796, %v1802
        %vm1804 = vcmp.eq.s32.totalorder %v1799, 2
        %v1805 = vxor.u32 %v1796, 2147483648
        %v1806 = vsel %vm1804, %v1805, %v1797
        %v1807 = vsel %vm1800, %v1803, %v1806
        %v1808 = vsel %vm1798, nan, %v1807
        %v1809 = vand.u32 2147483647, %v1031
        %vm1810 = vcmp.le.f32.partialorder %v1809, 0.7853982
        %vm1811 = vcmp.lt.s32.totalorder %v1031, 0
        %v1812 = vand.u32 %v1031, 2139095040
        %v1813 = vshrl.u32 %v1812, 23
        %v1814 = vsub.s32 %v1813, 127
        %v1815 = vand.u32 2147483647, %v1031
        %v1816 = vand.u32 %v1815, 8388607
        %v1817 = vor.u32 %v1816, 8388608
        %v1818 = vsub.s32 0, %v1817
        %v1819 = vadd.s32 %v1814, 1
        %vm1820 = vcmp.gt.s32.totalorder %v1819, 0
        %v1821 = vsel %vm1820, %v1819, 0
        %v1822 = vshrl.u32 %v1821, 5
        %v1823 = vand.u32 %v1821, 31
        %v1824 = vsub.s32 32, %v1823
        %v1825 = vshrl.u32 683565275, %v1824
        %v1826 = vshll.u32 683565275, %v1823
        %v1827 = vshrl.u32 2475754826, %v1824
        %v1828 = vor.u32 %v1826, %v1827
        %v1829 = vshll.u32 2475754826, %v1823
        %v1830 = vshrl.u32 2131351028, %v1824
        %v1831 = vor.u32 %v1829, %v1830
        %v1832 = vshll.u32 2131351028, %v1823
        %v1833 = vshrl.u32 2102212464, %v1824
        %v1834 = vor.u32 %v1832, %v1833
        %v1835 = vshll.u32 2102212464, %v1823
        %v1836 = vshrl.u32 920167782, %v1824
        %v1837 = vor.u32 %v1835, %v1836
        %v1838 = vshll.u32 920167782, %v1823
        %v1839 = vshrl.u32 1326507024, %v1824
        %v1840 = vor.u32 %v1838, %v1839
        %vm1841 = vcmp.lt.s32.totalorder %v1822, 1
        %vm1842 = vcmp.lt.s32.totalorder %v1822, 2
        %vm1843 = vcmp.lt.s32.totalorder %v1822, 3
        %vm1844 = vcmp.lt.s32.totalorder %v1822, 4
        %v1845 = vsel %vm1841, %v1825, %v1828
        %v1846 = vsel %vm1844, %v1834, 2102212464
        %v1847 = vsel %vm1843, %v1831, %v1846
        %v1848 = vsel %vm1842, %v1845, %v1847
        %v1849 = vsel %vm1841, %v1828, %v1831
        %v1850 = vsel %vm1844, %v1837, 920167782
        %v1851 = vsel %vm1843, %v1834, %v1850
        %v1852 = vsel %vm1842, %v1849, %v1851
        %v1853 = vsel %vm1841, %v1831, %v1834
        %v1854 = vsel %vm1844, %v1840, 1326507024
        %v1855 = vsel %vm1843, %v1837, %v1854
        %v1856 = vsel %vm1842, %v1853, %v1855
        %v1857 = vshll.u32 %v1817, 8
        %v1858 = vmul.u32.u64.compose %v1857, %v1856
        %v1859 = vextract.low.u32 %v1858
        %v1860 = vextract.high.u32 %v1858
        %v1861 = vmul.u32.u64.compose %v1857, %v1852
        %v1862 = vextract.low.u32 %v1861
        %v1863 = vextract.high.u32 %v1861
        %v1864 = vmul.u32 %v1857, %v1848
        %v1865 = vadd.s32 %v1860, %v1862
        %vm1866 = vc.u32 %v1860, %v1862
        %v1867 = vadd.s32 %v1863, 1
        %v1868 = vsel %vm1866, %v1867, %v1863
        %v1869 = vadd.s32 %v1864, %v1868
        %v1870 = vadd.s32 %v1869, 536870912
        %v1871 = vshrl.u32 %v1870, 30
        %v1872 = vshll.u32 %v1871, 30
        %v1873 = vsub.s32 %v1869, %v1872
        %vm1874 = vcmp.lt.s32.totalorder %v1873, 0
        %v1875 = vsub.s32 0, %v1873
        %v1876 = vsel %vm1874, %v1875, %v1873
        %v1877 = vclz %v1876
        %v1878 = vsub.s32 %v1877, 2
        %vm1879 = vcmp.gt.s32.totalorder 0, %v1878
        %v1880 = vsel %vm1879, 0, %v1878
        %v1881 = vsub.s32 32, %v1880
        %v1882 = vshll.u32 %v1873, %v1880
        %v1883 = vshrl.u32 %v1865, %v1881
        %v1884 = vor.u32 %v1882, %v1883
        %v1885 = vsub.s32 4294967266, %v1880
        %v1886 = vadd.s32 %v1885, 127
        %v1887 = vshll.u32 %v1886, 23
        %v1888 = vor.u32 4788187, %v1887
        %v1889 = vand.u32 2147483647, %v1888
        %v1891 = vcvt.s32.f32 %v1884
        %v1892 = vmul.f32 %v1891, %v1889
        %v1893 = vxor.u32 %v1892, 2147483648
        %v1894 = vsel %vm1811, %v1893, %v1892
        %v1895 = vsub.s32 4, %v1871
        %v1896 = vsel %vm1811, %v1895, %v1871
        %v1897 = vsel %vm1810, %v1031, %v1894
        %v1898 = vsel %vm1810, 0, %v1896
        %v1899 = vcosq.f32.pop %v1897
        %v1900 = vsinq.f32.pop %v1897
        %vm1901 = vweird.f32 %v1031
        %v1902 = vand.u32 %v1898, 3
        %vm1903 = vcmp.lt.s32.totalorder %v1902, 2
        %vm1904 = vcmp.eq.s32.totalorder %v1902, 0
        %v1905 = vxor.u32 %v1900, 2147483648
        %v1906 = vsel %vm1904, %v1899, %v1905
        %vm1907 = vcmp.eq.s32.totalorder %v1902, 2
        %v1908 = vxor.u32 %v1899, 2147483648
        %v1909 = vsel %vm1907, %v1908, %v1900
        %v1910 = vsel %vm1903, %v1906, %v1909
        %v1911 = vsel %vm1901, nan, %v1910
        %v1912 = vand.u32 2147483647, %v1032
        %vm1913 = vcmp.le.f32.partialorder %v1912, 0.7853982
        %vm1914 = vcmp.lt.s32.totalorder %v1032, 0
        %v1915 = vand.u32 %v1032, 2139095040
        %v1916 = vshrl.u32 %v1915, 23
        %v1917 = vsub.s32 %v1916, 127
        %v1918 = vand.u32 2147483647, %v1032
        %v1919 = vand.u32 %v1918, 8388607
        %v1920 = vor.u32 %v1919, 8388608
        %v1921 = vsub.s32 0, %v1920
        %v1922 = vadd.s32 %v1917, 1
        %vm1923 = vcmp.gt.s32.totalorder %v1922, 0
        %v1924 = vsel %vm1923, %v1922, 0
        %v1925 = vshrl.u32 %v1924, 5
        %v1926 = vand.u32 %v1924, 31
        %v1927 = vsub.s32 32, %v1926
        %v1928 = vshrl.u32 683565275, %v1927
        %v1929 = vshll.u32 683565275, %v1926
        %v1930 = vshrl.u32 2475754826, %v1927
        %v1931 = vor.u32 %v1929, %v1930
        %v1932 = vshll.u32 2475754826, %v1926
        %v1933 = vshrl.u32 2131351028, %v1927
        %v1934 = vor.u32 %v1932, %v1933
        %v1935 = vshll.u32 2131351028, %v1926
        %v1936 = vshrl.u32 2102212464, %v1927
        %v1937 = vor.u32 %v1935, %v1936
        %v1938 = vshll.u32 2102212464, %v1926
        %v1939 = vshrl.u32 920167782, %v1927
        %v1940 = vor.u32 %v1938, %v1939
        %v1941 = vshll.u32 920167782, %v1926
        %v1942 = vshrl.u32 1326507024, %v1927
        %v1943 = vor.u32 %v1941, %v1942
        %vm1944 = vcmp.lt.s32.totalorder %v1925, 1
        %vm1945 = vcmp.lt.s32.totalorder %v1925, 2
        %vm1946 = vcmp.lt.s32.totalorder %v1925, 3
        %vm1947 = vcmp.lt.s32.totalorder %v1925, 4
        %v1948 = vsel %vm1944, %v1928, %v1931
        %v1949 = vsel %vm1947, %v1937, 2102212464
        %v1950 = vsel %vm1946, %v1934, %v1949
        %v1951 = vsel %vm1945, %v1948, %v1950
        %v1952 = vsel %vm1944, %v1931, %v1934
        %v1953 = vsel %vm1947, %v1940, 920167782
        %v1954 = vsel %vm1946, %v1937, %v1953
        %v1955 = vsel %vm1945, %v1952, %v1954
        %v1956 = vsel %vm1944, %v1934, %v1937
        %v1957 = vsel %vm1947, %v1943, 1326507024
        %v1958 = vsel %vm1946, %v1940, %v1957
        %v1959 = vsel %vm1945, %v1956, %v1958
        %v1960 = vshll.u32 %v1920, 8
        %v1961 = vmul.u32.u64.compose %v1960, %v1959
        %v1962 = vextract.low.u32 %v1961
        %v1963 = vextract.high.u32 %v1961
        %v1964 = vmul.u32.u64.compose %v1960, %v1955
        %v1965 = vextract.low.u32 %v1964
        %v1966 = vextract.high.u32 %v1964
        %v1967 = vmul.u32 %v1960, %v1951
        %v1968 = vadd.s32 %v1963, %v1965
        %vm1969 = vc.u32 %v1963, %v1965
        %v1970 = vadd.s32 %v1966, 1
        %v1971 = vsel %vm1969, %v1970, %v1966
        %v1972 = vadd.s32 %v1967, %v1971
        %v1973 = vadd.s32 %v1972, 536870912
        %v1974 = vshrl.u32 %v1973, 30
        %v1975 = vshll.u32 %v1974, 30
        %v1976 = vsub.s32 %v1972, %v1975
        %vm1977 = vcmp.lt.s32.totalorder %v1976, 0
        %v1978 = vsub.s32 0, %v1976
        %v1979 = vsel %vm1977, %v1978, %v1976
        %v1980 = vclz %v1979
        %v1981 = vsub.s32 %v1980, 2
        %vm1982 = vcmp.gt.s32.totalorder 0, %v1981
        %v1983 = vsel %vm1982, 0, %v1981
        %v1984 = vsub.s32 32, %v1983
        %v1985 = vshll.u32 %v1976, %v1983
        %v1986 = vshrl.u32 %v1968, %v1984
        %v1987 = vor.u32 %v1985, %v1986
        %v1988 = vsub.s32 4294967266, %v1983
        %v1989 = vadd.s32 %v1988, 127
        %v1990 = vshll.u32 %v1989, 23
        %v1991 = vor.u32 4788187, %v1990
        %v1992 = vand.u32 2147483647, %v1991
        %v1994 = vcvt.s32.f32 %v1987
        %v1995 = vmul.f32 %v1994, %v1992
        %v1996 = vxor.u32 %v1995, 2147483648
        %v1997 = vsel %vm1914, %v1996, %v1995
        %v1998 = vsub.s32 4, %v1974
        %v1999 = vsel %vm1914, %v1998, %v1974
        %v2000 = vsel %vm1913, %v1032, %v1997
        %v2001 = vsel %vm1913, 0, %v1999
        %v2002 = vcosq.f32.pop %v2000
        %v2003 = vsinq.f32.pop %v2000
        %vm2004 = vweird.f32 %v1032
        %v2005 = vand.u32 %v2001, 3
        %vm2006 = vcmp.lt.s32.totalorder %v2005, 2
        %vm2007 = vcmp.eq.s32.totalorder %v2005, 0
        %v2008 = vxor.u32 %v2003, 2147483648
        %v2009 = vsel %vm2007, %v2002, %v2008
        %vm2010 = vcmp.eq.s32.totalorder %v2005, 2
        %v2011 = vxor.u32 %v2002, 2147483648
        %v2012 = vsel %vm2010, %v2011, %v2003
        %v2013 = vsel %vm2006, %v2009, %v2012
        %v2014 = vsel %vm2004, nan, %v2013
        %v2015 = vand.u32 2147483647, %v1033
        %vm2016 = vcmp.le.f32.partialorder %v2015, 0.7853982
        %vm2017 = vcmp.lt.s32.totalorder %v1033, 0
        %v2018 = vand.u32 %v1033, 2139095040
        %v2019 = vshrl.u32 %v2018, 23
        %v2020 = vsub.s32 %v2019, 127
        %v2021 = vand.u32 2147483647, %v1033
        %v2022 = vand.u32 %v2021, 8388607
        %v2023 = vor.u32 %v2022, 8388608
        %v2024 = vsub.s32 0, %v2023
        %v2025 = vadd.s32 %v2020, 1
        %vm2026 = vcmp.gt.s32.totalorder %v2025, 0
        %v2027 = vsel %vm2026, %v2025, 0
        %v2028 = vshrl.u32 %v2027, 5
        %v2029 = vand.u32 %v2027, 31
        %v2030 = vsub.s32 32, %v2029
        %v2031 = vshrl.u32 683565275, %v2030
        %v2032 = vshll.u32 683565275, %v2029
        %v2033 = vshrl.u32 2475754826, %v2030
        %v2034 = vor.u32 %v2032, %v2033
        %v2035 = vshll.u32 2475754826, %v2029
        %v2036 = vshrl.u32 2131351028, %v2030
        %v2037 = vor.u32 %v2035, %v2036
        %v2038 = vshll.u32 2131351028, %v2029
        %v2039 = vshrl.u32 2102212464, %v2030
        %v2040 = vor.u32 %v2038, %v2039
        %v2041 = vshll.u32 2102212464, %v2029
        %v2042 = vshrl.u32 920167782, %v2030
        %v2043 = vor.u32 %v2041, %v2042
        %v2044 = vshll.u32 920167782, %v2029
        %v2045 = vshrl.u32 1326507024, %v2030
        %v2046 = vor.u32 %v2044, %v2045
        %vm2047 = vcmp.lt.s32.totalorder %v2028, 1
        %vm2048 = vcmp.lt.s32.totalorder %v2028, 2
        %vm2049 = vcmp.lt.s32.totalorder %v2028, 3
        %vm2050 = vcmp.lt.s32.totalorder %v2028, 4
        %v2051 = vsel %vm2047, %v2031, %v2034
        %v2052 = vsel %vm2050, %v2040, 2102212464
        %v2053 = vsel %vm2049, %v2037, %v2052
        %v2054 = vsel %vm2048, %v2051, %v2053
        %v2055 = vsel %vm2047, %v2034, %v2037
        %v2056 = vsel %vm2050, %v2043, 920167782
        %v2057 = vsel %vm2049, %v2040, %v2056
        %v2058 = vsel %vm2048, %v2055, %v2057
        %v2059 = vsel %vm2047, %v2037, %v2040
        %v2060 = vsel %vm2050, %v2046, 1326507024
        %v2061 = vsel %vm2049, %v2043, %v2060
        %v2062 = vsel %vm2048, %v2059, %v2061
        %v2063 = vshll.u32 %v2023, 8
        %v2064 = vmul.u32.u64.compose %v2063, %v2062
        %v2065 = vextract.low.u32 %v2064
        %v2066 = vextract.high.u32 %v2064
        %v2067 = vmul.u32.u64.compose %v2063, %v2058
        %v2068 = vextract.low.u32 %v2067
        %v2069 = vextract.high.u32 %v2067
        %v2070 = vmul.u32 %v2063, %v2054
        %v2071 = vadd.s32 %v2066, %v2068
        %vm2072 = vc.u32 %v2066, %v2068
        %v2073 = vadd.s32 %v2069, 1
        %v2074 = vsel %vm2072, %v2073, %v2069
        %v2075 = vadd.s32 %v2070, %v2074
        %v2076 = vadd.s32 %v2075, 536870912
        %v2077 = vshrl.u32 %v2076, 30
        %v2078 = vshll.u32 %v2077, 30
        %v2079 = vsub.s32 %v2075, %v2078
        %vm2080 = vcmp.lt.s32.totalorder %v2079, 0
        %v2081 = vsub.s32 0, %v2079
        %v2082 = vsel %vm2080, %v2081, %v2079
        %v2083 = vclz %v2082
        %v2084 = vsub.s32 %v2083, 2
        %vm2085 = vcmp.gt.s32.totalorder 0, %v2084
        %v2086 = vsel %vm2085, 0, %v2084
        %v2087 = vsub.s32 32, %v2086
        %v2088 = vshll.u32 %v2079, %v2086
        %v2089 = vshrl.u32 %v2071, %v2087
        %v2090 = vor.u32 %v2088, %v2089
        %v2091 = vsub.s32 4294967266, %v2086
        %v2092 = vadd.s32 %v2091, 127
        %v2093 = vshll.u32 %v2092, 23
        %v2094 = vor.u32 4788187, %v2093
        %v2095 = vand.u32 2147483647, %v2094
        %v2097 = vcvt.s32.f32 %v2090
        %v2098 = vmul.f32 %v2097, %v2095
        %v2099 = vxor.u32 %v2098, 2147483648
        %v2100 = vsel %vm2017, %v2099, %v2098
        %v2101 = vsub.s32 4, %v2077
        %v2102 = vsel %vm2017, %v2101, %v2077
        %v2103 = vsel %vm2016, %v1033, %v2100
        %v2104 = vsel %vm2016, 0, %v2102
        %v2105 = vcosq.f32.pop %v2103
        %v2106 = vsinq.f32.pop %v2103
        %vm2107 = vweird.f32 %v1033
        %v2108 = vand.u32 %v2104, 3
        %vm2109 = vcmp.lt.s32.totalorder %v2108, 2
        %vm2110 = vcmp.eq.s32.totalorder %v2108, 0
        %v2111 = vxor.u32 %v2106, 2147483648
        %v2112 = vsel %vm2110, %v2105, %v2111
        %vm2113 = vcmp.eq.s32.totalorder %v2108, 2
        %v2114 = vxor.u32 %v2105, 2147483648
        %v2115 = vsel %vm2113, %v2114, %v2106
        %v2116 = vsel %vm2109, %v2112, %v2115
        %v2117 = vsel %vm2107, nan, %v2116
        %v2118 = vand.u32 2147483647, %v1034
        %vm2119 = vcmp.le.f32.partialorder %v2118, 0.7853982
        %vm2120 = vcmp.lt.s32.totalorder %v1034, 0
        %v2121 = vand.u32 %v1034, 2139095040
        %v2122 = vshrl.u32 %v2121, 23
        %v2123 = vsub.s32 %v2122, 127
        %v2124 = vand.u32 2147483647, %v1034
        %v2125 = vand.u32 %v2124, 8388607
        %v2126 = vor.u32 %v2125, 8388608
        %v2127 = vsub.s32 0, %v2126
        %v2128 = vadd.s32 %v2123, 1
        %vm2129 = vcmp.gt.s32.totalorder %v2128, 0
        %v2130 = vsel %vm2129, %v2128, 0
        %v2131 = vshrl.u32 %v2130, 5
        %v2132 = vand.u32 %v2130, 31
        %v2133 = vsub.s32 32, %v2132
        %v2134 = vshrl.u32 683565275, %v2133
        %v2135 = vshll.u32 683565275, %v2132
        %v2136 = vshrl.u32 2475754826, %v2133
        %v2137 = vor.u32 %v2135, %v2136
        %v2138 = vshll.u32 2475754826, %v2132
        %v2139 = vshrl.u32 2131351028, %v2133
        %v2140 = vor.u32 %v2138, %v2139
        %v2141 = vshll.u32 2131351028, %v2132
        %v2142 = vshrl.u32 2102212464, %v2133
        %v2143 = vor.u32 %v2141, %v2142
        %v2144 = vshll.u32 2102212464, %v2132
        %v2145 = vshrl.u32 920167782, %v2133
        %v2146 = vor.u32 %v2144, %v2145
        %v2147 = vshll.u32 920167782, %v2132
        %v2148 = vshrl.u32 1326507024, %v2133
        %v2149 = vor.u32 %v2147, %v2148
        %vm2150 = vcmp.lt.s32.totalorder %v2131, 1
        %vm2151 = vcmp.lt.s32.totalorder %v2131, 2
        %vm2152 = vcmp.lt.s32.totalorder %v2131, 3
        %vm2153 = vcmp.lt.s32.totalorder %v2131, 4
        %v2154 = vsel %vm2150, %v2134, %v2137
        %v2155 = vsel %vm2153, %v2143, 2102212464
        %v2156 = vsel %vm2152, %v2140, %v2155
        %v2157 = vsel %vm2151, %v2154, %v2156
        %v2158 = vsel %vm2150, %v2137, %v2140
        %v2159 = vsel %vm2153, %v2146, 920167782
        %v2160 = vsel %vm2152, %v2143, %v2159
        %v2161 = vsel %vm2151, %v2158, %v2160
        %v2162 = vsel %vm2150, %v2140, %v2143
        %v2163 = vsel %vm2153, %v2149, 1326507024
        %v2164 = vsel %vm2152, %v2146, %v2163
        %v2165 = vsel %vm2151, %v2162, %v2164
        %v2166 = vshll.u32 %v2126, 8
        %v2167 = vmul.u32.u64.compose %v2166, %v2165
        %v2168 = vextract.low.u32 %v2167
        %v2169 = vextract.high.u32 %v2167
        %v2170 = vmul.u32.u64.compose %v2166, %v2161
        %v2171 = vextract.low.u32 %v2170
        %v2172 = vextract.high.u32 %v2170
        %v2173 = vmul.u32 %v2166, %v2157
        %v2174 = vadd.s32 %v2169, %v2171
        %vm2175 = vc.u32 %v2169, %v2171
        %v2176 = vadd.s32 %v2172, 1
        %v2177 = vsel %vm2175, %v2176, %v2172
        %v2178 = vadd.s32 %v2173, %v2177
        %v2179 = vadd.s32 %v2178, 536870912
        %v2180 = vshrl.u32 %v2179, 30
        %v2181 = vshll.u32 %v2180, 30
        %v2182 = vsub.s32 %v2178, %v2181
        %vm2183 = vcmp.lt.s32.totalorder %v2182, 0
        %v2184 = vsub.s32 0, %v2182
        %v2185 = vsel %vm2183, %v2184, %v2182
        %v2186 = vclz %v2185
        %v2187 = vsub.s32 %v2186, 2
        %vm2188 = vcmp.gt.s32.totalorder 0, %v2187
        %v2189 = vsel %vm2188, 0, %v2187
        %v2190 = vsub.s32 32, %v2189
        %v2191 = vshll.u32 %v2182, %v2189
        %v2192 = vshrl.u32 %v2174, %v2190
        %v2193 = vor.u32 %v2191, %v2192
        %v2194 = vsub.s32 4294967266, %v2189
        %v2195 = vadd.s32 %v2194, 127
        %v2196 = vshll.u32 %v2195, 23
        %v2197 = vor.u32 4788187, %v2196
        %v2198 = vand.u32 2147483647, %v2197
        %v2200 = vcvt.s32.f32 %v2193
        %v2201 = vmul.f32 %v2200, %v2198
        %v2202 = vxor.u32 %v2201, 2147483648
        %v2203 = vsel %vm2120, %v2202, %v2201
        %v2204 = vsub.s32 4, %v2180
        %v2205 = vsel %vm2120, %v2204, %v2180
        %v2206 = vsel %vm2119, %v1034, %v2203
        %v2207 = vsel %vm2119, 0, %v2205
        %v2208 = vcosq.f32.pop %v2206
        %v2209 = vsinq.f32.pop %v2206
        %vm2210 = vweird.f32 %v1034
        %v2211 = vand.u32 %v2207, 3
        %vm2212 = vcmp.lt.s32.totalorder %v2211, 2
        %vm2213 = vcmp.eq.s32.totalorder %v2211, 0
        %v2214 = vxor.u32 %v2209, 2147483648
        %v2215 = vsel %vm2213, %v2208, %v2214
        %vm2216 = vcmp.eq.s32.totalorder %v2211, 2
        %v2217 = vxor.u32 %v2208, 2147483648
        %v2218 = vsel %vm2216, %v2217, %v2209
        %v2219 = vsel %vm2212, %v2215, %v2218
        %v2220 = vsel %vm2210, nan, %v2219
        %v2221 = vand.u32 2147483647, %v1035
        %vm2222 = vcmp.le.f32.partialorder %v2221, 0.7853982
        %vm2223 = vcmp.lt.s32.totalorder %v1035, 0
        %v2224 = vand.u32 %v1035, 2139095040
        %v2225 = vshrl.u32 %v2224, 23
        %v2226 = vsub.s32 %v2225, 127
        %v2227 = vand.u32 2147483647, %v1035
        %v2228 = vand.u32 %v2227, 8388607
        %v2229 = vor.u32 %v2228, 8388608
        %v2230 = vsub.s32 0, %v2229
        %v2231 = vadd.s32 %v2226, 1
        %vm2232 = vcmp.gt.s32.totalorder %v2231, 0
        %v2233 = vsel %vm2232, %v2231, 0
        %v2234 = vshrl.u32 %v2233, 5
        %v2235 = vand.u32 %v2233, 31
        %v2236 = vsub.s32 32, %v2235
        %v2237 = vshrl.u32 683565275, %v2236
        %v2238 = vshll.u32 683565275, %v2235
        %v2239 = vshrl.u32 2475754826, %v2236
        %v2240 = vor.u32 %v2238, %v2239
        %v2241 = vshll.u32 2475754826, %v2235
        %v2242 = vshrl.u32 2131351028, %v2236
        %v2243 = vor.u32 %v2241, %v2242
        %v2244 = vshll.u32 2131351028, %v2235
        %v2245 = vshrl.u32 2102212464, %v2236
        %v2246 = vor.u32 %v2244, %v2245
        %v2247 = vshll.u32 2102212464, %v2235
        %v2248 = vshrl.u32 920167782, %v2236
        %v2249 = vor.u32 %v2247, %v2248
        %v2250 = vshll.u32 920167782, %v2235
        %v2251 = vshrl.u32 1326507024, %v2236
        %v2252 = vor.u32 %v2250, %v2251
        %vm2253 = vcmp.lt.s32.totalorder %v2234, 1
        %vm2254 = vcmp.lt.s32.totalorder %v2234, 2
        %vm2255 = vcmp.lt.s32.totalorder %v2234, 3
        %vm2256 = vcmp.lt.s32.totalorder %v2234, 4
        %v2257 = vsel %vm2253, %v2237, %v2240
        %v2258 = vsel %vm2256, %v2246, 2102212464
        %v2259 = vsel %vm2255, %v2243, %v2258
        %v2260 = vsel %vm2254, %v2257, %v2259
        %v2261 = vsel %vm2253, %v2240, %v2243
        %v2262 = vsel %vm2256, %v2249, 920167782
        %v2263 = vsel %vm2255, %v2246, %v2262
        %v2264 = vsel %vm2254, %v2261, %v2263
        %v2265 = vsel %vm2253, %v2243, %v2246
        %v2266 = vsel %vm2256, %v2252, 1326507024
        %v2267 = vsel %vm2255, %v2249, %v2266
        %v2268 = vsel %vm2254, %v2265, %v2267
        %v2269 = vshll.u32 %v2229, 8
        %v2270 = vmul.u32.u64.compose %v2269, %v2268
        %v2271 = vextract.low.u32 %v2270
        %v2272 = vextract.high.u32 %v2270
        %v2273 = vmul.u32.u64.compose %v2269, %v2264
        %v2274 = vextract.low.u32 %v2273
        %v2275 = vextract.high.u32 %v2273
        %v2276 = vmul.u32 %v2269, %v2260
        %v2277 = vadd.s32 %v2272, %v2274
        %vm2278 = vc.u32 %v2272, %v2274
        %v2279 = vadd.s32 %v2275, 1
        %v2280 = vsel %vm2278, %v2279, %v2275
        %v2281 = vadd.s32 %v2276, %v2280
        %v2282 = vadd.s32 %v2281, 536870912
        %v2283 = vshrl.u32 %v2282, 30
        %v2284 = vshll.u32 %v2283, 30
        %v2285 = vsub.s32 %v2281, %v2284
        %vm2286 = vcmp.lt.s32.totalorder %v2285, 0
        %v2287 = vsub.s32 0, %v2285
        %v2288 = vsel %vm2286, %v2287, %v2285
        %v2289 = vclz %v2288
        %v2290 = vsub.s32 %v2289, 2
        %vm2291 = vcmp.gt.s32.totalorder 0, %v2290
        %v2292 = vsel %vm2291, 0, %v2290
        %v2293 = vsub.s32 32, %v2292
        %v2294 = vshll.u32 %v2285, %v2292
        %v2295 = vshrl.u32 %v2277, %v2293
        %v2296 = vor.u32 %v2294, %v2295
        %v2297 = vsub.s32 4294967266, %v2292
        %v2298 = vadd.s32 %v2297, 127
        %v2299 = vshll.u32 %v2298, 23
        %v2300 = vor.u32 4788187, %v2299
        %v2301 = vand.u32 2147483647, %v2300
        %v2303 = vcvt.s32.f32 %v2296
        %v2304 = vmul.f32 %v2303, %v2301
        %v2305 = vxor.u32 %v2304, 2147483648
        %v2306 = vsel %vm2223, %v2305, %v2304
        %v2307 = vsub.s32 4, %v2283
        %v2308 = vsel %vm2223, %v2307, %v2283
        %v2309 = vsel %vm2222, %v1035, %v2306
        %v2310 = vsel %vm2222, 0, %v2308
        %v2311 = vcosq.f32.pop %v2309
        %v2312 = vsinq.f32.pop %v2309
        %vm2313 = vweird.f32 %v1035
        %v2314 = vand.u32 %v2310, 3
        %vm2315 = vcmp.lt.s32.totalorder %v2314, 2
        %vm2316 = vcmp.eq.s32.totalorder %v2314, 0
        %v2317 = vxor.u32 %v2312, 2147483648
        %v2318 = vsel %vm2316, %v2311, %v2317
        %vm2319 = vcmp.eq.s32.totalorder %v2314, 2
        %v2320 = vxor.u32 %v2311, 2147483648
        %v2321 = vsel %vm2319, %v2320, %v2312
        %v2322 = vsel %vm2315, %v2318, %v2321
        %v2323 = vsel %vm2313, nan, %v2322
        %v2324 = vand.u32 2147483647, %v1036
        %vm2325 = vcmp.le.f32.partialorder %v2324, 0.7853982
        %vm2326 = vcmp.lt.s32.totalorder %v1036, 0
        %v2327 = vand.u32 %v1036, 2139095040
        %v2328 = vshrl.u32 %v2327, 23
        %v2329 = vsub.s32 %v2328, 127
        %v2330 = vand.u32 2147483647, %v1036
        %v2331 = vand.u32 %v2330, 8388607
        %v2332 = vor.u32 %v2331, 8388608
        %v2333 = vsub.s32 0, %v2332
        %v2334 = vadd.s32 %v2329, 1
        %vm2335 = vcmp.gt.s32.totalorder %v2334, 0
        %v2336 = vsel %vm2335, %v2334, 0
        %v2337 = vshrl.u32 %v2336, 5
        %v2338 = vand.u32 %v2336, 31
        %v2339 = vsub.s32 32, %v2338
        %v2340 = vshrl.u32 683565275, %v2339
        %v2341 = vshll.u32 683565275, %v2338
        %v2342 = vshrl.u32 2475754826, %v2339
        %v2343 = vor.u32 %v2341, %v2342
        %v2344 = vshll.u32 2475754826, %v2338
        %v2345 = vshrl.u32 2131351028, %v2339
        %v2346 = vor.u32 %v2344, %v2345
        %v2347 = vshll.u32 2131351028, %v2338
        %v2348 = vshrl.u32 2102212464, %v2339
        %v2349 = vor.u32 %v2347, %v2348
        %v2350 = vshll.u32 2102212464, %v2338
        %v2351 = vshrl.u32 920167782, %v2339
        %v2352 = vor.u32 %v2350, %v2351
        %v2353 = vshll.u32 920167782, %v2338
        %v2354 = vshrl.u32 1326507024, %v2339
        %v2355 = vor.u32 %v2353, %v2354
        %vm2356 = vcmp.lt.s32.totalorder %v2337, 1
        %vm2357 = vcmp.lt.s32.totalorder %v2337, 2
        %vm2358 = vcmp.lt.s32.totalorder %v2337, 3
        %vm2359 = vcmp.lt.s32.totalorder %v2337, 4
        %v2360 = vsel %vm2356, %v2340, %v2343
        %v2361 = vsel %vm2359, %v2349, 2102212464
        %v2362 = vsel %vm2358, %v2346, %v2361
        %v2363 = vsel %vm2357, %v2360, %v2362
        %v2364 = vsel %vm2356, %v2343, %v2346
        %v2365 = vsel %vm2359, %v2352, 920167782
        %v2366 = vsel %vm2358, %v2349, %v2365
        %v2367 = vsel %vm2357, %v2364, %v2366
        %v2368 = vsel %vm2356, %v2346, %v2349
        %v2369 = vsel %vm2359, %v2355, 1326507024
        %v2370 = vsel %vm2358, %v2352, %v2369
        %v2371 = vsel %vm2357, %v2368, %v2370
        %v2372 = vshll.u32 %v2332, 8
        %v2373 = vmul.u32.u64.compose %v2372, %v2371
        %v2374 = vextract.low.u32 %v2373
        %v2375 = vextract.high.u32 %v2373
        %v2376 = vmul.u32.u64.compose %v2372, %v2367
        %v2377 = vextract.low.u32 %v2376
        %v2378 = vextract.high.u32 %v2376
        %v2379 = vmul.u32 %v2372, %v2363
        %v2380 = vadd.s32 %v2375, %v2377
        %vm2381 = vc.u32 %v2375, %v2377
        %v2382 = vadd.s32 %v2378, 1
        %v2383 = vsel %vm2381, %v2382, %v2378
        %v2384 = vadd.s32 %v2379, %v2383
        %v2385 = vadd.s32 %v2384, 536870912
        %v2386 = vshrl.u32 %v2385, 30
        %v2387 = vshll.u32 %v2386, 30
        %v2388 = vsub.s32 %v2384, %v2387
        %vm2389 = vcmp.lt.s32.totalorder %v2388, 0
        %v2390 = vsub.s32 0, %v2388
        %v2391 = vsel %vm2389, %v2390, %v2388
        %v2392 = vclz %v2391
        %v2393 = vsub.s32 %v2392, 2
        %vm2394 = vcmp.gt.s32.totalorder 0, %v2393
        %v2395 = vsel %vm2394, 0, %v2393
        %v2396 = vsub.s32 32, %v2395
        %v2397 = vshll.u32 %v2388, %v2395
        %v2398 = vshrl.u32 %v2380, %v2396
        %v2399 = vor.u32 %v2397, %v2398
        %v2400 = vsub.s32 4294967266, %v2395
        %v2401 = vadd.s32 %v2400, 127
        %v2402 = vshll.u32 %v2401, 23
        %v2403 = vor.u32 4788187, %v2402
        %v2404 = vand.u32 2147483647, %v2403
        %v2406 = vcvt.s32.f32 %v2399
        %v2407 = vmul.f32 %v2406, %v2404
        %v2408 = vxor.u32 %v2407, 2147483648
        %v2409 = vsel %vm2326, %v2408, %v2407
        %v2410 = vsub.s32 4, %v2386
        %v2411 = vsel %vm2326, %v2410, %v2386
        %v2412 = vsel %vm2325, %v1036, %v2409
        %v2413 = vsel %vm2325, 0, %v2411
        %v2414 = vcosq.f32.pop %v2412
        %v2415 = vsinq.f32.pop %v2412
        %vm2416 = vweird.f32 %v1036
        %v2417 = vand.u32 %v2413, 3
        %vm2418 = vcmp.lt.s32.totalorder %v2417, 2
        %vm2419 = vcmp.eq.s32.totalorder %v2417, 0
        %v2420 = vxor.u32 %v2415, 2147483648
        %v2421 = vsel %vm2419, %v2414, %v2420
        %vm2422 = vcmp.eq.s32.totalorder %v2417, 2
        %v2423 = vxor.u32 %v2414, 2147483648
        %v2424 = vsel %vm2422, %v2423, %v2415
        %v2425 = vsel %vm2418, %v2421, %v2424
        %v2426 = vsel %vm2416, nan, %v2425
        %v2427 = vand.u32 2147483647, %v1037
        %vm2428 = vcmp.le.f32.partialorder %v2427, 0.7853982
        %vm2429 = vcmp.lt.s32.totalorder %v1037, 0
        %v2430 = vand.u32 %v1037, 2139095040
        %v2431 = vshrl.u32 %v2430, 23
        %v2432 = vsub.s32 %v2431, 127
        %v2433 = vand.u32 2147483647, %v1037
        %v2434 = vand.u32 %v2433, 8388607
        %v2435 = vor.u32 %v2434, 8388608
        %v2436 = vsub.s32 0, %v2435
        %v2437 = vadd.s32 %v2432, 1
        %vm2438 = vcmp.gt.s32.totalorder %v2437, 0
        %v2439 = vsel %vm2438, %v2437, 0
        %v2440 = vshrl.u32 %v2439, 5
        %v2441 = vand.u32 %v2439, 31
        %v2442 = vsub.s32 32, %v2441
        %v2443 = vshrl.u32 683565275, %v2442
        %v2444 = vshll.u32 683565275, %v2441
        %v2445 = vshrl.u32 2475754826, %v2442
        %v2446 = vor.u32 %v2444, %v2445
        %v2447 = vshll.u32 2475754826, %v2441
        %v2448 = vshrl.u32 2131351028, %v2442
        %v2449 = vor.u32 %v2447, %v2448
        %v2450 = vshll.u32 2131351028, %v2441
        %v2451 = vshrl.u32 2102212464, %v2442
        %v2452 = vor.u32 %v2450, %v2451
        %v2453 = vshll.u32 2102212464, %v2441
        %v2454 = vshrl.u32 920167782, %v2442
        %v2455 = vor.u32 %v2453, %v2454
        %v2456 = vshll.u32 920167782, %v2441
        %v2457 = vshrl.u32 1326507024, %v2442
        %v2458 = vor.u32 %v2456, %v2457
        %vm2459 = vcmp.lt.s32.totalorder %v2440, 1
        %vm2460 = vcmp.lt.s32.totalorder %v2440, 2
        %vm2461 = vcmp.lt.s32.totalorder %v2440, 3
        %vm2462 = vcmp.lt.s32.totalorder %v2440, 4
        %v2463 = vsel %vm2459, %v2443, %v2446
        %v2464 = vsel %vm2462, %v2452, 2102212464
        %v2465 = vsel %vm2461, %v2449, %v2464
        %v2466 = vsel %vm2460, %v2463, %v2465
        %v2467 = vsel %vm2459, %v2446, %v2449
        %v2468 = vsel %vm2462, %v2455, 920167782
        %v2469 = vsel %vm2461, %v2452, %v2468
        %v2470 = vsel %vm2460, %v2467, %v2469
        %v2471 = vsel %vm2459, %v2449, %v2452
        %v2472 = vsel %vm2462, %v2458, 1326507024
        %v2473 = vsel %vm2461, %v2455, %v2472
        %v2474 = vsel %vm2460, %v2471, %v2473
        %v2475 = vshll.u32 %v2435, 8
        %v2476 = vmul.u32.u64.compose %v2475, %v2474
        %v2477 = vextract.low.u32 %v2476
        %v2478 = vextract.high.u32 %v2476
        %v2479 = vmul.u32.u64.compose %v2475, %v2470
        %v2480 = vextract.low.u32 %v2479
        %v2481 = vextract.high.u32 %v2479
        %v2482 = vmul.u32 %v2475, %v2466
        %v2483 = vadd.s32 %v2478, %v2480
        %vm2484 = vc.u32 %v2478, %v2480
        %v2485 = vadd.s32 %v2481, 1
        %v2486 = vsel %vm2484, %v2485, %v2481
        %v2487 = vadd.s32 %v2482, %v2486
        %v2488 = vadd.s32 %v2487, 536870912
        %v2489 = vshrl.u32 %v2488, 30
        %v2490 = vshll.u32 %v2489, 30
        %v2491 = vsub.s32 %v2487, %v2490
        %vm2492 = vcmp.lt.s32.totalorder %v2491, 0
        %v2493 = vsub.s32 0, %v2491
        %v2494 = vsel %vm2492, %v2493, %v2491
        %v2495 = vclz %v2494
        %v2496 = vsub.s32 %v2495, 2
        %vm2497 = vcmp.gt.s32.totalorder 0, %v2496
        %v2498 = vsel %vm2497, 0, %v2496
        %v2499 = vsub.s32 32, %v2498
        %v2500 = vshll.u32 %v2491, %v2498
        %v2501 = vshrl.u32 %v2483, %v2499
        %v2502 = vor.u32 %v2500, %v2501
        %v2503 = vsub.s32 4294967266, %v2498
        %v2504 = vadd.s32 %v2503, 127
        %v2505 = vshll.u32 %v2504, 23
        %v2506 = vor.u32 4788187, %v2505
        %v2507 = vand.u32 2147483647, %v2506
        %v2509 = vcvt.s32.f32 %v2502
        %v2510 = vmul.f32 %v2509, %v2507
        %v2511 = vxor.u32 %v2510, 2147483648
        %v2512 = vsel %vm2429, %v2511, %v2510
        %v2513 = vsub.s32 4, %v2489
        %v2514 = vsel %vm2429, %v2513, %v2489
        %v2515 = vsel %vm2428, %v1037, %v2512
        %v2516 = vsel %vm2428, 0, %v2514
        %v2517 = vcosq.f32.pop %v2515
        %v2518 = vsinq.f32.pop %v2515
        %vm2519 = vweird.f32 %v1037
        %v2520 = vand.u32 %v2516, 3
        %vm2521 = vcmp.lt.s32.totalorder %v2520, 2
        %vm2522 = vcmp.eq.s32.totalorder %v2520, 0
        %v2523 = vxor.u32 %v2518, 2147483648
        %v2524 = vsel %vm2522, %v2517, %v2523
        %vm2525 = vcmp.eq.s32.totalorder %v2520, 2
        %v2526 = vxor.u32 %v2517, 2147483648
        %v2527 = vsel %vm2525, %v2526, %v2518
        %v2528 = vsel %vm2521, %v2524, %v2527
        %v2529 = vsel %vm2519, nan, %v2528
        %v2530 = vand.u32 2147483647, %v1038
        %vm2531 = vcmp.le.f32.partialorder %v2530, 0.7853982
        %vm2532 = vcmp.lt.s32.totalorder %v1038, 0
        %v2533 = vand.u32 %v1038, 2139095040
        %v2534 = vshrl.u32 %v2533, 23
        %v2535 = vsub.s32 %v2534, 127
        %v2536 = vand.u32 2147483647, %v1038
        %v2537 = vand.u32 %v2536, 8388607
        %v2538 = vor.u32 %v2537, 8388608
        %v2539 = vsub.s32 0, %v2538
        %v2540 = vadd.s32 %v2535, 1
        %vm2541 = vcmp.gt.s32.totalorder %v2540, 0
        %v2542 = vsel %vm2541, %v2540, 0
        %v2543 = vshrl.u32 %v2542, 5
        %v2544 = vand.u32 %v2542, 31
        %v2545 = vsub.s32 32, %v2544
        %v2546 = vshrl.u32 683565275, %v2545
        %v2547 = vshll.u32 683565275, %v2544
        %v2548 = vshrl.u32 2475754826, %v2545
        %v2549 = vor.u32 %v2547, %v2548
        %v2550 = vshll.u32 2475754826, %v2544
        %v2551 = vshrl.u32 2131351028, %v2545
        %v2552 = vor.u32 %v2550, %v2551
        %v2553 = vshll.u32 2131351028, %v2544
        %v2554 = vshrl.u32 2102212464, %v2545
        %v2555 = vor.u32 %v2553, %v2554
        %v2556 = vshll.u32 2102212464, %v2544
        %v2557 = vshrl.u32 920167782, %v2545
        %v2558 = vor.u32 %v2556, %v2557
        %v2559 = vshll.u32 920167782, %v2544
        %v2560 = vshrl.u32 1326507024, %v2545
        %v2561 = vor.u32 %v2559, %v2560
        %vm2562 = vcmp.lt.s32.totalorder %v2543, 1
        %vm2563 = vcmp.lt.s32.totalorder %v2543, 2
        %vm2564 = vcmp.lt.s32.totalorder %v2543, 3
        %vm2565 = vcmp.lt.s32.totalorder %v2543, 4
        %v2566 = vsel %vm2562, %v2546, %v2549
        %v2567 = vsel %vm2565, %v2555, 2102212464
        %v2568 = vsel %vm2564, %v2552, %v2567
        %v2569 = vsel %vm2563, %v2566, %v2568
        %v2570 = vsel %vm2562, %v2549, %v2552
        %v2571 = vsel %vm2565, %v2558, 920167782
        %v2572 = vsel %vm2564, %v2555, %v2571
        %v2573 = vsel %vm2563, %v2570, %v2572
        %v2574 = vsel %vm2562, %v2552, %v2555
        %v2575 = vsel %vm2565, %v2561, 1326507024
        %v2576 = vsel %vm2564, %v2558, %v2575
        %v2577 = vsel %vm2563, %v2574, %v2576
        %v2578 = vshll.u32 %v2538, 8
        %v2579 = vmul.u32.u64.compose %v2578, %v2577
        %v2580 = vextract.low.u32 %v2579
        %v2581 = vextract.high.u32 %v2579
        %v2582 = vmul.u32.u64.compose %v2578, %v2573
        %v2583 = vextract.low.u32 %v2582
        %v2584 = vextract.high.u32 %v2582
        %v2585 = vmul.u32 %v2578, %v2569
        %v2586 = vadd.s32 %v2581, %v2583
        %vm2587 = vc.u32 %v2581, %v2583
        %v2588 = vadd.s32 %v2584, 1
        %v2589 = vsel %vm2587, %v2588, %v2584
        %v2590 = vadd.s32 %v2585, %v2589
        %v2591 = vadd.s32 %v2590, 536870912
        %v2592 = vshrl.u32 %v2591, 30
        %v2593 = vshll.u32 %v2592, 30
        %v2594 = vsub.s32 %v2590, %v2593
        %vm2595 = vcmp.lt.s32.totalorder %v2594, 0
        %v2596 = vsub.s32 0, %v2594
        %v2597 = vsel %vm2595, %v2596, %v2594
        %v2598 = vclz %v2597
        %v2599 = vsub.s32 %v2598, 2
        %vm2600 = vcmp.gt.s32.totalorder 0, %v2599
        %v2601 = vsel %vm2600, 0, %v2599
        %v2602 = vsub.s32 32, %v2601
        %v2603 = vshll.u32 %v2594, %v2601
        %v2604 = vshrl.u32 %v2586, %v2602
        %v2605 = vor.u32 %v2603, %v2604
        %v2606 = vsub.s32 4294967266, %v2601
        %v2607 = vadd.s32 %v2606, 127
        %v2608 = vshll.u32 %v2607, 23
        %v2609 = vor.u32 4788187, %v2608
        %v2610 = vand.u32 2147483647, %v2609
        %v2612 = vcvt.s32.f32 %v2605
        %v2613 = vmul.f32 %v2612, %v2610
        %v2614 = vxor.u32 %v2613, 2147483648
        %v2615 = vsel %vm2532, %v2614, %v2613
        %v2616 = vsub.s32 4, %v2592
        %v2617 = vsel %vm2532, %v2616, %v2592
        %v2618 = vsel %vm2531, %v1038, %v2615
        %v2619 = vsel %vm2531, 0, %v2617
        %v2620 = vcosq.f32.pop %v2618
        %v2621 = vsinq.f32.pop %v2618
        %vm2622 = vweird.f32 %v1038
        %v2623 = vand.u32 %v2619, 3
        %vm2624 = vcmp.lt.s32.totalorder %v2623, 2
        %vm2625 = vcmp.eq.s32.totalorder %v2623, 0
        %v2626 = vxor.u32 %v2621, 2147483648
        %v2627 = vsel %vm2625, %v2620, %v2626
        %vm2628 = vcmp.eq.s32.totalorder %v2623, 2
        %v2629 = vxor.u32 %v2620, 2147483648
        %v2630 = vsel %vm2628, %v2629, %v2621
        %v2631 = vsel %vm2624, %v2627, %v2630
        %v2632 = vsel %vm2622, nan, %v2631
        %v2633 = vand.u32 2147483647, %v1039
        %vm2634 = vcmp.le.f32.partialorder %v2633, 0.7853982
        %vm2635 = vcmp.lt.s32.totalorder %v1039, 0
        %v2636 = vand.u32 %v1039, 2139095040
        %v2637 = vshrl.u32 %v2636, 23
        %v2638 = vsub.s32 %v2637, 127
        %v2639 = vand.u32 2147483647, %v1039
        %v2640 = vand.u32 %v2639, 8388607
        %v2641 = vor.u32 %v2640, 8388608
        %v2642 = vsub.s32 0, %v2641
        %v2643 = vadd.s32 %v2638, 1
        %vm2644 = vcmp.gt.s32.totalorder %v2643, 0
        %v2645 = vsel %vm2644, %v2643, 0
        %v2646 = vshrl.u32 %v2645, 5
        %v2647 = vand.u32 %v2645, 31
        %v2648 = vsub.s32 32, %v2647
        %v2649 = vshrl.u32 683565275, %v2648
        %v2650 = vshll.u32 683565275, %v2647
        %v2651 = vshrl.u32 2475754826, %v2648
        %v2652 = vor.u32 %v2650, %v2651
        %v2653 = vshll.u32 2475754826, %v2647
        %v2654 = vshrl.u32 2131351028, %v2648
        %v2655 = vor.u32 %v2653, %v2654
        %v2656 = vshll.u32 2131351028, %v2647
        %v2657 = vshrl.u32 2102212464, %v2648
        %v2658 = vor.u32 %v2656, %v2657
        %v2659 = vshll.u32 2102212464, %v2647
        %v2660 = vshrl.u32 920167782, %v2648
        %v2661 = vor.u32 %v2659, %v2660
        %v2662 = vshll.u32 920167782, %v2647
        %v2663 = vshrl.u32 1326507024, %v2648
        %v2664 = vor.u32 %v2662, %v2663
        %vm2665 = vcmp.lt.s32.totalorder %v2646, 1
        %vm2666 = vcmp.lt.s32.totalorder %v2646, 2
        %vm2667 = vcmp.lt.s32.totalorder %v2646, 3
        %vm2668 = vcmp.lt.s32.totalorder %v2646, 4
        %v2669 = vsel %vm2665, %v2649, %v2652
        %v2670 = vsel %vm2668, %v2658, 2102212464
        %v2671 = vsel %vm2667, %v2655, %v2670
        %v2672 = vsel %vm2666, %v2669, %v2671
        %v2673 = vsel %vm2665, %v2652, %v2655
        %v2674 = vsel %vm2668, %v2661, 920167782
        %v2675 = vsel %vm2667, %v2658, %v2674
        %v2676 = vsel %vm2666, %v2673, %v2675
        %v2677 = vsel %vm2665, %v2655, %v2658
        %v2678 = vsel %vm2668, %v2664, 1326507024
        %v2679 = vsel %vm2667, %v2661, %v2678
        %v2680 = vsel %vm2666, %v2677, %v2679
        %v2681 = vshll.u32 %v2641, 8
        %v2682 = vmul.u32.u64.compose %v2681, %v2680
        %v2683 = vextract.low.u32 %v2682
        %v2684 = vextract.high.u32 %v2682
        %v2685 = vmul.u32.u64.compose %v2681, %v2676
        %v2686 = vextract.low.u32 %v2685
        %v2687 = vextract.high.u32 %v2685
        %v2688 = vmul.u32 %v2681, %v2672
        %v2689 = vadd.s32 %v2684, %v2686
        %vm2690 = vc.u32 %v2684, %v2686
        %v2691 = vadd.s32 %v2687, 1
        %v2692 = vsel %vm2690, %v2691, %v2687
        %v2693 = vadd.s32 %v2688, %v2692
        %v2694 = vadd.s32 %v2693, 536870912
        %v2695 = vshrl.u32 %v2694, 30
        %v2696 = vshll.u32 %v2695, 30
        %v2697 = vsub.s32 %v2693, %v2696
        %vm2698 = vcmp.lt.s32.totalorder %v2697, 0
        %v2699 = vsub.s32 0, %v2697
        %v2700 = vsel %vm2698, %v2699, %v2697
        %v2701 = vclz %v2700
        %v2702 = vsub.s32 %v2701, 2
        %vm2703 = vcmp.gt.s32.totalorder 0, %v2702
        %v2704 = vsel %vm2703, 0, %v2702
        %v2705 = vsub.s32 32, %v2704
        %v2706 = vshll.u32 %v2697, %v2704
        %v2707 = vshrl.u32 %v2689, %v2705
        %v2708 = vor.u32 %v2706, %v2707
        %v2709 = vsub.s32 4294967266, %v2704
        %v2710 = vadd.s32 %v2709, 127
        %v2711 = vshll.u32 %v2710, 23
        %v2712 = vor.u32 4788187, %v2711
        %v2713 = vand.u32 2147483647, %v2712
        %v2715 = vcvt.s32.f32 %v2708
        %v2716 = vmul.f32 %v2715, %v2713
        %v2717 = vxor.u32 %v2716, 2147483648
        %v2718 = vsel %vm2635, %v2717, %v2716
        %v2719 = vsub.s32 4, %v2695
        %v2720 = vsel %vm2635, %v2719, %v2695
        %v2721 = vsel %vm2634, %v1039, %v2718
        %v2722 = vsel %vm2634, 0, %v2720
        %v2723 = vcosq.f32.pop %v2721
        %v2724 = vsinq.f32.pop %v2721
        %vm2725 = vweird.f32 %v1039
        %v2726 = vand.u32 %v2722, 3
        %vm2727 = vcmp.lt.s32.totalorder %v2726, 2
        %vm2728 = vcmp.eq.s32.totalorder %v2726, 0
        %v2729 = vxor.u32 %v2724, 2147483648
        %v2730 = vsel %vm2728, %v2723, %v2729
        %vm2731 = vcmp.eq.s32.totalorder %v2726, 2
        %v2732 = vxor.u32 %v2723, 2147483648
        %v2733 = vsel %vm2731, %v2732, %v2724
        %v2734 = vsel %vm2727, %v2730, %v2733
        %v2735 = vsel %vm2725, nan, %v2734
        %v2736 = vand.u32 2147483647, %v1040
        %vm2737 = vcmp.le.f32.partialorder %v2736, 0.7853982
        %vm2738 = vcmp.lt.s32.totalorder %v1040, 0
        %v2739 = vand.u32 %v1040, 2139095040
        %v2740 = vshrl.u32 %v2739, 23
        %v2741 = vsub.s32 %v2740, 127
        %v2742 = vand.u32 2147483647, %v1040
        %v2743 = vand.u32 %v2742, 8388607
        %v2744 = vor.u32 %v2743, 8388608
        %v2745 = vsub.s32 0, %v2744
        %v2746 = vadd.s32 %v2741, 1
        %vm2747 = vcmp.gt.s32.totalorder %v2746, 0
        %v2748 = vsel %vm2747, %v2746, 0
        %v2749 = vshrl.u32 %v2748, 5
        %v2750 = vand.u32 %v2748, 31
        %v2751 = vsub.s32 32, %v2750
        %v2752 = vshrl.u32 683565275, %v2751
        %v2753 = vshll.u32 683565275, %v2750
        %v2754 = vshrl.u32 2475754826, %v2751
        %v2755 = vor.u32 %v2753, %v2754
        %v2756 = vshll.u32 2475754826, %v2750
        %v2757 = vshrl.u32 2131351028, %v2751
        %v2758 = vor.u32 %v2756, %v2757
        %v2759 = vshll.u32 2131351028, %v2750
        %v2760 = vshrl.u32 2102212464, %v2751
        %v2761 = vor.u32 %v2759, %v2760
        %v2762 = vshll.u32 2102212464, %v2750
        %v2763 = vshrl.u32 920167782, %v2751
        %v2764 = vor.u32 %v2762, %v2763
        %v2765 = vshll.u32 920167782, %v2750
        %v2766 = vshrl.u32 1326507024, %v2751
        %v2767 = vor.u32 %v2765, %v2766
        %vm2768 = vcmp.lt.s32.totalorder %v2749, 1
        %vm2769 = vcmp.lt.s32.totalorder %v2749, 2
        %vm2770 = vcmp.lt.s32.totalorder %v2749, 3
        %vm2771 = vcmp.lt.s32.totalorder %v2749, 4
        %v2772 = vsel %vm2768, %v2752, %v2755
        %v2773 = vsel %vm2771, %v2761, 2102212464
        %v2774 = vsel %vm2770, %v2758, %v2773
        %v2775 = vsel %vm2769, %v2772, %v2774
        %v2776 = vsel %vm2768, %v2755, %v2758
        %v2777 = vsel %vm2771, %v2764, 920167782
        %v2778 = vsel %vm2770, %v2761, %v2777
        %v2779 = vsel %vm2769, %v2776, %v2778
        %v2780 = vsel %vm2768, %v2758, %v2761
        %v2781 = vsel %vm2771, %v2767, 1326507024
        %v2782 = vsel %vm2770, %v2764, %v2781
        %v2783 = vsel %vm2769, %v2780, %v2782
        %v2784 = vshll.u32 %v2744, 8
        %v2785 = vmul.u32.u64.compose %v2784, %v2783
        %v2786 = vextract.low.u32 %v2785
        %v2787 = vextract.high.u32 %v2785
        %v2788 = vmul.u32.u64.compose %v2784, %v2779
        %v2789 = vextract.low.u32 %v2788
        %v2790 = vextract.high.u32 %v2788
        %v2791 = vmul.u32 %v2784, %v2775
        %v2792 = vadd.s32 %v2787, %v2789
        %vm2793 = vc.u32 %v2787, %v2789
        %v2794 = vadd.s32 %v2790, 1
        %v2795 = vsel %vm2793, %v2794, %v2790
        %v2796 = vadd.s32 %v2791, %v2795
        %v2797 = vadd.s32 %v2796, 536870912
        %v2798 = vshrl.u32 %v2797, 30
        %v2799 = vshll.u32 %v2798, 30
        %v2800 = vsub.s32 %v2796, %v2799
        %vm2801 = vcmp.lt.s32.totalorder %v2800, 0
        %v2802 = vsub.s32 0, %v2800
        %v2803 = vsel %vm2801, %v2802, %v2800
        %v2804 = vclz %v2803
        %v2805 = vsub.s32 %v2804, 2
        %vm2806 = vcmp.gt.s32.totalorder 0, %v2805
        %v2807 = vsel %vm2806, 0, %v2805
        %v2808 = vsub.s32 32, %v2807
        %v2809 = vshll.u32 %v2800, %v2807
        %v2810 = vshrl.u32 %v2792, %v2808
        %v2811 = vor.u32 %v2809, %v2810
        %v2812 = vsub.s32 4294967266, %v2807
        %v2813 = vadd.s32 %v2812, 127
        %v2814 = vshll.u32 %v2813, 23
        %v2815 = vor.u32 4788187, %v2814
        %v2816 = vand.u32 2147483647, %v2815
        %v2818 = vcvt.s32.f32 %v2811
        %v2819 = vmul.f32 %v2818, %v2816
        %v2820 = vxor.u32 %v2819, 2147483648
        %v2821 = vsel %vm2738, %v2820, %v2819
        %v2822 = vsub.s32 4, %v2798
        %v2823 = vsel %vm2738, %v2822, %v2798
        %v2824 = vsel %vm2737, %v1040, %v2821
        %v2825 = vsel %vm2737, 0, %v2823
        %v2826 = vcosq.f32.pop %v2824
        %v2827 = vsinq.f32.pop %v2824
        %vm2828 = vweird.f32 %v1040
        %v2829 = vand.u32 %v2825, 3
        %vm2830 = vcmp.lt.s32.totalorder %v2829, 2
        %vm2831 = vcmp.eq.s32.totalorder %v2829, 0
        %v2832 = vxor.u32 %v2827, 2147483648
        %v2833 = vsel %vm2831, %v2826, %v2832
        %vm2834 = vcmp.eq.s32.totalorder %v2829, 2
        %v2835 = vxor.u32 %v2826, 2147483648
        %v2836 = vsel %vm2834, %v2835, %v2827
        %v2837 = vsel %vm2830, %v2833, %v2836
        %v2838 = vsel %vm2828, nan, %v2837
        %v2839 = vand.u32 2147483647, %v1041
        %vm2840 = vcmp.le.f32.partialorder %v2839, 0.7853982
        %vm2841 = vcmp.lt.s32.totalorder %v1041, 0
        %v2842 = vand.u32 %v1041, 2139095040
        %v2843 = vshrl.u32 %v2842, 23
        %v2844 = vsub.s32 %v2843, 127
        %v2845 = vand.u32 2147483647, %v1041
        %v2846 = vand.u32 %v2845, 8388607
        %v2847 = vor.u32 %v2846, 8388608
        %v2848 = vsub.s32 0, %v2847
        %v2849 = vadd.s32 %v2844, 1
        %vm2850 = vcmp.gt.s32.totalorder %v2849, 0
        %v2851 = vsel %vm2850, %v2849, 0
        %v2852 = vshrl.u32 %v2851, 5
        %v2853 = vand.u32 %v2851, 31
        %v2854 = vsub.s32 32, %v2853
        %v2855 = vshrl.u32 683565275, %v2854
        %v2856 = vshll.u32 683565275, %v2853
        %v2857 = vshrl.u32 2475754826, %v2854
        %v2858 = vor.u32 %v2856, %v2857
        %v2859 = vshll.u32 2475754826, %v2853
        %v2860 = vshrl.u32 2131351028, %v2854
        %v2861 = vor.u32 %v2859, %v2860
        %v2862 = vshll.u32 2131351028, %v2853
        %v2863 = vshrl.u32 2102212464, %v2854
        %v2864 = vor.u32 %v2862, %v2863
        %v2865 = vshll.u32 2102212464, %v2853
        %v2866 = vshrl.u32 920167782, %v2854
        %v2867 = vor.u32 %v2865, %v2866
        %v2868 = vshll.u32 920167782, %v2853
        %v2869 = vshrl.u32 1326507024, %v2854
        %v2870 = vor.u32 %v2868, %v2869
        %vm2871 = vcmp.lt.s32.totalorder %v2852, 1
        %vm2872 = vcmp.lt.s32.totalorder %v2852, 2
        %vm2873 = vcmp.lt.s32.totalorder %v2852, 3
        %vm2874 = vcmp.lt.s32.totalorder %v2852, 4
        %v2875 = vsel %vm2871, %v2855, %v2858
        %v2876 = vsel %vm2874, %v2864, 2102212464
        %v2877 = vsel %vm2873, %v2861, %v2876
        %v2878 = vsel %vm2872, %v2875, %v2877
        %v2879 = vsel %vm2871, %v2858, %v2861
        %v2880 = vsel %vm2874, %v2867, 920167782
        %v2881 = vsel %vm2873, %v2864, %v2880
        %v2882 = vsel %vm2872, %v2879, %v2881
        %v2883 = vsel %vm2871, %v2861, %v2864
        %v2884 = vsel %vm2874, %v2870, 1326507024
        %v2885 = vsel %vm2873, %v2867, %v2884
        %v2886 = vsel %vm2872, %v2883, %v2885
        %v2887 = vshll.u32 %v2847, 8
        %v2888 = vmul.u32.u64.compose %v2887, %v2886
        %v2889 = vextract.low.u32 %v2888
        %v2890 = vextract.high.u32 %v2888
        %v2891 = vmul.u32.u64.compose %v2887, %v2882
        %v2892 = vextract.low.u32 %v2891
        %v2893 = vextract.high.u32 %v2891
        %v2894 = vmul.u32 %v2887, %v2878
        %v2895 = vadd.s32 %v2890, %v2892
        %vm2896 = vc.u32 %v2890, %v2892
        %v2897 = vadd.s32 %v2893, 1
        %v2898 = vsel %vm2896, %v2897, %v2893
        %v2899 = vadd.s32 %v2894, %v2898
        %v2900 = vadd.s32 %v2899, 536870912
        %v2901 = vshrl.u32 %v2900, 30
        %v2902 = vshll.u32 %v2901, 30
        %v2903 = vsub.s32 %v2899, %v2902
        %vm2904 = vcmp.lt.s32.totalorder %v2903, 0
        %v2905 = vsub.s32 0, %v2903
        %v2906 = vsel %vm2904, %v2905, %v2903
        %v2907 = vclz %v2906
        %v2908 = vsub.s32 %v2907, 2
        %vm2909 = vcmp.gt.s32.totalorder 0, %v2908
        %v2910 = vsel %vm2909, 0, %v2908
        %v2911 = vsub.s32 32, %v2910
        %v2912 = vshll.u32 %v2903, %v2910
        %v2913 = vshrl.u32 %v2895, %v2911
        %v2914 = vor.u32 %v2912, %v2913
        %v2915 = vsub.s32 4294967266, %v2910
        %v2916 = vadd.s32 %v2915, 127
        %v2917 = vshll.u32 %v2916, 23
        %v2918 = vor.u32 4788187, %v2917
        %v2919 = vand.u32 2147483647, %v2918
        %v2921 = vcvt.s32.f32 %v2914
        %v2922 = vmul.f32 %v2921, %v2919
        %v2923 = vxor.u32 %v2922, 2147483648
        %v2924 = vsel %vm2841, %v2923, %v2922
        %v2925 = vsub.s32 4, %v2901
        %v2926 = vsel %vm2841, %v2925, %v2901
        %v2927 = vsel %vm2840, %v1041, %v2924
        %v2928 = vsel %vm2840, 0, %v2926
        %v2929 = vcosq.f32.pop %v2927
        %v2930 = vsinq.f32.pop %v2927
        %vm2931 = vweird.f32 %v1041
        %v2932 = vand.u32 %v2928, 3
        %vm2933 = vcmp.lt.s32.totalorder %v2932, 2
        %vm2934 = vcmp.eq.s32.totalorder %v2932, 0
        %v2935 = vxor.u32 %v2930, 2147483648
        %v2936 = vsel %vm2934, %v2929, %v2935
        %vm2937 = vcmp.eq.s32.totalorder %v2932, 2
        %v2938 = vxor.u32 %v2929, 2147483648
        %v2939 = vsel %vm2937, %v2938, %v2930
        %v2940 = vsel %vm2933, %v2936, %v2939
        %v2941 = vsel %vm2931, nan, %v2940
        %v2942 = vand.u32 2147483647, %v1042
        %vm2943 = vcmp.le.f32.partialorder %v2942, 0.7853982
        %vm2944 = vcmp.lt.s32.totalorder %v1042, 0
        %v2945 = vand.u32 %v1042, 2139095040
        %v2946 = vshrl.u32 %v2945, 23
        %v2947 = vsub.s32 %v2946, 127
        %v2948 = vand.u32 2147483647, %v1042
        %v2949 = vand.u32 %v2948, 8388607
        %v2950 = vor.u32 %v2949, 8388608
        %v2951 = vsub.s32 0, %v2950
        %v2952 = vadd.s32 %v2947, 1
        %vm2953 = vcmp.gt.s32.totalorder %v2952, 0
        %v2954 = vsel %vm2953, %v2952, 0
        %v2955 = vshrl.u32 %v2954, 5
        %v2956 = vand.u32 %v2954, 31
        %v2957 = vsub.s32 32, %v2956
        %v2958 = vshrl.u32 683565275, %v2957
        %v2959 = vshll.u32 683565275, %v2956
        %v2960 = vshrl.u32 2475754826, %v2957
        %v2961 = vor.u32 %v2959, %v2960
        %v2962 = vshll.u32 2475754826, %v2956
        %v2963 = vshrl.u32 2131351028, %v2957
        %v2964 = vor.u32 %v2962, %v2963
        %v2965 = vshll.u32 2131351028, %v2956
        %v2966 = vshrl.u32 2102212464, %v2957
        %v2967 = vor.u32 %v2965, %v2966
        %v2968 = vshll.u32 2102212464, %v2956
        %v2969 = vshrl.u32 920167782, %v2957
        %v2970 = vor.u32 %v2968, %v2969
        %v2971 = vshll.u32 920167782, %v2956
        %v2972 = vshrl.u32 1326507024, %v2957
        %v2973 = vor.u32 %v2971, %v2972
        %vm2974 = vcmp.lt.s32.totalorder %v2955, 1
        %vm2975 = vcmp.lt.s32.totalorder %v2955, 2
        %vm2976 = vcmp.lt.s32.totalorder %v2955, 3
        %vm2977 = vcmp.lt.s32.totalorder %v2955, 4
        %v2978 = vsel %vm2974, %v2958, %v2961
        %v2979 = vsel %vm2977, %v2967, 2102212464
        %v2980 = vsel %vm2976, %v2964, %v2979
        %v2981 = vsel %vm2975, %v2978, %v2980
        %v2982 = vsel %vm2974, %v2961, %v2964
        %v2983 = vsel %vm2977, %v2970, 920167782
        %v2984 = vsel %vm2976, %v2967, %v2983
        %v2985 = vsel %vm2975, %v2982, %v2984
        %v2986 = vsel %vm2974, %v2964, %v2967
        %v2987 = vsel %vm2977, %v2973, 1326507024
        %v2988 = vsel %vm2976, %v2970, %v2987
        %v2989 = vsel %vm2975, %v2986, %v2988
        %v2990 = vshll.u32 %v2950, 8
        %v2991 = vmul.u32.u64.compose %v2990, %v2989
        %v2992 = vextract.low.u32 %v2991
        %v2993 = vextract.high.u32 %v2991
        %v2994 = vmul.u32.u64.compose %v2990, %v2985
        %v2995 = vextract.low.u32 %v2994
        %v2996 = vextract.high.u32 %v2994
        %v2997 = vmul.u32 %v2990, %v2981
        %v2998 = vadd.s32 %v2993, %v2995
        %vm2999 = vc.u32 %v2993, %v2995
        %v3000 = vadd.s32 %v2996, 1
        %v3001 = vsel %vm2999, %v3000, %v2996
        %v3002 = vadd.s32 %v2997, %v3001
        %v3003 = vadd.s32 %v3002, 536870912
        %v3004 = vshrl.u32 %v3003, 30
        %v3005 = vshll.u32 %v3004, 30
        %v3006 = vsub.s32 %v3002, %v3005
        %vm3007 = vcmp.lt.s32.totalorder %v3006, 0
        %v3008 = vsub.s32 0, %v3006
        %v3009 = vsel %vm3007, %v3008, %v3006
        %v3010 = vclz %v3009
        %v3011 = vsub.s32 %v3010, 2
        %vm3012 = vcmp.gt.s32.totalorder 0, %v3011
        %v3013 = vsel %vm3012, 0, %v3011
        %v3014 = vsub.s32 32, %v3013
        %v3015 = vshll.u32 %v3006, %v3013
        %v3016 = vshrl.u32 %v2998, %v3014
        %v3017 = vor.u32 %v3015, %v3016
        %v3018 = vsub.s32 4294967266, %v3013
        %v3019 = vadd.s32 %v3018, 127
        %v3020 = vshll.u32 %v3019, 23
        %v3021 = vor.u32 4788187, %v3020
        %v3022 = vand.u32 2147483647, %v3021
        %v3024 = vcvt.s32.f32 %v3017
        %v3025 = vmul.f32 %v3024, %v3022
        %v3026 = vxor.u32 %v3025, 2147483648
        %v3027 = vsel %vm2944, %v3026, %v3025
        %v3028 = vsub.s32 4, %v3004
        %v3029 = vsel %vm2944, %v3028, %v3004
        %v3030 = vsel %vm2943, %v1042, %v3027
        %v3031 = vsel %vm2943, 0, %v3029
        %v3032 = vcosq.f32.pop %v3030
        %v3033 = vsinq.f32.pop %v3030
        %vm3034 = vweird.f32 %v1042
        %v3035 = vand.u32 %v3031, 3
        %vm3036 = vcmp.lt.s32.totalorder %v3035, 2
        %vm3037 = vcmp.eq.s32.totalorder %v3035, 0
        %v3038 = vxor.u32 %v3033, 2147483648
        %v3039 = vsel %vm3037, %v3032, %v3038
        %vm3040 = vcmp.eq.s32.totalorder %v3035, 2
        %v3041 = vxor.u32 %v3032, 2147483648
        %v3042 = vsel %vm3040, %v3041, %v3033
        %v3043 = vsel %vm3036, %v3039, %v3042
        %v3044 = vsel %vm3034, nan, %v3043
        %v3045 = vand.u32 2147483647, %v1043
        %vm3046 = vcmp.le.f32.partialorder %v3045, 0.7853982
        %vm3047 = vcmp.lt.s32.totalorder %v1043, 0
        %v3048 = vand.u32 %v1043, 2139095040
        %v3049 = vshrl.u32 %v3048, 23
        %v3050 = vsub.s32 %v3049, 127
        %v3051 = vand.u32 2147483647, %v1043
        %v3052 = vand.u32 %v3051, 8388607
        %v3053 = vor.u32 %v3052, 8388608
        %v3054 = vsub.s32 0, %v3053
        %v3055 = vadd.s32 %v3050, 1
        %vm3056 = vcmp.gt.s32.totalorder %v3055, 0
        %v3057 = vsel %vm3056, %v3055, 0
        %v3058 = vshrl.u32 %v3057, 5
        %v3059 = vand.u32 %v3057, 31
        %v3060 = vsub.s32 32, %v3059
        %v3061 = vshrl.u32 683565275, %v3060
        %v3062 = vshll.u32 683565275, %v3059
        %v3063 = vshrl.u32 2475754826, %v3060
        %v3064 = vor.u32 %v3062, %v3063
        %v3065 = vshll.u32 2475754826, %v3059
        %v3066 = vshrl.u32 2131351028, %v3060
        %v3067 = vor.u32 %v3065, %v3066
        %v3068 = vshll.u32 2131351028, %v3059
        %v3069 = vshrl.u32 2102212464, %v3060
        %v3070 = vor.u32 %v3068, %v3069
        %v3071 = vshll.u32 2102212464, %v3059
        %v3072 = vshrl.u32 920167782, %v3060
        %v3073 = vor.u32 %v3071, %v3072
        %v3074 = vshll.u32 920167782, %v3059
        %v3075 = vshrl.u32 1326507024, %v3060
        %v3076 = vor.u32 %v3074, %v3075
        %vm3077 = vcmp.lt.s32.totalorder %v3058, 1
        %vm3078 = vcmp.lt.s32.totalorder %v3058, 2
        %vm3079 = vcmp.lt.s32.totalorder %v3058, 3
        %vm3080 = vcmp.lt.s32.totalorder %v3058, 4
        %v3081 = vsel %vm3077, %v3061, %v3064
        %v3082 = vsel %vm3080, %v3070, 2102212464
        %v3083 = vsel %vm3079, %v3067, %v3082
        %v3084 = vsel %vm3078, %v3081, %v3083
        %v3085 = vsel %vm3077, %v3064, %v3067
        %v3086 = vsel %vm3080, %v3073, 920167782
        %v3087 = vsel %vm3079, %v3070, %v3086
        %v3088 = vsel %vm3078, %v3085, %v3087
        %v3089 = vsel %vm3077, %v3067, %v3070
        %v3090 = vsel %vm3080, %v3076, 1326507024
        %v3091 = vsel %vm3079, %v3073, %v3090
        %v3092 = vsel %vm3078, %v3089, %v3091
        %v3093 = vshll.u32 %v3053, 8
        %v3094 = vmul.u32.u64.compose %v3093, %v3092
        %v3095 = vextract.low.u32 %v3094
        %v3096 = vextract.high.u32 %v3094
        %v3097 = vmul.u32.u64.compose %v3093, %v3088
        %v3098 = vextract.low.u32 %v3097
        %v3099 = vextract.high.u32 %v3097
        %v3100 = vmul.u32 %v3093, %v3084
        %v3101 = vadd.s32 %v3096, %v3098
        %vm3102 = vc.u32 %v3096, %v3098
        %v3103 = vadd.s32 %v3099, 1
        %v3104 = vsel %vm3102, %v3103, %v3099
        %v3105 = vadd.s32 %v3100, %v3104
        %v3106 = vadd.s32 %v3105, 536870912
        %v3107 = vshrl.u32 %v3106, 30
        %v3108 = vshll.u32 %v3107, 30
        %v3109 = vsub.s32 %v3105, %v3108
        %vm3110 = vcmp.lt.s32.totalorder %v3109, 0
        %v3111 = vsub.s32 0, %v3109
        %v3112 = vsel %vm3110, %v3111, %v3109
        %v3113 = vclz %v3112
        %v3114 = vsub.s32 %v3113, 2
        %vm3115 = vcmp.gt.s32.totalorder 0, %v3114
        %v3116 = vsel %vm3115, 0, %v3114
        %v3117 = vsub.s32 32, %v3116
        %v3118 = vshll.u32 %v3109, %v3116
        %v3119 = vshrl.u32 %v3101, %v3117
        %v3120 = vor.u32 %v3118, %v3119
        %v3121 = vsub.s32 4294967266, %v3116
        %v3122 = vadd.s32 %v3121, 127
        %v3123 = vshll.u32 %v3122, 23
        %v3124 = vor.u32 4788187, %v3123
        %v3125 = vand.u32 2147483647, %v3124
        %v3127 = vcvt.s32.f32 %v3120
        %v3128 = vmul.f32 %v3127, %v3125
        %v3129 = vxor.u32 %v3128, 2147483648
        %v3130 = vsel %vm3047, %v3129, %v3128
        %v3131 = vsub.s32 4, %v3107
        %v3132 = vsel %vm3047, %v3131, %v3107
        %v3133 = vsel %vm3046, %v1043, %v3130
        %v3134 = vsel %vm3046, 0, %v3132
        %v3135 = vcosq.f32.pop %v3133
        %v3136 = vsinq.f32.pop %v3133
        %vm3137 = vweird.f32 %v1043
        %v3138 = vand.u32 %v3134, 3
        %vm3139 = vcmp.lt.s32.totalorder %v3138, 2
        %vm3140 = vcmp.eq.s32.totalorder %v3138, 0
        %v3141 = vxor.u32 %v3136, 2147483648
        %v3142 = vsel %vm3140, %v3135, %v3141
        %vm3143 = vcmp.eq.s32.totalorder %v3138, 2
        %v3144 = vxor.u32 %v3135, 2147483648
        %v3145 = vsel %vm3143, %v3144, %v3136
        %v3146 = vsel %vm3139, %v3142, %v3145
        %v3147 = vsel %vm3137, nan, %v3146
        %v3148 = vand.u32 2147483647, %v1044
        %vm3149 = vcmp.le.f32.partialorder %v3148, 0.7853982
        %vm3150 = vcmp.lt.s32.totalorder %v1044, 0
        %v3151 = vand.u32 %v1044, 2139095040
        %v3152 = vshrl.u32 %v3151, 23
        %v3153 = vsub.s32 %v3152, 127
        %v3154 = vand.u32 2147483647, %v1044
        %v3155 = vand.u32 %v3154, 8388607
        %v3156 = vor.u32 %v3155, 8388608
        %v3157 = vsub.s32 0, %v3156
        %v3158 = vadd.s32 %v3153, 1
        %vm3159 = vcmp.gt.s32.totalorder %v3158, 0
        %v3160 = vsel %vm3159, %v3158, 0
        %v3161 = vshrl.u32 %v3160, 5
        %v3162 = vand.u32 %v3160, 31
        %v3163 = vsub.s32 32, %v3162
        %v3164 = vshrl.u32 683565275, %v3163
        %v3165 = vshll.u32 683565275, %v3162
        %v3166 = vshrl.u32 2475754826, %v3163
        %v3167 = vor.u32 %v3165, %v3166
        %v3168 = vshll.u32 2475754826, %v3162
        %v3169 = vshrl.u32 2131351028, %v3163
        %v3170 = vor.u32 %v3168, %v3169
        %v3171 = vshll.u32 2131351028, %v3162
        %v3172 = vshrl.u32 2102212464, %v3163
        %v3173 = vor.u32 %v3171, %v3172
        %v3174 = vshll.u32 2102212464, %v3162
        %v3175 = vshrl.u32 920167782, %v3163
        %v3176 = vor.u32 %v3174, %v3175
        %v3177 = vshll.u32 920167782, %v3162
        %v3178 = vshrl.u32 1326507024, %v3163
        %v3179 = vor.u32 %v3177, %v3178
        %vm3180 = vcmp.lt.s32.totalorder %v3161, 1
        %vm3181 = vcmp.lt.s32.totalorder %v3161, 2
        %vm3182 = vcmp.lt.s32.totalorder %v3161, 3
        %vm3183 = vcmp.lt.s32.totalorder %v3161, 4
        %v3184 = vsel %vm3180, %v3164, %v3167
        %v3185 = vsel %vm3183, %v3173, 2102212464
        %v3186 = vsel %vm3182, %v3170, %v3185
        %v3187 = vsel %vm3181, %v3184, %v3186
        %v3188 = vsel %vm3180, %v3167, %v3170
        %v3189 = vsel %vm3183, %v3176, 920167782
        %v3190 = vsel %vm3182, %v3173, %v3189
        %v3191 = vsel %vm3181, %v3188, %v3190
        %v3192 = vsel %vm3180, %v3170, %v3173
        %v3193 = vsel %vm3183, %v3179, 1326507024
        %v3194 = vsel %vm3182, %v3176, %v3193
        %v3195 = vsel %vm3181, %v3192, %v3194
        %v3196 = vshll.u32 %v3156, 8
        %v3197 = vmul.u32.u64.compose %v3196, %v3195
        %v3198 = vextract.low.u32 %v3197
        %v3199 = vextract.high.u32 %v3197
        %v3200 = vmul.u32.u64.compose %v3196, %v3191
        %v3201 = vextract.low.u32 %v3200
        %v3202 = vextract.high.u32 %v3200
        %v3203 = vmul.u32 %v3196, %v3187
        %v3204 = vadd.s32 %v3199, %v3201
        %vm3205 = vc.u32 %v3199, %v3201
        %v3206 = vadd.s32 %v3202, 1
        %v3207 = vsel %vm3205, %v3206, %v3202
        %v3208 = vadd.s32 %v3203, %v3207
        %v3209 = vadd.s32 %v3208, 536870912
        %v3210 = vshrl.u32 %v3209, 30
        %v3211 = vshll.u32 %v3210, 30
        %v3212 = vsub.s32 %v3208, %v3211
        %vm3213 = vcmp.lt.s32.totalorder %v3212, 0
        %v3214 = vsub.s32 0, %v3212
        %v3215 = vsel %vm3213, %v3214, %v3212
        %v3216 = vclz %v3215
        %v3217 = vsub.s32 %v3216, 2
        %vm3218 = vcmp.gt.s32.totalorder 0, %v3217
        %v3219 = vsel %vm3218, 0, %v3217
        %v3220 = vsub.s32 32, %v3219
        %v3221 = vshll.u32 %v3212, %v3219
        %v3222 = vshrl.u32 %v3204, %v3220
        %v3223 = vor.u32 %v3221, %v3222
        %v3224 = vsub.s32 4294967266, %v3219
        %v3225 = vadd.s32 %v3224, 127
        %v3226 = vshll.u32 %v3225, 23
        %v3227 = vor.u32 4788187, %v3226
        %v3228 = vand.u32 2147483647, %v3227
        %v3230 = vcvt.s32.f32 %v3223
        %v3231 = vmul.f32 %v3230, %v3228
        %v3232 = vxor.u32 %v3231, 2147483648
        %v3233 = vsel %vm3150, %v3232, %v3231
        %v3234 = vsub.s32 4, %v3210
        %v3235 = vsel %vm3150, %v3234, %v3210
        %v3236 = vsel %vm3149, %v1044, %v3233
        %v3237 = vsel %vm3149, 0, %v3235
        %v3238 = vcosq.f32.pop %v3236
        %v3239 = vsinq.f32.pop %v3236
        %vm3240 = vweird.f32 %v1044
        %v3241 = vand.u32 %v3237, 3
        %vm3242 = vcmp.lt.s32.totalorder %v3241, 2
        %vm3243 = vcmp.eq.s32.totalorder %v3241, 0
        %v3244 = vxor.u32 %v3239, 2147483648
        %v3245 = vsel %vm3243, %v3238, %v3244
        %vm3246 = vcmp.eq.s32.totalorder %v3241, 2
        %v3247 = vxor.u32 %v3238, 2147483648
        %v3248 = vsel %vm3246, %v3247, %v3239
        %v3249 = vsel %vm3242, %v3245, %v3248
        %v3250 = vsel %vm3240, nan, %v3249
        %v3251 = vand.u32 2147483647, %v1045
        %vm3252 = vcmp.le.f32.partialorder %v3251, 0.7853982
        %vm3253 = vcmp.lt.s32.totalorder %v1045, 0
        %v3254 = vand.u32 %v1045, 2139095040
        %v3255 = vshrl.u32 %v3254, 23
        %v3256 = vsub.s32 %v3255, 127
        %v3257 = vand.u32 2147483647, %v1045
        %v3258 = vand.u32 %v3257, 8388607
        %v3259 = vor.u32 %v3258, 8388608
        %v3260 = vsub.s32 0, %v3259
        %v3261 = vadd.s32 %v3256, 1
        %vm3262 = vcmp.gt.s32.totalorder %v3261, 0
        %v3263 = vsel %vm3262, %v3261, 0
        %v3264 = vshrl.u32 %v3263, 5
        %v3265 = vand.u32 %v3263, 31
        %v3266 = vsub.s32 32, %v3265
        %v3267 = vshrl.u32 683565275, %v3266
        %v3268 = vshll.u32 683565275, %v3265
        %v3269 = vshrl.u32 2475754826, %v3266
        %v3270 = vor.u32 %v3268, %v3269
        %v3271 = vshll.u32 2475754826, %v3265
        %v3272 = vshrl.u32 2131351028, %v3266
        %v3273 = vor.u32 %v3271, %v3272
        %v3274 = vshll.u32 2131351028, %v3265
        %v3275 = vshrl.u32 2102212464, %v3266
        %v3276 = vor.u32 %v3274, %v3275
        %v3277 = vshll.u32 2102212464, %v3265
        %v3278 = vshrl.u32 920167782, %v3266
        %v3279 = vor.u32 %v3277, %v3278
        %v3280 = vshll.u32 920167782, %v3265
        %v3281 = vshrl.u32 1326507024, %v3266
        %v3282 = vor.u32 %v3280, %v3281
        %vm3283 = vcmp.lt.s32.totalorder %v3264, 1
        %vm3284 = vcmp.lt.s32.totalorder %v3264, 2
        %vm3285 = vcmp.lt.s32.totalorder %v3264, 3
        %vm3286 = vcmp.lt.s32.totalorder %v3264, 4
        %v3287 = vsel %vm3283, %v3267, %v3270
        %v3288 = vsel %vm3286, %v3276, 2102212464
        %v3289 = vsel %vm3285, %v3273, %v3288
        %v3290 = vsel %vm3284, %v3287, %v3289
        %v3291 = vsel %vm3283, %v3270, %v3273
        %v3292 = vsel %vm3286, %v3279, 920167782
        %v3293 = vsel %vm3285, %v3276, %v3292
        %v3294 = vsel %vm3284, %v3291, %v3293
        %v3295 = vsel %vm3283, %v3273, %v3276
        %v3296 = vsel %vm3286, %v3282, 1326507024
        %v3297 = vsel %vm3285, %v3279, %v3296
        %v3298 = vsel %vm3284, %v3295, %v3297
        %v3299 = vshll.u32 %v3259, 8
        %v3300 = vmul.u32.u64.compose %v3299, %v3298
        %v3301 = vextract.low.u32 %v3300
        %v3302 = vextract.high.u32 %v3300
        %v3303 = vmul.u32.u64.compose %v3299, %v3294
        %v3304 = vextract.low.u32 %v3303
        %v3305 = vextract.high.u32 %v3303
        %v3306 = vmul.u32 %v3299, %v3290
        %v3307 = vadd.s32 %v3302, %v3304
        %vm3308 = vc.u32 %v3302, %v3304
        %v3309 = vadd.s32 %v3305, 1
        %v3310 = vsel %vm3308, %v3309, %v3305
        %v3311 = vadd.s32 %v3306, %v3310
        %v3312 = vadd.s32 %v3311, 536870912
        %v3313 = vshrl.u32 %v3312, 30
        %v3314 = vshll.u32 %v3313, 30
        %v3315 = vsub.s32 %v3311, %v3314
        %vm3316 = vcmp.lt.s32.totalorder %v3315, 0
        %v3317 = vsub.s32 0, %v3315
        %v3318 = vsel %vm3316, %v3317, %v3315
        %v3319 = vclz %v3318
        %v3320 = vsub.s32 %v3319, 2
        %vm3321 = vcmp.gt.s32.totalorder 0, %v3320
        %v3322 = vsel %vm3321, 0, %v3320
        %v3323 = vsub.s32 32, %v3322
        %v3324 = vshll.u32 %v3315, %v3322
        %v3325 = vshrl.u32 %v3307, %v3323
        %v3326 = vor.u32 %v3324, %v3325
        %v3327 = vsub.s32 4294967266, %v3322
        %v3328 = vadd.s32 %v3327, 127
        %v3329 = vshll.u32 %v3328, 23
        %v3330 = vor.u32 4788187, %v3329
        %v3331 = vand.u32 2147483647, %v3330
        %v3333 = vcvt.s32.f32 %v3326
        %v3334 = vmul.f32 %v3333, %v3331
        %v3335 = vxor.u32 %v3334, 2147483648
        %v3336 = vsel %vm3253, %v3335, %v3334
        %v3337 = vsub.s32 4, %v3313
        %v3338 = vsel %vm3253, %v3337, %v3313
        %v3339 = vsel %vm3252, %v1045, %v3336
        %v3340 = vsel %vm3252, 0, %v3338
        %v3341 = vcosq.f32.pop %v3339
        %v3342 = vsinq.f32.pop %v3339
        %vm3343 = vweird.f32 %v1045
        %v3344 = vand.u32 %v3340, 3
        %vm3345 = vcmp.lt.s32.totalorder %v3344, 2
        %vm3346 = vcmp.eq.s32.totalorder %v3344, 0
        %v3347 = vxor.u32 %v3342, 2147483648
        %v3348 = vsel %vm3346, %v3341, %v3347
        %vm3349 = vcmp.eq.s32.totalorder %v3344, 2
        %v3350 = vxor.u32 %v3341, 2147483648
        %v3351 = vsel %vm3349, %v3350, %v3342
        %v3352 = vsel %vm3345, %v3348, %v3351
        %v3353 = vsel %vm3343, nan, %v3352
        %v3354 = vand.u32 2147483647, %v1046
        %vm3355 = vcmp.le.f32.partialorder %v3354, 0.7853982
        %vm3356 = vcmp.lt.s32.totalorder %v1046, 0
        %v3357 = vand.u32 %v1046, 2139095040
        %v3358 = vshrl.u32 %v3357, 23
        %v3359 = vsub.s32 %v3358, 127
        %v3360 = vand.u32 2147483647, %v1046
        %v3361 = vand.u32 %v3360, 8388607
        %v3362 = vor.u32 %v3361, 8388608
        %v3363 = vsub.s32 0, %v3362
        %v3364 = vadd.s32 %v3359, 1
        %vm3365 = vcmp.gt.s32.totalorder %v3364, 0
        %v3366 = vsel %vm3365, %v3364, 0
        %v3367 = vshrl.u32 %v3366, 5
        %v3368 = vand.u32 %v3366, 31
        %v3369 = vsub.s32 32, %v3368
        %v3370 = vshrl.u32 683565275, %v3369
        %v3371 = vshll.u32 683565275, %v3368
        %v3372 = vshrl.u32 2475754826, %v3369
        %v3373 = vor.u32 %v3371, %v3372
        %v3374 = vshll.u32 2475754826, %v3368
        %v3375 = vshrl.u32 2131351028, %v3369
        %v3376 = vor.u32 %v3374, %v3375
        %v3377 = vshll.u32 2131351028, %v3368
        %v3378 = vshrl.u32 2102212464, %v3369
        %v3379 = vor.u32 %v3377, %v3378
        %v3380 = vshll.u32 2102212464, %v3368
        %v3381 = vshrl.u32 920167782, %v3369
        %v3382 = vor.u32 %v3380, %v3381
        %v3383 = vshll.u32 920167782, %v3368
        %v3384 = vshrl.u32 1326507024, %v3369
        %v3385 = vor.u32 %v3383, %v3384
        %vm3386 = vcmp.lt.s32.totalorder %v3367, 1
        %vm3387 = vcmp.lt.s32.totalorder %v3367, 2
        %vm3388 = vcmp.lt.s32.totalorder %v3367, 3
        %vm3389 = vcmp.lt.s32.totalorder %v3367, 4
        %v3390 = vsel %vm3386, %v3370, %v3373
        %v3391 = vsel %vm3389, %v3379, 2102212464
        %v3392 = vsel %vm3388, %v3376, %v3391
        %v3393 = vsel %vm3387, %v3390, %v3392
        %v3394 = vsel %vm3386, %v3373, %v3376
        %v3395 = vsel %vm3389, %v3382, 920167782
        %v3396 = vsel %vm3388, %v3379, %v3395
        %v3397 = vsel %vm3387, %v3394, %v3396
        %v3398 = vsel %vm3386, %v3376, %v3379
        %v3399 = vsel %vm3389, %v3385, 1326507024
        %v3400 = vsel %vm3388, %v3382, %v3399
        %v3401 = vsel %vm3387, %v3398, %v3400
        %v3402 = vshll.u32 %v3362, 8
        %v3403 = vmul.u32.u64.compose %v3402, %v3401
        %v3404 = vextract.low.u32 %v3403
        %v3405 = vextract.high.u32 %v3403
        %v3406 = vmul.u32.u64.compose %v3402, %v3397
        %v3407 = vextract.low.u32 %v3406
        %v3408 = vextract.high.u32 %v3406
        %v3409 = vmul.u32 %v3402, %v3393
        %v3410 = vadd.s32 %v3405, %v3407
        %vm3411 = vc.u32 %v3405, %v3407
        %v3412 = vadd.s32 %v3408, 1
        %v3413 = vsel %vm3411, %v3412, %v3408
        %v3414 = vadd.s32 %v3409, %v3413
        %v3415 = vadd.s32 %v3414, 536870912
        %v3416 = vshrl.u32 %v3415, 30
        %v3417 = vshll.u32 %v3416, 30
        %v3418 = vsub.s32 %v3414, %v3417
        %vm3419 = vcmp.lt.s32.totalorder %v3418, 0
        %v3420 = vsub.s32 0, %v3418
        %v3421 = vsel %vm3419, %v3420, %v3418
        %v3422 = vclz %v3421
        %v3423 = vsub.s32 %v3422, 2
        %vm3424 = vcmp.gt.s32.totalorder 0, %v3423
        %v3425 = vsel %vm3424, 0, %v3423
        %v3426 = vsub.s32 32, %v3425
        %v3427 = vshll.u32 %v3418, %v3425
        %v3428 = vshrl.u32 %v3410, %v3426
        %v3429 = vor.u32 %v3427, %v3428
        %v3430 = vsub.s32 4294967266, %v3425
        %v3431 = vadd.s32 %v3430, 127
        %v3432 = vshll.u32 %v3431, 23
        %v3433 = vor.u32 4788187, %v3432
        %v3434 = vand.u32 2147483647, %v3433
        %v3436 = vcvt.s32.f32 %v3429
        %v3437 = vmul.f32 %v3436, %v3434
        %v3438 = vxor.u32 %v3437, 2147483648
        %v3439 = vsel %vm3356, %v3438, %v3437
        %v3440 = vsub.s32 4, %v3416
        %v3441 = vsel %vm3356, %v3440, %v3416
        %v3442 = vsel %vm3355, %v1046, %v3439
        %v3443 = vsel %vm3355, 0, %v3441
        %v3444 = vcosq.f32.pop %v3442
        %v3445 = vsinq.f32.pop %v3442
        %vm3446 = vweird.f32 %v1046
        %v3447 = vand.u32 %v3443, 3
        %vm3448 = vcmp.lt.s32.totalorder %v3447, 2
        %vm3449 = vcmp.eq.s32.totalorder %v3447, 0
        %v3450 = vxor.u32 %v3445, 2147483648
        %v3451 = vsel %vm3449, %v3444, %v3450
        %vm3452 = vcmp.eq.s32.totalorder %v3447, 2
        %v3453 = vxor.u32 %v3444, 2147483648
        %v3454 = vsel %vm3452, %v3453, %v3445
        %v3455 = vsel %vm3448, %v3451, %v3454
        %v3456 = vsel %vm3446, nan, %v3455
        %v3457 = vand.u32 2147483647, %v1047
        %vm3458 = vcmp.le.f32.partialorder %v3457, 0.7853982
        %vm3459 = vcmp.lt.s32.totalorder %v1047, 0
        %v3460 = vand.u32 %v1047, 2139095040
        %v3461 = vshrl.u32 %v3460, 23
        %v3462 = vsub.s32 %v3461, 127
        %v3463 = vand.u32 2147483647, %v1047
        %v3464 = vand.u32 %v3463, 8388607
        %v3465 = vor.u32 %v3464, 8388608
        %v3466 = vsub.s32 0, %v3465
        %v3467 = vadd.s32 %v3462, 1
        %vm3468 = vcmp.gt.s32.totalorder %v3467, 0
        %v3469 = vsel %vm3468, %v3467, 0
        %v3470 = vshrl.u32 %v3469, 5
        %v3471 = vand.u32 %v3469, 31
        %v3472 = vsub.s32 32, %v3471
        %v3473 = vshrl.u32 683565275, %v3472
        %v3474 = vshll.u32 683565275, %v3471
        %v3475 = vshrl.u32 2475754826, %v3472
        %v3476 = vor.u32 %v3474, %v3475
        %v3477 = vshll.u32 2475754826, %v3471
        %v3478 = vshrl.u32 2131351028, %v3472
        %v3479 = vor.u32 %v3477, %v3478
        %v3480 = vshll.u32 2131351028, %v3471
        %v3481 = vshrl.u32 2102212464, %v3472
        %v3482 = vor.u32 %v3480, %v3481
        %v3483 = vshll.u32 2102212464, %v3471
        %v3484 = vshrl.u32 920167782, %v3472
        %v3485 = vor.u32 %v3483, %v3484
        %v3486 = vshll.u32 920167782, %v3471
        %v3487 = vshrl.u32 1326507024, %v3472
        %v3488 = vor.u32 %v3486, %v3487
        %vm3489 = vcmp.lt.s32.totalorder %v3470, 1
        %vm3490 = vcmp.lt.s32.totalorder %v3470, 2
        %vm3491 = vcmp.lt.s32.totalorder %v3470, 3
        %vm3492 = vcmp.lt.s32.totalorder %v3470, 4
        %v3493 = vsel %vm3489, %v3473, %v3476
        %v3494 = vsel %vm3492, %v3482, 2102212464
        %v3495 = vsel %vm3491, %v3479, %v3494
        %v3496 = vsel %vm3490, %v3493, %v3495
        %v3497 = vsel %vm3489, %v3476, %v3479
        %v3498 = vsel %vm3492, %v3485, 920167782
        %v3499 = vsel %vm3491, %v3482, %v3498
        %v3500 = vsel %vm3490, %v3497, %v3499
        %v3501 = vsel %vm3489, %v3479, %v3482
        %v3502 = vsel %vm3492, %v3488, 1326507024
        %v3503 = vsel %vm3491, %v3485, %v3502
        %v3504 = vsel %vm3490, %v3501, %v3503
        %v3505 = vshll.u32 %v3465, 8
        %v3506 = vmul.u32.u64.compose %v3505, %v3504
        %v3507 = vextract.low.u32 %v3506
        %v3508 = vextract.high.u32 %v3506
        %v3509 = vmul.u32.u64.compose %v3505, %v3500
        %v3510 = vextract.low.u32 %v3509
        %v3511 = vextract.high.u32 %v3509
        %v3512 = vmul.u32 %v3505, %v3496
        %v3513 = vadd.s32 %v3508, %v3510
        %vm3514 = vc.u32 %v3508, %v3510
        %v3515 = vadd.s32 %v3511, 1
        %v3516 = vsel %vm3514, %v3515, %v3511
        %v3517 = vadd.s32 %v3512, %v3516
        %v3518 = vadd.s32 %v3517, 536870912
        %v3519 = vshrl.u32 %v3518, 30
        %v3520 = vshll.u32 %v3519, 30
        %v3521 = vsub.s32 %v3517, %v3520
        %vm3522 = vcmp.lt.s32.totalorder %v3521, 0
        %v3523 = vsub.s32 0, %v3521
        %v3524 = vsel %vm3522, %v3523, %v3521
        %v3525 = vclz %v3524
        %v3526 = vsub.s32 %v3525, 2
        %vm3527 = vcmp.gt.s32.totalorder 0, %v3526
        %v3528 = vsel %vm3527, 0, %v3526
        %v3529 = vsub.s32 32, %v3528
        %v3530 = vshll.u32 %v3521, %v3528
        %v3531 = vshrl.u32 %v3513, %v3529
        %v3532 = vor.u32 %v3530, %v3531
        %v3533 = vsub.s32 4294967266, %v3528
        %v3534 = vadd.s32 %v3533, 127
        %v3535 = vshll.u32 %v3534, 23
        %v3536 = vor.u32 4788187, %v3535
        %v3537 = vand.u32 2147483647, %v3536
        %v3539 = vcvt.s32.f32 %v3532
        %v3540 = vmul.f32 %v3539, %v3537
        %v3541 = vxor.u32 %v3540, 2147483648
        %v3542 = vsel %vm3459, %v3541, %v3540
        %v3543 = vsub.s32 4, %v3519
        %v3544 = vsel %vm3459, %v3543, %v3519
        %v3545 = vsel %vm3458, %v1047, %v3542
        %v3546 = vsel %vm3458, 0, %v3544
        %v3547 = vcosq.f32.pop %v3545
        %v3548 = vsinq.f32.pop %v3545
        %vm3549 = vweird.f32 %v1047
        %v3550 = vand.u32 %v3546, 3
        %vm3551 = vcmp.lt.s32.totalorder %v3550, 2
        %vm3552 = vcmp.eq.s32.totalorder %v3550, 0
        %v3553 = vxor.u32 %v3548, 2147483648
        %v3554 = vsel %vm3552, %v3547, %v3553
        %vm3555 = vcmp.eq.s32.totalorder %v3550, 2
        %v3556 = vxor.u32 %v3547, 2147483648
        %v3557 = vsel %vm3555, %v3556, %v3548
        %v3558 = vsel %vm3551, %v3554, %v3557
        %v3559 = vsel %vm3549, nan, %v3558
        %v3560 = vand.u32 2147483647, %v1048
        %vm3561 = vcmp.le.f32.partialorder %v3560, 0.7853982
        %vm3562 = vcmp.lt.s32.totalorder %v1048, 0
        %v3563 = vand.u32 %v1048, 2139095040
        %v3564 = vshrl.u32 %v3563, 23
        %v3565 = vsub.s32 %v3564, 127
        %v3566 = vand.u32 2147483647, %v1048
        %v3567 = vand.u32 %v3566, 8388607
        %v3568 = vor.u32 %v3567, 8388608
        %v3569 = vsub.s32 0, %v3568
        %v3570 = vadd.s32 %v3565, 1
        %vm3571 = vcmp.gt.s32.totalorder %v3570, 0
        %v3572 = vsel %vm3571, %v3570, 0
        %v3573 = vshrl.u32 %v3572, 5
        %v3574 = vand.u32 %v3572, 31
        %v3575 = vsub.s32 32, %v3574
        %v3576 = vshrl.u32 683565275, %v3575
        %v3577 = vshll.u32 683565275, %v3574
        %v3578 = vshrl.u32 2475754826, %v3575
        %v3579 = vor.u32 %v3577, %v3578
        %v3580 = vshll.u32 2475754826, %v3574
        %v3581 = vshrl.u32 2131351028, %v3575
        %v3582 = vor.u32 %v3580, %v3581
        %v3583 = vshll.u32 2131351028, %v3574
        %v3584 = vshrl.u32 2102212464, %v3575
        %v3585 = vor.u32 %v3583, %v3584
        %v3586 = vshll.u32 2102212464, %v3574
        %v3587 = vshrl.u32 920167782, %v3575
        %v3588 = vor.u32 %v3586, %v3587
        %v3589 = vshll.u32 920167782, %v3574
        %v3590 = vshrl.u32 1326507024, %v3575
        %v3591 = vor.u32 %v3589, %v3590
        %vm3592 = vcmp.lt.s32.totalorder %v3573, 1
        %vm3593 = vcmp.lt.s32.totalorder %v3573, 2
        %vm3594 = vcmp.lt.s32.totalorder %v3573, 3
        %vm3595 = vcmp.lt.s32.totalorder %v3573, 4
        %v3596 = vsel %vm3592, %v3576, %v3579
        %v3597 = vsel %vm3595, %v3585, 2102212464
        %v3598 = vsel %vm3594, %v3582, %v3597
        %v3599 = vsel %vm3593, %v3596, %v3598
        %v3600 = vsel %vm3592, %v3579, %v3582
        %v3601 = vsel %vm3595, %v3588, 920167782
        %v3602 = vsel %vm3594, %v3585, %v3601
        %v3603 = vsel %vm3593, %v3600, %v3602
        %v3604 = vsel %vm3592, %v3582, %v3585
        %v3605 = vsel %vm3595, %v3591, 1326507024
        %v3606 = vsel %vm3594, %v3588, %v3605
        %v3607 = vsel %vm3593, %v3604, %v3606
        %v3608 = vshll.u32 %v3568, 8
        %v3609 = vmul.u32.u64.compose %v3608, %v3607
        %v3610 = vextract.low.u32 %v3609
        %v3611 = vextract.high.u32 %v3609
        %v3612 = vmul.u32.u64.compose %v3608, %v3603
        %v3613 = vextract.low.u32 %v3612
        %v3614 = vextract.high.u32 %v3612
        %v3615 = vmul.u32 %v3608, %v3599
        %v3616 = vadd.s32 %v3611, %v3613
        %vm3617 = vc.u32 %v3611, %v3613
        %v3618 = vadd.s32 %v3614, 1
        %v3619 = vsel %vm3617, %v3618, %v3614
        %v3620 = vadd.s32 %v3615, %v3619
        %v3621 = vadd.s32 %v3620, 536870912
        %v3622 = vshrl.u32 %v3621, 30
        %v3623 = vshll.u32 %v3622, 30
        %v3624 = vsub.s32 %v3620, %v3623
        %vm3625 = vcmp.lt.s32.totalorder %v3624, 0
        %v3626 = vsub.s32 0, %v3624
        %v3627 = vsel %vm3625, %v3626, %v3624
        %v3628 = vclz %v3627
        %v3629 = vsub.s32 %v3628, 2
        %vm3630 = vcmp.gt.s32.totalorder 0, %v3629
        %v3631 = vsel %vm3630, 0, %v3629
        %v3632 = vsub.s32 32, %v3631
        %v3633 = vshll.u32 %v3624, %v3631
        %v3634 = vshrl.u32 %v3616, %v3632
        %v3635 = vor.u32 %v3633, %v3634
        %v3636 = vsub.s32 4294967266, %v3631
        %v3637 = vadd.s32 %v3636, 127
        %v3638 = vshll.u32 %v3637, 23
        %v3639 = vor.u32 4788187, %v3638
        %v3640 = vand.u32 2147483647, %v3639
        %v3642 = vcvt.s32.f32 %v3635
        %v3643 = vmul.f32 %v3642, %v3640
        %v3644 = vxor.u32 %v3643, 2147483648
        %v3645 = vsel %vm3562, %v3644, %v3643
        %v3646 = vsub.s32 4, %v3622
        %v3647 = vsel %vm3562, %v3646, %v3622
        %v3648 = vsel %vm3561, %v1048, %v3645
        %v3649 = vsel %vm3561, 0, %v3647
        %v3650 = vcosq.f32.pop %v3648
        %v3651 = vsinq.f32.pop %v3648
        %vm3652 = vweird.f32 %v1048
        %v3653 = vand.u32 %v3649, 3
        %vm3654 = vcmp.lt.s32.totalorder %v3653, 2
        %vm3655 = vcmp.eq.s32.totalorder %v3653, 0
        %v3656 = vxor.u32 %v3651, 2147483648
        %v3657 = vsel %vm3655, %v3650, %v3656
        %vm3658 = vcmp.eq.s32.totalorder %v3653, 2
        %v3659 = vxor.u32 %v3650, 2147483648
        %v3660 = vsel %vm3658, %v3659, %v3651
        %v3661 = vsel %vm3654, %v3657, %v3660
        %v3662 = vsel %vm3652, nan, %v3661
        %v3663 = vand.u32 2147483647, %v1049
        %vm3664 = vcmp.le.f32.partialorder %v3663, 0.7853982
        %vm3665 = vcmp.lt.s32.totalorder %v1049, 0
        %v3666 = vand.u32 %v1049, 2139095040
        %v3667 = vshrl.u32 %v3666, 23
        %v3668 = vsub.s32 %v3667, 127
        %v3669 = vand.u32 2147483647, %v1049
        %v3670 = vand.u32 %v3669, 8388607
        %v3671 = vor.u32 %v3670, 8388608
        %v3672 = vsub.s32 0, %v3671
        %v3673 = vadd.s32 %v3668, 1
        %vm3674 = vcmp.gt.s32.totalorder %v3673, 0
        %v3675 = vsel %vm3674, %v3673, 0
        %v3676 = vshrl.u32 %v3675, 5
        %v3677 = vand.u32 %v3675, 31
        %v3678 = vsub.s32 32, %v3677
        %v3679 = vshrl.u32 683565275, %v3678
        %v3680 = vshll.u32 683565275, %v3677
        %v3681 = vshrl.u32 2475754826, %v3678
        %v3682 = vor.u32 %v3680, %v3681
        %v3683 = vshll.u32 2475754826, %v3677
        %v3684 = vshrl.u32 2131351028, %v3678
        %v3685 = vor.u32 %v3683, %v3684
        %v3686 = vshll.u32 2131351028, %v3677
        %v3687 = vshrl.u32 2102212464, %v3678
        %v3688 = vor.u32 %v3686, %v3687
        %v3689 = vshll.u32 2102212464, %v3677
        %v3690 = vshrl.u32 920167782, %v3678
        %v3691 = vor.u32 %v3689, %v3690
        %v3692 = vshll.u32 920167782, %v3677
        %v3693 = vshrl.u32 1326507024, %v3678
        %v3694 = vor.u32 %v3692, %v3693
        %vm3695 = vcmp.lt.s32.totalorder %v3676, 1
        %vm3696 = vcmp.lt.s32.totalorder %v3676, 2
        %vm3697 = vcmp.lt.s32.totalorder %v3676, 3
        %vm3698 = vcmp.lt.s32.totalorder %v3676, 4
        %v3699 = vsel %vm3695, %v3679, %v3682
        %v3700 = vsel %vm3698, %v3688, 2102212464
        %v3701 = vsel %vm3697, %v3685, %v3700
        %v3702 = vsel %vm3696, %v3699, %v3701
        %v3703 = vsel %vm3695, %v3682, %v3685
        %v3704 = vsel %vm3698, %v3691, 920167782
        %v3705 = vsel %vm3697, %v3688, %v3704
        %v3706 = vsel %vm3696, %v3703, %v3705
        %v3707 = vsel %vm3695, %v3685, %v3688
        %v3708 = vsel %vm3698, %v3694, 1326507024
        %v3709 = vsel %vm3697, %v3691, %v3708
        %v3710 = vsel %vm3696, %v3707, %v3709
        %v3711 = vshll.u32 %v3671, 8
        %v3712 = vmul.u32.u64.compose %v3711, %v3710
        %v3713 = vextract.low.u32 %v3712
        %v3714 = vextract.high.u32 %v3712
        %v3715 = vmul.u32.u64.compose %v3711, %v3706
        %v3716 = vextract.low.u32 %v3715
        %v3717 = vextract.high.u32 %v3715
        %v3718 = vmul.u32 %v3711, %v3702
        %v3719 = vadd.s32 %v3714, %v3716
        %vm3720 = vc.u32 %v3714, %v3716
        %v3721 = vadd.s32 %v3717, 1
        %v3722 = vsel %vm3720, %v3721, %v3717
        %v3723 = vadd.s32 %v3718, %v3722
        %v3724 = vadd.s32 %v3723, 536870912
        %v3725 = vshrl.u32 %v3724, 30
        %v3726 = vshll.u32 %v3725, 30
        %v3727 = vsub.s32 %v3723, %v3726
        %vm3728 = vcmp.lt.s32.totalorder %v3727, 0
        %v3729 = vsub.s32 0, %v3727
        %v3730 = vsel %vm3728, %v3729, %v3727
        %v3731 = vclz %v3730
        %v3732 = vsub.s32 %v3731, 2
        %vm3733 = vcmp.gt.s32.totalorder 0, %v3732
        %v3734 = vsel %vm3733, 0, %v3732
        %v3735 = vsub.s32 32, %v3734
        %v3736 = vshll.u32 %v3727, %v3734
        %v3737 = vshrl.u32 %v3719, %v3735
        %v3738 = vor.u32 %v3736, %v3737
        %v3739 = vsub.s32 4294967266, %v3734
        %v3740 = vadd.s32 %v3739, 127
        %v3741 = vshll.u32 %v3740, 23
        %v3742 = vor.u32 4788187, %v3741
        %v3743 = vand.u32 2147483647, %v3742
        %v3745 = vcvt.s32.f32 %v3738
        %v3746 = vmul.f32 %v3745, %v3743
        %v3747 = vxor.u32 %v3746, 2147483648
        %v3748 = vsel %vm3665, %v3747, %v3746
        %v3749 = vsub.s32 4, %v3725
        %v3750 = vsel %vm3665, %v3749, %v3725
        %v3751 = vsel %vm3664, %v1049, %v3748
        %v3752 = vsel %vm3664, 0, %v3750
        %v3753 = vcosq.f32.pop %v3751
        %v3754 = vsinq.f32.pop %v3751
        %vm3755 = vweird.f32 %v1049
        %v3756 = vand.u32 %v3752, 3
        %vm3757 = vcmp.lt.s32.totalorder %v3756, 2
        %vm3758 = vcmp.eq.s32.totalorder %v3756, 0
        %v3759 = vxor.u32 %v3754, 2147483648
        %v3760 = vsel %vm3758, %v3753, %v3759
        %vm3761 = vcmp.eq.s32.totalorder %v3756, 2
        %v3762 = vxor.u32 %v3753, 2147483648
        %v3763 = vsel %vm3761, %v3762, %v3754
        %v3764 = vsel %vm3757, %v3760, %v3763
        %v3765 = vsel %vm3755, nan, %v3764
        %v3766 = vand.u32 2147483647, %v1050
        %vm3767 = vcmp.le.f32.partialorder %v3766, 0.7853982
        %vm3768 = vcmp.lt.s32.totalorder %v1050, 0
        %v3769 = vand.u32 %v1050, 2139095040
        %v3770 = vshrl.u32 %v3769, 23
        %v3771 = vsub.s32 %v3770, 127
        %v3772 = vand.u32 2147483647, %v1050
        %v3773 = vand.u32 %v3772, 8388607
        %v3774 = vor.u32 %v3773, 8388608
        %v3775 = vsub.s32 0, %v3774
        %v3776 = vadd.s32 %v3771, 1
        %vm3777 = vcmp.gt.s32.totalorder %v3776, 0
        %v3778 = vsel %vm3777, %v3776, 0
        %v3779 = vshrl.u32 %v3778, 5
        %v3780 = vand.u32 %v3778, 31
        %v3781 = vsub.s32 32, %v3780
        %v3782 = vshrl.u32 683565275, %v3781
        %v3783 = vshll.u32 683565275, %v3780
        %v3784 = vshrl.u32 2475754826, %v3781
        %v3785 = vor.u32 %v3783, %v3784
        %v3786 = vshll.u32 2475754826, %v3780
        %v3787 = vshrl.u32 2131351028, %v3781
        %v3788 = vor.u32 %v3786, %v3787
        %v3789 = vshll.u32 2131351028, %v3780
        %v3790 = vshrl.u32 2102212464, %v3781
        %v3791 = vor.u32 %v3789, %v3790
        %v3792 = vshll.u32 2102212464, %v3780
        %v3793 = vshrl.u32 920167782, %v3781
        %v3794 = vor.u32 %v3792, %v3793
        %v3795 = vshll.u32 920167782, %v3780
        %v3796 = vshrl.u32 1326507024, %v3781
        %v3797 = vor.u32 %v3795, %v3796
        %vm3798 = vcmp.lt.s32.totalorder %v3779, 1
        %vm3799 = vcmp.lt.s32.totalorder %v3779, 2
        %vm3800 = vcmp.lt.s32.totalorder %v3779, 3
        %vm3801 = vcmp.lt.s32.totalorder %v3779, 4
        %v3802 = vsel %vm3798, %v3782, %v3785
        %v3803 = vsel %vm3801, %v3791, 2102212464
        %v3804 = vsel %vm3800, %v3788, %v3803
        %v3805 = vsel %vm3799, %v3802, %v3804
        %v3806 = vsel %vm3798, %v3785, %v3788
        %v3807 = vsel %vm3801, %v3794, 920167782
        %v3808 = vsel %vm3800, %v3791, %v3807
        %v3809 = vsel %vm3799, %v3806, %v3808
        %v3810 = vsel %vm3798, %v3788, %v3791
        %v3811 = vsel %vm3801, %v3797, 1326507024
        %v3812 = vsel %vm3800, %v3794, %v3811
        %v3813 = vsel %vm3799, %v3810, %v3812
        %v3814 = vshll.u32 %v3774, 8
        %v3815 = vmul.u32.u64.compose %v3814, %v3813
        %v3816 = vextract.low.u32 %v3815
        %v3817 = vextract.high.u32 %v3815
        %v3818 = vmul.u32.u64.compose %v3814, %v3809
        %v3819 = vextract.low.u32 %v3818
        %v3820 = vextract.high.u32 %v3818
        %v3821 = vmul.u32 %v3814, %v3805
        %v3822 = vadd.s32 %v3817, %v3819
        %vm3823 = vc.u32 %v3817, %v3819
        %v3824 = vadd.s32 %v3820, 1
        %v3825 = vsel %vm3823, %v3824, %v3820
        %v3826 = vadd.s32 %v3821, %v3825
        %v3827 = vadd.s32 %v3826, 536870912
        %v3828 = vshrl.u32 %v3827, 30
        %v3829 = vshll.u32 %v3828, 30
        %v3830 = vsub.s32 %v3826, %v3829
        %vm3831 = vcmp.lt.s32.totalorder %v3830, 0
        %v3832 = vsub.s32 0, %v3830
        %v3833 = vsel %vm3831, %v3832, %v3830
        %v3834 = vclz %v3833
        %v3835 = vsub.s32 %v3834, 2
        %vm3836 = vcmp.gt.s32.totalorder 0, %v3835
        %v3837 = vsel %vm3836, 0, %v3835
        %v3838 = vsub.s32 32, %v3837
        %v3839 = vshll.u32 %v3830, %v3837
        %v3840 = vshrl.u32 %v3822, %v3838
        %v3841 = vor.u32 %v3839, %v3840
        %v3842 = vsub.s32 4294967266, %v3837
        %v3843 = vadd.s32 %v3842, 127
        %v3844 = vshll.u32 %v3843, 23
        %v3845 = vor.u32 4788187, %v3844
        %v3846 = vand.u32 2147483647, %v3845
        %v3848 = vcvt.s32.f32 %v3841
        %v3849 = vmul.f32 %v3848, %v3846
        %v3850 = vxor.u32 %v3849, 2147483648
        %v3851 = vsel %vm3768, %v3850, %v3849
        %v3852 = vsub.s32 4, %v3828
        %v3853 = vsel %vm3768, %v3852, %v3828
        %v3854 = vsel %vm3767, %v1050, %v3851
        %v3855 = vsel %vm3767, 0, %v3853
        %v3856 = vcosq.f32.pop %v3854
        %v3857 = vsinq.f32.pop %v3854
        %vm3858 = vweird.f32 %v1050
        %v3859 = vand.u32 %v3855, 3
        %vm3860 = vcmp.lt.s32.totalorder %v3859, 2
        %vm3861 = vcmp.eq.s32.totalorder %v3859, 0
        %v3862 = vxor.u32 %v3857, 2147483648
        %v3863 = vsel %vm3861, %v3856, %v3862
        %vm3864 = vcmp.eq.s32.totalorder %v3859, 2
        %v3865 = vxor.u32 %v3856, 2147483648
        %v3866 = vsel %vm3864, %v3865, %v3857
        %v3867 = vsel %vm3860, %v3863, %v3866
        %v3868 = vsel %vm3858, nan, %v3867
        %v3869 = vand.u32 2147483647, %v1051
        %vm3870 = vcmp.le.f32.partialorder %v3869, 0.7853982
        %vm3871 = vcmp.lt.s32.totalorder %v1051, 0
        %v3872 = vand.u32 %v1051, 2139095040
        %v3873 = vshrl.u32 %v3872, 23
        %v3874 = vsub.s32 %v3873, 127
        %v3875 = vand.u32 2147483647, %v1051
        %v3876 = vand.u32 %v3875, 8388607
        %v3877 = vor.u32 %v3876, 8388608
        %v3878 = vsub.s32 0, %v3877
        %v3879 = vadd.s32 %v3874, 1
        %vm3880 = vcmp.gt.s32.totalorder %v3879, 0
        %v3881 = vsel %vm3880, %v3879, 0
        %v3882 = vshrl.u32 %v3881, 5
        %v3883 = vand.u32 %v3881, 31
        %v3884 = vsub.s32 32, %v3883
        %v3885 = vshrl.u32 683565275, %v3884
        %v3886 = vshll.u32 683565275, %v3883
        %v3887 = vshrl.u32 2475754826, %v3884
        %v3888 = vor.u32 %v3886, %v3887
        %v3889 = vshll.u32 2475754826, %v3883
        %v3890 = vshrl.u32 2131351028, %v3884
        %v3891 = vor.u32 %v3889, %v3890
        %v3892 = vshll.u32 2131351028, %v3883
        %v3893 = vshrl.u32 2102212464, %v3884
        %v3894 = vor.u32 %v3892, %v3893
        %v3895 = vshll.u32 2102212464, %v3883
        %v3896 = vshrl.u32 920167782, %v3884
        %v3897 = vor.u32 %v3895, %v3896
        %v3898 = vshll.u32 920167782, %v3883
        %v3899 = vshrl.u32 1326507024, %v3884
        %v3900 = vor.u32 %v3898, %v3899
        %vm3901 = vcmp.lt.s32.totalorder %v3882, 1
        %vm3902 = vcmp.lt.s32.totalorder %v3882, 2
        %vm3903 = vcmp.lt.s32.totalorder %v3882, 3
        %vm3904 = vcmp.lt.s32.totalorder %v3882, 4
        %v3905 = vsel %vm3901, %v3885, %v3888
        %v3906 = vsel %vm3904, %v3894, 2102212464
        %v3907 = vsel %vm3903, %v3891, %v3906
        %v3908 = vsel %vm3902, %v3905, %v3907
        %v3909 = vsel %vm3901, %v3888, %v3891
        %v3910 = vsel %vm3904, %v3897, 920167782
        %v3911 = vsel %vm3903, %v3894, %v3910
        %v3912 = vsel %vm3902, %v3909, %v3911
        %v3913 = vsel %vm3901, %v3891, %v3894
        %v3914 = vsel %vm3904, %v3900, 1326507024
        %v3915 = vsel %vm3903, %v3897, %v3914
        %v3916 = vsel %vm3902, %v3913, %v3915
        %v3917 = vshll.u32 %v3877, 8
        %v3918 = vmul.u32.u64.compose %v3917, %v3916
        %v3919 = vextract.low.u32 %v3918
        %v3920 = vextract.high.u32 %v3918
        %v3921 = vmul.u32.u64.compose %v3917, %v3912
        %v3922 = vextract.low.u32 %v3921
        %v3923 = vextract.high.u32 %v3921
        %v3924 = vmul.u32 %v3917, %v3908
        %v3925 = vadd.s32 %v3920, %v3922
        %vm3926 = vc.u32 %v3920, %v3922
        %v3927 = vadd.s32 %v3923, 1
        %v3928 = vsel %vm3926, %v3927, %v3923
        %v3929 = vadd.s32 %v3924, %v3928
        %v3930 = vadd.s32 %v3929, 536870912
        %v3931 = vshrl.u32 %v3930, 30
        %v3932 = vshll.u32 %v3931, 30
        %v3933 = vsub.s32 %v3929, %v3932
        %vm3934 = vcmp.lt.s32.totalorder %v3933, 0
        %v3935 = vsub.s32 0, %v3933
        %v3936 = vsel %vm3934, %v3935, %v3933
        %v3937 = vclz %v3936
        %v3938 = vsub.s32 %v3937, 2
        %vm3939 = vcmp.gt.s32.totalorder 0, %v3938
        %v3940 = vsel %vm3939, 0, %v3938
        %v3941 = vsub.s32 32, %v3940
        %v3942 = vshll.u32 %v3933, %v3940
        %v3943 = vshrl.u32 %v3925, %v3941
        %v3944 = vor.u32 %v3942, %v3943
        %v3945 = vsub.s32 4294967266, %v3940
        %v3946 = vadd.s32 %v3945, 127
        %v3947 = vshll.u32 %v3946, 23
        %v3948 = vor.u32 4788187, %v3947
        %v3949 = vand.u32 2147483647, %v3948
        %v3951 = vcvt.s32.f32 %v3944
        %v3952 = vmul.f32 %v3951, %v3949
        %v3953 = vxor.u32 %v3952, 2147483648
        %v3954 = vsel %vm3871, %v3953, %v3952
        %v3955 = vsub.s32 4, %v3931
        %v3956 = vsel %vm3871, %v3955, %v3931
        %v3957 = vsel %vm3870, %v1051, %v3954
        %v3958 = vsel %vm3870, 0, %v3956
        %v3959 = vcosq.f32.pop %v3957
        %v3960 = vsinq.f32.pop %v3957
        %vm3961 = vweird.f32 %v1051
        %v3962 = vand.u32 %v3958, 3
        %vm3963 = vcmp.lt.s32.totalorder %v3962, 2
        %vm3964 = vcmp.eq.s32.totalorder %v3962, 0
        %v3965 = vxor.u32 %v3960, 2147483648
        %v3966 = vsel %vm3964, %v3959, %v3965
        %vm3967 = vcmp.eq.s32.totalorder %v3962, 2
        %v3968 = vxor.u32 %v3959, 2147483648
        %v3969 = vsel %vm3967, %v3968, %v3960
        %v3970 = vsel %vm3963, %v3966, %v3969
        %v3971 = vsel %vm3961, nan, %v3970
        %v3972 = vand.u32 2147483647, %v1052
        %vm3973 = vcmp.le.f32.partialorder %v3972, 0.7853982
        %vm3974 = vcmp.lt.s32.totalorder %v1052, 0
        %v3975 = vand.u32 %v1052, 2139095040
        %v3976 = vshrl.u32 %v3975, 23
        %v3977 = vsub.s32 %v3976, 127
        %v3978 = vand.u32 2147483647, %v1052
        %v3979 = vand.u32 %v3978, 8388607
        %v3980 = vor.u32 %v3979, 8388608
        %v3981 = vsub.s32 0, %v3980
        %v3982 = vadd.s32 %v3977, 1
        %vm3983 = vcmp.gt.s32.totalorder %v3982, 0
        %v3984 = vsel %vm3983, %v3982, 0
        %v3985 = vshrl.u32 %v3984, 5
        %v3986 = vand.u32 %v3984, 31
        %v3987 = vsub.s32 32, %v3986
        %v3988 = vshrl.u32 683565275, %v3987
        %v3989 = vshll.u32 683565275, %v3986
        %v3990 = vshrl.u32 2475754826, %v3987
        %v3991 = vor.u32 %v3989, %v3990
        %v3992 = vshll.u32 2475754826, %v3986
        %v3993 = vshrl.u32 2131351028, %v3987
        %v3994 = vor.u32 %v3992, %v3993
        %v3995 = vshll.u32 2131351028, %v3986
        %v3996 = vshrl.u32 2102212464, %v3987
        %v3997 = vor.u32 %v3995, %v3996
        %v3998 = vshll.u32 2102212464, %v3986
        %v3999 = vshrl.u32 920167782, %v3987
        %v4000 = vor.u32 %v3998, %v3999
        %v4001 = vshll.u32 920167782, %v3986
        %v4002 = vshrl.u32 1326507024, %v3987
        %v4003 = vor.u32 %v4001, %v4002
        %vm4004 = vcmp.lt.s32.totalorder %v3985, 1
        %vm4005 = vcmp.lt.s32.totalorder %v3985, 2
        %vm4006 = vcmp.lt.s32.totalorder %v3985, 3
        %vm4007 = vcmp.lt.s32.totalorder %v3985, 4
        %v4008 = vsel %vm4004, %v3988, %v3991
        %v4009 = vsel %vm4007, %v3997, 2102212464
        %v4010 = vsel %vm4006, %v3994, %v4009
        %v4011 = vsel %vm4005, %v4008, %v4010
        %v4012 = vsel %vm4004, %v3991, %v3994
        %v4013 = vsel %vm4007, %v4000, 920167782
        %v4014 = vsel %vm4006, %v3997, %v4013
        %v4015 = vsel %vm4005, %v4012, %v4014
        %v4016 = vsel %vm4004, %v3994, %v3997
        %v4017 = vsel %vm4007, %v4003, 1326507024
        %v4018 = vsel %vm4006, %v4000, %v4017
        %v4019 = vsel %vm4005, %v4016, %v4018
        %v4020 = vshll.u32 %v3980, 8
        %v4021 = vmul.u32.u64.compose %v4020, %v4019
        %v4022 = vextract.low.u32 %v4021
        %v4023 = vextract.high.u32 %v4021
        %v4024 = vmul.u32.u64.compose %v4020, %v4015
        %v4025 = vextract.low.u32 %v4024
        %v4026 = vextract.high.u32 %v4024
        %v4027 = vmul.u32 %v4020, %v4011
        %v4028 = vadd.s32 %v4023, %v4025
        %vm4029 = vc.u32 %v4023, %v4025
        %v4030 = vadd.s32 %v4026, 1
        %v4031 = vsel %vm4029, %v4030, %v4026
        %v4032 = vadd.s32 %v4027, %v4031
        %v4033 = vadd.s32 %v4032, 536870912
        %v4034 = vshrl.u32 %v4033, 30
        %v4035 = vshll.u32 %v4034, 30
        %v4036 = vsub.s32 %v4032, %v4035
        %vm4037 = vcmp.lt.s32.totalorder %v4036, 0
        %v4038 = vsub.s32 0, %v4036
        %v4039 = vsel %vm4037, %v4038, %v4036
        %v4040 = vclz %v4039
        %v4041 = vsub.s32 %v4040, 2
        %vm4042 = vcmp.gt.s32.totalorder 0, %v4041
        %v4043 = vsel %vm4042, 0, %v4041
        %v4044 = vsub.s32 32, %v4043
        %v4045 = vshll.u32 %v4036, %v4043
        %v4046 = vshrl.u32 %v4028, %v4044
        %v4047 = vor.u32 %v4045, %v4046
        %v4048 = vsub.s32 4294967266, %v4043
        %v4049 = vadd.s32 %v4048, 127
        %v4050 = vshll.u32 %v4049, 23
        %v4051 = vor.u32 4788187, %v4050
        %v4052 = vand.u32 2147483647, %v4051
        %v4054 = vcvt.s32.f32 %v4047
        %v4055 = vmul.f32 %v4054, %v4052
        %v4056 = vxor.u32 %v4055, 2147483648
        %v4057 = vsel %vm3974, %v4056, %v4055
        %v4058 = vsub.s32 4, %v4034
        %v4059 = vsel %vm3974, %v4058, %v4034
        %v4060 = vsel %vm3973, %v1052, %v4057
        %v4061 = vsel %vm3973, 0, %v4059
        %v4062 = vcosq.f32.pop %v4060
        %v4063 = vsinq.f32.pop %v4060
        %vm4064 = vweird.f32 %v1052
        %v4065 = vand.u32 %v4061, 3
        %vm4066 = vcmp.lt.s32.totalorder %v4065, 2
        %vm4067 = vcmp.eq.s32.totalorder %v4065, 0
        %v4068 = vxor.u32 %v4063, 2147483648
        %v4069 = vsel %vm4067, %v4062, %v4068
        %vm4070 = vcmp.eq.s32.totalorder %v4065, 2
        %v4071 = vxor.u32 %v4062, 2147483648
        %v4072 = vsel %vm4070, %v4071, %v4063
        %v4073 = vsel %vm4066, %v4069, %v4072
        %v4074 = vsel %vm4064, nan, %v4073
        %v4075 = vand.u32 2147483647, %v1053
        %vm4076 = vcmp.le.f32.partialorder %v4075, 0.7853982
        %vm4077 = vcmp.lt.s32.totalorder %v1053, 0
        %v4078 = vand.u32 %v1053, 2139095040
        %v4079 = vshrl.u32 %v4078, 23
        %v4080 = vsub.s32 %v4079, 127
        %v4081 = vand.u32 2147483647, %v1053
        %v4082 = vand.u32 %v4081, 8388607
        %v4083 = vor.u32 %v4082, 8388608
        %v4084 = vsub.s32 0, %v4083
        %v4085 = vadd.s32 %v4080, 1
        %vm4086 = vcmp.gt.s32.totalorder %v4085, 0
        %v4087 = vsel %vm4086, %v4085, 0
        %v4088 = vshrl.u32 %v4087, 5
        %v4089 = vand.u32 %v4087, 31
        %v4090 = vsub.s32 32, %v4089
        %v4091 = vshrl.u32 683565275, %v4090
        %v4092 = vshll.u32 683565275, %v4089
        %v4093 = vshrl.u32 2475754826, %v4090
        %v4094 = vor.u32 %v4092, %v4093
        %v4095 = vshll.u32 2475754826, %v4089
        %v4096 = vshrl.u32 2131351028, %v4090
        %v4097 = vor.u32 %v4095, %v4096
        %v4098 = vshll.u32 2131351028, %v4089
        %v4099 = vshrl.u32 2102212464, %v4090
        %v4100 = vor.u32 %v4098, %v4099
        %v4101 = vshll.u32 2102212464, %v4089
        %v4102 = vshrl.u32 920167782, %v4090
        %v4103 = vor.u32 %v4101, %v4102
        %v4104 = vshll.u32 920167782, %v4089
        %v4105 = vshrl.u32 1326507024, %v4090
        %v4106 = vor.u32 %v4104, %v4105
        %vm4107 = vcmp.lt.s32.totalorder %v4088, 1
        %vm4108 = vcmp.lt.s32.totalorder %v4088, 2
        %vm4109 = vcmp.lt.s32.totalorder %v4088, 3
        %vm4110 = vcmp.lt.s32.totalorder %v4088, 4
        %v4111 = vsel %vm4107, %v4091, %v4094
        %v4112 = vsel %vm4110, %v4100, 2102212464
        %v4113 = vsel %vm4109, %v4097, %v4112
        %v4114 = vsel %vm4108, %v4111, %v4113
        %v4115 = vsel %vm4107, %v4094, %v4097
        %v4116 = vsel %vm4110, %v4103, 920167782
        %v4117 = vsel %vm4109, %v4100, %v4116
        %v4118 = vsel %vm4108, %v4115, %v4117
        %v4119 = vsel %vm4107, %v4097, %v4100
        %v4120 = vsel %vm4110, %v4106, 1326507024
        %v4121 = vsel %vm4109, %v4103, %v4120
        %v4122 = vsel %vm4108, %v4119, %v4121
        %v4123 = vshll.u32 %v4083, 8
        %v4124 = vmul.u32.u64.compose %v4123, %v4122
        %v4125 = vextract.low.u32 %v4124
        %v4126 = vextract.high.u32 %v4124
        %v4127 = vmul.u32.u64.compose %v4123, %v4118
        %v4128 = vextract.low.u32 %v4127
        %v4129 = vextract.high.u32 %v4127
        %v4130 = vmul.u32 %v4123, %v4114
        %v4131 = vadd.s32 %v4126, %v4128
        %vm4132 = vc.u32 %v4126, %v4128
        %v4133 = vadd.s32 %v4129, 1
        %v4134 = vsel %vm4132, %v4133, %v4129
        %v4135 = vadd.s32 %v4130, %v4134
        %v4136 = vadd.s32 %v4135, 536870912
        %v4137 = vshrl.u32 %v4136, 30
        %v4138 = vshll.u32 %v4137, 30
        %v4139 = vsub.s32 %v4135, %v4138
        %vm4140 = vcmp.lt.s32.totalorder %v4139, 0
        %v4141 = vsub.s32 0, %v4139
        %v4142 = vsel %vm4140, %v4141, %v4139
        %v4143 = vclz %v4142
        %v4144 = vsub.s32 %v4143, 2
        %vm4145 = vcmp.gt.s32.totalorder 0, %v4144
        %v4146 = vsel %vm4145, 0, %v4144
        %v4147 = vsub.s32 32, %v4146
        %v4148 = vshll.u32 %v4139, %v4146
        %v4149 = vshrl.u32 %v4131, %v4147
        %v4150 = vor.u32 %v4148, %v4149
        %v4151 = vsub.s32 4294967266, %v4146
        %v4152 = vadd.s32 %v4151, 127
        %v4153 = vshll.u32 %v4152, 23
        %v4154 = vor.u32 4788187, %v4153
        %v4155 = vand.u32 2147483647, %v4154
        %v4157 = vcvt.s32.f32 %v4150
        %v4158 = vmul.f32 %v4157, %v4155
        %v4159 = vxor.u32 %v4158, 2147483648
        %v4160 = vsel %vm4077, %v4159, %v4158
        %v4161 = vsub.s32 4, %v4137
        %v4162 = vsel %vm4077, %v4161, %v4137
        %v4163 = vsel %vm4076, %v1053, %v4160
        %v4164 = vsel %vm4076, 0, %v4162
        %v4165 = vcosq.f32.pop %v4163
        %v4166 = vsinq.f32.pop %v4163
        %vm4167 = vweird.f32 %v1053
        %v4168 = vand.u32 %v4164, 3
        %vm4169 = vcmp.lt.s32.totalorder %v4168, 2
        %vm4170 = vcmp.eq.s32.totalorder %v4168, 0
        %v4171 = vxor.u32 %v4166, 2147483648
        %v4172 = vsel %vm4170, %v4165, %v4171
        %vm4173 = vcmp.eq.s32.totalorder %v4168, 2
        %v4174 = vxor.u32 %v4165, 2147483648
        %v4175 = vsel %vm4173, %v4174, %v4166
        %v4176 = vsel %vm4169, %v4172, %v4175
        %v4177 = vsel %vm4167, nan, %v4176
        %v4178 = vand.u32 2147483647, %v1054
        %vm4179 = vcmp.le.f32.partialorder %v4178, 0.7853982
        %vm4180 = vcmp.lt.s32.totalorder %v1054, 0
        %v4181 = vand.u32 %v1054, 2139095040
        %v4182 = vshrl.u32 %v4181, 23
        %v4183 = vsub.s32 %v4182, 127
        %v4184 = vand.u32 2147483647, %v1054
        %v4185 = vand.u32 %v4184, 8388607
        %v4186 = vor.u32 %v4185, 8388608
        %v4187 = vsub.s32 0, %v4186
        %v4188 = vadd.s32 %v4183, 1
        %vm4189 = vcmp.gt.s32.totalorder %v4188, 0
        %v4190 = vsel %vm4189, %v4188, 0
        %v4191 = vshrl.u32 %v4190, 5
        %v4192 = vand.u32 %v4190, 31
        %v4193 = vsub.s32 32, %v4192
        %v4194 = vshrl.u32 683565275, %v4193
        %v4195 = vshll.u32 683565275, %v4192
        %v4196 = vshrl.u32 2475754826, %v4193
        %v4197 = vor.u32 %v4195, %v4196
        %v4198 = vshll.u32 2475754826, %v4192
        %v4199 = vshrl.u32 2131351028, %v4193
        %v4200 = vor.u32 %v4198, %v4199
        %v4201 = vshll.u32 2131351028, %v4192
        %v4202 = vshrl.u32 2102212464, %v4193
        %v4203 = vor.u32 %v4201, %v4202
        %v4204 = vshll.u32 2102212464, %v4192
        %v4205 = vshrl.u32 920167782, %v4193
        %v4206 = vor.u32 %v4204, %v4205
        %v4207 = vshll.u32 920167782, %v4192
        %v4208 = vshrl.u32 1326507024, %v4193
        %v4209 = vor.u32 %v4207, %v4208
        %vm4210 = vcmp.lt.s32.totalorder %v4191, 1
        %vm4211 = vcmp.lt.s32.totalorder %v4191, 2
        %vm4212 = vcmp.lt.s32.totalorder %v4191, 3
        %vm4213 = vcmp.lt.s32.totalorder %v4191, 4
        %v4214 = vsel %vm4210, %v4194, %v4197
        %v4215 = vsel %vm4213, %v4203, 2102212464
        %v4216 = vsel %vm4212, %v4200, %v4215
        %v4217 = vsel %vm4211, %v4214, %v4216
        %v4218 = vsel %vm4210, %v4197, %v4200
        %v4219 = vsel %vm4213, %v4206, 920167782
        %v4220 = vsel %vm4212, %v4203, %v4219
        %v4221 = vsel %vm4211, %v4218, %v4220
        %v4222 = vsel %vm4210, %v4200, %v4203
        %v4223 = vsel %vm4213, %v4209, 1326507024
        %v4224 = vsel %vm4212, %v4206, %v4223
        %v4225 = vsel %vm4211, %v4222, %v4224
        %v4226 = vshll.u32 %v4186, 8
        %v4227 = vmul.u32.u64.compose %v4226, %v4225
        %v4228 = vextract.low.u32 %v4227
        %v4229 = vextract.high.u32 %v4227
        %v4230 = vmul.u32.u64.compose %v4226, %v4221
        %v4231 = vextract.low.u32 %v4230
        %v4232 = vextract.high.u32 %v4230
        %v4233 = vmul.u32 %v4226, %v4217
        %v4234 = vadd.s32 %v4229, %v4231
        %vm4235 = vc.u32 %v4229, %v4231
        %v4236 = vadd.s32 %v4232, 1
        %v4237 = vsel %vm4235, %v4236, %v4232
        %v4238 = vadd.s32 %v4233, %v4237
        %v4239 = vadd.s32 %v4238, 536870912
        %v4240 = vshrl.u32 %v4239, 30
        %v4241 = vshll.u32 %v4240, 30
        %v4242 = vsub.s32 %v4238, %v4241
        %vm4243 = vcmp.lt.s32.totalorder %v4242, 0
        %v4244 = vsub.s32 0, %v4242
        %v4245 = vsel %vm4243, %v4244, %v4242
        %v4246 = vclz %v4245
        %v4247 = vsub.s32 %v4246, 2
        %vm4248 = vcmp.gt.s32.totalorder 0, %v4247
        %v4249 = vsel %vm4248, 0, %v4247
        %v4250 = vsub.s32 32, %v4249
        %v4251 = vshll.u32 %v4242, %v4249
        %v4252 = vshrl.u32 %v4234, %v4250
        %v4253 = vor.u32 %v4251, %v4252
        %v4254 = vsub.s32 4294967266, %v4249
        %v4255 = vadd.s32 %v4254, 127
        %v4256 = vshll.u32 %v4255, 23
        %v4257 = vor.u32 4788187, %v4256
        %v4258 = vand.u32 2147483647, %v4257
        %v4260 = vcvt.s32.f32 %v4253
        %v4261 = vmul.f32 %v4260, %v4258
        %v4262 = vxor.u32 %v4261, 2147483648
        %v4263 = vsel %vm4180, %v4262, %v4261
        %v4264 = vsub.s32 4, %v4240
        %v4265 = vsel %vm4180, %v4264, %v4240
        %v4266 = vsel %vm4179, %v1054, %v4263
        %v4267 = vsel %vm4179, 0, %v4265
        %v4268 = vcosq.f32.pop %v4266
        %v4269 = vsinq.f32.pop %v4266
        %vm4270 = vweird.f32 %v1054
        %v4271 = vand.u32 %v4267, 3
        %vm4272 = vcmp.lt.s32.totalorder %v4271, 2
        %vm4273 = vcmp.eq.s32.totalorder %v4271, 0
        %v4274 = vxor.u32 %v4269, 2147483648
        %v4275 = vsel %vm4273, %v4268, %v4274
        %vm4276 = vcmp.eq.s32.totalorder %v4271, 2
        %v4277 = vxor.u32 %v4268, 2147483648
        %v4278 = vsel %vm4276, %v4277, %v4269
        %v4279 = vsel %vm4272, %v4275, %v4278
        %v4280 = vsel %vm4270, nan, %v4279
        %v4281 = vand.u32 2147483647, %v1055
        %vm4282 = vcmp.le.f32.partialorder %v4281, 0.7853982
        %vm4283 = vcmp.lt.s32.totalorder %v1055, 0
        %v4284 = vand.u32 %v1055, 2139095040
        %v4285 = vshrl.u32 %v4284, 23
        %v4286 = vsub.s32 %v4285, 127
        %v4287 = vand.u32 2147483647, %v1055
        %v4288 = vand.u32 %v4287, 8388607
        %v4289 = vor.u32 %v4288, 8388608
        %v4290 = vsub.s32 0, %v4289
        %v4291 = vadd.s32 %v4286, 1
        %vm4292 = vcmp.gt.s32.totalorder %v4291, 0
        %v4293 = vsel %vm4292, %v4291, 0
        %v4294 = vshrl.u32 %v4293, 5
        %v4295 = vand.u32 %v4293, 31
        %v4296 = vsub.s32 32, %v4295
        %v4297 = vshrl.u32 683565275, %v4296
        %v4298 = vshll.u32 683565275, %v4295
        %v4299 = vshrl.u32 2475754826, %v4296
        %v4300 = vor.u32 %v4298, %v4299
        %v4301 = vshll.u32 2475754826, %v4295
        %v4302 = vshrl.u32 2131351028, %v4296
        %v4303 = vor.u32 %v4301, %v4302
        %v4304 = vshll.u32 2131351028, %v4295
        %v4305 = vshrl.u32 2102212464, %v4296
        %v4306 = vor.u32 %v4304, %v4305
        %v4307 = vshll.u32 2102212464, %v4295
        %v4308 = vshrl.u32 920167782, %v4296
        %v4309 = vor.u32 %v4307, %v4308
        %v4310 = vshll.u32 920167782, %v4295
        %v4311 = vshrl.u32 1326507024, %v4296
        %v4312 = vor.u32 %v4310, %v4311
        %vm4313 = vcmp.lt.s32.totalorder %v4294, 1
        %vm4314 = vcmp.lt.s32.totalorder %v4294, 2
        %vm4315 = vcmp.lt.s32.totalorder %v4294, 3
        %vm4316 = vcmp.lt.s32.totalorder %v4294, 4
        %v4317 = vsel %vm4313, %v4297, %v4300
        %v4318 = vsel %vm4316, %v4306, 2102212464
        %v4319 = vsel %vm4315, %v4303, %v4318
        %v4320 = vsel %vm4314, %v4317, %v4319
        %v4321 = vsel %vm4313, %v4300, %v4303
        %v4322 = vsel %vm4316, %v4309, 920167782
        %v4323 = vsel %vm4315, %v4306, %v4322
        %v4324 = vsel %vm4314, %v4321, %v4323
        %v4325 = vsel %vm4313, %v4303, %v4306
        %v4326 = vsel %vm4316, %v4312, 1326507024
        %v4327 = vsel %vm4315, %v4309, %v4326
        %v4328 = vsel %vm4314, %v4325, %v4327
        %v4329 = vshll.u32 %v4289, 8
        %v4330 = vmul.u32.u64.compose %v4329, %v4328
        %v4331 = vextract.low.u32 %v4330
        %v4332 = vextract.high.u32 %v4330
        %v4333 = vmul.u32.u64.compose %v4329, %v4324
        %v4334 = vextract.low.u32 %v4333
        %v4335 = vextract.high.u32 %v4333
        %v4336 = vmul.u32 %v4329, %v4320
        %v4337 = vadd.s32 %v4332, %v4334
        %vm4338 = vc.u32 %v4332, %v4334
        %v4339 = vadd.s32 %v4335, 1
        %v4340 = vsel %vm4338, %v4339, %v4335
        %v4341 = vadd.s32 %v4336, %v4340
        %v4342 = vadd.s32 %v4341, 536870912
        %v4343 = vshrl.u32 %v4342, 30
        %v4344 = vshll.u32 %v4343, 30
        %v4345 = vsub.s32 %v4341, %v4344
        %vm4346 = vcmp.lt.s32.totalorder %v4345, 0
        %v4347 = vsub.s32 0, %v4345
        %v4348 = vsel %vm4346, %v4347, %v4345
        %v4349 = vclz %v4348
        %v4350 = vsub.s32 %v4349, 2
        %vm4351 = vcmp.gt.s32.totalorder 0, %v4350
        %v4352 = vsel %vm4351, 0, %v4350
        %v4353 = vsub.s32 32, %v4352
        %v4354 = vshll.u32 %v4345, %v4352
        %v4355 = vshrl.u32 %v4337, %v4353
        %v4356 = vor.u32 %v4354, %v4355
        %v4357 = vsub.s32 4294967266, %v4352
        %v4358 = vadd.s32 %v4357, 127
        %v4359 = vshll.u32 %v4358, 23
        %v4360 = vor.u32 4788187, %v4359
        %v4361 = vand.u32 2147483647, %v4360
        %v4363 = vcvt.s32.f32 %v4356
        %v4364 = vmul.f32 %v4363, %v4361
        %v4365 = vxor.u32 %v4364, 2147483648
        %v4366 = vsel %vm4283, %v4365, %v4364
        %v4367 = vsub.s32 4, %v4343
        %v4368 = vsel %vm4283, %v4367, %v4343
        %v4369 = vsel %vm4282, %v1055, %v4366
        %v4370 = vsel %vm4282, 0, %v4368
        %v4371 = vcosq.f32.pop %v4369
        %v4372 = vsinq.f32.pop %v4369
        %vm4373 = vweird.f32 %v1055
        %v4374 = vand.u32 %v4370, 3
        %vm4375 = vcmp.lt.s32.totalorder %v4374, 2
        %vm4376 = vcmp.eq.s32.totalorder %v4374, 0
        %v4377 = vxor.u32 %v4372, 2147483648
        %v4378 = vsel %vm4376, %v4371, %v4377
        %vm4379 = vcmp.eq.s32.totalorder %v4374, 2
        %v4380 = vxor.u32 %v4371, 2147483648
        %v4381 = vsel %vm4379, %v4380, %v4372
        %v4382 = vsel %vm4375, %v4378, %v4381
        %v4383 = vsel %vm4373, nan, %v4382
        %v4384 = vand.u32 2147483647, %v1056
        %vm4385 = vcmp.le.f32.partialorder %v4384, 0.7853982
        %vm4386 = vcmp.lt.s32.totalorder %v1056, 0
        %v4387 = vand.u32 %v1056, 2139095040
        %v4388 = vshrl.u32 %v4387, 23
        %v4389 = vsub.s32 %v4388, 127
        %v4390 = vand.u32 2147483647, %v1056
        %v4391 = vand.u32 %v4390, 8388607
        %v4392 = vor.u32 %v4391, 8388608
        %v4393 = vsub.s32 0, %v4392
        %v4394 = vadd.s32 %v4389, 1
        %vm4395 = vcmp.gt.s32.totalorder %v4394, 0
        %v4396 = vsel %vm4395, %v4394, 0
        %v4397 = vshrl.u32 %v4396, 5
        %v4398 = vand.u32 %v4396, 31
        %v4399 = vsub.s32 32, %v4398
        %v4400 = vshrl.u32 683565275, %v4399
        %v4401 = vshll.u32 683565275, %v4398
        %v4402 = vshrl.u32 2475754826, %v4399
        %v4403 = vor.u32 %v4401, %v4402
        %v4404 = vshll.u32 2475754826, %v4398
        %v4405 = vshrl.u32 2131351028, %v4399
        %v4406 = vor.u32 %v4404, %v4405
        %v4407 = vshll.u32 2131351028, %v4398
        %v4408 = vshrl.u32 2102212464, %v4399
        %v4409 = vor.u32 %v4407, %v4408
        %v4410 = vshll.u32 2102212464, %v4398
        %v4411 = vshrl.u32 920167782, %v4399
        %v4412 = vor.u32 %v4410, %v4411
        %v4413 = vshll.u32 920167782, %v4398
        %v4414 = vshrl.u32 1326507024, %v4399
        %v4415 = vor.u32 %v4413, %v4414
        %vm4416 = vcmp.lt.s32.totalorder %v4397, 1
        %vm4417 = vcmp.lt.s32.totalorder %v4397, 2
        %vm4418 = vcmp.lt.s32.totalorder %v4397, 3
        %vm4419 = vcmp.lt.s32.totalorder %v4397, 4
        %v4420 = vsel %vm4416, %v4400, %v4403
        %v4421 = vsel %vm4419, %v4409, 2102212464
        %v4422 = vsel %vm4418, %v4406, %v4421
        %v4423 = vsel %vm4417, %v4420, %v4422
        %v4424 = vsel %vm4416, %v4403, %v4406
        %v4425 = vsel %vm4419, %v4412, 920167782
        %v4426 = vsel %vm4418, %v4409, %v4425
        %v4427 = vsel %vm4417, %v4424, %v4426
        %v4428 = vsel %vm4416, %v4406, %v4409
        %v4429 = vsel %vm4419, %v4415, 1326507024
        %v4430 = vsel %vm4418, %v4412, %v4429
        %v4431 = vsel %vm4417, %v4428, %v4430
        %v4432 = vshll.u32 %v4392, 8
        %v4433 = vmul.u32.u64.compose %v4432, %v4431
        %v4434 = vextract.low.u32 %v4433
        %v4435 = vextract.high.u32 %v4433
        %v4436 = vmul.u32.u64.compose %v4432, %v4427
        %v4437 = vextract.low.u32 %v4436
        %v4438 = vextract.high.u32 %v4436
        %v4439 = vmul.u32 %v4432, %v4423
        %v4440 = vadd.s32 %v4435, %v4437
        %vm4441 = vc.u32 %v4435, %v4437
        %v4442 = vadd.s32 %v4438, 1
        %v4443 = vsel %vm4441, %v4442, %v4438
        %v4444 = vadd.s32 %v4439, %v4443
        %v4445 = vadd.s32 %v4444, 536870912
        %v4446 = vshrl.u32 %v4445, 30
        %v4447 = vshll.u32 %v4446, 30
        %v4448 = vsub.s32 %v4444, %v4447
        %vm4449 = vcmp.lt.s32.totalorder %v4448, 0
        %v4450 = vsub.s32 0, %v4448
        %v4451 = vsel %vm4449, %v4450, %v4448
        %v4452 = vclz %v4451
        %v4453 = vsub.s32 %v4452, 2
        %vm4454 = vcmp.gt.s32.totalorder 0, %v4453
        %v4455 = vsel %vm4454, 0, %v4453
        %v4456 = vsub.s32 32, %v4455
        %v4457 = vshll.u32 %v4448, %v4455
        %v4458 = vshrl.u32 %v4440, %v4456
        %v4459 = vor.u32 %v4457, %v4458
        %v4460 = vsub.s32 4294967266, %v4455
        %v4461 = vadd.s32 %v4460, 127
        %v4462 = vshll.u32 %v4461, 23
        %v4463 = vor.u32 4788187, %v4462
        %v4464 = vand.u32 2147483647, %v4463
        %v4466 = vcvt.s32.f32 %v4459
        %v4467 = vmul.f32 %v4466, %v4464
        %v4468 = vxor.u32 %v4467, 2147483648
        %v4469 = vsel %vm4386, %v4468, %v4467
        %v4470 = vsub.s32 4, %v4446
        %v4471 = vsel %vm4386, %v4470, %v4446
        %v4472 = vsel %vm4385, %v1056, %v4469
        %v4473 = vsel %vm4385, 0, %v4471
        %v4474 = vcosq.f32.pop %v4472
        %v4475 = vsinq.f32.pop %v4472
        %vm4476 = vweird.f32 %v1056
        %v4477 = vand.u32 %v4473, 3
        %vm4478 = vcmp.lt.s32.totalorder %v4477, 2
        %vm4479 = vcmp.eq.s32.totalorder %v4477, 0
        %v4480 = vxor.u32 %v4475, 2147483648
        %v4481 = vsel %vm4479, %v4474, %v4480
        %vm4482 = vcmp.eq.s32.totalorder %v4477, 2
        %v4483 = vxor.u32 %v4474, 2147483648
        %v4484 = vsel %vm4482, %v4483, %v4475
        %v4485 = vsel %vm4478, %v4481, %v4484
        %v4486 = vsel %vm4476, nan, %v4485
        %v4487 = vand.u32 2147483647, %v1057
        %vm4488 = vcmp.le.f32.partialorder %v4487, 0.7853982
        %vm4489 = vcmp.lt.s32.totalorder %v1057, 0
        %v4490 = vand.u32 %v1057, 2139095040
        %v4491 = vshrl.u32 %v4490, 23
        %v4492 = vsub.s32 %v4491, 127
        %v4493 = vand.u32 2147483647, %v1057
        %v4494 = vand.u32 %v4493, 8388607
        %v4495 = vor.u32 %v4494, 8388608
        %v4496 = vsub.s32 0, %v4495
        %v4497 = vadd.s32 %v4492, 1
        %vm4498 = vcmp.gt.s32.totalorder %v4497, 0
        %v4499 = vsel %vm4498, %v4497, 0
        %v4500 = vshrl.u32 %v4499, 5
        %v4501 = vand.u32 %v4499, 31
        %v4502 = vsub.s32 32, %v4501
        %v4503 = vshrl.u32 683565275, %v4502
        %v4504 = vshll.u32 683565275, %v4501
        %v4505 = vshrl.u32 2475754826, %v4502
        %v4506 = vor.u32 %v4504, %v4505
        %v4507 = vshll.u32 2475754826, %v4501
        %v4508 = vshrl.u32 2131351028, %v4502
        %v4509 = vor.u32 %v4507, %v4508
        %v4510 = vshll.u32 2131351028, %v4501
        %v4511 = vshrl.u32 2102212464, %v4502
        %v4512 = vor.u32 %v4510, %v4511
        %v4513 = vshll.u32 2102212464, %v4501
        %v4514 = vshrl.u32 920167782, %v4502
        %v4515 = vor.u32 %v4513, %v4514
        %v4516 = vshll.u32 920167782, %v4501
        %v4517 = vshrl.u32 1326507024, %v4502
        %v4518 = vor.u32 %v4516, %v4517
        %vm4519 = vcmp.lt.s32.totalorder %v4500, 1
        %vm4520 = vcmp.lt.s32.totalorder %v4500, 2
        %vm4521 = vcmp.lt.s32.totalorder %v4500, 3
        %vm4522 = vcmp.lt.s32.totalorder %v4500, 4
        %v4523 = vsel %vm4519, %v4503, %v4506
        %v4524 = vsel %vm4522, %v4512, 2102212464
        %v4525 = vsel %vm4521, %v4509, %v4524
        %v4526 = vsel %vm4520, %v4523, %v4525
        %v4527 = vsel %vm4519, %v4506, %v4509
        %v4528 = vsel %vm4522, %v4515, 920167782
        %v4529 = vsel %vm4521, %v4512, %v4528
        %v4530 = vsel %vm4520, %v4527, %v4529
        %v4531 = vsel %vm4519, %v4509, %v4512
        %v4532 = vsel %vm4522, %v4518, 1326507024
        %v4533 = vsel %vm4521, %v4515, %v4532
        %v4534 = vsel %vm4520, %v4531, %v4533
        %v4535 = vshll.u32 %v4495, 8
        %v4536 = vmul.u32.u64.compose %v4535, %v4534
        %v4537 = vextract.low.u32 %v4536
        %v4538 = vextract.high.u32 %v4536
        %v4539 = vmul.u32.u64.compose %v4535, %v4530
        %v4540 = vextract.low.u32 %v4539
        %v4541 = vextract.high.u32 %v4539
        %v4542 = vmul.u32 %v4535, %v4526
        %v4543 = vadd.s32 %v4538, %v4540
        %vm4544 = vc.u32 %v4538, %v4540
        %v4545 = vadd.s32 %v4541, 1
        %v4546 = vsel %vm4544, %v4545, %v4541
        %v4547 = vadd.s32 %v4542, %v4546
        %v4548 = vadd.s32 %v4547, 536870912
        %v4549 = vshrl.u32 %v4548, 30
        %v4550 = vshll.u32 %v4549, 30
        %v4551 = vsub.s32 %v4547, %v4550
        %vm4552 = vcmp.lt.s32.totalorder %v4551, 0
        %v4553 = vsub.s32 0, %v4551
        %v4554 = vsel %vm4552, %v4553, %v4551
        %v4555 = vclz %v4554
        %v4556 = vsub.s32 %v4555, 2
        %vm4557 = vcmp.gt.s32.totalorder 0, %v4556
        %v4558 = vsel %vm4557, 0, %v4556
        %v4559 = vsub.s32 32, %v4558
        %v4560 = vshll.u32 %v4551, %v4558
        %v4561 = vshrl.u32 %v4543, %v4559
        %v4562 = vor.u32 %v4560, %v4561
        %v4563 = vsub.s32 4294967266, %v4558
        %v4564 = vadd.s32 %v4563, 127
        %v4565 = vshll.u32 %v4564, 23
        %v4566 = vor.u32 4788187, %v4565
        %v4567 = vand.u32 2147483647, %v4566
        %v4569 = vcvt.s32.f32 %v4562
        %v4570 = vmul.f32 %v4569, %v4567
        %v4571 = vxor.u32 %v4570, 2147483648
        %v4572 = vsel %vm4489, %v4571, %v4570
        %v4573 = vsub.s32 4, %v4549
        %v4574 = vsel %vm4489, %v4573, %v4549
        %v4575 = vsel %vm4488, %v1057, %v4572
        %v4576 = vsel %vm4488, 0, %v4574
        %v4577 = vcosq.f32.pop %v4575
        %v4578 = vsinq.f32.pop %v4575
        %vm4579 = vweird.f32 %v1057
        %v4580 = vand.u32 %v4576, 3
        %vm4581 = vcmp.lt.s32.totalorder %v4580, 2
        %vm4582 = vcmp.eq.s32.totalorder %v4580, 0
        %v4583 = vxor.u32 %v4578, 2147483648
        %v4584 = vsel %vm4582, %v4577, %v4583
        %vm4585 = vcmp.eq.s32.totalorder %v4580, 2
        %v4586 = vxor.u32 %v4577, 2147483648
        %v4587 = vsel %vm4585, %v4586, %v4578
        %v4588 = vsel %vm4581, %v4584, %v4587
        %v4589 = vsel %vm4579, nan, %v4588
        %v4590 = vand.u32 2147483647, %v1058
        %vm4591 = vcmp.le.f32.partialorder %v4590, 0.7853982
        %vm4592 = vcmp.lt.s32.totalorder %v1058, 0
        %v4593 = vand.u32 %v1058, 2139095040
        %v4594 = vshrl.u32 %v4593, 23
        %v4595 = vsub.s32 %v4594, 127
        %v4596 = vand.u32 2147483647, %v1058
        %v4597 = vand.u32 %v4596, 8388607
        %v4598 = vor.u32 %v4597, 8388608
        %v4599 = vsub.s32 0, %v4598
        %v4600 = vadd.s32 %v4595, 1
        %vm4601 = vcmp.gt.s32.totalorder %v4600, 0
        %v4602 = vsel %vm4601, %v4600, 0
        %v4603 = vshrl.u32 %v4602, 5
        %v4604 = vand.u32 %v4602, 31
        %v4605 = vsub.s32 32, %v4604
        %v4606 = vshrl.u32 683565275, %v4605
        %v4607 = vshll.u32 683565275, %v4604
        %v4608 = vshrl.u32 2475754826, %v4605
        %v4609 = vor.u32 %v4607, %v4608
        %v4610 = vshll.u32 2475754826, %v4604
        %v4611 = vshrl.u32 2131351028, %v4605
        %v4612 = vor.u32 %v4610, %v4611
        %v4613 = vshll.u32 2131351028, %v4604
        %v4614 = vshrl.u32 2102212464, %v4605
        %v4615 = vor.u32 %v4613, %v4614
        %v4616 = vshll.u32 2102212464, %v4604
        %v4617 = vshrl.u32 920167782, %v4605
        %v4618 = vor.u32 %v4616, %v4617
        %v4619 = vshll.u32 920167782, %v4604
        %v4620 = vshrl.u32 1326507024, %v4605
        %v4621 = vor.u32 %v4619, %v4620
        %vm4622 = vcmp.lt.s32.totalorder %v4603, 1
        %vm4623 = vcmp.lt.s32.totalorder %v4603, 2
        %vm4624 = vcmp.lt.s32.totalorder %v4603, 3
        %vm4625 = vcmp.lt.s32.totalorder %v4603, 4
        %v4626 = vsel %vm4622, %v4606, %v4609
        %v4627 = vsel %vm4625, %v4615, 2102212464
        %v4628 = vsel %vm4624, %v4612, %v4627
        %v4629 = vsel %vm4623, %v4626, %v4628
        %v4630 = vsel %vm4622, %v4609, %v4612
        %v4631 = vsel %vm4625, %v4618, 920167782
        %v4632 = vsel %vm4624, %v4615, %v4631
        %v4633 = vsel %vm4623, %v4630, %v4632
        %v4634 = vsel %vm4622, %v4612, %v4615
        %v4635 = vsel %vm4625, %v4621, 1326507024
        %v4636 = vsel %vm4624, %v4618, %v4635
        %v4637 = vsel %vm4623, %v4634, %v4636
        %v4638 = vshll.u32 %v4598, 8
        %v4639 = vmul.u32.u64.compose %v4638, %v4637
        %v4640 = vextract.low.u32 %v4639
        %v4641 = vextract.high.u32 %v4639
        %v4642 = vmul.u32.u64.compose %v4638, %v4633
        %v4643 = vextract.low.u32 %v4642
        %v4644 = vextract.high.u32 %v4642
        %v4645 = vmul.u32 %v4638, %v4629
        %v4646 = vadd.s32 %v4641, %v4643
        %vm4647 = vc.u32 %v4641, %v4643
        %v4648 = vadd.s32 %v4644, 1
        %v4649 = vsel %vm4647, %v4648, %v4644
        %v4650 = vadd.s32 %v4645, %v4649
        %v4651 = vadd.s32 %v4650, 536870912
        %v4652 = vshrl.u32 %v4651, 30
        %v4653 = vshll.u32 %v4652, 30
        %v4654 = vsub.s32 %v4650, %v4653
        %vm4655 = vcmp.lt.s32.totalorder %v4654, 0
        %v4656 = vsub.s32 0, %v4654
        %v4657 = vsel %vm4655, %v4656, %v4654
        %v4658 = vclz %v4657
        %v4659 = vsub.s32 %v4658, 2
        %vm4660 = vcmp.gt.s32.totalorder 0, %v4659
        %v4661 = vsel %vm4660, 0, %v4659
        %v4662 = vsub.s32 32, %v4661
        %v4663 = vshll.u32 %v4654, %v4661
        %v4664 = vshrl.u32 %v4646, %v4662
        %v4665 = vor.u32 %v4663, %v4664
        %v4666 = vsub.s32 4294967266, %v4661
        %v4667 = vadd.s32 %v4666, 127
        %v4668 = vshll.u32 %v4667, 23
        %v4669 = vor.u32 4788187, %v4668
        %v4670 = vand.u32 2147483647, %v4669
        %v4672 = vcvt.s32.f32 %v4665
        %v4673 = vmul.f32 %v4672, %v4670
        %v4674 = vxor.u32 %v4673, 2147483648
        %v4675 = vsel %vm4592, %v4674, %v4673
        %v4676 = vsub.s32 4, %v4652
        %v4677 = vsel %vm4592, %v4676, %v4652
        %v4678 = vsel %vm4591, %v1058, %v4675
        %v4679 = vsel %vm4591, 0, %v4677
        %v4680 = vcosq.f32.pop %v4678
        %v4681 = vsinq.f32.pop %v4678
        %vm4682 = vweird.f32 %v1058
        %v4683 = vand.u32 %v4679, 3
        %vm4684 = vcmp.lt.s32.totalorder %v4683, 2
        %vm4685 = vcmp.eq.s32.totalorder %v4683, 0
        %v4686 = vxor.u32 %v4681, 2147483648
        %v4687 = vsel %vm4685, %v4680, %v4686
        %vm4688 = vcmp.eq.s32.totalorder %v4683, 2
        %v4689 = vxor.u32 %v4680, 2147483648
        %v4690 = vsel %vm4688, %v4689, %v4681
        %v4691 = vsel %vm4684, %v4687, %v4690
        %v4692 = vsel %vm4682, nan, %v4691
        %v4693 = vand.u32 2147483647, %v1059
        %vm4694 = vcmp.le.f32.partialorder %v4693, 0.7853982
        %vm4695 = vcmp.lt.s32.totalorder %v1059, 0
        %v4696 = vand.u32 %v1059, 2139095040
        %v4697 = vshrl.u32 %v4696, 23
        %v4698 = vsub.s32 %v4697, 127
        %v4699 = vand.u32 2147483647, %v1059
        %v4700 = vand.u32 %v4699, 8388607
        %v4701 = vor.u32 %v4700, 8388608
        %v4702 = vsub.s32 0, %v4701
        %v4703 = vadd.s32 %v4698, 1
        %vm4704 = vcmp.gt.s32.totalorder %v4703, 0
        %v4705 = vsel %vm4704, %v4703, 0
        %v4706 = vshrl.u32 %v4705, 5
        %v4707 = vand.u32 %v4705, 31
        %v4708 = vsub.s32 32, %v4707
        %v4709 = vshrl.u32 683565275, %v4708
        %v4710 = vshll.u32 683565275, %v4707
        %v4711 = vshrl.u32 2475754826, %v4708
        %v4712 = vor.u32 %v4710, %v4711
        %v4713 = vshll.u32 2475754826, %v4707
        %v4714 = vshrl.u32 2131351028, %v4708
        %v4715 = vor.u32 %v4713, %v4714
        %v4716 = vshll.u32 2131351028, %v4707
        %v4717 = vshrl.u32 2102212464, %v4708
        %v4718 = vor.u32 %v4716, %v4717
        %v4719 = vshll.u32 2102212464, %v4707
        %v4720 = vshrl.u32 920167782, %v4708
        %v4721 = vor.u32 %v4719, %v4720
        %v4722 = vshll.u32 920167782, %v4707
        %v4723 = vshrl.u32 1326507024, %v4708
        %v4724 = vor.u32 %v4722, %v4723
        %vm4725 = vcmp.lt.s32.totalorder %v4706, 1
        %vm4726 = vcmp.lt.s32.totalorder %v4706, 2
        %vm4727 = vcmp.lt.s32.totalorder %v4706, 3
        %vm4728 = vcmp.lt.s32.totalorder %v4706, 4
        %v4729 = vsel %vm4725, %v4709, %v4712
        %v4730 = vsel %vm4728, %v4718, 2102212464
        %v4731 = vsel %vm4727, %v4715, %v4730
        %v4732 = vsel %vm4726, %v4729, %v4731
        %v4733 = vsel %vm4725, %v4712, %v4715
        %v4734 = vsel %vm4728, %v4721, 920167782
        %v4735 = vsel %vm4727, %v4718, %v4734
        %v4736 = vsel %vm4726, %v4733, %v4735
        %v4737 = vsel %vm4725, %v4715, %v4718
        %v4738 = vsel %vm4728, %v4724, 1326507024
        %v4739 = vsel %vm4727, %v4721, %v4738
        %v4740 = vsel %vm4726, %v4737, %v4739
        %v4741 = vshll.u32 %v4701, 8
        %v4742 = vmul.u32.u64.compose %v4741, %v4740
        %v4743 = vextract.low.u32 %v4742
        %v4744 = vextract.high.u32 %v4742
        %v4745 = vmul.u32.u64.compose %v4741, %v4736
        %v4746 = vextract.low.u32 %v4745
        %v4747 = vextract.high.u32 %v4745
        %v4748 = vmul.u32 %v4741, %v4732
        %v4749 = vadd.s32 %v4744, %v4746
        %vm4750 = vc.u32 %v4744, %v4746
        %v4751 = vadd.s32 %v4747, 1
        %v4752 = vsel %vm4750, %v4751, %v4747
        %v4753 = vadd.s32 %v4748, %v4752
        %v4754 = vadd.s32 %v4753, 536870912
        %v4755 = vshrl.u32 %v4754, 30
        %v4756 = vshll.u32 %v4755, 30
        %v4757 = vsub.s32 %v4753, %v4756
        %vm4758 = vcmp.lt.s32.totalorder %v4757, 0
        %v4759 = vsub.s32 0, %v4757
        %v4760 = vsel %vm4758, %v4759, %v4757
        %v4761 = vclz %v4760
        %v4762 = vsub.s32 %v4761, 2
        %vm4763 = vcmp.gt.s32.totalorder 0, %v4762
        %v4764 = vsel %vm4763, 0, %v4762
        %v4765 = vsub.s32 32, %v4764
        %v4766 = vshll.u32 %v4757, %v4764
        %v4767 = vshrl.u32 %v4749, %v4765
        %v4768 = vor.u32 %v4766, %v4767
        %v4769 = vsub.s32 4294967266, %v4764
        %v4770 = vadd.s32 %v4769, 127
        %v4771 = vshll.u32 %v4770, 23
        %v4772 = vor.u32 4788187, %v4771
        %v4773 = vand.u32 2147483647, %v4772
        %v4775 = vcvt.s32.f32 %v4768
        %v4776 = vmul.f32 %v4775, %v4773
        %v4777 = vxor.u32 %v4776, 2147483648
        %v4778 = vsel %vm4695, %v4777, %v4776
        %v4779 = vsub.s32 4, %v4755
        %v4780 = vsel %vm4695, %v4779, %v4755
        %v4781 = vsel %vm4694, %v1059, %v4778
        %v4782 = vsel %vm4694, 0, %v4780
        %v4783 = vcosq.f32.pop %v4781
        %v4784 = vsinq.f32.pop %v4781
        %vm4785 = vweird.f32 %v1059
        %v4786 = vand.u32 %v4782, 3
        %vm4787 = vcmp.lt.s32.totalorder %v4786, 2
        %vm4788 = vcmp.eq.s32.totalorder %v4786, 0
        %v4789 = vxor.u32 %v4784, 2147483648
        %v4790 = vsel %vm4788, %v4783, %v4789
        %vm4791 = vcmp.eq.s32.totalorder %v4786, 2
        %v4792 = vxor.u32 %v4783, 2147483648
        %v4793 = vsel %vm4791, %v4792, %v4784
        %v4794 = vsel %vm4787, %v4790, %v4793
        %v4795 = vsel %vm4785, nan, %v4794
        %v4796 = vand.u32 2147483647, %v1060
        %vm4797 = vcmp.le.f32.partialorder %v4796, 0.7853982
        %vm4798 = vcmp.lt.s32.totalorder %v1060, 0
        %v4799 = vand.u32 %v1060, 2139095040
        %v4800 = vshrl.u32 %v4799, 23
        %v4801 = vsub.s32 %v4800, 127
        %v4802 = vand.u32 2147483647, %v1060
        %v4803 = vand.u32 %v4802, 8388607
        %v4804 = vor.u32 %v4803, 8388608
        %v4805 = vsub.s32 0, %v4804
        %v4806 = vadd.s32 %v4801, 1
        %vm4807 = vcmp.gt.s32.totalorder %v4806, 0
        %v4808 = vsel %vm4807, %v4806, 0
        %v4809 = vshrl.u32 %v4808, 5
        %v4810 = vand.u32 %v4808, 31
        %v4811 = vsub.s32 32, %v4810
        %v4812 = vshrl.u32 683565275, %v4811
        %v4813 = vshll.u32 683565275, %v4810
        %v4814 = vshrl.u32 2475754826, %v4811
        %v4815 = vor.u32 %v4813, %v4814
        %v4816 = vshll.u32 2475754826, %v4810
        %v4817 = vshrl.u32 2131351028, %v4811
        %v4818 = vor.u32 %v4816, %v4817
        %v4819 = vshll.u32 2131351028, %v4810
        %v4820 = vshrl.u32 2102212464, %v4811
        %v4821 = vor.u32 %v4819, %v4820
        %v4822 = vshll.u32 2102212464, %v4810
        %v4823 = vshrl.u32 920167782, %v4811
        %v4824 = vor.u32 %v4822, %v4823
        %v4825 = vshll.u32 920167782, %v4810
        %v4826 = vshrl.u32 1326507024, %v4811
        %v4827 = vor.u32 %v4825, %v4826
        %vm4828 = vcmp.lt.s32.totalorder %v4809, 1
        %vm4829 = vcmp.lt.s32.totalorder %v4809, 2
        %vm4830 = vcmp.lt.s32.totalorder %v4809, 3
        %vm4831 = vcmp.lt.s32.totalorder %v4809, 4
        %v4832 = vsel %vm4828, %v4812, %v4815
        %v4833 = vsel %vm4831, %v4821, 2102212464
        %v4834 = vsel %vm4830, %v4818, %v4833
        %v4835 = vsel %vm4829, %v4832, %v4834
        %v4836 = vsel %vm4828, %v4815, %v4818
        %v4837 = vsel %vm4831, %v4824, 920167782
        %v4838 = vsel %vm4830, %v4821, %v4837
        %v4839 = vsel %vm4829, %v4836, %v4838
        %v4840 = vsel %vm4828, %v4818, %v4821
        %v4841 = vsel %vm4831, %v4827, 1326507024
        %v4842 = vsel %vm4830, %v4824, %v4841
        %v4843 = vsel %vm4829, %v4840, %v4842
        %v4844 = vshll.u32 %v4804, 8
        %v4845 = vmul.u32.u64.compose %v4844, %v4843
        %v4846 = vextract.low.u32 %v4845
        %v4847 = vextract.high.u32 %v4845
        %v4848 = vmul.u32.u64.compose %v4844, %v4839
        %v4849 = vextract.low.u32 %v4848
        %v4850 = vextract.high.u32 %v4848
        %v4851 = vmul.u32 %v4844, %v4835
        %v4852 = vadd.s32 %v4847, %v4849
        %vm4853 = vc.u32 %v4847, %v4849
        %v4854 = vadd.s32 %v4850, 1
        %v4855 = vsel %vm4853, %v4854, %v4850
        %v4856 = vadd.s32 %v4851, %v4855
        %v4857 = vadd.s32 %v4856, 536870912
        %v4858 = vshrl.u32 %v4857, 30
        %v4859 = vshll.u32 %v4858, 30
        %v4860 = vsub.s32 %v4856, %v4859
        %vm4861 = vcmp.lt.s32.totalorder %v4860, 0
        %v4862 = vsub.s32 0, %v4860
        %v4863 = vsel %vm4861, %v4862, %v4860
        %v4864 = vclz %v4863
        %v4865 = vsub.s32 %v4864, 2
        %vm4866 = vcmp.gt.s32.totalorder 0, %v4865
        %v4867 = vsel %vm4866, 0, %v4865
        %v4868 = vsub.s32 32, %v4867
        %v4869 = vshll.u32 %v4860, %v4867
        %v4870 = vshrl.u32 %v4852, %v4868
        %v4871 = vor.u32 %v4869, %v4870
        %v4872 = vsub.s32 4294967266, %v4867
        %v4873 = vadd.s32 %v4872, 127
        %v4874 = vshll.u32 %v4873, 23
        %v4875 = vor.u32 4788187, %v4874
        %v4876 = vand.u32 2147483647, %v4875
        %v4878 = vcvt.s32.f32 %v4871
        %v4879 = vmul.f32 %v4878, %v4876
        %v4880 = vxor.u32 %v4879, 2147483648
        %v4881 = vsel %vm4798, %v4880, %v4879
        %v4882 = vsub.s32 4, %v4858
        %v4883 = vsel %vm4798, %v4882, %v4858
        %v4884 = vsel %vm4797, %v1060, %v4881
        %v4885 = vsel %vm4797, 0, %v4883
        %v4886 = vcosq.f32.pop %v4884
        %v4887 = vsinq.f32.pop %v4884
        %vm4888 = vweird.f32 %v1060
        %v4889 = vand.u32 %v4885, 3
        %vm4890 = vcmp.lt.s32.totalorder %v4889, 2
        %vm4891 = vcmp.eq.s32.totalorder %v4889, 0
        %v4892 = vxor.u32 %v4887, 2147483648
        %v4893 = vsel %vm4891, %v4886, %v4892
        %vm4894 = vcmp.eq.s32.totalorder %v4889, 2
        %v4895 = vxor.u32 %v4886, 2147483648
        %v4896 = vsel %vm4894, %v4895, %v4887
        %v4897 = vsel %vm4890, %v4893, %v4896
        %v4898 = vsel %vm4888, nan, %v4897
        %v4899 = vand.u32 2147483647, %v1061
        %vm4900 = vcmp.le.f32.partialorder %v4899, 0.7853982
        %vm4901 = vcmp.lt.s32.totalorder %v1061, 0
        %v4902 = vand.u32 %v1061, 2139095040
        %v4903 = vshrl.u32 %v4902, 23
        %v4904 = vsub.s32 %v4903, 127
        %v4905 = vand.u32 2147483647, %v1061
        %v4906 = vand.u32 %v4905, 8388607
        %v4907 = vor.u32 %v4906, 8388608
        %v4908 = vsub.s32 0, %v4907
        %v4909 = vadd.s32 %v4904, 1
        %vm4910 = vcmp.gt.s32.totalorder %v4909, 0
        %v4911 = vsel %vm4910, %v4909, 0
        %v4912 = vshrl.u32 %v4911, 5
        %v4913 = vand.u32 %v4911, 31
        %v4914 = vsub.s32 32, %v4913
        %v4915 = vshrl.u32 683565275, %v4914
        %v4916 = vshll.u32 683565275, %v4913
        %v4917 = vshrl.u32 2475754826, %v4914
        %v4918 = vor.u32 %v4916, %v4917
        %v4919 = vshll.u32 2475754826, %v4913
        %v4920 = vshrl.u32 2131351028, %v4914
        %v4921 = vor.u32 %v4919, %v4920
        %v4922 = vshll.u32 2131351028, %v4913
        %v4923 = vshrl.u32 2102212464, %v4914
        %v4924 = vor.u32 %v4922, %v4923
        %v4925 = vshll.u32 2102212464, %v4913
        %v4926 = vshrl.u32 920167782, %v4914
        %v4927 = vor.u32 %v4925, %v4926
        %v4928 = vshll.u32 920167782, %v4913
        %v4929 = vshrl.u32 1326507024, %v4914
        %v4930 = vor.u32 %v4928, %v4929
        %vm4931 = vcmp.lt.s32.totalorder %v4912, 1
        %vm4932 = vcmp.lt.s32.totalorder %v4912, 2
        %vm4933 = vcmp.lt.s32.totalorder %v4912, 3
        %vm4934 = vcmp.lt.s32.totalorder %v4912, 4
        %v4935 = vsel %vm4931, %v4915, %v4918
        %v4936 = vsel %vm4934, %v4924, 2102212464
        %v4937 = vsel %vm4933, %v4921, %v4936
        %v4938 = vsel %vm4932, %v4935, %v4937
        %v4939 = vsel %vm4931, %v4918, %v4921
        %v4940 = vsel %vm4934, %v4927, 920167782
        %v4941 = vsel %vm4933, %v4924, %v4940
        %v4942 = vsel %vm4932, %v4939, %v4941
        %v4943 = vsel %vm4931, %v4921, %v4924
        %v4944 = vsel %vm4934, %v4930, 1326507024
        %v4945 = vsel %vm4933, %v4927, %v4944
        %v4946 = vsel %vm4932, %v4943, %v4945
        %v4947 = vshll.u32 %v4907, 8
        %v4948 = vmul.u32.u64.compose %v4947, %v4946
        %v4949 = vextract.low.u32 %v4948
        %v4950 = vextract.high.u32 %v4948
        %v4951 = vmul.u32.u64.compose %v4947, %v4942
        %v4952 = vextract.low.u32 %v4951
        %v4953 = vextract.high.u32 %v4951
        %v4954 = vmul.u32 %v4947, %v4938
        %v4955 = vadd.s32 %v4950, %v4952
        %vm4956 = vc.u32 %v4950, %v4952
        %v4957 = vadd.s32 %v4953, 1
        %v4958 = vsel %vm4956, %v4957, %v4953
        %v4959 = vadd.s32 %v4954, %v4958
        %v4960 = vadd.s32 %v4959, 536870912
        %v4961 = vshrl.u32 %v4960, 30
        %v4962 = vshll.u32 %v4961, 30
        %v4963 = vsub.s32 %v4959, %v4962
        %vm4964 = vcmp.lt.s32.totalorder %v4963, 0
        %v4965 = vsub.s32 0, %v4963
        %v4966 = vsel %vm4964, %v4965, %v4963
        %v4967 = vclz %v4966
        %v4968 = vsub.s32 %v4967, 2
        %vm4969 = vcmp.gt.s32.totalorder 0, %v4968
        %v4970 = vsel %vm4969, 0, %v4968
        %v4971 = vsub.s32 32, %v4970
        %v4972 = vshll.u32 %v4963, %v4970
        %v4973 = vshrl.u32 %v4955, %v4971
        %v4974 = vor.u32 %v4972, %v4973
        %v4975 = vsub.s32 4294967266, %v4970
        %v4976 = vadd.s32 %v4975, 127
        %v4977 = vshll.u32 %v4976, 23
        %v4978 = vor.u32 4788187, %v4977
        %v4979 = vand.u32 2147483647, %v4978
        %v4981 = vcvt.s32.f32 %v4974
        %v4982 = vmul.f32 %v4981, %v4979
        %v4983 = vxor.u32 %v4982, 2147483648
        %v4984 = vsel %vm4901, %v4983, %v4982
        %v4985 = vsub.s32 4, %v4961
        %v4986 = vsel %vm4901, %v4985, %v4961
        %v4987 = vsel %vm4900, %v1061, %v4984
        %v4988 = vsel %vm4900, 0, %v4986
        %v4989 = vcosq.f32.pop %v4987
        %v4990 = vsinq.f32.pop %v4987
        %vm4991 = vweird.f32 %v1061
        %v4992 = vand.u32 %v4988, 3
        %vm4993 = vcmp.lt.s32.totalorder %v4992, 2
        %vm4994 = vcmp.eq.s32.totalorder %v4992, 0
        %v4995 = vxor.u32 %v4990, 2147483648
        %v4996 = vsel %vm4994, %v4989, %v4995
        %vm4997 = vcmp.eq.s32.totalorder %v4992, 2
        %v4998 = vxor.u32 %v4989, 2147483648
        %v4999 = vsel %vm4997, %v4998, %v4990
        %v5000 = vsel %vm4993, %v4996, %v4999
        %v5001 = vsel %vm4991, nan, %v5000
        %v5002 = vand.u32 2147483647, %v1062
        %vm5003 = vcmp.le.f32.partialorder %v5002, 0.7853982
        %vm5004 = vcmp.lt.s32.totalorder %v1062, 0
        %v5005 = vand.u32 %v1062, 2139095040
        %v5006 = vshrl.u32 %v5005, 23
        %v5007 = vsub.s32 %v5006, 127
        %v5008 = vand.u32 2147483647, %v1062
        %v5009 = vand.u32 %v5008, 8388607
        %v5010 = vor.u32 %v5009, 8388608
        %v5011 = vsub.s32 0, %v5010
        %v5012 = vadd.s32 %v5007, 1
        %vm5013 = vcmp.gt.s32.totalorder %v5012, 0
        %v5014 = vsel %vm5013, %v5012, 0
        %v5015 = vshrl.u32 %v5014, 5
        %v5016 = vand.u32 %v5014, 31
        %v5017 = vsub.s32 32, %v5016
        %v5018 = vshrl.u32 683565275, %v5017
        %v5019 = vshll.u32 683565275, %v5016
        %v5020 = vshrl.u32 2475754826, %v5017
        %v5021 = vor.u32 %v5019, %v5020
        %v5022 = vshll.u32 2475754826, %v5016
        %v5023 = vshrl.u32 2131351028, %v5017
        %v5024 = vor.u32 %v5022, %v5023
        %v5025 = vshll.u32 2131351028, %v5016
        %v5026 = vshrl.u32 2102212464, %v5017
        %v5027 = vor.u32 %v5025, %v5026
        %v5028 = vshll.u32 2102212464, %v5016
        %v5029 = vshrl.u32 920167782, %v5017
        %v5030 = vor.u32 %v5028, %v5029
        %v5031 = vshll.u32 920167782, %v5016
        %v5032 = vshrl.u32 1326507024, %v5017
        %v5033 = vor.u32 %v5031, %v5032
        %vm5034 = vcmp.lt.s32.totalorder %v5015, 1
        %vm5035 = vcmp.lt.s32.totalorder %v5015, 2
        %vm5036 = vcmp.lt.s32.totalorder %v5015, 3
        %vm5037 = vcmp.lt.s32.totalorder %v5015, 4
        %v5038 = vsel %vm5034, %v5018, %v5021
        %v5039 = vsel %vm5037, %v5027, 2102212464
        %v5040 = vsel %vm5036, %v5024, %v5039
        %v5041 = vsel %vm5035, %v5038, %v5040
        %v5042 = vsel %vm5034, %v5021, %v5024
        %v5043 = vsel %vm5037, %v5030, 920167782
        %v5044 = vsel %vm5036, %v5027, %v5043
        %v5045 = vsel %vm5035, %v5042, %v5044
        %v5046 = vsel %vm5034, %v5024, %v5027
        %v5047 = vsel %vm5037, %v5033, 1326507024
        %v5048 = vsel %vm5036, %v5030, %v5047
        %v5049 = vsel %vm5035, %v5046, %v5048
        %v5050 = vshll.u32 %v5010, 8
        %v5051 = vmul.u32.u64.compose %v5050, %v5049
        %v5052 = vextract.low.u32 %v5051
        %v5053 = vextract.high.u32 %v5051
        %v5054 = vmul.u32.u64.compose %v5050, %v5045
        %v5055 = vextract.low.u32 %v5054
        %v5056 = vextract.high.u32 %v5054
        %v5057 = vmul.u32 %v5050, %v5041
        %v5058 = vadd.s32 %v5053, %v5055
        %vm5059 = vc.u32 %v5053, %v5055
        %v5060 = vadd.s32 %v5056, 1
        %v5061 = vsel %vm5059, %v5060, %v5056
        %v5062 = vadd.s32 %v5057, %v5061
        %v5063 = vadd.s32 %v5062, 536870912
        %v5064 = vshrl.u32 %v5063, 30
        %v5065 = vshll.u32 %v5064, 30
        %v5066 = vsub.s32 %v5062, %v5065
        %vm5067 = vcmp.lt.s32.totalorder %v5066, 0
        %v5068 = vsub.s32 0, %v5066
        %v5069 = vsel %vm5067, %v5068, %v5066
        %v5070 = vclz %v5069
        %v5071 = vsub.s32 %v5070, 2
        %vm5072 = vcmp.gt.s32.totalorder 0, %v5071
        %v5073 = vsel %vm5072, 0, %v5071
        %v5074 = vsub.s32 32, %v5073
        %v5075 = vshll.u32 %v5066, %v5073
        %v5076 = vshrl.u32 %v5058, %v5074
        %v5077 = vor.u32 %v5075, %v5076
        %v5078 = vsub.s32 4294967266, %v5073
        %v5079 = vadd.s32 %v5078, 127
        %v5080 = vshll.u32 %v5079, 23
        %v5081 = vor.u32 4788187, %v5080
        %v5082 = vand.u32 2147483647, %v5081
        %v5084 = vcvt.s32.f32 %v5077
        %v5085 = vmul.f32 %v5084, %v5082
        %v5086 = vxor.u32 %v5085, 2147483648
        %v5087 = vsel %vm5004, %v5086, %v5085
        %v5088 = vsub.s32 4, %v5064
        %v5089 = vsel %vm5004, %v5088, %v5064
        %v5090 = vsel %vm5003, %v1062, %v5087
        %v5091 = vsel %vm5003, 0, %v5089
        %v5092 = vcosq.f32.pop %v5090
        %v5093 = vsinq.f32.pop %v5090
        %vm5094 = vweird.f32 %v1062
        %v5095 = vand.u32 %v5091, 3
        %vm5096 = vcmp.lt.s32.totalorder %v5095, 2
        %vm5097 = vcmp.eq.s32.totalorder %v5095, 0
        %v5098 = vxor.u32 %v5093, 2147483648
        %v5099 = vsel %vm5097, %v5092, %v5098
        %vm5100 = vcmp.eq.s32.totalorder %v5095, 2
        %v5101 = vxor.u32 %v5092, 2147483648
        %v5102 = vsel %vm5100, %v5101, %v5093
        %v5103 = vsel %vm5096, %v5099, %v5102
        %v5104 = vsel %vm5094, nan, %v5103
        %v5105 = vand.u32 2147483647, %v1063
        %vm5106 = vcmp.le.f32.partialorder %v5105, 0.7853982
        %vm5107 = vcmp.lt.s32.totalorder %v1063, 0
        %v5108 = vand.u32 %v1063, 2139095040
        %v5109 = vshrl.u32 %v5108, 23
        %v5110 = vsub.s32 %v5109, 127
        %v5111 = vand.u32 2147483647, %v1063
        %v5112 = vand.u32 %v5111, 8388607
        %v5113 = vor.u32 %v5112, 8388608
        %v5114 = vsub.s32 0, %v5113
        %v5115 = vadd.s32 %v5110, 1
        %vm5116 = vcmp.gt.s32.totalorder %v5115, 0
        %v5117 = vsel %vm5116, %v5115, 0
        %v5118 = vshrl.u32 %v5117, 5
        %v5119 = vand.u32 %v5117, 31
        %v5120 = vsub.s32 32, %v5119
        %v5121 = vshrl.u32 683565275, %v5120
        %v5122 = vshll.u32 683565275, %v5119
        %v5123 = vshrl.u32 2475754826, %v5120
        %v5124 = vor.u32 %v5122, %v5123
        %v5125 = vshll.u32 2475754826, %v5119
        %v5126 = vshrl.u32 2131351028, %v5120
        %v5127 = vor.u32 %v5125, %v5126
        %v5128 = vshll.u32 2131351028, %v5119
        %v5129 = vshrl.u32 2102212464, %v5120
        %v5130 = vor.u32 %v5128, %v5129
        %v5131 = vshll.u32 2102212464, %v5119
        %v5132 = vshrl.u32 920167782, %v5120
        %v5133 = vor.u32 %v5131, %v5132
        %v5134 = vshll.u32 920167782, %v5119
        %v5135 = vshrl.u32 1326507024, %v5120
        %v5136 = vor.u32 %v5134, %v5135
        %vm5137 = vcmp.lt.s32.totalorder %v5118, 1
        %vm5138 = vcmp.lt.s32.totalorder %v5118, 2
        %vm5139 = vcmp.lt.s32.totalorder %v5118, 3
        %vm5140 = vcmp.lt.s32.totalorder %v5118, 4
        %v5141 = vsel %vm5137, %v5121, %v5124
        %v5142 = vsel %vm5140, %v5130, 2102212464
        %v5143 = vsel %vm5139, %v5127, %v5142
        %v5144 = vsel %vm5138, %v5141, %v5143
        %v5145 = vsel %vm5137, %v5124, %v5127
        %v5146 = vsel %vm5140, %v5133, 920167782
        %v5147 = vsel %vm5139, %v5130, %v5146
        %v5148 = vsel %vm5138, %v5145, %v5147
        %v5149 = vsel %vm5137, %v5127, %v5130
        %v5150 = vsel %vm5140, %v5136, 1326507024
        %v5151 = vsel %vm5139, %v5133, %v5150
        %v5152 = vsel %vm5138, %v5149, %v5151
        %v5153 = vshll.u32 %v5113, 8
        %v5154 = vmul.u32.u64.compose %v5153, %v5152
        %v5155 = vextract.low.u32 %v5154
        %v5156 = vextract.high.u32 %v5154
        %v5157 = vmul.u32.u64.compose %v5153, %v5148
        %v5158 = vextract.low.u32 %v5157
        %v5159 = vextract.high.u32 %v5157
        %v5160 = vmul.u32 %v5153, %v5144
        %v5161 = vadd.s32 %v5156, %v5158
        %vm5162 = vc.u32 %v5156, %v5158
        %v5163 = vadd.s32 %v5159, 1
        %v5164 = vsel %vm5162, %v5163, %v5159
        %v5165 = vadd.s32 %v5160, %v5164
        %v5166 = vadd.s32 %v5165, 536870912
        %v5167 = vshrl.u32 %v5166, 30
        %v5168 = vshll.u32 %v5167, 30
        %v5169 = vsub.s32 %v5165, %v5168
        %vm5170 = vcmp.lt.s32.totalorder %v5169, 0
        %v5171 = vsub.s32 0, %v5169
        %v5172 = vsel %vm5170, %v5171, %v5169
        %v5173 = vclz %v5172
        %v5174 = vsub.s32 %v5173, 2
        %vm5175 = vcmp.gt.s32.totalorder 0, %v5174
        %v5176 = vsel %vm5175, 0, %v5174
        %v5177 = vsub.s32 32, %v5176
        %v5178 = vshll.u32 %v5169, %v5176
        %v5179 = vshrl.u32 %v5161, %v5177
        %v5180 = vor.u32 %v5178, %v5179
        %v5181 = vsub.s32 4294967266, %v5176
        %v5182 = vadd.s32 %v5181, 127
        %v5183 = vshll.u32 %v5182, 23
        %v5184 = vor.u32 4788187, %v5183
        %v5185 = vand.u32 2147483647, %v5184
        %v5187 = vcvt.s32.f32 %v5180
        %v5188 = vmul.f32 %v5187, %v5185
        %v5189 = vxor.u32 %v5188, 2147483648
        %v5190 = vsel %vm5107, %v5189, %v5188
        %v5191 = vsub.s32 4, %v5167
        %v5192 = vsel %vm5107, %v5191, %v5167
        %v5193 = vsel %vm5106, %v1063, %v5190
        %v5194 = vsel %vm5106, 0, %v5192
        %v5195 = vcosq.f32.pop %v5193
        %v5196 = vsinq.f32.pop %v5193
        %vm5197 = vweird.f32 %v1063
        %v5198 = vand.u32 %v5194, 3
        %vm5199 = vcmp.lt.s32.totalorder %v5198, 2
        %vm5200 = vcmp.eq.s32.totalorder %v5198, 0
        %v5201 = vxor.u32 %v5196, 2147483648
        %v5202 = vsel %vm5200, %v5195, %v5201
        %vm5203 = vcmp.eq.s32.totalorder %v5198, 2
        %v5204 = vxor.u32 %v5195, 2147483648
        %v5205 = vsel %vm5203, %v5204, %v5196
        %v5206 = vsel %vm5199, %v5202, %v5205
        %v5207 = vsel %vm5197, nan, %v5206
        %v5208 = vand.u32 2147483647, %v1064
        %vm5209 = vcmp.le.f32.partialorder %v5208, 0.7853982
        %vm5210 = vcmp.lt.s32.totalorder %v1064, 0
        %v5211 = vand.u32 %v1064, 2139095040
        %v5212 = vshrl.u32 %v5211, 23
        %v5213 = vsub.s32 %v5212, 127
        %v5214 = vand.u32 2147483647, %v1064
        %v5215 = vand.u32 %v5214, 8388607
        %v5216 = vor.u32 %v5215, 8388608
        %v5217 = vsub.s32 0, %v5216
        %v5218 = vadd.s32 %v5213, 1
        %vm5219 = vcmp.gt.s32.totalorder %v5218, 0
        %v5220 = vsel %vm5219, %v5218, 0
        %v5221 = vshrl.u32 %v5220, 5
        %v5222 = vand.u32 %v5220, 31
        %v5223 = vsub.s32 32, %v5222
        %v5224 = vshrl.u32 683565275, %v5223
        %v5225 = vshll.u32 683565275, %v5222
        %v5226 = vshrl.u32 2475754826, %v5223
        %v5227 = vor.u32 %v5225, %v5226
        %v5228 = vshll.u32 2475754826, %v5222
        %v5229 = vshrl.u32 2131351028, %v5223
        %v5230 = vor.u32 %v5228, %v5229
        %v5231 = vshll.u32 2131351028, %v5222
        %v5232 = vshrl.u32 2102212464, %v5223
        %v5233 = vor.u32 %v5231, %v5232
        %v5234 = vshll.u32 2102212464, %v5222
        %v5235 = vshrl.u32 920167782, %v5223
        %v5236 = vor.u32 %v5234, %v5235
        %v5237 = vshll.u32 920167782, %v5222
        %v5238 = vshrl.u32 1326507024, %v5223
        %v5239 = vor.u32 %v5237, %v5238
        %vm5240 = vcmp.lt.s32.totalorder %v5221, 1
        %vm5241 = vcmp.lt.s32.totalorder %v5221, 2
        %vm5242 = vcmp.lt.s32.totalorder %v5221, 3
        %vm5243 = vcmp.lt.s32.totalorder %v5221, 4
        %v5244 = vsel %vm5240, %v5224, %v5227
        %v5245 = vsel %vm5243, %v5233, 2102212464
        %v5246 = vsel %vm5242, %v5230, %v5245
        %v5247 = vsel %vm5241, %v5244, %v5246
        %v5248 = vsel %vm5240, %v5227, %v5230
        %v5249 = vsel %vm5243, %v5236, 920167782
        %v5250 = vsel %vm5242, %v5233, %v5249
        %v5251 = vsel %vm5241, %v5248, %v5250
        %v5252 = vsel %vm5240, %v5230, %v5233
        %v5253 = vsel %vm5243, %v5239, 1326507024
        %v5254 = vsel %vm5242, %v5236, %v5253
        %v5255 = vsel %vm5241, %v5252, %v5254
        %v5256 = vshll.u32 %v5216, 8
        %v5257 = vmul.u32.u64.compose %v5256, %v5255
        %v5258 = vextract.low.u32 %v5257
        %v5259 = vextract.high.u32 %v5257
        %v5260 = vmul.u32.u64.compose %v5256, %v5251
        %v5261 = vextract.low.u32 %v5260
        %v5262 = vextract.high.u32 %v5260
        %v5263 = vmul.u32 %v5256, %v5247
        %v5264 = vadd.s32 %v5259, %v5261
        %vm5265 = vc.u32 %v5259, %v5261
        %v5266 = vadd.s32 %v5262, 1
        %v5267 = vsel %vm5265, %v5266, %v5262
        %v5268 = vadd.s32 %v5263, %v5267
        %v5269 = vadd.s32 %v5268, 536870912
        %v5270 = vshrl.u32 %v5269, 30
        %v5271 = vshll.u32 %v5270, 30
        %v5272 = vsub.s32 %v5268, %v5271
        %vm5273 = vcmp.lt.s32.totalorder %v5272, 0
        %v5274 = vsub.s32 0, %v5272
        %v5275 = vsel %vm5273, %v5274, %v5272
        %v5276 = vclz %v5275
        %v5277 = vsub.s32 %v5276, 2
        %vm5278 = vcmp.gt.s32.totalorder 0, %v5277
        %v5279 = vsel %vm5278, 0, %v5277
        %v5280 = vsub.s32 32, %v5279
        %v5281 = vshll.u32 %v5272, %v5279
        %v5282 = vshrl.u32 %v5264, %v5280
        %v5283 = vor.u32 %v5281, %v5282
        %v5284 = vsub.s32 4294967266, %v5279
        %v5285 = vadd.s32 %v5284, 127
        %v5286 = vshll.u32 %v5285, 23
        %v5287 = vor.u32 4788187, %v5286
        %v5288 = vand.u32 2147483647, %v5287
        %v5290 = vcvt.s32.f32 %v5283
        %v5291 = vmul.f32 %v5290, %v5288
        %v5292 = vxor.u32 %v5291, 2147483648
        %v5293 = vsel %vm5210, %v5292, %v5291
        %v5294 = vsub.s32 4, %v5270
        %v5295 = vsel %vm5210, %v5294, %v5270
        %v5296 = vsel %vm5209, %v1064, %v5293
        %v5297 = vsel %vm5209, 0, %v5295
        %v5298 = vcosq.f32.pop %v5296
        %v5299 = vsinq.f32.pop %v5296
        %vm5300 = vweird.f32 %v1064
        %v5301 = vand.u32 %v5297, 3
        %vm5302 = vcmp.lt.s32.totalorder %v5301, 2
        %vm5303 = vcmp.eq.s32.totalorder %v5301, 0
        %v5304 = vxor.u32 %v5299, 2147483648
        %v5305 = vsel %vm5303, %v5298, %v5304
        %vm5306 = vcmp.eq.s32.totalorder %v5301, 2
        %v5307 = vxor.u32 %v5298, 2147483648
        %v5308 = vsel %vm5306, %v5307, %v5299
        %v5309 = vsel %vm5302, %v5305, %v5308
        %v5310 = vsel %vm5300, nan, %v5309
        %v5311 = vand.u32 2147483647, %v1065
        %vm5312 = vcmp.le.f32.partialorder %v5311, 0.7853982
        %vm5313 = vcmp.lt.s32.totalorder %v1065, 0
        %v5314 = vand.u32 %v1065, 2139095040
        %v5315 = vshrl.u32 %v5314, 23
        %v5316 = vsub.s32 %v5315, 127
        %v5317 = vand.u32 2147483647, %v1065
        %v5318 = vand.u32 %v5317, 8388607
        %v5319 = vor.u32 %v5318, 8388608
        %v5320 = vsub.s32 0, %v5319
        %v5321 = vadd.s32 %v5316, 1
        %vm5322 = vcmp.gt.s32.totalorder %v5321, 0
        %v5323 = vsel %vm5322, %v5321, 0
        %v5324 = vshrl.u32 %v5323, 5
        %v5325 = vand.u32 %v5323, 31
        %v5326 = vsub.s32 32, %v5325
        %v5327 = vshrl.u32 683565275, %v5326
        %v5328 = vshll.u32 683565275, %v5325
        %v5329 = vshrl.u32 2475754826, %v5326
        %v5330 = vor.u32 %v5328, %v5329
        %v5331 = vshll.u32 2475754826, %v5325
        %v5332 = vshrl.u32 2131351028, %v5326
        %v5333 = vor.u32 %v5331, %v5332
        %v5334 = vshll.u32 2131351028, %v5325
        %v5335 = vshrl.u32 2102212464, %v5326
        %v5336 = vor.u32 %v5334, %v5335
        %v5337 = vshll.u32 2102212464, %v5325
        %v5338 = vshrl.u32 920167782, %v5326
        %v5339 = vor.u32 %v5337, %v5338
        %v5340 = vshll.u32 920167782, %v5325
        %v5341 = vshrl.u32 1326507024, %v5326
        %v5342 = vor.u32 %v5340, %v5341
        %vm5343 = vcmp.lt.s32.totalorder %v5324, 1
        %vm5344 = vcmp.lt.s32.totalorder %v5324, 2
        %vm5345 = vcmp.lt.s32.totalorder %v5324, 3
        %vm5346 = vcmp.lt.s32.totalorder %v5324, 4
        %v5347 = vsel %vm5343, %v5327, %v5330
        %v5348 = vsel %vm5346, %v5336, 2102212464
        %v5349 = vsel %vm5345, %v5333, %v5348
        %v5350 = vsel %vm5344, %v5347, %v5349
        %v5351 = vsel %vm5343, %v5330, %v5333
        %v5352 = vsel %vm5346, %v5339, 920167782
        %v5353 = vsel %vm5345, %v5336, %v5352
        %v5354 = vsel %vm5344, %v5351, %v5353
        %v5355 = vsel %vm5343, %v5333, %v5336
        %v5356 = vsel %vm5346, %v5342, 1326507024
        %v5357 = vsel %vm5345, %v5339, %v5356
        %v5358 = vsel %vm5344, %v5355, %v5357
        %v5359 = vshll.u32 %v5319, 8
        %v5360 = vmul.u32.u64.compose %v5359, %v5358
        %v5361 = vextract.low.u32 %v5360
        %v5362 = vextract.high.u32 %v5360
        %v5363 = vmul.u32.u64.compose %v5359, %v5354
        %v5364 = vextract.low.u32 %v5363
        %v5365 = vextract.high.u32 %v5363
        %v5366 = vmul.u32 %v5359, %v5350
        %v5367 = vadd.s32 %v5362, %v5364
        %vm5368 = vc.u32 %v5362, %v5364
        %v5369 = vadd.s32 %v5365, 1
        %v5370 = vsel %vm5368, %v5369, %v5365
        %v5371 = vadd.s32 %v5366, %v5370
        %v5372 = vadd.s32 %v5371, 536870912
        %v5373 = vshrl.u32 %v5372, 30
        %v5374 = vshll.u32 %v5373, 30
        %v5375 = vsub.s32 %v5371, %v5374
        %vm5376 = vcmp.lt.s32.totalorder %v5375, 0
        %v5377 = vsub.s32 0, %v5375
        %v5378 = vsel %vm5376, %v5377, %v5375
        %v5379 = vclz %v5378
        %v5380 = vsub.s32 %v5379, 2
        %vm5381 = vcmp.gt.s32.totalorder 0, %v5380
        %v5382 = vsel %vm5381, 0, %v5380
        %v5383 = vsub.s32 32, %v5382
        %v5384 = vshll.u32 %v5375, %v5382
        %v5385 = vshrl.u32 %v5367, %v5383
        %v5386 = vor.u32 %v5384, %v5385
        %v5387 = vsub.s32 4294967266, %v5382
        %v5388 = vadd.s32 %v5387, 127
        %v5389 = vshll.u32 %v5388, 23
        %v5390 = vor.u32 4788187, %v5389
        %v5391 = vand.u32 2147483647, %v5390
        %v5393 = vcvt.s32.f32 %v5386
        %v5394 = vmul.f32 %v5393, %v5391
        %v5395 = vxor.u32 %v5394, 2147483648
        %v5396 = vsel %vm5313, %v5395, %v5394
        %v5397 = vsub.s32 4, %v5373
        %v5398 = vsel %vm5313, %v5397, %v5373
        %v5399 = vsel %vm5312, %v1065, %v5396
        %v5400 = vsel %vm5312, 0, %v5398
        %v5401 = vcosq.f32.pop %v5399
        %v5402 = vsinq.f32.pop %v5399
        %vm5403 = vweird.f32 %v1065
        %v5404 = vand.u32 %v5400, 3
        %vm5405 = vcmp.lt.s32.totalorder %v5404, 2
        %vm5406 = vcmp.eq.s32.totalorder %v5404, 0
        %v5407 = vxor.u32 %v5402, 2147483648
        %v5408 = vsel %vm5406, %v5401, %v5407
        %vm5409 = vcmp.eq.s32.totalorder %v5404, 2
        %v5410 = vxor.u32 %v5401, 2147483648
        %v5411 = vsel %vm5409, %v5410, %v5402
        %v5412 = vsel %vm5405, %v5408, %v5411
        %v5413 = vsel %vm5403, nan, %v5412
        %v5414 = vand.u32 2147483647, %v1066
        %vm5415 = vcmp.le.f32.partialorder %v5414, 0.7853982
        %vm5416 = vcmp.lt.s32.totalorder %v1066, 0
        %v5417 = vand.u32 %v1066, 2139095040
        %v5418 = vshrl.u32 %v5417, 23
        %v5419 = vsub.s32 %v5418, 127
        %v5420 = vand.u32 2147483647, %v1066
        %v5421 = vand.u32 %v5420, 8388607
        %v5422 = vor.u32 %v5421, 8388608
        %v5423 = vsub.s32 0, %v5422
        %v5424 = vadd.s32 %v5419, 1
        %vm5425 = vcmp.gt.s32.totalorder %v5424, 0
        %v5426 = vsel %vm5425, %v5424, 0
        %v5427 = vshrl.u32 %v5426, 5
        %v5428 = vand.u32 %v5426, 31
        %v5429 = vsub.s32 32, %v5428
        %v5430 = vshrl.u32 683565275, %v5429
        %v5431 = vshll.u32 683565275, %v5428
        %v5432 = vshrl.u32 2475754826, %v5429
        %v5433 = vor.u32 %v5431, %v5432
        %v5434 = vshll.u32 2475754826, %v5428
        %v5435 = vshrl.u32 2131351028, %v5429
        %v5436 = vor.u32 %v5434, %v5435
        %v5437 = vshll.u32 2131351028, %v5428
        %v5438 = vshrl.u32 2102212464, %v5429
        %v5439 = vor.u32 %v5437, %v5438
        %v5440 = vshll.u32 2102212464, %v5428
        %v5441 = vshrl.u32 920167782, %v5429
        %v5442 = vor.u32 %v5440, %v5441
        %v5443 = vshll.u32 920167782, %v5428
        %v5444 = vshrl.u32 1326507024, %v5429
        %v5445 = vor.u32 %v5443, %v5444
        %vm5446 = vcmp.lt.s32.totalorder %v5427, 1
        %vm5447 = vcmp.lt.s32.totalorder %v5427, 2
        %vm5448 = vcmp.lt.s32.totalorder %v5427, 3
        %vm5449 = vcmp.lt.s32.totalorder %v5427, 4
        %v5450 = vsel %vm5446, %v5430, %v5433
        %v5451 = vsel %vm5449, %v5439, 2102212464
        %v5452 = vsel %vm5448, %v5436, %v5451
        %v5453 = vsel %vm5447, %v5450, %v5452
        %v5454 = vsel %vm5446, %v5433, %v5436
        %v5455 = vsel %vm5449, %v5442, 920167782
        %v5456 = vsel %vm5448, %v5439, %v5455
        %v5457 = vsel %vm5447, %v5454, %v5456
        %v5458 = vsel %vm5446, %v5436, %v5439
        %v5459 = vsel %vm5449, %v5445, 1326507024
        %v5460 = vsel %vm5448, %v5442, %v5459
        %v5461 = vsel %vm5447, %v5458, %v5460
        %v5462 = vshll.u32 %v5422, 8
        %v5463 = vmul.u32.u64.compose %v5462, %v5461
        %v5464 = vextract.low.u32 %v5463
        %v5465 = vextract.high.u32 %v5463
        %v5466 = vmul.u32.u64.compose %v5462, %v5457
        %v5467 = vextract.low.u32 %v5466
        %v5468 = vextract.high.u32 %v5466
        %v5469 = vmul.u32 %v5462, %v5453
        %v5470 = vadd.s32 %v5465, %v5467
        %vm5471 = vc.u32 %v5465, %v5467
        %v5472 = vadd.s32 %v5468, 1
        %v5473 = vsel %vm5471, %v5472, %v5468
        %v5474 = vadd.s32 %v5469, %v5473
        %v5475 = vadd.s32 %v5474, 536870912
        %v5476 = vshrl.u32 %v5475, 30
        %v5477 = vshll.u32 %v5476, 30
        %v5478 = vsub.s32 %v5474, %v5477
        %vm5479 = vcmp.lt.s32.totalorder %v5478, 0
        %v5480 = vsub.s32 0, %v5478
        %v5481 = vsel %vm5479, %v5480, %v5478
        %v5482 = vclz %v5481
        %v5483 = vsub.s32 %v5482, 2
        %vm5484 = vcmp.gt.s32.totalorder 0, %v5483
        %v5485 = vsel %vm5484, 0, %v5483
        %v5486 = vsub.s32 32, %v5485
        %v5487 = vshll.u32 %v5478, %v5485
        %v5488 = vshrl.u32 %v5470, %v5486
        %v5489 = vor.u32 %v5487, %v5488
        %v5490 = vsub.s32 4294967266, %v5485
        %v5491 = vadd.s32 %v5490, 127
        %v5492 = vshll.u32 %v5491, 23
        %v5493 = vor.u32 4788187, %v5492
        %v5494 = vand.u32 2147483647, %v5493
        %v5496 = vcvt.s32.f32 %v5489
        %v5497 = vmul.f32 %v5496, %v5494
        %v5498 = vxor.u32 %v5497, 2147483648
        %v5499 = vsel %vm5416, %v5498, %v5497
        %v5500 = vsub.s32 4, %v5476
        %v5501 = vsel %vm5416, %v5500, %v5476
        %v5502 = vsel %vm5415, %v1066, %v5499
        %v5503 = vsel %vm5415, 0, %v5501
        %v5504 = vcosq.f32.pop %v5502
        %v5505 = vsinq.f32.pop %v5502
        %vm5506 = vweird.f32 %v1066
        %v5507 = vand.u32 %v5503, 3
        %vm5508 = vcmp.lt.s32.totalorder %v5507, 2
        %vm5509 = vcmp.eq.s32.totalorder %v5507, 0
        %v5510 = vxor.u32 %v5505, 2147483648
        %v5511 = vsel %vm5509, %v5504, %v5510
        %vm5512 = vcmp.eq.s32.totalorder %v5507, 2
        %v5513 = vxor.u32 %v5504, 2147483648
        %v5514 = vsel %vm5512, %v5513, %v5505
        %v5515 = vsel %vm5508, %v5511, %v5514
        %v5516 = vsel %vm5506, nan, %v5515
        %v5517 = vand.u32 2147483647, %v1067
        %vm5518 = vcmp.le.f32.partialorder %v5517, 0.7853982
        %vm5519 = vcmp.lt.s32.totalorder %v1067, 0
        %v5520 = vand.u32 %v1067, 2139095040
        %v5521 = vshrl.u32 %v5520, 23
        %v5522 = vsub.s32 %v5521, 127
        %v5523 = vand.u32 2147483647, %v1067
        %v5524 = vand.u32 %v5523, 8388607
        %v5525 = vor.u32 %v5524, 8388608
        %v5526 = vsub.s32 0, %v5525
        %v5527 = vadd.s32 %v5522, 1
        %vm5528 = vcmp.gt.s32.totalorder %v5527, 0
        %v5529 = vsel %vm5528, %v5527, 0
        %v5530 = vshrl.u32 %v5529, 5
        %v5531 = vand.u32 %v5529, 31
        %v5532 = vsub.s32 32, %v5531
        %v5533 = vshrl.u32 683565275, %v5532
        %v5534 = vshll.u32 683565275, %v5531
        %v5535 = vshrl.u32 2475754826, %v5532
        %v5536 = vor.u32 %v5534, %v5535
        %v5537 = vshll.u32 2475754826, %v5531
        %v5538 = vshrl.u32 2131351028, %v5532
        %v5539 = vor.u32 %v5537, %v5538
        %v5540 = vshll.u32 2131351028, %v5531
        %v5541 = vshrl.u32 2102212464, %v5532
        %v5542 = vor.u32 %v5540, %v5541
        %v5543 = vshll.u32 2102212464, %v5531
        %v5544 = vshrl.u32 920167782, %v5532
        %v5545 = vor.u32 %v5543, %v5544
        %v5546 = vshll.u32 920167782, %v5531
        %v5547 = vshrl.u32 1326507024, %v5532
        %v5548 = vor.u32 %v5546, %v5547
        %vm5549 = vcmp.lt.s32.totalorder %v5530, 1
        %vm5550 = vcmp.lt.s32.totalorder %v5530, 2
        %vm5551 = vcmp.lt.s32.totalorder %v5530, 3
        %vm5552 = vcmp.lt.s32.totalorder %v5530, 4
        %v5553 = vsel %vm5549, %v5533, %v5536
        %v5554 = vsel %vm5552, %v5542, 2102212464
        %v5555 = vsel %vm5551, %v5539, %v5554
        %v5556 = vsel %vm5550, %v5553, %v5555
        %v5557 = vsel %vm5549, %v5536, %v5539
        %v5558 = vsel %vm5552, %v5545, 920167782
        %v5559 = vsel %vm5551, %v5542, %v5558
        %v5560 = vsel %vm5550, %v5557, %v5559
        %v5561 = vsel %vm5549, %v5539, %v5542
        %v5562 = vsel %vm5552, %v5548, 1326507024
        %v5563 = vsel %vm5551, %v5545, %v5562
        %v5564 = vsel %vm5550, %v5561, %v5563
        %v5565 = vshll.u32 %v5525, 8
        %v5566 = vmul.u32.u64.compose %v5565, %v5564
        %v5567 = vextract.low.u32 %v5566
        %v5568 = vextract.high.u32 %v5566
        %v5569 = vmul.u32.u64.compose %v5565, %v5560
        %v5570 = vextract.low.u32 %v5569
        %v5571 = vextract.high.u32 %v5569
        %v5572 = vmul.u32 %v5565, %v5556
        %v5573 = vadd.s32 %v5568, %v5570
        %vm5574 = vc.u32 %v5568, %v5570
        %v5575 = vadd.s32 %v5571, 1
        %v5576 = vsel %vm5574, %v5575, %v5571
        %v5577 = vadd.s32 %v5572, %v5576
        %v5578 = vadd.s32 %v5577, 536870912
        %v5579 = vshrl.u32 %v5578, 30
        %v5580 = vshll.u32 %v5579, 30
        %v5581 = vsub.s32 %v5577, %v5580
        %vm5582 = vcmp.lt.s32.totalorder %v5581, 0
        %v5583 = vsub.s32 0, %v5581
        %v5584 = vsel %vm5582, %v5583, %v5581
        %v5585 = vclz %v5584
        %v5586 = vsub.s32 %v5585, 2
        %vm5587 = vcmp.gt.s32.totalorder 0, %v5586
        %v5588 = vsel %vm5587, 0, %v5586
        %v5589 = vsub.s32 32, %v5588
        %v5590 = vshll.u32 %v5581, %v5588
        %v5591 = vshrl.u32 %v5573, %v5589
        %v5592 = vor.u32 %v5590, %v5591
        %v5593 = vsub.s32 4294967266, %v5588
        %v5594 = vadd.s32 %v5593, 127
        %v5595 = vshll.u32 %v5594, 23
        %v5596 = vor.u32 4788187, %v5595
        %v5597 = vand.u32 2147483647, %v5596
        %v5599 = vcvt.s32.f32 %v5592
        %v5600 = vmul.f32 %v5599, %v5597
        %v5601 = vxor.u32 %v5600, 2147483648
        %v5602 = vsel %vm5519, %v5601, %v5600
        %v5603 = vsub.s32 4, %v5579
        %v5604 = vsel %vm5519, %v5603, %v5579
        %v5605 = vsel %vm5518, %v1067, %v5602
        %v5606 = vsel %vm5518, 0, %v5604
        %v5607 = vcosq.f32.pop %v5605
        %v5608 = vsinq.f32.pop %v5605
        %vm5609 = vweird.f32 %v1067
        %v5610 = vand.u32 %v5606, 3
        %vm5611 = vcmp.lt.s32.totalorder %v5610, 2
        %vm5612 = vcmp.eq.s32.totalorder %v5610, 0
        %v5613 = vxor.u32 %v5608, 2147483648
        %v5614 = vsel %vm5612, %v5607, %v5613
        %vm5615 = vcmp.eq.s32.totalorder %v5610, 2
        %v5616 = vxor.u32 %v5607, 2147483648
        %v5617 = vsel %vm5615, %v5616, %v5608
        %v5618 = vsel %vm5611, %v5614, %v5617
        %v5619 = vsel %vm5609, nan, %v5618
        %v5620 = vand.u32 2147483647, %v1068
        %vm5621 = vcmp.le.f32.partialorder %v5620, 0.7853982
        %vm5622 = vcmp.lt.s32.totalorder %v1068, 0
        %v5623 = vand.u32 %v1068, 2139095040
        %v5624 = vshrl.u32 %v5623, 23
        %v5625 = vsub.s32 %v5624, 127
        %v5626 = vand.u32 2147483647, %v1068
        %v5627 = vand.u32 %v5626, 8388607
        %v5628 = vor.u32 %v5627, 8388608
        %v5629 = vsub.s32 0, %v5628
        %v5630 = vadd.s32 %v5625, 1
        %vm5631 = vcmp.gt.s32.totalorder %v5630, 0
        %v5632 = vsel %vm5631, %v5630, 0
        %v5633 = vshrl.u32 %v5632, 5
        %v5634 = vand.u32 %v5632, 31
        %v5635 = vsub.s32 32, %v5634
        %v5636 = vshrl.u32 683565275, %v5635
        %v5637 = vshll.u32 683565275, %v5634
        %v5638 = vshrl.u32 2475754826, %v5635
        %v5639 = vor.u32 %v5637, %v5638
        %v5640 = vshll.u32 2475754826, %v5634
        %v5641 = vshrl.u32 2131351028, %v5635
        %v5642 = vor.u32 %v5640, %v5641
        %v5643 = vshll.u32 2131351028, %v5634
        %v5644 = vshrl.u32 2102212464, %v5635
        %v5645 = vor.u32 %v5643, %v5644
        %v5646 = vshll.u32 2102212464, %v5634
        %v5647 = vshrl.u32 920167782, %v5635
        %v5648 = vor.u32 %v5646, %v5647
        %v5649 = vshll.u32 920167782, %v5634
        %v5650 = vshrl.u32 1326507024, %v5635
        %v5651 = vor.u32 %v5649, %v5650
        %vm5652 = vcmp.lt.s32.totalorder %v5633, 1
        %vm5653 = vcmp.lt.s32.totalorder %v5633, 2
        %vm5654 = vcmp.lt.s32.totalorder %v5633, 3
        %vm5655 = vcmp.lt.s32.totalorder %v5633, 4
        %v5656 = vsel %vm5652, %v5636, %v5639
        %v5657 = vsel %vm5655, %v5645, 2102212464
        %v5658 = vsel %vm5654, %v5642, %v5657
        %v5659 = vsel %vm5653, %v5656, %v5658
        %v5660 = vsel %vm5652, %v5639, %v5642
        %v5661 = vsel %vm5655, %v5648, 920167782
        %v5662 = vsel %vm5654, %v5645, %v5661
        %v5663 = vsel %vm5653, %v5660, %v5662
        %v5664 = vsel %vm5652, %v5642, %v5645
        %v5665 = vsel %vm5655, %v5651, 1326507024
        %v5666 = vsel %vm5654, %v5648, %v5665
        %v5667 = vsel %vm5653, %v5664, %v5666
        %v5668 = vshll.u32 %v5628, 8
        %v5669 = vmul.u32.u64.compose %v5668, %v5667
        %v5670 = vextract.low.u32 %v5669
        %v5671 = vextract.high.u32 %v5669
        %v5672 = vmul.u32.u64.compose %v5668, %v5663
        %v5673 = vextract.low.u32 %v5672
        %v5674 = vextract.high.u32 %v5672
        %v5675 = vmul.u32 %v5668, %v5659
        %v5676 = vadd.s32 %v5671, %v5673
        %vm5677 = vc.u32 %v5671, %v5673
        %v5678 = vadd.s32 %v5674, 1
        %v5679 = vsel %vm5677, %v5678, %v5674
        %v5680 = vadd.s32 %v5675, %v5679
        %v5681 = vadd.s32 %v5680, 536870912
        %v5682 = vshrl.u32 %v5681, 30
        %v5683 = vshll.u32 %v5682, 30
        %v5684 = vsub.s32 %v5680, %v5683
        %vm5685 = vcmp.lt.s32.totalorder %v5684, 0
        %v5686 = vsub.s32 0, %v5684
        %v5687 = vsel %vm5685, %v5686, %v5684
        %v5688 = vclz %v5687
        %v5689 = vsub.s32 %v5688, 2
        %vm5690 = vcmp.gt.s32.totalorder 0, %v5689
        %v5691 = vsel %vm5690, 0, %v5689
        %v5692 = vsub.s32 32, %v5691
        %v5693 = vshll.u32 %v5684, %v5691
        %v5694 = vshrl.u32 %v5676, %v5692
        %v5695 = vor.u32 %v5693, %v5694
        %v5696 = vsub.s32 4294967266, %v5691
        %v5697 = vadd.s32 %v5696, 127
        %v5698 = vshll.u32 %v5697, 23
        %v5699 = vor.u32 4788187, %v5698
        %v5700 = vand.u32 2147483647, %v5699
        %v5702 = vcvt.s32.f32 %v5695
        %v5703 = vmul.f32 %v5702, %v5700
        %v5704 = vxor.u32 %v5703, 2147483648
        %v5705 = vsel %vm5622, %v5704, %v5703
        %v5706 = vsub.s32 4, %v5682
        %v5707 = vsel %vm5622, %v5706, %v5682
        %v5708 = vsel %vm5621, %v1068, %v5705
        %v5709 = vsel %vm5621, 0, %v5707
        %v5710 = vcosq.f32.pop %v5708
        %v5711 = vsinq.f32.pop %v5708
        %vm5712 = vweird.f32 %v1068
        %v5713 = vand.u32 %v5709, 3
        %vm5714 = vcmp.lt.s32.totalorder %v5713, 2
        %vm5715 = vcmp.eq.s32.totalorder %v5713, 0
        %v5716 = vxor.u32 %v5711, 2147483648
        %v5717 = vsel %vm5715, %v5710, %v5716
        %vm5718 = vcmp.eq.s32.totalorder %v5713, 2
        %v5719 = vxor.u32 %v5710, 2147483648
        %v5720 = vsel %vm5718, %v5719, %v5711
        %v5721 = vsel %vm5714, %v5717, %v5720
        %v5722 = vsel %vm5712, nan, %v5721
        %v5723 = vand.u32 2147483647, %v1069
        %vm5724 = vcmp.le.f32.partialorder %v5723, 0.7853982
        %vm5725 = vcmp.lt.s32.totalorder %v1069, 0
        %v5726 = vand.u32 %v1069, 2139095040
        %v5727 = vshrl.u32 %v5726, 23
        %v5728 = vsub.s32 %v5727, 127
        %v5729 = vand.u32 2147483647, %v1069
        %v5730 = vand.u32 %v5729, 8388607
        %v5731 = vor.u32 %v5730, 8388608
        %v5732 = vsub.s32 0, %v5731
        %v5733 = vadd.s32 %v5728, 1
        %vm5734 = vcmp.gt.s32.totalorder %v5733, 0
        %v5735 = vsel %vm5734, %v5733, 0
        %v5736 = vshrl.u32 %v5735, 5
        %v5737 = vand.u32 %v5735, 31
        %v5738 = vsub.s32 32, %v5737
        %v5739 = vshrl.u32 683565275, %v5738
        %v5740 = vshll.u32 683565275, %v5737
        %v5741 = vshrl.u32 2475754826, %v5738
        %v5742 = vor.u32 %v5740, %v5741
        %v5743 = vshll.u32 2475754826, %v5737
        %v5744 = vshrl.u32 2131351028, %v5738
        %v5745 = vor.u32 %v5743, %v5744
        %v5746 = vshll.u32 2131351028, %v5737
        %v5747 = vshrl.u32 2102212464, %v5738
        %v5748 = vor.u32 %v5746, %v5747
        %v5749 = vshll.u32 2102212464, %v5737
        %v5750 = vshrl.u32 920167782, %v5738
        %v5751 = vor.u32 %v5749, %v5750
        %v5752 = vshll.u32 920167782, %v5737
        %v5753 = vshrl.u32 1326507024, %v5738
        %v5754 = vor.u32 %v5752, %v5753
        %vm5755 = vcmp.lt.s32.totalorder %v5736, 1
        %vm5756 = vcmp.lt.s32.totalorder %v5736, 2
        %vm5757 = vcmp.lt.s32.totalorder %v5736, 3
        %vm5758 = vcmp.lt.s32.totalorder %v5736, 4
        %v5759 = vsel %vm5755, %v5739, %v5742
        %v5760 = vsel %vm5758, %v5748, 2102212464
        %v5761 = vsel %vm5757, %v5745, %v5760
        %v5762 = vsel %vm5756, %v5759, %v5761
        %v5763 = vsel %vm5755, %v5742, %v5745
        %v5764 = vsel %vm5758, %v5751, 920167782
        %v5765 = vsel %vm5757, %v5748, %v5764
        %v5766 = vsel %vm5756, %v5763, %v5765
        %v5767 = vsel %vm5755, %v5745, %v5748
        %v5768 = vsel %vm5758, %v5754, 1326507024
        %v5769 = vsel %vm5757, %v5751, %v5768
        %v5770 = vsel %vm5756, %v5767, %v5769
        %v5771 = vshll.u32 %v5731, 8
        %v5772 = vmul.u32.u64.compose %v5771, %v5770
        %v5773 = vextract.low.u32 %v5772
        %v5774 = vextract.high.u32 %v5772
        %v5775 = vmul.u32.u64.compose %v5771, %v5766
        %v5776 = vextract.low.u32 %v5775
        %v5777 = vextract.high.u32 %v5775
        %v5778 = vmul.u32 %v5771, %v5762
        %v5779 = vadd.s32 %v5774, %v5776
        %vm5780 = vc.u32 %v5774, %v5776
        %v5781 = vadd.s32 %v5777, 1
        %v5782 = vsel %vm5780, %v5781, %v5777
        %v5783 = vadd.s32 %v5778, %v5782
        %v5784 = vadd.s32 %v5783, 536870912
        %v5785 = vshrl.u32 %v5784, 30
        %v5786 = vshll.u32 %v5785, 30
        %v5787 = vsub.s32 %v5783, %v5786
        %vm5788 = vcmp.lt.s32.totalorder %v5787, 0
        %v5789 = vsub.s32 0, %v5787
        %v5790 = vsel %vm5788, %v5789, %v5787
        %v5791 = vclz %v5790
        %v5792 = vsub.s32 %v5791, 2
        %vm5793 = vcmp.gt.s32.totalorder 0, %v5792
        %v5794 = vsel %vm5793, 0, %v5792
        %v5795 = vsub.s32 32, %v5794
        %v5796 = vshll.u32 %v5787, %v5794
        %v5797 = vshrl.u32 %v5779, %v5795
        %v5798 = vor.u32 %v5796, %v5797
        %v5799 = vsub.s32 4294967266, %v5794
        %v5800 = vadd.s32 %v5799, 127
        %v5801 = vshll.u32 %v5800, 23
        %v5802 = vor.u32 4788187, %v5801
        %v5803 = vand.u32 2147483647, %v5802
        %v5805 = vcvt.s32.f32 %v5798
        %v5806 = vmul.f32 %v5805, %v5803
        %v5807 = vxor.u32 %v5806, 2147483648
        %v5808 = vsel %vm5725, %v5807, %v5806
        %v5809 = vsub.s32 4, %v5785
        %v5810 = vsel %vm5725, %v5809, %v5785
        %v5811 = vsel %vm5724, %v1069, %v5808
        %v5812 = vsel %vm5724, 0, %v5810
        %v5813 = vcosq.f32.pop %v5811
        %v5814 = vsinq.f32.pop %v5811
        %vm5815 = vweird.f32 %v1069
        %v5816 = vand.u32 %v5812, 3
        %vm5817 = vcmp.lt.s32.totalorder %v5816, 2
        %vm5818 = vcmp.eq.s32.totalorder %v5816, 0
        %v5819 = vxor.u32 %v5814, 2147483648
        %v5820 = vsel %vm5818, %v5813, %v5819
        %vm5821 = vcmp.eq.s32.totalorder %v5816, 2
        %v5822 = vxor.u32 %v5813, 2147483648
        %v5823 = vsel %vm5821, %v5822, %v5814
        %v5824 = vsel %vm5817, %v5820, %v5823
        %v5825 = vsel %vm5815, nan, %v5824
        %v5826 = vand.u32 2147483647, %v1070
        %vm5827 = vcmp.le.f32.partialorder %v5826, 0.7853982
        %vm5828 = vcmp.lt.s32.totalorder %v1070, 0
        %v5829 = vand.u32 %v1070, 2139095040
        %v5830 = vshrl.u32 %v5829, 23
        %v5831 = vsub.s32 %v5830, 127
        %v5832 = vand.u32 2147483647, %v1070
        %v5833 = vand.u32 %v5832, 8388607
        %v5834 = vor.u32 %v5833, 8388608
        %v5835 = vsub.s32 0, %v5834
        %v5836 = vadd.s32 %v5831, 1
        %vm5837 = vcmp.gt.s32.totalorder %v5836, 0
        %v5838 = vsel %vm5837, %v5836, 0
        %v5839 = vshrl.u32 %v5838, 5
        %v5840 = vand.u32 %v5838, 31
        %v5841 = vsub.s32 32, %v5840
        %v5842 = vshrl.u32 683565275, %v5841
        %v5843 = vshll.u32 683565275, %v5840
        %v5844 = vshrl.u32 2475754826, %v5841
        %v5845 = vor.u32 %v5843, %v5844
        %v5846 = vshll.u32 2475754826, %v5840
        %v5847 = vshrl.u32 2131351028, %v5841
        %v5848 = vor.u32 %v5846, %v5847
        %v5849 = vshll.u32 2131351028, %v5840
        %v5850 = vshrl.u32 2102212464, %v5841
        %v5851 = vor.u32 %v5849, %v5850
        %v5852 = vshll.u32 2102212464, %v5840
        %v5853 = vshrl.u32 920167782, %v5841
        %v5854 = vor.u32 %v5852, %v5853
        %v5855 = vshll.u32 920167782, %v5840
        %v5856 = vshrl.u32 1326507024, %v5841
        %v5857 = vor.u32 %v5855, %v5856
        %vm5858 = vcmp.lt.s32.totalorder %v5839, 1
        %vm5859 = vcmp.lt.s32.totalorder %v5839, 2
        %vm5860 = vcmp.lt.s32.totalorder %v5839, 3
        %vm5861 = vcmp.lt.s32.totalorder %v5839, 4
        %v5862 = vsel %vm5858, %v5842, %v5845
        %v5863 = vsel %vm5861, %v5851, 2102212464
        %v5864 = vsel %vm5860, %v5848, %v5863
        %v5865 = vsel %vm5859, %v5862, %v5864
        %v5866 = vsel %vm5858, %v5845, %v5848
        %v5867 = vsel %vm5861, %v5854, 920167782
        %v5868 = vsel %vm5860, %v5851, %v5867
        %v5869 = vsel %vm5859, %v5866, %v5868
        %v5870 = vsel %vm5858, %v5848, %v5851
        %v5871 = vsel %vm5861, %v5857, 1326507024
        %v5872 = vsel %vm5860, %v5854, %v5871
        %v5873 = vsel %vm5859, %v5870, %v5872
        %v5874 = vshll.u32 %v5834, 8
        %v5875 = vmul.u32.u64.compose %v5874, %v5873
        %v5876 = vextract.low.u32 %v5875
        %v5877 = vextract.high.u32 %v5875
        %v5878 = vmul.u32.u64.compose %v5874, %v5869
        %v5879 = vextract.low.u32 %v5878
        %v5880 = vextract.high.u32 %v5878
        %v5881 = vmul.u32 %v5874, %v5865
        %v5882 = vadd.s32 %v5877, %v5879
        %vm5883 = vc.u32 %v5877, %v5879
        %v5884 = vadd.s32 %v5880, 1
        %v5885 = vsel %vm5883, %v5884, %v5880
        %v5886 = vadd.s32 %v5881, %v5885
        %v5887 = vadd.s32 %v5886, 536870912
        %v5888 = vshrl.u32 %v5887, 30
        %v5889 = vshll.u32 %v5888, 30
        %v5890 = vsub.s32 %v5886, %v5889
        %vm5891 = vcmp.lt.s32.totalorder %v5890, 0
        %v5892 = vsub.s32 0, %v5890
        %v5893 = vsel %vm5891, %v5892, %v5890
        %v5894 = vclz %v5893
        %v5895 = vsub.s32 %v5894, 2
        %vm5896 = vcmp.gt.s32.totalorder 0, %v5895
        %v5897 = vsel %vm5896, 0, %v5895
        %v5898 = vsub.s32 32, %v5897
        %v5899 = vshll.u32 %v5890, %v5897
        %v5900 = vshrl.u32 %v5882, %v5898
        %v5901 = vor.u32 %v5899, %v5900
        %v5902 = vsub.s32 4294967266, %v5897
        %v5903 = vadd.s32 %v5902, 127
        %v5904 = vshll.u32 %v5903, 23
        %v5905 = vor.u32 4788187, %v5904
        %v5906 = vand.u32 2147483647, %v5905
        %v5908 = vcvt.s32.f32 %v5901
        %v5909 = vmul.f32 %v5908, %v5906
        %v5910 = vxor.u32 %v5909, 2147483648
        %v5911 = vsel %vm5828, %v5910, %v5909
        %v5912 = vsub.s32 4, %v5888
        %v5913 = vsel %vm5828, %v5912, %v5888
        %v5914 = vsel %vm5827, %v1070, %v5911
        %v5915 = vsel %vm5827, 0, %v5913
        %v5916 = vcosq.f32.pop %v5914
        %v5917 = vsinq.f32.pop %v5914
        %vm5918 = vweird.f32 %v1070
        %v5919 = vand.u32 %v5915, 3
        %vm5920 = vcmp.lt.s32.totalorder %v5919, 2
        %vm5921 = vcmp.eq.s32.totalorder %v5919, 0
        %v5922 = vxor.u32 %v5917, 2147483648
        %v5923 = vsel %vm5921, %v5916, %v5922
        %vm5924 = vcmp.eq.s32.totalorder %v5919, 2
        %v5925 = vxor.u32 %v5916, 2147483648
        %v5926 = vsel %vm5924, %v5925, %v5917
        %v5927 = vsel %vm5920, %v5923, %v5926
        %v5928 = vsel %vm5918, nan, %v5927
        %v5929 = vand.u32 2147483647, %v1071
        %vm5930 = vcmp.le.f32.partialorder %v5929, 0.7853982
        %vm5931 = vcmp.lt.s32.totalorder %v1071, 0
        %v5932 = vand.u32 %v1071, 2139095040
        %v5933 = vshrl.u32 %v5932, 23
        %v5934 = vsub.s32 %v5933, 127
        %v5935 = vand.u32 2147483647, %v1071
        %v5936 = vand.u32 %v5935, 8388607
        %v5937 = vor.u32 %v5936, 8388608
        %v5938 = vsub.s32 0, %v5937
        %v5939 = vadd.s32 %v5934, 1
        %vm5940 = vcmp.gt.s32.totalorder %v5939, 0
        %v5941 = vsel %vm5940, %v5939, 0
        %v5942 = vshrl.u32 %v5941, 5
        %v5943 = vand.u32 %v5941, 31
        %v5944 = vsub.s32 32, %v5943
        %v5945 = vshrl.u32 683565275, %v5944
        %v5946 = vshll.u32 683565275, %v5943
        %v5947 = vshrl.u32 2475754826, %v5944
        %v5948 = vor.u32 %v5946, %v5947
        %v5949 = vshll.u32 2475754826, %v5943
        %v5950 = vshrl.u32 2131351028, %v5944
        %v5951 = vor.u32 %v5949, %v5950
        %v5952 = vshll.u32 2131351028, %v5943
        %v5953 = vshrl.u32 2102212464, %v5944
        %v5954 = vor.u32 %v5952, %v5953
        %v5955 = vshll.u32 2102212464, %v5943
        %v5956 = vshrl.u32 920167782, %v5944
        %v5957 = vor.u32 %v5955, %v5956
        %v5958 = vshll.u32 920167782, %v5943
        %v5959 = vshrl.u32 1326507024, %v5944
        %v5960 = vor.u32 %v5958, %v5959
        %vm5961 = vcmp.lt.s32.totalorder %v5942, 1
        %vm5962 = vcmp.lt.s32.totalorder %v5942, 2
        %vm5963 = vcmp.lt.s32.totalorder %v5942, 3
        %vm5964 = vcmp.lt.s32.totalorder %v5942, 4
        %v5965 = vsel %vm5961, %v5945, %v5948
        %v5966 = vsel %vm5964, %v5954, 2102212464
        %v5967 = vsel %vm5963, %v5951, %v5966
        %v5968 = vsel %vm5962, %v5965, %v5967
        %v5969 = vsel %vm5961, %v5948, %v5951
        %v5970 = vsel %vm5964, %v5957, 920167782
        %v5971 = vsel %vm5963, %v5954, %v5970
        %v5972 = vsel %vm5962, %v5969, %v5971
        %v5973 = vsel %vm5961, %v5951, %v5954
        %v5974 = vsel %vm5964, %v5960, 1326507024
        %v5975 = vsel %vm5963, %v5957, %v5974
        %v5976 = vsel %vm5962, %v5973, %v5975
        %v5977 = vshll.u32 %v5937, 8
        %v5978 = vmul.u32.u64.compose %v5977, %v5976
        %v5979 = vextract.low.u32 %v5978
        %v5980 = vextract.high.u32 %v5978
        %v5981 = vmul.u32.u64.compose %v5977, %v5972
        %v5982 = vextract.low.u32 %v5981
        %v5983 = vextract.high.u32 %v5981
        %v5984 = vmul.u32 %v5977, %v5968
        %v5985 = vadd.s32 %v5980, %v5982
        %vm5986 = vc.u32 %v5980, %v5982
        %v5987 = vadd.s32 %v5983, 1
        %v5988 = vsel %vm5986, %v5987, %v5983
        %v5989 = vadd.s32 %v5984, %v5988
        %v5990 = vadd.s32 %v5989, 536870912
        %v5991 = vshrl.u32 %v5990, 30
        %v5992 = vshll.u32 %v5991, 30
        %v5993 = vsub.s32 %v5989, %v5992
        %vm5994 = vcmp.lt.s32.totalorder %v5993, 0
        %v5995 = vsub.s32 0, %v5993
        %v5996 = vsel %vm5994, %v5995, %v5993
        %v5997 = vclz %v5996
        %v5998 = vsub.s32 %v5997, 2
        %vm5999 = vcmp.gt.s32.totalorder 0, %v5998
        %v6000 = vsel %vm5999, 0, %v5998
        %v6001 = vsub.s32 32, %v6000
        %v6002 = vshll.u32 %v5993, %v6000
        %v6003 = vshrl.u32 %v5985, %v6001
        %v6004 = vor.u32 %v6002, %v6003
        %v6005 = vsub.s32 4294967266, %v6000
        %v6006 = vadd.s32 %v6005, 127
        %v6007 = vshll.u32 %v6006, 23
        %v6008 = vor.u32 4788187, %v6007
        %v6009 = vand.u32 2147483647, %v6008
        %v6011 = vcvt.s32.f32 %v6004
        %v6012 = vmul.f32 %v6011, %v6009
        %v6013 = vxor.u32 %v6012, 2147483648
        %v6014 = vsel %vm5931, %v6013, %v6012
        %v6015 = vsub.s32 4, %v5991
        %v6016 = vsel %vm5931, %v6015, %v5991
        %v6017 = vsel %vm5930, %v1071, %v6014
        %v6018 = vsel %vm5930, 0, %v6016
        %v6019 = vcosq.f32.pop %v6017
        %v6020 = vsinq.f32.pop %v6017
        %vm6021 = vweird.f32 %v1071
        %v6022 = vand.u32 %v6018, 3
        %vm6023 = vcmp.lt.s32.totalorder %v6022, 2
        %vm6024 = vcmp.eq.s32.totalorder %v6022, 0
        %v6025 = vxor.u32 %v6020, 2147483648
        %v6026 = vsel %vm6024, %v6019, %v6025
        %vm6027 = vcmp.eq.s32.totalorder %v6022, 2
        %v6028 = vxor.u32 %v6019, 2147483648
        %v6029 = vsel %vm6027, %v6028, %v6020
        %v6030 = vsel %vm6023, %v6026, %v6029
        %v6031 = vsel %vm6021, nan, %v6030
        %v6032 = vand.u32 2147483647, %v1072
        %vm6033 = vcmp.le.f32.partialorder %v6032, 0.7853982
        %vm6034 = vcmp.lt.s32.totalorder %v1072, 0
        %v6035 = vand.u32 %v1072, 2139095040
        %v6036 = vshrl.u32 %v6035, 23
        %v6037 = vsub.s32 %v6036, 127
        %v6038 = vand.u32 2147483647, %v1072
        %v6039 = vand.u32 %v6038, 8388607
        %v6040 = vor.u32 %v6039, 8388608
        %v6041 = vsub.s32 0, %v6040
        %v6042 = vadd.s32 %v6037, 1
        %vm6043 = vcmp.gt.s32.totalorder %v6042, 0
        %v6044 = vsel %vm6043, %v6042, 0
        %v6045 = vshrl.u32 %v6044, 5
        %v6046 = vand.u32 %v6044, 31
        %v6047 = vsub.s32 32, %v6046
        %v6048 = vshrl.u32 683565275, %v6047
        %v6049 = vshll.u32 683565275, %v6046
        %v6050 = vshrl.u32 2475754826, %v6047
        %v6051 = vor.u32 %v6049, %v6050
        %v6052 = vshll.u32 2475754826, %v6046
        %v6053 = vshrl.u32 2131351028, %v6047
        %v6054 = vor.u32 %v6052, %v6053
        %v6055 = vshll.u32 2131351028, %v6046
        %v6056 = vshrl.u32 2102212464, %v6047
        %v6057 = vor.u32 %v6055, %v6056
        %v6058 = vshll.u32 2102212464, %v6046
        %v6059 = vshrl.u32 920167782, %v6047
        %v6060 = vor.u32 %v6058, %v6059
        %v6061 = vshll.u32 920167782, %v6046
        %v6062 = vshrl.u32 1326507024, %v6047
        %v6063 = vor.u32 %v6061, %v6062
        %vm6064 = vcmp.lt.s32.totalorder %v6045, 1
        %vm6065 = vcmp.lt.s32.totalorder %v6045, 2
        %vm6066 = vcmp.lt.s32.totalorder %v6045, 3
        %vm6067 = vcmp.lt.s32.totalorder %v6045, 4
        %v6068 = vsel %vm6064, %v6048, %v6051
        %v6069 = vsel %vm6067, %v6057, 2102212464
        %v6070 = vsel %vm6066, %v6054, %v6069
        %v6071 = vsel %vm6065, %v6068, %v6070
        %v6072 = vsel %vm6064, %v6051, %v6054
        %v6073 = vsel %vm6067, %v6060, 920167782
        %v6074 = vsel %vm6066, %v6057, %v6073
        %v6075 = vsel %vm6065, %v6072, %v6074
        %v6076 = vsel %vm6064, %v6054, %v6057
        %v6077 = vsel %vm6067, %v6063, 1326507024
        %v6078 = vsel %vm6066, %v6060, %v6077
        %v6079 = vsel %vm6065, %v6076, %v6078
        %v6080 = vshll.u32 %v6040, 8
        %v6081 = vmul.u32.u64.compose %v6080, %v6079
        %v6082 = vextract.low.u32 %v6081
        %v6083 = vextract.high.u32 %v6081
        %v6084 = vmul.u32.u64.compose %v6080, %v6075
        %v6085 = vextract.low.u32 %v6084
        %v6086 = vextract.high.u32 %v6084
        %v6087 = vmul.u32 %v6080, %v6071
        %v6088 = vadd.s32 %v6083, %v6085
        %vm6089 = vc.u32 %v6083, %v6085
        %v6090 = vadd.s32 %v6086, 1
        %v6091 = vsel %vm6089, %v6090, %v6086
        %v6092 = vadd.s32 %v6087, %v6091
        %v6093 = vadd.s32 %v6092, 536870912
        %v6094 = vshrl.u32 %v6093, 30
        %v6095 = vshll.u32 %v6094, 30
        %v6096 = vsub.s32 %v6092, %v6095
        %vm6097 = vcmp.lt.s32.totalorder %v6096, 0
        %v6098 = vsub.s32 0, %v6096
        %v6099 = vsel %vm6097, %v6098, %v6096
        %v6100 = vclz %v6099
        %v6101 = vsub.s32 %v6100, 2
        %vm6102 = vcmp.gt.s32.totalorder 0, %v6101
        %v6103 = vsel %vm6102, 0, %v6101
        %v6104 = vsub.s32 32, %v6103
        %v6105 = vshll.u32 %v6096, %v6103
        %v6106 = vshrl.u32 %v6088, %v6104
        %v6107 = vor.u32 %v6105, %v6106
        %v6108 = vsub.s32 4294967266, %v6103
        %v6109 = vadd.s32 %v6108, 127
        %v6110 = vshll.u32 %v6109, 23
        %v6111 = vor.u32 4788187, %v6110
        %v6112 = vand.u32 2147483647, %v6111
        %v6114 = vcvt.s32.f32 %v6107
        %v6115 = vmul.f32 %v6114, %v6112
        %v6116 = vxor.u32 %v6115, 2147483648
        %v6117 = vsel %vm6034, %v6116, %v6115
        %v6118 = vsub.s32 4, %v6094
        %v6119 = vsel %vm6034, %v6118, %v6094
        %v6120 = vsel %vm6033, %v1072, %v6117
        %v6121 = vsel %vm6033, 0, %v6119
        %v6122 = vcosq.f32.pop %v6120
        %v6123 = vsinq.f32.pop %v6120
        %vm6124 = vweird.f32 %v1072
        %v6125 = vand.u32 %v6121, 3
        %vm6126 = vcmp.lt.s32.totalorder %v6125, 2
        %vm6127 = vcmp.eq.s32.totalorder %v6125, 0
        %v6128 = vxor.u32 %v6123, 2147483648
        %v6129 = vsel %vm6127, %v6122, %v6128
        %vm6130 = vcmp.eq.s32.totalorder %v6125, 2
        %v6131 = vxor.u32 %v6122, 2147483648
        %v6132 = vsel %vm6130, %v6131, %v6123
        %v6133 = vsel %vm6126, %v6129, %v6132
        %v6134 = vsel %vm6124, nan, %v6133
        %v6135 = vand.u32 2147483647, %v1073
        %vm6136 = vcmp.le.f32.partialorder %v6135, 0.7853982
        %vm6137 = vcmp.lt.s32.totalorder %v1073, 0
        %v6138 = vand.u32 %v1073, 2139095040
        %v6139 = vshrl.u32 %v6138, 23
        %v6140 = vsub.s32 %v6139, 127
        %v6141 = vand.u32 2147483647, %v1073
        %v6142 = vand.u32 %v6141, 8388607
        %v6143 = vor.u32 %v6142, 8388608
        %v6144 = vsub.s32 0, %v6143
        %v6145 = vadd.s32 %v6140, 1
        %vm6146 = vcmp.gt.s32.totalorder %v6145, 0
        %v6147 = vsel %vm6146, %v6145, 0
        %v6148 = vshrl.u32 %v6147, 5
        %v6149 = vand.u32 %v6147, 31
        %v6150 = vsub.s32 32, %v6149
        %v6151 = vshrl.u32 683565275, %v6150
        %v6152 = vshll.u32 683565275, %v6149
        %v6153 = vshrl.u32 2475754826, %v6150
        %v6154 = vor.u32 %v6152, %v6153
        %v6155 = vshll.u32 2475754826, %v6149
        %v6156 = vshrl.u32 2131351028, %v6150
        %v6157 = vor.u32 %v6155, %v6156
        %v6158 = vshll.u32 2131351028, %v6149
        %v6159 = vshrl.u32 2102212464, %v6150
        %v6160 = vor.u32 %v6158, %v6159
        %v6161 = vshll.u32 2102212464, %v6149
        %v6162 = vshrl.u32 920167782, %v6150
        %v6163 = vor.u32 %v6161, %v6162
        %v6164 = vshll.u32 920167782, %v6149
        %v6165 = vshrl.u32 1326507024, %v6150
        %v6166 = vor.u32 %v6164, %v6165
        %vm6167 = vcmp.lt.s32.totalorder %v6148, 1
        %vm6168 = vcmp.lt.s32.totalorder %v6148, 2
        %vm6169 = vcmp.lt.s32.totalorder %v6148, 3
        %vm6170 = vcmp.lt.s32.totalorder %v6148, 4
        %v6171 = vsel %vm6167, %v6151, %v6154
        %v6172 = vsel %vm6170, %v6160, 2102212464
        %v6173 = vsel %vm6169, %v6157, %v6172
        %v6174 = vsel %vm6168, %v6171, %v6173
        %v6175 = vsel %vm6167, %v6154, %v6157
        %v6176 = vsel %vm6170, %v6163, 920167782
        %v6177 = vsel %vm6169, %v6160, %v6176
        %v6178 = vsel %vm6168, %v6175, %v6177
        %v6179 = vsel %vm6167, %v6157, %v6160
        %v6180 = vsel %vm6170, %v6166, 1326507024
        %v6181 = vsel %vm6169, %v6163, %v6180
        %v6182 = vsel %vm6168, %v6179, %v6181
        %v6183 = vshll.u32 %v6143, 8
        %v6184 = vmul.u32.u64.compose %v6183, %v6182
        %v6185 = vextract.low.u32 %v6184
        %v6186 = vextract.high.u32 %v6184
        %v6187 = vmul.u32.u64.compose %v6183, %v6178
        %v6188 = vextract.low.u32 %v6187
        %v6189 = vextract.high.u32 %v6187
        %v6190 = vmul.u32 %v6183, %v6174
        %v6191 = vadd.s32 %v6186, %v6188
        %vm6192 = vc.u32 %v6186, %v6188
        %v6193 = vadd.s32 %v6189, 1
        %v6194 = vsel %vm6192, %v6193, %v6189
        %v6195 = vadd.s32 %v6190, %v6194
        %v6196 = vadd.s32 %v6195, 536870912
        %v6197 = vshrl.u32 %v6196, 30
        %v6198 = vshll.u32 %v6197, 30
        %v6199 = vsub.s32 %v6195, %v6198
        %vm6200 = vcmp.lt.s32.totalorder %v6199, 0
        %v6201 = vsub.s32 0, %v6199
        %v6202 = vsel %vm6200, %v6201, %v6199
        %v6203 = vclz %v6202
        %v6204 = vsub.s32 %v6203, 2
        %vm6205 = vcmp.gt.s32.totalorder 0, %v6204
        %v6206 = vsel %vm6205, 0, %v6204
        %v6207 = vsub.s32 32, %v6206
        %v6208 = vshll.u32 %v6199, %v6206
        %v6209 = vshrl.u32 %v6191, %v6207
        %v6210 = vor.u32 %v6208, %v6209
        %v6211 = vsub.s32 4294967266, %v6206
        %v6212 = vadd.s32 %v6211, 127
        %v6213 = vshll.u32 %v6212, 23
        %v6214 = vor.u32 4788187, %v6213
        %v6215 = vand.u32 2147483647, %v6214
        %v6217 = vcvt.s32.f32 %v6210
        %v6218 = vmul.f32 %v6217, %v6215
        %v6219 = vxor.u32 %v6218, 2147483648
        %v6220 = vsel %vm6137, %v6219, %v6218
        %v6221 = vsub.s32 4, %v6197
        %v6222 = vsel %vm6137, %v6221, %v6197
        %v6223 = vsel %vm6136, %v1073, %v6220
        %v6224 = vsel %vm6136, 0, %v6222
        %v6225 = vcosq.f32.pop %v6223
        %v6226 = vsinq.f32.pop %v6223
        %vm6227 = vweird.f32 %v1073
        %v6228 = vand.u32 %v6224, 3
        %vm6229 = vcmp.lt.s32.totalorder %v6228, 2
        %vm6230 = vcmp.eq.s32.totalorder %v6228, 0
        %v6231 = vxor.u32 %v6226, 2147483648
        %v6232 = vsel %vm6230, %v6225, %v6231
        %vm6233 = vcmp.eq.s32.totalorder %v6228, 2
        %v6234 = vxor.u32 %v6225, 2147483648
        %v6235 = vsel %vm6233, %v6234, %v6226
        %v6236 = vsel %vm6229, %v6232, %v6235
        %v6237 = vsel %vm6227, nan, %v6236
        %v6238 = vand.u32 2147483647, %v1074
        %vm6239 = vcmp.le.f32.partialorder %v6238, 0.7853982
        %vm6240 = vcmp.lt.s32.totalorder %v1074, 0
        %v6241 = vand.u32 %v1074, 2139095040
        %v6242 = vshrl.u32 %v6241, 23
        %v6243 = vsub.s32 %v6242, 127
        %v6244 = vand.u32 2147483647, %v1074
        %v6245 = vand.u32 %v6244, 8388607
        %v6246 = vor.u32 %v6245, 8388608
        %v6247 = vsub.s32 0, %v6246
        %v6248 = vadd.s32 %v6243, 1
        %vm6249 = vcmp.gt.s32.totalorder %v6248, 0
        %v6250 = vsel %vm6249, %v6248, 0
        %v6251 = vshrl.u32 %v6250, 5
        %v6252 = vand.u32 %v6250, 31
        %v6253 = vsub.s32 32, %v6252
        %v6254 = vshrl.u32 683565275, %v6253
        %v6255 = vshll.u32 683565275, %v6252
        %v6256 = vshrl.u32 2475754826, %v6253
        %v6257 = vor.u32 %v6255, %v6256
        %v6258 = vshll.u32 2475754826, %v6252
        %v6259 = vshrl.u32 2131351028, %v6253
        %v6260 = vor.u32 %v6258, %v6259
        %v6261 = vshll.u32 2131351028, %v6252
        %v6262 = vshrl.u32 2102212464, %v6253
        %v6263 = vor.u32 %v6261, %v6262
        %v6264 = vshll.u32 2102212464, %v6252
        %v6265 = vshrl.u32 920167782, %v6253
        %v6266 = vor.u32 %v6264, %v6265
        %v6267 = vshll.u32 920167782, %v6252
        %v6268 = vshrl.u32 1326507024, %v6253
        %v6269 = vor.u32 %v6267, %v6268
        %vm6270 = vcmp.lt.s32.totalorder %v6251, 1
        %vm6271 = vcmp.lt.s32.totalorder %v6251, 2
        %vm6272 = vcmp.lt.s32.totalorder %v6251, 3
        %vm6273 = vcmp.lt.s32.totalorder %v6251, 4
        %v6274 = vsel %vm6270, %v6254, %v6257
        %v6275 = vsel %vm6273, %v6263, 2102212464
        %v6276 = vsel %vm6272, %v6260, %v6275
        %v6277 = vsel %vm6271, %v6274, %v6276
        %v6278 = vsel %vm6270, %v6257, %v6260
        %v6279 = vsel %vm6273, %v6266, 920167782
        %v6280 = vsel %vm6272, %v6263, %v6279
        %v6281 = vsel %vm6271, %v6278, %v6280
        %v6282 = vsel %vm6270, %v6260, %v6263
        %v6283 = vsel %vm6273, %v6269, 1326507024
        %v6284 = vsel %vm6272, %v6266, %v6283
        %v6285 = vsel %vm6271, %v6282, %v6284
        %v6286 = vshll.u32 %v6246, 8
        %v6287 = vmul.u32.u64.compose %v6286, %v6285
        %v6288 = vextract.low.u32 %v6287
        %v6289 = vextract.high.u32 %v6287
        %v6290 = vmul.u32.u64.compose %v6286, %v6281
        %v6291 = vextract.low.u32 %v6290
        %v6292 = vextract.high.u32 %v6290
        %v6293 = vmul.u32 %v6286, %v6277
        %v6294 = vadd.s32 %v6289, %v6291
        %vm6295 = vc.u32 %v6289, %v6291
        %v6296 = vadd.s32 %v6292, 1
        %v6297 = vsel %vm6295, %v6296, %v6292
        %v6298 = vadd.s32 %v6293, %v6297
        %v6299 = vadd.s32 %v6298, 536870912
        %v6300 = vshrl.u32 %v6299, 30
        %v6301 = vshll.u32 %v6300, 30
        %v6302 = vsub.s32 %v6298, %v6301
        %vm6303 = vcmp.lt.s32.totalorder %v6302, 0
        %v6304 = vsub.s32 0, %v6302
        %v6305 = vsel %vm6303, %v6304, %v6302
        %v6306 = vclz %v6305
        %v6307 = vsub.s32 %v6306, 2
        %vm6308 = vcmp.gt.s32.totalorder 0, %v6307
        %v6309 = vsel %vm6308, 0, %v6307
        %v6310 = vsub.s32 32, %v6309
        %v6311 = vshll.u32 %v6302, %v6309
        %v6312 = vshrl.u32 %v6294, %v6310
        %v6313 = vor.u32 %v6311, %v6312
        %v6314 = vsub.s32 4294967266, %v6309
        %v6315 = vadd.s32 %v6314, 127
        %v6316 = vshll.u32 %v6315, 23
        %v6317 = vor.u32 4788187, %v6316
        %v6318 = vand.u32 2147483647, %v6317
        %v6320 = vcvt.s32.f32 %v6313
        %v6321 = vmul.f32 %v6320, %v6318
        %v6322 = vxor.u32 %v6321, 2147483648
        %v6323 = vsel %vm6240, %v6322, %v6321
        %v6324 = vsub.s32 4, %v6300
        %v6325 = vsel %vm6240, %v6324, %v6300
        %v6326 = vsel %vm6239, %v1074, %v6323
        %v6327 = vsel %vm6239, 0, %v6325
        %v6328 = vcosq.f32.pop %v6326
        %v6329 = vsinq.f32.pop %v6326
        %vm6330 = vweird.f32 %v1074
        %v6331 = vand.u32 %v6327, 3
        %vm6332 = vcmp.lt.s32.totalorder %v6331, 2
        %vm6333 = vcmp.eq.s32.totalorder %v6331, 0
        %v6334 = vxor.u32 %v6329, 2147483648
        %v6335 = vsel %vm6333, %v6328, %v6334
        %vm6336 = vcmp.eq.s32.totalorder %v6331, 2
        %v6337 = vxor.u32 %v6328, 2147483648
        %v6338 = vsel %vm6336, %v6337, %v6329
        %v6339 = vsel %vm6332, %v6335, %v6338
        %v6340 = vsel %vm6330, nan, %v6339
        %v6341 = vand.u32 2147483647, %v1075
        %vm6342 = vcmp.le.f32.partialorder %v6341, 0.7853982
        %vm6343 = vcmp.lt.s32.totalorder %v1075, 0
        %v6344 = vand.u32 %v1075, 2139095040
        %v6345 = vshrl.u32 %v6344, 23
        %v6346 = vsub.s32 %v6345, 127
        %v6347 = vand.u32 2147483647, %v1075
        %v6348 = vand.u32 %v6347, 8388607
        %v6349 = vor.u32 %v6348, 8388608
        %v6350 = vsub.s32 0, %v6349
        %v6351 = vadd.s32 %v6346, 1
        %vm6352 = vcmp.gt.s32.totalorder %v6351, 0
        %v6353 = vsel %vm6352, %v6351, 0
        %v6354 = vshrl.u32 %v6353, 5
        %v6355 = vand.u32 %v6353, 31
        %v6356 = vsub.s32 32, %v6355
        %v6357 = vshrl.u32 683565275, %v6356
        %v6358 = vshll.u32 683565275, %v6355
        %v6359 = vshrl.u32 2475754826, %v6356
        %v6360 = vor.u32 %v6358, %v6359
        %v6361 = vshll.u32 2475754826, %v6355
        %v6362 = vshrl.u32 2131351028, %v6356
        %v6363 = vor.u32 %v6361, %v6362
        %v6364 = vshll.u32 2131351028, %v6355
        %v6365 = vshrl.u32 2102212464, %v6356
        %v6366 = vor.u32 %v6364, %v6365
        %v6367 = vshll.u32 2102212464, %v6355
        %v6368 = vshrl.u32 920167782, %v6356
        %v6369 = vor.u32 %v6367, %v6368
        %v6370 = vshll.u32 920167782, %v6355
        %v6371 = vshrl.u32 1326507024, %v6356
        %v6372 = vor.u32 %v6370, %v6371
        %vm6373 = vcmp.lt.s32.totalorder %v6354, 1
        %vm6374 = vcmp.lt.s32.totalorder %v6354, 2
        %vm6375 = vcmp.lt.s32.totalorder %v6354, 3
        %vm6376 = vcmp.lt.s32.totalorder %v6354, 4
        %v6377 = vsel %vm6373, %v6357, %v6360
        %v6378 = vsel %vm6376, %v6366, 2102212464
        %v6379 = vsel %vm6375, %v6363, %v6378
        %v6380 = vsel %vm6374, %v6377, %v6379
        %v6381 = vsel %vm6373, %v6360, %v6363
        %v6382 = vsel %vm6376, %v6369, 920167782
        %v6383 = vsel %vm6375, %v6366, %v6382
        %v6384 = vsel %vm6374, %v6381, %v6383
        %v6385 = vsel %vm6373, %v6363, %v6366
        %v6386 = vsel %vm6376, %v6372, 1326507024
        %v6387 = vsel %vm6375, %v6369, %v6386
        %v6388 = vsel %vm6374, %v6385, %v6387
        %v6389 = vshll.u32 %v6349, 8
        %v6390 = vmul.u32.u64.compose %v6389, %v6388
        %v6391 = vextract.low.u32 %v6390
        %v6392 = vextract.high.u32 %v6390
        %v6393 = vmul.u32.u64.compose %v6389, %v6384
        %v6394 = vextract.low.u32 %v6393
        %v6395 = vextract.high.u32 %v6393
        %v6396 = vmul.u32 %v6389, %v6380
        %v6397 = vadd.s32 %v6392, %v6394
        %vm6398 = vc.u32 %v6392, %v6394
        %v6399 = vadd.s32 %v6395, 1
        %v6400 = vsel %vm6398, %v6399, %v6395
        %v6401 = vadd.s32 %v6396, %v6400
        %v6402 = vadd.s32 %v6401, 536870912
        %v6403 = vshrl.u32 %v6402, 30
        %v6404 = vshll.u32 %v6403, 30
        %v6405 = vsub.s32 %v6401, %v6404
        %vm6406 = vcmp.lt.s32.totalorder %v6405, 0
        %v6407 = vsub.s32 0, %v6405
        %v6408 = vsel %vm6406, %v6407, %v6405
        %v6409 = vclz %v6408
        %v6410 = vsub.s32 %v6409, 2
        %vm6411 = vcmp.gt.s32.totalorder 0, %v6410
        %v6412 = vsel %vm6411, 0, %v6410
        %v6413 = vsub.s32 32, %v6412
        %v6414 = vshll.u32 %v6405, %v6412
        %v6415 = vshrl.u32 %v6397, %v6413
        %v6416 = vor.u32 %v6414, %v6415
        %v6417 = vsub.s32 4294967266, %v6412
        %v6418 = vadd.s32 %v6417, 127
        %v6419 = vshll.u32 %v6418, 23
        %v6420 = vor.u32 4788187, %v6419
        %v6421 = vand.u32 2147483647, %v6420
        %v6423 = vcvt.s32.f32 %v6416
        %v6424 = vmul.f32 %v6423, %v6421
        %v6425 = vxor.u32 %v6424, 2147483648
        %v6426 = vsel %vm6343, %v6425, %v6424
        %v6427 = vsub.s32 4, %v6403
        %v6428 = vsel %vm6343, %v6427, %v6403
        %v6429 = vsel %vm6342, %v1075, %v6426
        %v6430 = vsel %vm6342, 0, %v6428
        %v6431 = vcosq.f32.pop %v6429
        %v6432 = vsinq.f32.pop %v6429
        %vm6433 = vweird.f32 %v1075
        %v6434 = vand.u32 %v6430, 3
        %vm6435 = vcmp.lt.s32.totalorder %v6434, 2
        %vm6436 = vcmp.eq.s32.totalorder %v6434, 0
        %v6437 = vxor.u32 %v6432, 2147483648
        %v6438 = vsel %vm6436, %v6431, %v6437
        %vm6439 = vcmp.eq.s32.totalorder %v6434, 2
        %v6440 = vxor.u32 %v6431, 2147483648
        %v6441 = vsel %vm6439, %v6440, %v6432
        %v6442 = vsel %vm6435, %v6438, %v6441
        %v6443 = vsel %vm6433, nan, %v6442
        %v6444 = vand.u32 2147483647, %v1076
        %vm6445 = vcmp.le.f32.partialorder %v6444, 0.7853982
        %vm6446 = vcmp.lt.s32.totalorder %v1076, 0
        %v6447 = vand.u32 %v1076, 2139095040
        %v6448 = vshrl.u32 %v6447, 23
        %v6449 = vsub.s32 %v6448, 127
        %v6450 = vand.u32 2147483647, %v1076
        %v6451 = vand.u32 %v6450, 8388607
        %v6452 = vor.u32 %v6451, 8388608
        %v6453 = vsub.s32 0, %v6452
        %v6454 = vadd.s32 %v6449, 1
        %vm6455 = vcmp.gt.s32.totalorder %v6454, 0
        %v6456 = vsel %vm6455, %v6454, 0
        %v6457 = vshrl.u32 %v6456, 5
        %v6458 = vand.u32 %v6456, 31
        %v6459 = vsub.s32 32, %v6458
        %v6460 = vshrl.u32 683565275, %v6459
        %v6461 = vshll.u32 683565275, %v6458
        %v6462 = vshrl.u32 2475754826, %v6459
        %v6463 = vor.u32 %v6461, %v6462
        %v6464 = vshll.u32 2475754826, %v6458
        %v6465 = vshrl.u32 2131351028, %v6459
        %v6466 = vor.u32 %v6464, %v6465
        %v6467 = vshll.u32 2131351028, %v6458
        %v6468 = vshrl.u32 2102212464, %v6459
        %v6469 = vor.u32 %v6467, %v6468
        %v6470 = vshll.u32 2102212464, %v6458
        %v6471 = vshrl.u32 920167782, %v6459
        %v6472 = vor.u32 %v6470, %v6471
        %v6473 = vshll.u32 920167782, %v6458
        %v6474 = vshrl.u32 1326507024, %v6459
        %v6475 = vor.u32 %v6473, %v6474
        %vm6476 = vcmp.lt.s32.totalorder %v6457, 1
        %vm6477 = vcmp.lt.s32.totalorder %v6457, 2
        %vm6478 = vcmp.lt.s32.totalorder %v6457, 3
        %vm6479 = vcmp.lt.s32.totalorder %v6457, 4
        %v6480 = vsel %vm6476, %v6460, %v6463
        %v6481 = vsel %vm6479, %v6469, 2102212464
        %v6482 = vsel %vm6478, %v6466, %v6481
        %v6483 = vsel %vm6477, %v6480, %v6482
        %v6484 = vsel %vm6476, %v6463, %v6466
        %v6485 = vsel %vm6479, %v6472, 920167782
        %v6486 = vsel %vm6478, %v6469, %v6485
        %v6487 = vsel %vm6477, %v6484, %v6486
        %v6488 = vsel %vm6476, %v6466, %v6469
        %v6489 = vsel %vm6479, %v6475, 1326507024
        %v6490 = vsel %vm6478, %v6472, %v6489
        %v6491 = vsel %vm6477, %v6488, %v6490
        %v6492 = vshll.u32 %v6452, 8
        %v6493 = vmul.u32.u64.compose %v6492, %v6491
        %v6494 = vextract.low.u32 %v6493
        %v6495 = vextract.high.u32 %v6493
        %v6496 = vmul.u32.u64.compose %v6492, %v6487
        %v6497 = vextract.low.u32 %v6496
        %v6498 = vextract.high.u32 %v6496
        %v6499 = vmul.u32 %v6492, %v6483
        %v6500 = vadd.s32 %v6495, %v6497
        %vm6501 = vc.u32 %v6495, %v6497
        %v6502 = vadd.s32 %v6498, 1
        %v6503 = vsel %vm6501, %v6502, %v6498
        %v6504 = vadd.s32 %v6499, %v6503
        %v6505 = vadd.s32 %v6504, 536870912
        %v6506 = vshrl.u32 %v6505, 30
        %v6507 = vshll.u32 %v6506, 30
        %v6508 = vsub.s32 %v6504, %v6507
        %vm6509 = vcmp.lt.s32.totalorder %v6508, 0
        %v6510 = vsub.s32 0, %v6508
        %v6511 = vsel %vm6509, %v6510, %v6508
        %v6512 = vclz %v6511
        %v6513 = vsub.s32 %v6512, 2
        %vm6514 = vcmp.gt.s32.totalorder 0, %v6513
        %v6515 = vsel %vm6514, 0, %v6513
        %v6516 = vsub.s32 32, %v6515
        %v6517 = vshll.u32 %v6508, %v6515
        %v6518 = vshrl.u32 %v6500, %v6516
        %v6519 = vor.u32 %v6517, %v6518
        %v6520 = vsub.s32 4294967266, %v6515
        %v6521 = vadd.s32 %v6520, 127
        %v6522 = vshll.u32 %v6521, 23
        %v6523 = vor.u32 4788187, %v6522
        %v6524 = vand.u32 2147483647, %v6523
        %v6526 = vcvt.s32.f32 %v6519
        %v6527 = vmul.f32 %v6526, %v6524
        %v6528 = vxor.u32 %v6527, 2147483648
        %v6529 = vsel %vm6446, %v6528, %v6527
        %v6530 = vsub.s32 4, %v6506
        %v6531 = vsel %vm6446, %v6530, %v6506
        %v6532 = vsel %vm6445, %v1076, %v6529
        %v6533 = vsel %vm6445, 0, %v6531
        %v6534 = vcosq.f32.pop %v6532
        %v6535 = vsinq.f32.pop %v6532
        %vm6536 = vweird.f32 %v1076
        %v6537 = vand.u32 %v6533, 3
        %vm6538 = vcmp.lt.s32.totalorder %v6537, 2
        %vm6539 = vcmp.eq.s32.totalorder %v6537, 0
        %v6540 = vxor.u32 %v6535, 2147483648
        %v6541 = vsel %vm6539, %v6534, %v6540
        %vm6542 = vcmp.eq.s32.totalorder %v6537, 2
        %v6543 = vxor.u32 %v6534, 2147483648
        %v6544 = vsel %vm6542, %v6543, %v6535
        %v6545 = vsel %vm6538, %v6541, %v6544
        %v6546 = vsel %vm6536, nan, %v6545
        %v6547 = vand.u32 2147483647, %v1077
        %vm6548 = vcmp.le.f32.partialorder %v6547, 0.7853982
        %vm6549 = vcmp.lt.s32.totalorder %v1077, 0
        %v6550 = vand.u32 %v1077, 2139095040
        %v6551 = vshrl.u32 %v6550, 23
        %v6552 = vsub.s32 %v6551, 127
        %v6553 = vand.u32 2147483647, %v1077
        %v6554 = vand.u32 %v6553, 8388607
        %v6555 = vor.u32 %v6554, 8388608
        %v6556 = vsub.s32 0, %v6555
        %v6557 = vadd.s32 %v6552, 1
        %vm6558 = vcmp.gt.s32.totalorder %v6557, 0
        %v6559 = vsel %vm6558, %v6557, 0
        %v6560 = vshrl.u32 %v6559, 5
        %v6561 = vand.u32 %v6559, 31
        %v6562 = vsub.s32 32, %v6561
        %v6563 = vshrl.u32 683565275, %v6562
        %v6564 = vshll.u32 683565275, %v6561
        %v6565 = vshrl.u32 2475754826, %v6562
        %v6566 = vor.u32 %v6564, %v6565
        %v6567 = vshll.u32 2475754826, %v6561
        %v6568 = vshrl.u32 2131351028, %v6562
        %v6569 = vor.u32 %v6567, %v6568
        %v6570 = vshll.u32 2131351028, %v6561
        %v6571 = vshrl.u32 2102212464, %v6562
        %v6572 = vor.u32 %v6570, %v6571
        %v6573 = vshll.u32 2102212464, %v6561
        %v6574 = vshrl.u32 920167782, %v6562
        %v6575 = vor.u32 %v6573, %v6574
        %v6576 = vshll.u32 920167782, %v6561
        %v6577 = vshrl.u32 1326507024, %v6562
        %v6578 = vor.u32 %v6576, %v6577
        %vm6579 = vcmp.lt.s32.totalorder %v6560, 1
        %vm6580 = vcmp.lt.s32.totalorder %v6560, 2
        %vm6581 = vcmp.lt.s32.totalorder %v6560, 3
        %vm6582 = vcmp.lt.s32.totalorder %v6560, 4
        %v6583 = vsel %vm6579, %v6563, %v6566
        %v6584 = vsel %vm6582, %v6572, 2102212464
        %v6585 = vsel %vm6581, %v6569, %v6584
        %v6586 = vsel %vm6580, %v6583, %v6585
        %v6587 = vsel %vm6579, %v6566, %v6569
        %v6588 = vsel %vm6582, %v6575, 920167782
        %v6589 = vsel %vm6581, %v6572, %v6588
        %v6590 = vsel %vm6580, %v6587, %v6589
        %v6591 = vsel %vm6579, %v6569, %v6572
        %v6592 = vsel %vm6582, %v6578, 1326507024
        %v6593 = vsel %vm6581, %v6575, %v6592
        %v6594 = vsel %vm6580, %v6591, %v6593
        %v6595 = vshll.u32 %v6555, 8
        %v6596 = vmul.u32.u64.compose %v6595, %v6594
        %v6597 = vextract.low.u32 %v6596
        %v6598 = vextract.high.u32 %v6596
        %v6599 = vmul.u32.u64.compose %v6595, %v6590
        %v6600 = vextract.low.u32 %v6599
        %v6601 = vextract.high.u32 %v6599
        %v6602 = vmul.u32 %v6595, %v6586
        %v6603 = vadd.s32 %v6598, %v6600
        %vm6604 = vc.u32 %v6598, %v6600
        %v6605 = vadd.s32 %v6601, 1
        %v6606 = vsel %vm6604, %v6605, %v6601
        %v6607 = vadd.s32 %v6602, %v6606
        %v6608 = vadd.s32 %v6607, 536870912
        %v6609 = vshrl.u32 %v6608, 30
        %v6610 = vshll.u32 %v6609, 30
        %v6611 = vsub.s32 %v6607, %v6610
        %vm6612 = vcmp.lt.s32.totalorder %v6611, 0
        %v6613 = vsub.s32 0, %v6611
        %v6614 = vsel %vm6612, %v6613, %v6611
        %v6615 = vclz %v6614
        %v6616 = vsub.s32 %v6615, 2
        %vm6617 = vcmp.gt.s32.totalorder 0, %v6616
        %v6618 = vsel %vm6617, 0, %v6616
        %v6619 = vsub.s32 32, %v6618
        %v6620 = vshll.u32 %v6611, %v6618
        %v6621 = vshrl.u32 %v6603, %v6619
        %v6622 = vor.u32 %v6620, %v6621
        %v6623 = vsub.s32 4294967266, %v6618
        %v6624 = vadd.s32 %v6623, 127
        %v6625 = vshll.u32 %v6624, 23
        %v6626 = vor.u32 4788187, %v6625
        %v6627 = vand.u32 2147483647, %v6626
        %v6629 = vcvt.s32.f32 %v6622
        %v6630 = vmul.f32 %v6629, %v6627
        %v6631 = vxor.u32 %v6630, 2147483648
        %v6632 = vsel %vm6549, %v6631, %v6630
        %v6633 = vsub.s32 4, %v6609
        %v6634 = vsel %vm6549, %v6633, %v6609
        %v6635 = vsel %vm6548, %v1077, %v6632
        %v6636 = vsel %vm6548, 0, %v6634
        %v6637 = vcosq.f32.pop %v6635
        %v6638 = vsinq.f32.pop %v6635
        %vm6639 = vweird.f32 %v1077
        %v6640 = vand.u32 %v6636, 3
        %vm6641 = vcmp.lt.s32.totalorder %v6640, 2
        %vm6642 = vcmp.eq.s32.totalorder %v6640, 0
        %v6643 = vxor.u32 %v6638, 2147483648
        %v6644 = vsel %vm6642, %v6637, %v6643
        %vm6645 = vcmp.eq.s32.totalorder %v6640, 2
        %v6646 = vxor.u32 %v6637, 2147483648
        %v6647 = vsel %vm6645, %v6646, %v6638
        %v6648 = vsel %vm6641, %v6644, %v6647
        %v6649 = vsel %vm6639, nan, %v6648
        %v6650 = vand.u32 2147483647, %v1078
        %vm6651 = vcmp.le.f32.partialorder %v6650, 0.7853982
        %vm6652 = vcmp.lt.s32.totalorder %v1078, 0
        %v6653 = vand.u32 %v1078, 2139095040
        %v6654 = vshrl.u32 %v6653, 23
        %v6655 = vsub.s32 %v6654, 127
        %v6656 = vand.u32 2147483647, %v1078
        %v6657 = vand.u32 %v6656, 8388607
        %v6658 = vor.u32 %v6657, 8388608
        %v6659 = vsub.s32 0, %v6658
        %v6660 = vadd.s32 %v6655, 1
        %vm6661 = vcmp.gt.s32.totalorder %v6660, 0
        %v6662 = vsel %vm6661, %v6660, 0
        %v6663 = vshrl.u32 %v6662, 5
        %v6664 = vand.u32 %v6662, 31
        %v6665 = vsub.s32 32, %v6664
        %v6666 = vshrl.u32 683565275, %v6665
        %v6667 = vshll.u32 683565275, %v6664
        %v6668 = vshrl.u32 2475754826, %v6665
        %v6669 = vor.u32 %v6667, %v6668
        %v6670 = vshll.u32 2475754826, %v6664
        %v6671 = vshrl.u32 2131351028, %v6665
        %v6672 = vor.u32 %v6670, %v6671
        %v6673 = vshll.u32 2131351028, %v6664
        %v6674 = vshrl.u32 2102212464, %v6665
        %v6675 = vor.u32 %v6673, %v6674
        %v6676 = vshll.u32 2102212464, %v6664
        %v6677 = vshrl.u32 920167782, %v6665
        %v6678 = vor.u32 %v6676, %v6677
        %v6679 = vshll.u32 920167782, %v6664
        %v6680 = vshrl.u32 1326507024, %v6665
        %v6681 = vor.u32 %v6679, %v6680
        %vm6682 = vcmp.lt.s32.totalorder %v6663, 1
        %vm6683 = vcmp.lt.s32.totalorder %v6663, 2
        %vm6684 = vcmp.lt.s32.totalorder %v6663, 3
        %vm6685 = vcmp.lt.s32.totalorder %v6663, 4
        %v6686 = vsel %vm6682, %v6666, %v6669
        %v6687 = vsel %vm6685, %v6675, 2102212464
        %v6688 = vsel %vm6684, %v6672, %v6687
        %v6689 = vsel %vm6683, %v6686, %v6688
        %v6690 = vsel %vm6682, %v6669, %v6672
        %v6691 = vsel %vm6685, %v6678, 920167782
        %v6692 = vsel %vm6684, %v6675, %v6691
        %v6693 = vsel %vm6683, %v6690, %v6692
        %v6694 = vsel %vm6682, %v6672, %v6675
        %v6695 = vsel %vm6685, %v6681, 1326507024
        %v6696 = vsel %vm6684, %v6678, %v6695
        %v6697 = vsel %vm6683, %v6694, %v6696
        %v6698 = vshll.u32 %v6658, 8
        %v6699 = vmul.u32.u64.compose %v6698, %v6697
        %v6700 = vextract.low.u32 %v6699
        %v6701 = vextract.high.u32 %v6699
        %v6702 = vmul.u32.u64.compose %v6698, %v6693
        %v6703 = vextract.low.u32 %v6702
        %v6704 = vextract.high.u32 %v6702
        %v6705 = vmul.u32 %v6698, %v6689
        %v6706 = vadd.s32 %v6701, %v6703
        %vm6707 = vc.u32 %v6701, %v6703
        %v6708 = vadd.s32 %v6704, 1
        %v6709 = vsel %vm6707, %v6708, %v6704
        %v6710 = vadd.s32 %v6705, %v6709
        %v6711 = vadd.s32 %v6710, 536870912
        %v6712 = vshrl.u32 %v6711, 30
        %v6713 = vshll.u32 %v6712, 30
        %v6714 = vsub.s32 %v6710, %v6713
        %vm6715 = vcmp.lt.s32.totalorder %v6714, 0
        %v6716 = vsub.s32 0, %v6714
        %v6717 = vsel %vm6715, %v6716, %v6714
        %v6718 = vclz %v6717
        %v6719 = vsub.s32 %v6718, 2
        %vm6720 = vcmp.gt.s32.totalorder 0, %v6719
        %v6721 = vsel %vm6720, 0, %v6719
        %v6722 = vsub.s32 32, %v6721
        %v6723 = vshll.u32 %v6714, %v6721
        %v6724 = vshrl.u32 %v6706, %v6722
        %v6725 = vor.u32 %v6723, %v6724
        %v6726 = vsub.s32 4294967266, %v6721
        %v6727 = vadd.s32 %v6726, 127
        %v6728 = vshll.u32 %v6727, 23
        %v6729 = vor.u32 4788187, %v6728
        %v6730 = vand.u32 2147483647, %v6729
        %v6732 = vcvt.s32.f32 %v6725
        %v6733 = vmul.f32 %v6732, %v6730
        %v6734 = vxor.u32 %v6733, 2147483648
        %v6735 = vsel %vm6652, %v6734, %v6733
        %v6736 = vsub.s32 4, %v6712
        %v6737 = vsel %vm6652, %v6736, %v6712
        %v6738 = vsel %vm6651, %v1078, %v6735
        %v6739 = vsel %vm6651, 0, %v6737
        %v6740 = vcosq.f32.pop %v6738
        %v6741 = vsinq.f32.pop %v6738
        %vm6742 = vweird.f32 %v1078
        %v6743 = vand.u32 %v6739, 3
        %vm6744 = vcmp.lt.s32.totalorder %v6743, 2
        %vm6745 = vcmp.eq.s32.totalorder %v6743, 0
        %v6746 = vxor.u32 %v6741, 2147483648
        %v6747 = vsel %vm6745, %v6740, %v6746
        %vm6748 = vcmp.eq.s32.totalorder %v6743, 2
        %v6749 = vxor.u32 %v6740, 2147483648
        %v6750 = vsel %vm6748, %v6749, %v6741
        %v6751 = vsel %vm6744, %v6747, %v6750
        %v6752 = vsel %vm6742, nan, %v6751
        %v6753 = vand.u32 2147483647, %v1079
        %vm6754 = vcmp.le.f32.partialorder %v6753, 0.7853982
        %vm6755 = vcmp.lt.s32.totalorder %v1079, 0
        %v6756 = vand.u32 %v1079, 2139095040
        %v6757 = vshrl.u32 %v6756, 23
        %v6758 = vsub.s32 %v6757, 127
        %v6759 = vand.u32 2147483647, %v1079
        %v6760 = vand.u32 %v6759, 8388607
        %v6761 = vor.u32 %v6760, 8388608
        %v6762 = vsub.s32 0, %v6761
        %v6763 = vadd.s32 %v6758, 1
        %vm6764 = vcmp.gt.s32.totalorder %v6763, 0
        %v6765 = vsel %vm6764, %v6763, 0
        %v6766 = vshrl.u32 %v6765, 5
        %v6767 = vand.u32 %v6765, 31
        %v6768 = vsub.s32 32, %v6767
        %v6769 = vshrl.u32 683565275, %v6768
        %v6770 = vshll.u32 683565275, %v6767
        %v6771 = vshrl.u32 2475754826, %v6768
        %v6772 = vor.u32 %v6770, %v6771
        %v6773 = vshll.u32 2475754826, %v6767
        %v6774 = vshrl.u32 2131351028, %v6768
        %v6775 = vor.u32 %v6773, %v6774
        %v6776 = vshll.u32 2131351028, %v6767
        %v6777 = vshrl.u32 2102212464, %v6768
        %v6778 = vor.u32 %v6776, %v6777
        %v6779 = vshll.u32 2102212464, %v6767
        %v6780 = vshrl.u32 920167782, %v6768
        %v6781 = vor.u32 %v6779, %v6780
        %v6782 = vshll.u32 920167782, %v6767
        %v6783 = vshrl.u32 1326507024, %v6768
        %v6784 = vor.u32 %v6782, %v6783
        %vm6785 = vcmp.lt.s32.totalorder %v6766, 1
        %vm6786 = vcmp.lt.s32.totalorder %v6766, 2
        %vm6787 = vcmp.lt.s32.totalorder %v6766, 3
        %vm6788 = vcmp.lt.s32.totalorder %v6766, 4
        %v6789 = vsel %vm6785, %v6769, %v6772
        %v6790 = vsel %vm6788, %v6778, 2102212464
        %v6791 = vsel %vm6787, %v6775, %v6790
        %v6792 = vsel %vm6786, %v6789, %v6791
        %v6793 = vsel %vm6785, %v6772, %v6775
        %v6794 = vsel %vm6788, %v6781, 920167782
        %v6795 = vsel %vm6787, %v6778, %v6794
        %v6796 = vsel %vm6786, %v6793, %v6795
        %v6797 = vsel %vm6785, %v6775, %v6778
        %v6798 = vsel %vm6788, %v6784, 1326507024
        %v6799 = vsel %vm6787, %v6781, %v6798
        %v6800 = vsel %vm6786, %v6797, %v6799
        %v6801 = vshll.u32 %v6761, 8
        %v6802 = vmul.u32.u64.compose %v6801, %v6800
        %v6803 = vextract.low.u32 %v6802
        %v6804 = vextract.high.u32 %v6802
        %v6805 = vmul.u32.u64.compose %v6801, %v6796
        %v6806 = vextract.low.u32 %v6805
        %v6807 = vextract.high.u32 %v6805
        %v6808 = vmul.u32 %v6801, %v6792
        %v6809 = vadd.s32 %v6804, %v6806
        %vm6810 = vc.u32 %v6804, %v6806
        %v6811 = vadd.s32 %v6807, 1
        %v6812 = vsel %vm6810, %v6811, %v6807
        %v6813 = vadd.s32 %v6808, %v6812
        %v6814 = vadd.s32 %v6813, 536870912
        %v6815 = vshrl.u32 %v6814, 30
        %v6816 = vshll.u32 %v6815, 30
        %v6817 = vsub.s32 %v6813, %v6816
        %vm6818 = vcmp.lt.s32.totalorder %v6817, 0
        %v6819 = vsub.s32 0, %v6817
        %v6820 = vsel %vm6818, %v6819, %v6817
        %v6821 = vclz %v6820
        %v6822 = vsub.s32 %v6821, 2
        %vm6823 = vcmp.gt.s32.totalorder 0, %v6822
        %v6824 = vsel %vm6823, 0, %v6822
        %v6825 = vsub.s32 32, %v6824
        %v6826 = vshll.u32 %v6817, %v6824
        %v6827 = vshrl.u32 %v6809, %v6825
        %v6828 = vor.u32 %v6826, %v6827
        %v6829 = vsub.s32 4294967266, %v6824
        %v6830 = vadd.s32 %v6829, 127
        %v6831 = vshll.u32 %v6830, 23
        %v6832 = vor.u32 4788187, %v6831
        %v6833 = vand.u32 2147483647, %v6832
        %v6835 = vcvt.s32.f32 %v6828
        %v6836 = vmul.f32 %v6835, %v6833
        %v6837 = vxor.u32 %v6836, 2147483648
        %v6838 = vsel %vm6755, %v6837, %v6836
        %v6839 = vsub.s32 4, %v6815
        %v6840 = vsel %vm6755, %v6839, %v6815
        %v6841 = vsel %vm6754, %v1079, %v6838
        %v6842 = vsel %vm6754, 0, %v6840
        %v6843 = vcosq.f32.pop %v6841
        %v6844 = vsinq.f32.pop %v6841
        %vm6845 = vweird.f32 %v1079
        %v6846 = vand.u32 %v6842, 3
        %vm6847 = vcmp.lt.s32.totalorder %v6846, 2
        %vm6848 = vcmp.eq.s32.totalorder %v6846, 0
        %v6849 = vxor.u32 %v6844, 2147483648
        %v6850 = vsel %vm6848, %v6843, %v6849
        %vm6851 = vcmp.eq.s32.totalorder %v6846, 2
        %v6852 = vxor.u32 %v6843, 2147483648
        %v6853 = vsel %vm6851, %v6852, %v6844
        %v6854 = vsel %vm6847, %v6850, %v6853
        %v6855 = vsel %vm6845, nan, %v6854
        %v6856 = vand.u32 2147483647, %v1080
        %vm6857 = vcmp.le.f32.partialorder %v6856, 0.7853982
        %vm6858 = vcmp.lt.s32.totalorder %v1080, 0
        %v6859 = vand.u32 %v1080, 2139095040
        %v6860 = vshrl.u32 %v6859, 23
        %v6861 = vsub.s32 %v6860, 127
        %v6862 = vand.u32 2147483647, %v1080
        %v6863 = vand.u32 %v6862, 8388607
        %v6864 = vor.u32 %v6863, 8388608
        %v6865 = vsub.s32 0, %v6864
        %v6866 = vadd.s32 %v6861, 1
        %vm6867 = vcmp.gt.s32.totalorder %v6866, 0
        %v6868 = vsel %vm6867, %v6866, 0
        %v6869 = vshrl.u32 %v6868, 5
        %v6870 = vand.u32 %v6868, 31
        %v6871 = vsub.s32 32, %v6870
        %v6872 = vshrl.u32 683565275, %v6871
        %v6873 = vshll.u32 683565275, %v6870
        %v6874 = vshrl.u32 2475754826, %v6871
        %v6875 = vor.u32 %v6873, %v6874
        %v6876 = vshll.u32 2475754826, %v6870
        %v6877 = vshrl.u32 2131351028, %v6871
        %v6878 = vor.u32 %v6876, %v6877
        %v6879 = vshll.u32 2131351028, %v6870
        %v6880 = vshrl.u32 2102212464, %v6871
        %v6881 = vor.u32 %v6879, %v6880
        %v6882 = vshll.u32 2102212464, %v6870
        %v6883 = vshrl.u32 920167782, %v6871
        %v6884 = vor.u32 %v6882, %v6883
        %v6885 = vshll.u32 920167782, %v6870
        %v6886 = vshrl.u32 1326507024, %v6871
        %v6887 = vor.u32 %v6885, %v6886
        %vm6888 = vcmp.lt.s32.totalorder %v6869, 1
        %vm6889 = vcmp.lt.s32.totalorder %v6869, 2
        %vm6890 = vcmp.lt.s32.totalorder %v6869, 3
        %vm6891 = vcmp.lt.s32.totalorder %v6869, 4
        %v6892 = vsel %vm6888, %v6872, %v6875
        %v6893 = vsel %vm6891, %v6881, 2102212464
        %v6894 = vsel %vm6890, %v6878, %v6893
        %v6895 = vsel %vm6889, %v6892, %v6894
        %v6896 = vsel %vm6888, %v6875, %v6878
        %v6897 = vsel %vm6891, %v6884, 920167782
        %v6898 = vsel %vm6890, %v6881, %v6897
        %v6899 = vsel %vm6889, %v6896, %v6898
        %v6900 = vsel %vm6888, %v6878, %v6881
        %v6901 = vsel %vm6891, %v6887, 1326507024
        %v6902 = vsel %vm6890, %v6884, %v6901
        %v6903 = vsel %vm6889, %v6900, %v6902
        %v6904 = vshll.u32 %v6864, 8
        %v6905 = vmul.u32.u64.compose %v6904, %v6903
        %v6906 = vextract.low.u32 %v6905
        %v6907 = vextract.high.u32 %v6905
        %v6908 = vmul.u32.u64.compose %v6904, %v6899
        %v6909 = vextract.low.u32 %v6908
        %v6910 = vextract.high.u32 %v6908
        %v6911 = vmul.u32 %v6904, %v6895
        %v6912 = vadd.s32 %v6907, %v6909
        %vm6913 = vc.u32 %v6907, %v6909
        %v6914 = vadd.s32 %v6910, 1
        %v6915 = vsel %vm6913, %v6914, %v6910
        %v6916 = vadd.s32 %v6911, %v6915
        %v6917 = vadd.s32 %v6916, 536870912
        %v6918 = vshrl.u32 %v6917, 30
        %v6919 = vshll.u32 %v6918, 30
        %v6920 = vsub.s32 %v6916, %v6919
        %vm6921 = vcmp.lt.s32.totalorder %v6920, 0
        %v6922 = vsub.s32 0, %v6920
        %v6923 = vsel %vm6921, %v6922, %v6920
        %v6924 = vclz %v6923
        %v6925 = vsub.s32 %v6924, 2
        %vm6926 = vcmp.gt.s32.totalorder 0, %v6925
        %v6927 = vsel %vm6926, 0, %v6925
        %v6928 = vsub.s32 32, %v6927
        %v6929 = vshll.u32 %v6920, %v6927
        %v6930 = vshrl.u32 %v6912, %v6928
        %v6931 = vor.u32 %v6929, %v6930
        %v6932 = vsub.s32 4294967266, %v6927
        %v6933 = vadd.s32 %v6932, 127
        %v6934 = vshll.u32 %v6933, 23
        %v6935 = vor.u32 4788187, %v6934
        %v6936 = vand.u32 2147483647, %v6935
        %v6938 = vcvt.s32.f32 %v6931
        %v6939 = vmul.f32 %v6938, %v6936
        %v6940 = vxor.u32 %v6939, 2147483648
        %v6941 = vsel %vm6858, %v6940, %v6939
        %v6942 = vsub.s32 4, %v6918
        %v6943 = vsel %vm6858, %v6942, %v6918
        %v6944 = vsel %vm6857, %v1080, %v6941
        %v6945 = vsel %vm6857, 0, %v6943
        %v6946 = vcosq.f32.pop %v6944
        %v6947 = vsinq.f32.pop %v6944
        %vm6948 = vweird.f32 %v1080
        %v6949 = vand.u32 %v6945, 3
        %vm6950 = vcmp.lt.s32.totalorder %v6949, 2
        %vm6951 = vcmp.eq.s32.totalorder %v6949, 0
        %v6952 = vxor.u32 %v6947, 2147483648
        %v6953 = vsel %vm6951, %v6946, %v6952
        %vm6954 = vcmp.eq.s32.totalorder %v6949, 2
        %v6955 = vxor.u32 %v6946, 2147483648
        %v6956 = vsel %vm6954, %v6955, %v6947
        %v6957 = vsel %vm6950, %v6953, %v6956
        %v6958 = vsel %vm6948, nan, %v6957
        %v6959 = vand.u32 2147483647, %v1081
        %vm6960 = vcmp.le.f32.partialorder %v6959, 0.7853982
        %vm6961 = vcmp.lt.s32.totalorder %v1081, 0
        %v6962 = vand.u32 %v1081, 2139095040
        %v6963 = vshrl.u32 %v6962, 23
        %v6964 = vsub.s32 %v6963, 127
        %v6965 = vand.u32 2147483647, %v1081
        %v6966 = vand.u32 %v6965, 8388607
        %v6967 = vor.u32 %v6966, 8388608
        %v6968 = vsub.s32 0, %v6967
        %v6969 = vadd.s32 %v6964, 1
        %vm6970 = vcmp.gt.s32.totalorder %v6969, 0
        %v6971 = vsel %vm6970, %v6969, 0
        %v6972 = vshrl.u32 %v6971, 5
        %v6973 = vand.u32 %v6971, 31
        %v6974 = vsub.s32 32, %v6973
        %v6975 = vshrl.u32 683565275, %v6974
        %v6976 = vshll.u32 683565275, %v6973
        %v6977 = vshrl.u32 2475754826, %v6974
        %v6978 = vor.u32 %v6976, %v6977
        %v6979 = vshll.u32 2475754826, %v6973
        %v6980 = vshrl.u32 2131351028, %v6974
        %v6981 = vor.u32 %v6979, %v6980
        %v6982 = vshll.u32 2131351028, %v6973
        %v6983 = vshrl.u32 2102212464, %v6974
        %v6984 = vor.u32 %v6982, %v6983
        %v6985 = vshll.u32 2102212464, %v6973
        %v6986 = vshrl.u32 920167782, %v6974
        %v6987 = vor.u32 %v6985, %v6986
        %v6988 = vshll.u32 920167782, %v6973
        %v6989 = vshrl.u32 1326507024, %v6974
        %v6990 = vor.u32 %v6988, %v6989
        %vm6991 = vcmp.lt.s32.totalorder %v6972, 1
        %vm6992 = vcmp.lt.s32.totalorder %v6972, 2
        %vm6993 = vcmp.lt.s32.totalorder %v6972, 3
        %vm6994 = vcmp.lt.s32.totalorder %v6972, 4
        %v6995 = vsel %vm6991, %v6975, %v6978
        %v6996 = vsel %vm6994, %v6984, 2102212464
        %v6997 = vsel %vm6993, %v6981, %v6996
        %v6998 = vsel %vm6992, %v6995, %v6997
        %v6999 = vsel %vm6991, %v6978, %v6981
        %v7000 = vsel %vm6994, %v6987, 920167782
        %v7001 = vsel %vm6993, %v6984, %v7000
        %v7002 = vsel %vm6992, %v6999, %v7001
        %v7003 = vsel %vm6991, %v6981, %v6984
        %v7004 = vsel %vm6994, %v6990, 1326507024
        %v7005 = vsel %vm6993, %v6987, %v7004
        %v7006 = vsel %vm6992, %v7003, %v7005
        %v7007 = vshll.u32 %v6967, 8
        %v7008 = vmul.u32.u64.compose %v7007, %v7006
        %v7009 = vextract.low.u32 %v7008
        %v7010 = vextract.high.u32 %v7008
        %v7011 = vmul.u32.u64.compose %v7007, %v7002
        %v7012 = vextract.low.u32 %v7011
        %v7013 = vextract.high.u32 %v7011
        %v7014 = vmul.u32 %v7007, %v6998
        %v7015 = vadd.s32 %v7010, %v7012
        %vm7016 = vc.u32 %v7010, %v7012
        %v7017 = vadd.s32 %v7013, 1
        %v7018 = vsel %vm7016, %v7017, %v7013
        %v7019 = vadd.s32 %v7014, %v7018
        %v7020 = vadd.s32 %v7019, 536870912
        %v7021 = vshrl.u32 %v7020, 30
        %v7022 = vshll.u32 %v7021, 30
        %v7023 = vsub.s32 %v7019, %v7022
        %vm7024 = vcmp.lt.s32.totalorder %v7023, 0
        %v7025 = vsub.s32 0, %v7023
        %v7026 = vsel %vm7024, %v7025, %v7023
        %v7027 = vclz %v7026
        %v7028 = vsub.s32 %v7027, 2
        %vm7029 = vcmp.gt.s32.totalorder 0, %v7028
        %v7030 = vsel %vm7029, 0, %v7028
        %v7031 = vsub.s32 32, %v7030
        %v7032 = vshll.u32 %v7023, %v7030
        %v7033 = vshrl.u32 %v7015, %v7031
        %v7034 = vor.u32 %v7032, %v7033
        %v7035 = vsub.s32 4294967266, %v7030
        %v7036 = vadd.s32 %v7035, 127
        %v7037 = vshll.u32 %v7036, 23
        %v7038 = vor.u32 4788187, %v7037
        %v7039 = vand.u32 2147483647, %v7038
        %v7041 = vcvt.s32.f32 %v7034
        %v7042 = vmul.f32 %v7041, %v7039
        %v7043 = vxor.u32 %v7042, 2147483648
        %v7044 = vsel %vm6961, %v7043, %v7042
        %v7045 = vsub.s32 4, %v7021
        %v7046 = vsel %vm6961, %v7045, %v7021
        %v7047 = vsel %vm6960, %v1081, %v7044
        %v7048 = vsel %vm6960, 0, %v7046
        %v7049 = vcosq.f32.pop %v7047
        %v7050 = vsinq.f32.pop %v7047
        %vm7051 = vweird.f32 %v1081
        %v7052 = vand.u32 %v7048, 3
        %vm7053 = vcmp.lt.s32.totalorder %v7052, 2
        %vm7054 = vcmp.eq.s32.totalorder %v7052, 0
        %v7055 = vxor.u32 %v7050, 2147483648
        %v7056 = vsel %vm7054, %v7049, %v7055
        %vm7057 = vcmp.eq.s32.totalorder %v7052, 2
        %v7058 = vxor.u32 %v7049, 2147483648
        %v7059 = vsel %vm7057, %v7058, %v7050
        %v7060 = vsel %vm7053, %v7056, %v7059
        %v7061 = vsel %vm7051, nan, %v7060
        %v7062 = vand.u32 2147483647, %v1082
        %vm7063 = vcmp.le.f32.partialorder %v7062, 0.7853982
        %vm7064 = vcmp.lt.s32.totalorder %v1082, 0
        %v7065 = vand.u32 %v1082, 2139095040
        %v7066 = vshrl.u32 %v7065, 23
        %v7067 = vsub.s32 %v7066, 127
        %v7068 = vand.u32 2147483647, %v1082
        %v7069 = vand.u32 %v7068, 8388607
        %v7070 = vor.u32 %v7069, 8388608
        %v7071 = vsub.s32 0, %v7070
        %v7072 = vadd.s32 %v7067, 1
        %vm7073 = vcmp.gt.s32.totalorder %v7072, 0
        %v7074 = vsel %vm7073, %v7072, 0
        %v7075 = vshrl.u32 %v7074, 5
        %v7076 = vand.u32 %v7074, 31
        %v7077 = vsub.s32 32, %v7076
        %v7078 = vshrl.u32 683565275, %v7077
        %v7079 = vshll.u32 683565275, %v7076
        %v7080 = vshrl.u32 2475754826, %v7077
        %v7081 = vor.u32 %v7079, %v7080
        %v7082 = vshll.u32 2475754826, %v7076
        %v7083 = vshrl.u32 2131351028, %v7077
        %v7084 = vor.u32 %v7082, %v7083
        %v7085 = vshll.u32 2131351028, %v7076
        %v7086 = vshrl.u32 2102212464, %v7077
        %v7087 = vor.u32 %v7085, %v7086
        %v7088 = vshll.u32 2102212464, %v7076
        %v7089 = vshrl.u32 920167782, %v7077
        %v7090 = vor.u32 %v7088, %v7089
        %v7091 = vshll.u32 920167782, %v7076
        %v7092 = vshrl.u32 1326507024, %v7077
        %v7093 = vor.u32 %v7091, %v7092
        %vm7094 = vcmp.lt.s32.totalorder %v7075, 1
        %vm7095 = vcmp.lt.s32.totalorder %v7075, 2
        %vm7096 = vcmp.lt.s32.totalorder %v7075, 3
        %vm7097 = vcmp.lt.s32.totalorder %v7075, 4
        %v7098 = vsel %vm7094, %v7078, %v7081
        %v7099 = vsel %vm7097, %v7087, 2102212464
        %v7100 = vsel %vm7096, %v7084, %v7099
        %v7101 = vsel %vm7095, %v7098, %v7100
        %v7102 = vsel %vm7094, %v7081, %v7084
        %v7103 = vsel %vm7097, %v7090, 920167782
        %v7104 = vsel %vm7096, %v7087, %v7103
        %v7105 = vsel %vm7095, %v7102, %v7104
        %v7106 = vsel %vm7094, %v7084, %v7087
        %v7107 = vsel %vm7097, %v7093, 1326507024
        %v7108 = vsel %vm7096, %v7090, %v7107
        %v7109 = vsel %vm7095, %v7106, %v7108
        %v7110 = vshll.u32 %v7070, 8
        %v7111 = vmul.u32.u64.compose %v7110, %v7109
        %v7112 = vextract.low.u32 %v7111
        %v7113 = vextract.high.u32 %v7111
        %v7114 = vmul.u32.u64.compose %v7110, %v7105
        %v7115 = vextract.low.u32 %v7114
        %v7116 = vextract.high.u32 %v7114
        %v7117 = vmul.u32 %v7110, %v7101
        %v7118 = vadd.s32 %v7113, %v7115
        %vm7119 = vc.u32 %v7113, %v7115
        %v7120 = vadd.s32 %v7116, 1
        %v7121 = vsel %vm7119, %v7120, %v7116
        %v7122 = vadd.s32 %v7117, %v7121
        %v7123 = vadd.s32 %v7122, 536870912
        %v7124 = vshrl.u32 %v7123, 30
        %v7125 = vshll.u32 %v7124, 30
        %v7126 = vsub.s32 %v7122, %v7125
        %vm7127 = vcmp.lt.s32.totalorder %v7126, 0
        %v7128 = vsub.s32 0, %v7126
        %v7129 = vsel %vm7127, %v7128, %v7126
        %v7130 = vclz %v7129
        %v7131 = vsub.s32 %v7130, 2
        %vm7132 = vcmp.gt.s32.totalorder 0, %v7131
        %v7133 = vsel %vm7132, 0, %v7131
        %v7134 = vsub.s32 32, %v7133
        %v7135 = vshll.u32 %v7126, %v7133
        %v7136 = vshrl.u32 %v7118, %v7134
        %v7137 = vor.u32 %v7135, %v7136
        %v7138 = vsub.s32 4294967266, %v7133
        %v7139 = vadd.s32 %v7138, 127
        %v7140 = vshll.u32 %v7139, 23
        %v7141 = vor.u32 4788187, %v7140
        %v7142 = vand.u32 2147483647, %v7141
        %v7144 = vcvt.s32.f32 %v7137
        %v7145 = vmul.f32 %v7144, %v7142
        %v7146 = vxor.u32 %v7145, 2147483648
        %v7147 = vsel %vm7064, %v7146, %v7145
        %v7148 = vsub.s32 4, %v7124
        %v7149 = vsel %vm7064, %v7148, %v7124
        %v7150 = vsel %vm7063, %v1082, %v7147
        %v7151 = vsel %vm7063, 0, %v7149
        %v7152 = vcosq.f32.pop %v7150
        %v7153 = vsinq.f32.pop %v7150
        %vm7154 = vweird.f32 %v1082
        %v7155 = vand.u32 %v7151, 3
        %vm7156 = vcmp.lt.s32.totalorder %v7155, 2
        %vm7157 = vcmp.eq.s32.totalorder %v7155, 0
        %v7158 = vxor.u32 %v7153, 2147483648
        %v7159 = vsel %vm7157, %v7152, %v7158
        %vm7160 = vcmp.eq.s32.totalorder %v7155, 2
        %v7161 = vxor.u32 %v7152, 2147483648
        %v7162 = vsel %vm7160, %v7161, %v7153
        %v7163 = vsel %vm7156, %v7159, %v7162
        %v7164 = vsel %vm7154, nan, %v7163
        %v7165 = vand.u32 2147483647, %v1083
        %vm7166 = vcmp.le.f32.partialorder %v7165, 0.7853982
        %vm7167 = vcmp.lt.s32.totalorder %v1083, 0
        %v7168 = vand.u32 %v1083, 2139095040
        %v7169 = vshrl.u32 %v7168, 23
        %v7170 = vsub.s32 %v7169, 127
        %v7171 = vand.u32 2147483647, %v1083
        %v7172 = vand.u32 %v7171, 8388607
        %v7173 = vor.u32 %v7172, 8388608
        %v7174 = vsub.s32 0, %v7173
        %v7175 = vadd.s32 %v7170, 1
        %vm7176 = vcmp.gt.s32.totalorder %v7175, 0
        %v7177 = vsel %vm7176, %v7175, 0
        %v7178 = vshrl.u32 %v7177, 5
        %v7179 = vand.u32 %v7177, 31
        %v7180 = vsub.s32 32, %v7179
        %v7181 = vshrl.u32 683565275, %v7180
        %v7182 = vshll.u32 683565275, %v7179
        %v7183 = vshrl.u32 2475754826, %v7180
        %v7184 = vor.u32 %v7182, %v7183
        %v7185 = vshll.u32 2475754826, %v7179
        %v7186 = vshrl.u32 2131351028, %v7180
        %v7187 = vor.u32 %v7185, %v7186
        %v7188 = vshll.u32 2131351028, %v7179
        %v7189 = vshrl.u32 2102212464, %v7180
        %v7190 = vor.u32 %v7188, %v7189
        %v7191 = vshll.u32 2102212464, %v7179
        %v7192 = vshrl.u32 920167782, %v7180
        %v7193 = vor.u32 %v7191, %v7192
        %v7194 = vshll.u32 920167782, %v7179
        %v7195 = vshrl.u32 1326507024, %v7180
        %v7196 = vor.u32 %v7194, %v7195
        %vm7197 = vcmp.lt.s32.totalorder %v7178, 1
        %vm7198 = vcmp.lt.s32.totalorder %v7178, 2
        %vm7199 = vcmp.lt.s32.totalorder %v7178, 3
        %vm7200 = vcmp.lt.s32.totalorder %v7178, 4
        %v7201 = vsel %vm7197, %v7181, %v7184
        %v7202 = vsel %vm7200, %v7190, 2102212464
        %v7203 = vsel %vm7199, %v7187, %v7202
        %v7204 = vsel %vm7198, %v7201, %v7203
        %v7205 = vsel %vm7197, %v7184, %v7187
        %v7206 = vsel %vm7200, %v7193, 920167782
        %v7207 = vsel %vm7199, %v7190, %v7206
        %v7208 = vsel %vm7198, %v7205, %v7207
        %v7209 = vsel %vm7197, %v7187, %v7190
        %v7210 = vsel %vm7200, %v7196, 1326507024
        %v7211 = vsel %vm7199, %v7193, %v7210
        %v7212 = vsel %vm7198, %v7209, %v7211
        %v7213 = vshll.u32 %v7173, 8
        %v7214 = vmul.u32.u64.compose %v7213, %v7212
        %v7215 = vextract.low.u32 %v7214
        %v7216 = vextract.high.u32 %v7214
        %v7217 = vmul.u32.u64.compose %v7213, %v7208
        %v7218 = vextract.low.u32 %v7217
        %v7219 = vextract.high.u32 %v7217
        %v7220 = vmul.u32 %v7213, %v7204
        %v7221 = vadd.s32 %v7216, %v7218
        %vm7222 = vc.u32 %v7216, %v7218
        %v7223 = vadd.s32 %v7219, 1
        %v7224 = vsel %vm7222, %v7223, %v7219
        %v7225 = vadd.s32 %v7220, %v7224
        %v7226 = vadd.s32 %v7225, 536870912
        %v7227 = vshrl.u32 %v7226, 30
        %v7228 = vshll.u32 %v7227, 30
        %v7229 = vsub.s32 %v7225, %v7228
        %vm7230 = vcmp.lt.s32.totalorder %v7229, 0
        %v7231 = vsub.s32 0, %v7229
        %v7232 = vsel %vm7230, %v7231, %v7229
        %v7233 = vclz %v7232
        %v7234 = vsub.s32 %v7233, 2
        %vm7235 = vcmp.gt.s32.totalorder 0, %v7234
        %v7236 = vsel %vm7235, 0, %v7234
        %v7237 = vsub.s32 32, %v7236
        %v7238 = vshll.u32 %v7229, %v7236
        %v7239 = vshrl.u32 %v7221, %v7237
        %v7240 = vor.u32 %v7238, %v7239
        %v7241 = vsub.s32 4294967266, %v7236
        %v7242 = vadd.s32 %v7241, 127
        %v7243 = vshll.u32 %v7242, 23
        %v7244 = vor.u32 4788187, %v7243
        %v7245 = vand.u32 2147483647, %v7244
        %v7247 = vcvt.s32.f32 %v7240
        %v7248 = vmul.f32 %v7247, %v7245
        %v7249 = vxor.u32 %v7248, 2147483648
        %v7250 = vsel %vm7167, %v7249, %v7248
        %v7251 = vsub.s32 4, %v7227
        %v7252 = vsel %vm7167, %v7251, %v7227
        %v7253 = vsel %vm7166, %v1083, %v7250
        %v7254 = vsel %vm7166, 0, %v7252
        %v7255 = vcosq.f32.pop %v7253
        %v7256 = vsinq.f32.pop %v7253
        %vm7257 = vweird.f32 %v1083
        %v7258 = vand.u32 %v7254, 3
        %vm7259 = vcmp.lt.s32.totalorder %v7258, 2
        %vm7260 = vcmp.eq.s32.totalorder %v7258, 0
        %v7261 = vxor.u32 %v7256, 2147483648
        %v7262 = vsel %vm7260, %v7255, %v7261
        %vm7263 = vcmp.eq.s32.totalorder %v7258, 2
        %v7264 = vxor.u32 %v7255, 2147483648
        %v7265 = vsel %vm7263, %v7264, %v7256
        %v7266 = vsel %vm7259, %v7262, %v7265
        %v7267 = vsel %vm7257, nan, %v7266
        %v7268 = vand.u32 2147483647, %v1084
        %vm7269 = vcmp.le.f32.partialorder %v7268, 0.7853982
        %vm7270 = vcmp.lt.s32.totalorder %v1084, 0
        %v7271 = vand.u32 %v1084, 2139095040
        %v7272 = vshrl.u32 %v7271, 23
        %v7273 = vsub.s32 %v7272, 127
        %v7274 = vand.u32 2147483647, %v1084
        %v7275 = vand.u32 %v7274, 8388607
        %v7276 = vor.u32 %v7275, 8388608
        %v7277 = vsub.s32 0, %v7276
        %v7278 = vadd.s32 %v7273, 1
        %vm7279 = vcmp.gt.s32.totalorder %v7278, 0
        %v7280 = vsel %vm7279, %v7278, 0
        %v7281 = vshrl.u32 %v7280, 5
        %v7282 = vand.u32 %v7280, 31
        %v7283 = vsub.s32 32, %v7282
        %v7284 = vshrl.u32 683565275, %v7283
        %v7285 = vshll.u32 683565275, %v7282
        %v7286 = vshrl.u32 2475754826, %v7283
        %v7287 = vor.u32 %v7285, %v7286
        %v7288 = vshll.u32 2475754826, %v7282
        %v7289 = vshrl.u32 2131351028, %v7283
        %v7290 = vor.u32 %v7288, %v7289
        %v7291 = vshll.u32 2131351028, %v7282
        %v7292 = vshrl.u32 2102212464, %v7283
        %v7293 = vor.u32 %v7291, %v7292
        %v7294 = vshll.u32 2102212464, %v7282
        %v7295 = vshrl.u32 920167782, %v7283
        %v7296 = vor.u32 %v7294, %v7295
        %v7297 = vshll.u32 920167782, %v7282
        %v7298 = vshrl.u32 1326507024, %v7283
        %v7299 = vor.u32 %v7297, %v7298
        %vm7300 = vcmp.lt.s32.totalorder %v7281, 1
        %vm7301 = vcmp.lt.s32.totalorder %v7281, 2
        %vm7302 = vcmp.lt.s32.totalorder %v7281, 3
        %vm7303 = vcmp.lt.s32.totalorder %v7281, 4
        %v7304 = vsel %vm7300, %v7284, %v7287
        %v7305 = vsel %vm7303, %v7293, 2102212464
        %v7306 = vsel %vm7302, %v7290, %v7305
        %v7307 = vsel %vm7301, %v7304, %v7306
        %v7308 = vsel %vm7300, %v7287, %v7290
        %v7309 = vsel %vm7303, %v7296, 920167782
        %v7310 = vsel %vm7302, %v7293, %v7309
        %v7311 = vsel %vm7301, %v7308, %v7310
        %v7312 = vsel %vm7300, %v7290, %v7293
        %v7313 = vsel %vm7303, %v7299, 1326507024
        %v7314 = vsel %vm7302, %v7296, %v7313
        %v7315 = vsel %vm7301, %v7312, %v7314
        %v7316 = vshll.u32 %v7276, 8
        %v7317 = vmul.u32.u64.compose %v7316, %v7315
        %v7318 = vextract.low.u32 %v7317
        %v7319 = vextract.high.u32 %v7317
        %v7320 = vmul.u32.u64.compose %v7316, %v7311
        %v7321 = vextract.low.u32 %v7320
        %v7322 = vextract.high.u32 %v7320
        %v7323 = vmul.u32 %v7316, %v7307
        %v7324 = vadd.s32 %v7319, %v7321
        %vm7325 = vc.u32 %v7319, %v7321
        %v7326 = vadd.s32 %v7322, 1
        %v7327 = vsel %vm7325, %v7326, %v7322
        %v7328 = vadd.s32 %v7323, %v7327
        %v7329 = vadd.s32 %v7328, 536870912
        %v7330 = vshrl.u32 %v7329, 30
        %v7331 = vshll.u32 %v7330, 30
        %v7332 = vsub.s32 %v7328, %v7331
        %vm7333 = vcmp.lt.s32.totalorder %v7332, 0
        %v7334 = vsub.s32 0, %v7332
        %v7335 = vsel %vm7333, %v7334, %v7332
        %v7336 = vclz %v7335
        %v7337 = vsub.s32 %v7336, 2
        %vm7338 = vcmp.gt.s32.totalorder 0, %v7337
        %v7339 = vsel %vm7338, 0, %v7337
        %v7340 = vsub.s32 32, %v7339
        %v7341 = vshll.u32 %v7332, %v7339
        %v7342 = vshrl.u32 %v7324, %v7340
        %v7343 = vor.u32 %v7341, %v7342
        %v7344 = vsub.s32 4294967266, %v7339
        %v7345 = vadd.s32 %v7344, 127
        %v7346 = vshll.u32 %v7345, 23
        %v7347 = vor.u32 4788187, %v7346
        %v7348 = vand.u32 2147483647, %v7347
        %v7350 = vcvt.s32.f32 %v7343
        %v7351 = vmul.f32 %v7350, %v7348
        %v7352 = vxor.u32 %v7351, 2147483648
        %v7353 = vsel %vm7270, %v7352, %v7351
        %v7354 = vsub.s32 4, %v7330
        %v7355 = vsel %vm7270, %v7354, %v7330
        %v7356 = vsel %vm7269, %v1084, %v7353
        %v7357 = vsel %vm7269, 0, %v7355
        %v7358 = vcosq.f32.pop %v7356
        %v7359 = vsinq.f32.pop %v7356
        %vm7360 = vweird.f32 %v1084
        %v7361 = vand.u32 %v7357, 3
        %vm7362 = vcmp.lt.s32.totalorder %v7361, 2
        %vm7363 = vcmp.eq.s32.totalorder %v7361, 0
        %v7364 = vxor.u32 %v7359, 2147483648
        %v7365 = vsel %vm7363, %v7358, %v7364
        %vm7366 = vcmp.eq.s32.totalorder %v7361, 2
        %v7367 = vxor.u32 %v7358, 2147483648
        %v7368 = vsel %vm7366, %v7367, %v7359
        %v7369 = vsel %vm7362, %v7365, %v7368
        %v7370 = vsel %vm7360, nan, %v7369
        %v7371 = vand.u32 2147483647, %v1085
        %vm7372 = vcmp.le.f32.partialorder %v7371, 0.7853982
        %vm7373 = vcmp.lt.s32.totalorder %v1085, 0
        %v7374 = vand.u32 %v1085, 2139095040
        %v7375 = vshrl.u32 %v7374, 23
        %v7376 = vsub.s32 %v7375, 127
        %v7377 = vand.u32 2147483647, %v1085
        %v7378 = vand.u32 %v7377, 8388607
        %v7379 = vor.u32 %v7378, 8388608
        %v7380 = vsub.s32 0, %v7379
        %v7381 = vadd.s32 %v7376, 1
        %vm7382 = vcmp.gt.s32.totalorder %v7381, 0
        %v7383 = vsel %vm7382, %v7381, 0
        %v7384 = vshrl.u32 %v7383, 5
        %v7385 = vand.u32 %v7383, 31
        %v7386 = vsub.s32 32, %v7385
        %v7387 = vshrl.u32 683565275, %v7386
        %v7388 = vshll.u32 683565275, %v7385
        %v7389 = vshrl.u32 2475754826, %v7386
        %v7390 = vor.u32 %v7388, %v7389
        %v7391 = vshll.u32 2475754826, %v7385
        %v7392 = vshrl.u32 2131351028, %v7386
        %v7393 = vor.u32 %v7391, %v7392
        %v7394 = vshll.u32 2131351028, %v7385
        %v7395 = vshrl.u32 2102212464, %v7386
        %v7396 = vor.u32 %v7394, %v7395
        %v7397 = vshll.u32 2102212464, %v7385
        %v7398 = vshrl.u32 920167782, %v7386
        %v7399 = vor.u32 %v7397, %v7398
        %v7400 = vshll.u32 920167782, %v7385
        %v7401 = vshrl.u32 1326507024, %v7386
        %v7402 = vor.u32 %v7400, %v7401
        %vm7403 = vcmp.lt.s32.totalorder %v7384, 1
        %vm7404 = vcmp.lt.s32.totalorder %v7384, 2
        %vm7405 = vcmp.lt.s32.totalorder %v7384, 3
        %vm7406 = vcmp.lt.s32.totalorder %v7384, 4
        %v7407 = vsel %vm7403, %v7387, %v7390
        %v7408 = vsel %vm7406, %v7396, 2102212464
        %v7409 = vsel %vm7405, %v7393, %v7408
        %v7410 = vsel %vm7404, %v7407, %v7409
        %v7411 = vsel %vm7403, %v7390, %v7393
        %v7412 = vsel %vm7406, %v7399, 920167782
        %v7413 = vsel %vm7405, %v7396, %v7412
        %v7414 = vsel %vm7404, %v7411, %v7413
        %v7415 = vsel %vm7403, %v7393, %v7396
        %v7416 = vsel %vm7406, %v7402, 1326507024
        %v7417 = vsel %vm7405, %v7399, %v7416
        %v7418 = vsel %vm7404, %v7415, %v7417
        %v7419 = vshll.u32 %v7379, 8
        %v7420 = vmul.u32.u64.compose %v7419, %v7418
        %v7421 = vextract.low.u32 %v7420
        %v7422 = vextract.high.u32 %v7420
        %v7423 = vmul.u32.u64.compose %v7419, %v7414
        %v7424 = vextract.low.u32 %v7423
        %v7425 = vextract.high.u32 %v7423
        %v7426 = vmul.u32 %v7419, %v7410
        %v7427 = vadd.s32 %v7422, %v7424
        %vm7428 = vc.u32 %v7422, %v7424
        %v7429 = vadd.s32 %v7425, 1
        %v7430 = vsel %vm7428, %v7429, %v7425
        %v7431 = vadd.s32 %v7426, %v7430
        %v7432 = vadd.s32 %v7431, 536870912
        %v7433 = vshrl.u32 %v7432, 30
        %v7434 = vshll.u32 %v7433, 30
        %v7435 = vsub.s32 %v7431, %v7434
        %vm7436 = vcmp.lt.s32.totalorder %v7435, 0
        %v7437 = vsub.s32 0, %v7435
        %v7438 = vsel %vm7436, %v7437, %v7435
        %v7439 = vclz %v7438
        %v7440 = vsub.s32 %v7439, 2
        %vm7441 = vcmp.gt.s32.totalorder 0, %v7440
        %v7442 = vsel %vm7441, 0, %v7440
        %v7443 = vsub.s32 32, %v7442
        %v7444 = vshll.u32 %v7435, %v7442
        %v7445 = vshrl.u32 %v7427, %v7443
        %v7446 = vor.u32 %v7444, %v7445
        %v7447 = vsub.s32 4294967266, %v7442
        %v7448 = vadd.s32 %v7447, 127
        %v7449 = vshll.u32 %v7448, 23
        %v7450 = vor.u32 4788187, %v7449
        %v7451 = vand.u32 2147483647, %v7450
        %v7453 = vcvt.s32.f32 %v7446
        %v7454 = vmul.f32 %v7453, %v7451
        %v7455 = vxor.u32 %v7454, 2147483648
        %v7456 = vsel %vm7373, %v7455, %v7454
        %v7457 = vsub.s32 4, %v7433
        %v7458 = vsel %vm7373, %v7457, %v7433
        %v7459 = vsel %vm7372, %v1085, %v7456
        %v7460 = vsel %vm7372, 0, %v7458
        %v7461 = vcosq.f32.pop %v7459
        %v7462 = vsinq.f32.pop %v7459
        %vm7463 = vweird.f32 %v1085
        %v7464 = vand.u32 %v7460, 3
        %vm7465 = vcmp.lt.s32.totalorder %v7464, 2
        %vm7466 = vcmp.eq.s32.totalorder %v7464, 0
        %v7467 = vxor.u32 %v7462, 2147483648
        %v7468 = vsel %vm7466, %v7461, %v7467
        %vm7469 = vcmp.eq.s32.totalorder %v7464, 2
        %v7470 = vxor.u32 %v7461, 2147483648
        %v7471 = vsel %vm7469, %v7470, %v7462
        %v7472 = vsel %vm7465, %v7468, %v7471
        %v7473 = vsel %vm7463, nan, %v7472
        %v7474 = vand.u32 2147483647, %v1086
        %vm7475 = vcmp.le.f32.partialorder %v7474, 0.7853982
        %vm7476 = vcmp.lt.s32.totalorder %v1086, 0
        %v7477 = vand.u32 %v1086, 2139095040
        %v7478 = vshrl.u32 %v7477, 23
        %v7479 = vsub.s32 %v7478, 127
        %v7480 = vand.u32 2147483647, %v1086
        %v7481 = vand.u32 %v7480, 8388607
        %v7482 = vor.u32 %v7481, 8388608
        %v7483 = vsub.s32 0, %v7482
        %v7484 = vadd.s32 %v7479, 1
        %vm7485 = vcmp.gt.s32.totalorder %v7484, 0
        %v7486 = vsel %vm7485, %v7484, 0
        %v7487 = vshrl.u32 %v7486, 5
        %v7488 = vand.u32 %v7486, 31
        %v7489 = vsub.s32 32, %v7488
        %v7490 = vshrl.u32 683565275, %v7489
        %v7491 = vshll.u32 683565275, %v7488
        %v7492 = vshrl.u32 2475754826, %v7489
        %v7493 = vor.u32 %v7491, %v7492
        %v7494 = vshll.u32 2475754826, %v7488
        %v7495 = vshrl.u32 2131351028, %v7489
        %v7496 = vor.u32 %v7494, %v7495
        %v7497 = vshll.u32 2131351028, %v7488
        %v7498 = vshrl.u32 2102212464, %v7489
        %v7499 = vor.u32 %v7497, %v7498
        %v7500 = vshll.u32 2102212464, %v7488
        %v7501 = vshrl.u32 920167782, %v7489
        %v7502 = vor.u32 %v7500, %v7501
        %v7503 = vshll.u32 920167782, %v7488
        %v7504 = vshrl.u32 1326507024, %v7489
        %v7505 = vor.u32 %v7503, %v7504
        %vm7506 = vcmp.lt.s32.totalorder %v7487, 1
        %vm7507 = vcmp.lt.s32.totalorder %v7487, 2
        %vm7508 = vcmp.lt.s32.totalorder %v7487, 3
        %vm7509 = vcmp.lt.s32.totalorder %v7487, 4
        %v7510 = vsel %vm7506, %v7490, %v7493
        %v7511 = vsel %vm7509, %v7499, 2102212464
        %v7512 = vsel %vm7508, %v7496, %v7511
        %v7513 = vsel %vm7507, %v7510, %v7512
        %v7514 = vsel %vm7506, %v7493, %v7496
        %v7515 = vsel %vm7509, %v7502, 920167782
        %v7516 = vsel %vm7508, %v7499, %v7515
        %v7517 = vsel %vm7507, %v7514, %v7516
        %v7518 = vsel %vm7506, %v7496, %v7499
        %v7519 = vsel %vm7509, %v7505, 1326507024
        %v7520 = vsel %vm7508, %v7502, %v7519
        %v7521 = vsel %vm7507, %v7518, %v7520
        %v7522 = vshll.u32 %v7482, 8
        %v7523 = vmul.u32.u64.compose %v7522, %v7521
        %v7524 = vextract.low.u32 %v7523
        %v7525 = vextract.high.u32 %v7523
        %v7526 = vmul.u32.u64.compose %v7522, %v7517
        %v7527 = vextract.low.u32 %v7526
        %v7528 = vextract.high.u32 %v7526
        %v7529 = vmul.u32 %v7522, %v7513
        %v7530 = vadd.s32 %v7525, %v7527
        %vm7531 = vc.u32 %v7525, %v7527
        %v7532 = vadd.s32 %v7528, 1
        %v7533 = vsel %vm7531, %v7532, %v7528
        %v7534 = vadd.s32 %v7529, %v7533
        %v7535 = vadd.s32 %v7534, 536870912
        %v7536 = vshrl.u32 %v7535, 30
        %v7537 = vshll.u32 %v7536, 30
        %v7538 = vsub.s32 %v7534, %v7537
        %vm7539 = vcmp.lt.s32.totalorder %v7538, 0
        %v7540 = vsub.s32 0, %v7538
        %v7541 = vsel %vm7539, %v7540, %v7538
        %v7542 = vclz %v7541
        %v7543 = vsub.s32 %v7542, 2
        %vm7544 = vcmp.gt.s32.totalorder 0, %v7543
        %v7545 = vsel %vm7544, 0, %v7543
        %v7546 = vsub.s32 32, %v7545
        %v7547 = vshll.u32 %v7538, %v7545
        %v7548 = vshrl.u32 %v7530, %v7546
        %v7549 = vor.u32 %v7547, %v7548
        %v7550 = vsub.s32 4294967266, %v7545
        %v7551 = vadd.s32 %v7550, 127
        %v7552 = vshll.u32 %v7551, 23
        %v7553 = vor.u32 4788187, %v7552
        %v7554 = vand.u32 2147483647, %v7553
        %v7556 = vcvt.s32.f32 %v7549
        %v7557 = vmul.f32 %v7556, %v7554
        %v7558 = vxor.u32 %v7557, 2147483648
        %v7559 = vsel %vm7476, %v7558, %v7557
        %v7560 = vsub.s32 4, %v7536
        %v7561 = vsel %vm7476, %v7560, %v7536
        %v7562 = vsel %vm7475, %v1086, %v7559
        %v7563 = vsel %vm7475, 0, %v7561
        %v7564 = vcosq.f32.pop %v7562
        %v7565 = vsinq.f32.pop %v7562
        %vm7566 = vweird.f32 %v1086
        %v7567 = vand.u32 %v7563, 3
        %vm7568 = vcmp.lt.s32.totalorder %v7567, 2
        %vm7569 = vcmp.eq.s32.totalorder %v7567, 0
        %v7570 = vxor.u32 %v7565, 2147483648
        %v7571 = vsel %vm7569, %v7564, %v7570
        %vm7572 = vcmp.eq.s32.totalorder %v7567, 2
        %v7573 = vxor.u32 %v7564, 2147483648
        %v7574 = vsel %vm7572, %v7573, %v7565
        %v7575 = vsel %vm7568, %v7571, %v7574
        %v7576 = vsel %vm7566, nan, %v7575
        %v7577 = vand.u32 2147483647, %v1087
        %vm7578 = vcmp.le.f32.partialorder %v7577, 0.7853982
        %vm7579 = vcmp.lt.s32.totalorder %v1087, 0
        %v7580 = vand.u32 %v1087, 2139095040
        %v7581 = vshrl.u32 %v7580, 23
        %v7582 = vsub.s32 %v7581, 127
        %v7583 = vand.u32 2147483647, %v1087
        %v7584 = vand.u32 %v7583, 8388607
        %v7585 = vor.u32 %v7584, 8388608
        %v7586 = vsub.s32 0, %v7585
        %v7587 = vadd.s32 %v7582, 1
        %vm7588 = vcmp.gt.s32.totalorder %v7587, 0
        %v7589 = vsel %vm7588, %v7587, 0
        %v7590 = vshrl.u32 %v7589, 5
        %v7591 = vand.u32 %v7589, 31
        %v7592 = vsub.s32 32, %v7591
        %v7593 = vshrl.u32 683565275, %v7592
        %v7594 = vshll.u32 683565275, %v7591
        %v7595 = vshrl.u32 2475754826, %v7592
        %v7596 = vor.u32 %v7594, %v7595
        %v7597 = vshll.u32 2475754826, %v7591
        %v7598 = vshrl.u32 2131351028, %v7592
        %v7599 = vor.u32 %v7597, %v7598
        %v7600 = vshll.u32 2131351028, %v7591
        %v7601 = vshrl.u32 2102212464, %v7592
        %v7602 = vor.u32 %v7600, %v7601
        %v7603 = vshll.u32 2102212464, %v7591
        %v7604 = vshrl.u32 920167782, %v7592
        %v7605 = vor.u32 %v7603, %v7604
        %v7606 = vshll.u32 920167782, %v7591
        %v7607 = vshrl.u32 1326507024, %v7592
        %v7608 = vor.u32 %v7606, %v7607
        %vm7609 = vcmp.lt.s32.totalorder %v7590, 1
        %vm7610 = vcmp.lt.s32.totalorder %v7590, 2
        %vm7611 = vcmp.lt.s32.totalorder %v7590, 3
        %vm7612 = vcmp.lt.s32.totalorder %v7590, 4
        %v7613 = vsel %vm7609, %v7593, %v7596
        %v7614 = vsel %vm7612, %v7602, 2102212464
        %v7615 = vsel %vm7611, %v7599, %v7614
        %v7616 = vsel %vm7610, %v7613, %v7615
        %v7617 = vsel %vm7609, %v7596, %v7599
        %v7618 = vsel %vm7612, %v7605, 920167782
        %v7619 = vsel %vm7611, %v7602, %v7618
        %v7620 = vsel %vm7610, %v7617, %v7619
        %v7621 = vsel %vm7609, %v7599, %v7602
        %v7622 = vsel %vm7612, %v7608, 1326507024
        %v7623 = vsel %vm7611, %v7605, %v7622
        %v7624 = vsel %vm7610, %v7621, %v7623
        %v7625 = vshll.u32 %v7585, 8
        %v7626 = vmul.u32.u64.compose %v7625, %v7624
        %v7627 = vextract.low.u32 %v7626
        %v7628 = vextract.high.u32 %v7626
        %v7629 = vmul.u32.u64.compose %v7625, %v7620
        %v7630 = vextract.low.u32 %v7629
        %v7631 = vextract.high.u32 %v7629
        %v7632 = vmul.u32 %v7625, %v7616
        %v7633 = vadd.s32 %v7628, %v7630
        %vm7634 = vc.u32 %v7628, %v7630
        %v7635 = vadd.s32 %v7631, 1
        %v7636 = vsel %vm7634, %v7635, %v7631
        %v7637 = vadd.s32 %v7632, %v7636
        %v7638 = vadd.s32 %v7637, 536870912
        %v7639 = vshrl.u32 %v7638, 30
        %v7640 = vshll.u32 %v7639, 30
        %v7641 = vsub.s32 %v7637, %v7640
        %vm7642 = vcmp.lt.s32.totalorder %v7641, 0
        %v7643 = vsub.s32 0, %v7641
        %v7644 = vsel %vm7642, %v7643, %v7641
        %v7645 = vclz %v7644
        %v7646 = vsub.s32 %v7645, 2
        %vm7647 = vcmp.gt.s32.totalorder 0, %v7646
        %v7648 = vsel %vm7647, 0, %v7646
        %v7649 = vsub.s32 32, %v7648
        %v7650 = vshll.u32 %v7641, %v7648
        %v7651 = vshrl.u32 %v7633, %v7649
        %v7652 = vor.u32 %v7650, %v7651
        %v7653 = vsub.s32 4294967266, %v7648
        %v7654 = vadd.s32 %v7653, 127
        %v7655 = vshll.u32 %v7654, 23
        %v7656 = vor.u32 4788187, %v7655
        %v7657 = vand.u32 2147483647, %v7656
        %v7659 = vcvt.s32.f32 %v7652
        %v7660 = vmul.f32 %v7659, %v7657
        %v7661 = vxor.u32 %v7660, 2147483648
        %v7662 = vsel %vm7579, %v7661, %v7660
        %v7663 = vsub.s32 4, %v7639
        %v7664 = vsel %vm7579, %v7663, %v7639
        %v7665 = vsel %vm7578, %v1087, %v7662
        %v7666 = vsel %vm7578, 0, %v7664
        %v7667 = vcosq.f32.pop %v7665
        %v7668 = vsinq.f32.pop %v7665
        %vm7669 = vweird.f32 %v1087
        %v7670 = vand.u32 %v7666, 3
        %vm7671 = vcmp.lt.s32.totalorder %v7670, 2
        %vm7672 = vcmp.eq.s32.totalorder %v7670, 0
        %v7673 = vxor.u32 %v7668, 2147483648
        %v7674 = vsel %vm7672, %v7667, %v7673
        %vm7675 = vcmp.eq.s32.totalorder %v7670, 2
        %v7676 = vxor.u32 %v7667, 2147483648
        %v7677 = vsel %vm7675, %v7676, %v7668
        %v7678 = vsel %vm7671, %v7674, %v7677
        %v7679 = vsel %vm7669, nan, %v7678
        %7680 = vst [vmem:[%s161] sm:$0xff] %v1190
        %7681 = vst [vmem:[%s161 + $0x8] sm:$0xff] %v1293
        %7682 = vst [vmem:[%s161 + $0x10] sm:$0xff] %v1396
        %7683 = vst [vmem:[%s161 + $0x18] sm:$0xff] %v1499
        %7684 = vst [vmem:[%s161 + $0x20] sm:$0xff] %v1602
        %7685 = vst [vmem:[%s161 + $0x28] sm:$0xff] %v1705
        %7686 = vst [vmem:[%s161 + $0x30] sm:$0xff] %v1808
        %7687 = vst [vmem:[%s161 + $0x38] sm:$0xff] %v1911
        %7688 = vst [vmem:[%s161 + $0x40] sm:$0xff] %v2014
        %7689 = vst [vmem:[%s161 + $0x48] sm:$0xff] %v2117
        %7690 = vst [vmem:[%s161 + $0x50] sm:$0xff] %v2220
        %7691 = vst [vmem:[%s161 + $0x58] sm:$0xff] %v2323
        %7692 = vst [vmem:[%s161 + $0x60] sm:$0xff] %v2426
        %7693 = vst [vmem:[%s161 + $0x68] sm:$0xff] %v2529
        %7694 = vst [vmem:[%s161 + $0x70] sm:$0xff] %v2632
        %7695 = vst [vmem:[%s161 + $0x78] sm:$0xff] %v2735
        %7696 = vst [vmem:[%s161 + $0x80] sm:$0xff] %v2838
        %7697 = vst [vmem:[%s161 + $0x88] sm:$0xff] %v2941
        %7698 = vst [vmem:[%s161 + $0x90] sm:$0xff] %v3044
        %7699 = vst [vmem:[%s161 + $0x98] sm:$0xff] %v3147
        %7700 = vst [vmem:[%s161 + $0xa0] sm:$0xff] %v3250
        %7701 = vst [vmem:[%s161 + $0xa8] sm:$0xff] %v3353
        %7702 = vst [vmem:[%s161 + $0xb0] sm:$0xff] %v3456
        %7703 = vst [vmem:[%s161 + $0xb8] sm:$0xff] %v3559
        %7704 = vst [vmem:[%s161 + $0xc0] sm:$0xff] %v3662
        %7705 = vst [vmem:[%s161 + $0xc8] sm:$0xff] %v3765
        %7706 = vst [vmem:[%s161 + $0xd0] sm:$0xff] %v3868
        %7707 = vst [vmem:[%s161 + $0xd8] sm:$0xff] %v3971
        %7708 = vst [vmem:[%s161 + $0xe0] sm:$0xff] %v4074
        %7709 = vst [vmem:[%s161 + $0xe8] sm:$0xff] %v4177
        %7710 = vst [vmem:[%s161 + $0xf0] sm:$0xff] %v4280
        %7711 = vst [vmem:[%s161 + $0xf8] sm:$0xff] %v4383
        %7712 = vst [vmem:[%s161 + $0x100] sm:$0xff] %v4486
        %7713 = vst [vmem:[%s161 + $0x108] sm:$0xff] %v4589
        %7714 = vst [vmem:[%s161 + $0x110] sm:$0xff] %v4692
        %7715 = vst [vmem:[%s161 + $0x118] sm:$0xff] %v4795
        %7716 = vst [vmem:[%s161 + $0x120] sm:$0xff] %v4898
        %7717 = vst [vmem:[%s161 + $0x128] sm:$0xff] %v5001
        %7718 = vst [vmem:[%s161 + $0x130] sm:$0xff] %v5104
        %7719 = vst [vmem:[%s161 + $0x138] sm:$0xff] %v5207
        %7720 = vst [vmem:[%s161 + $0x140] sm:$0xff] %v5310
        %7721 = vst [vmem:[%s161 + $0x148] sm:$0xff] %v5413
        %7722 = vst [vmem:[%s161 + $0x150] sm:$0xff] %v5516
        %7723 = vst [vmem:[%s161 + $0x158] sm:$0xff] %v5619
        %7724 = vst [vmem:[%s161 + $0x160] sm:$0xff] %v5722
        %7725 = vst [vmem:[%s161 + $0x168] sm:$0xff] %v5825
        %7726 = vst [vmem:[%s161 + $0x170] sm:$0xff] %v5928
        %7727 = vst [vmem:[%s161 + $0x178] sm:$0xff] %v6031
        %7728 = vst [vmem:[%s161 + $0x180] sm:$0xff] %v6134
        %7729 = vst [vmem:[%s161 + $0x188] sm:$0xff] %v6237
        %7730 = vst [vmem:[%s161 + $0x190] sm:$0xff] %v6340
        %7731 = vst [vmem:[%s161 + $0x198] sm:$0xff] %v6443
        %7732 = vst [vmem:[%s161 + $0x1a0] sm:$0xff] %v6546
        %7733 = vst [vmem:[%s161 + $0x1a8] sm:$0xff] %v6649
        %7734 = vst [vmem:[%s161 + $0x1b0] sm:$0xff] %v6752
        %7735 = vst [vmem:[%s161 + $0x1b8] sm:$0xff] %v6855
        %7736 = vst [vmem:[%s161 + $0x1c0] sm:$0xff] %v6958
        %7737 = vst [vmem:[%s161 + $0x1c8] sm:$0xff] %v7061
        %7738 = vst [vmem:[%s161 + $0x1d0] sm:$0xff] %v7164
        %7739 = vst [vmem:[%s161 + $0x1d8] sm:$0xff] %v7267
        %7740 = vst [vmem:[%s161 + $0x1e0] sm:$0xff] %v7370
        %7741 = vst [vmem:[%s161 + $0x1e8] sm:$0xff] %v7473
        %7742 = vst [vmem:[%s161 + $0x1f0] sm:$0xff] %v7576
        %7743 = vst [vmem:[%s161 + $0x1f8] sm:$0xff] %v7679
        %s7744 = sand.u32 %s87, 1
        %s7745 = scalar_lea.sflag [#allocation3], %s7744
        %s7746 = sand.u32 %s87, 1
        %s7747 = smul.addr %s7746, 512
        %s7748 = scalar_lea.vmem [#allocation2], %s7747
        // Predicated region
        $region29: #{tpu_custom_call.1} parent=27 // pred_check
          %p7749 = pneg %p97
        $region30: #{tpu_custom_call.1} parent=27 // pred_check_branch
          %7751 = sbr.rel (%p7749) target = $region32
        $region31: #{tpu_custom_call.1} parent=27 // pred_region
          %s7752 = smul.u32 32, %s21
          %s7754 = ssub.s32 8192, 8192
          %7755 = vsyncadd %s7745, %s7754
          %s7756 = smul.addr %s7752, 2
          %s7757 = smul.addr %s20, 128
          %s7758 = sadd.s32 %s7756, %s7757
          %s7759 = smul.addr %s7758, 128
          %s7760 = scalar_lea.hbm %s2, %s7759
          %s7761 = sshll.u32 %s7748, 4
          %s7762 = int_to_ptr.vmem [resolvable:$true] %s7761
          %7767 = dma.vmem_to_hbm [thread:$0]  %s7762, 8192, %s7760, %s7745, 256, 256, 16
        $region32: #{tpu_custom_call.1} parent=27 // pred_fallthru
          _
      $region28: #{tpu_custom_call.1} parent=5 // pred_fallthru
        _
      %p7768 = scmp.le.s32.totalorder 2, %s11
      // Predicated region
      $region33: #{tpu_custom_call.1} parent=5 // pred_check
        %p7769 = pneg %p7768
      $region34: #{tpu_custom_call.1} parent=5 // pred_check_branch
        %7771 = sbr.rel (%p7769) target = $region36
      $region35: #{tpu_custom_call.1} parent=5 // pred_region
        %s7772 = ssub.s32 %s11, 2
        // Predicated region
        $region37: #{tpu_custom_call.1} parent=35 // pred_check
          %p7773 = pneg %p103
        $region38: #{tpu_custom_call.1} parent=35 // pred_check_branch
          %7775 = sbr.rel (%p7773) target = $region40
        $region39: #{tpu_custom_call.1} parent=35 // pred_region
          %s7776 = sand.u32 %s88, 1
          %s7777 = scalar_lea.sflag [#allocation3], %s7776
          %s7778 = sand.u32 %s88, 1
          %s7779 = smul.addr %s7778, 512
          %s7780 = scalar_lea.vmem [#allocation2], %s7779
          %7781 = dma.done %s7777, 8192
        $region40: #{tpu_custom_call.1} parent=35 // pred_fallthru
          _
      $region36: #{tpu_custom_call.1} parent=5 // pred_fallthru
        _
    $region6: #{tpu_custom_call.1} parent=1 // loop_footer
      %s15 = sadd.s32 1, %s11
    $region7: #{tpu_custom_call.1} parent=1 // loop_footer_branch
      %10 = sbr.rel target = $region3
    $region8: #{tpu_custom_call.1} parent=1 // loop_exit
      _
    %7782 = vsyncpa [#allocation3], 1
    %s7783 = scalar_lea.sflag [#allocation3], 1
    %7784 = vsyncpa %s7783, 1

</llo_original>
